<compile_context>
chip_gen: v7x
topology: tpu7x:2x2x1
jax: 0.10.0
libtpu: 0.0.40
codegen_flags: <defaults>
</compile_context>

<pallas_src>
import math
import functools

import jax
import jax.numpy as jnp
from jax import lax
from jax.experimental import pallas as pl
from jax.experimental.pallas import tpu as pltpu

# ---------------- small synthetic config (scaled-down from the original) -----
BATCH = 2
IMG = 16                                   # original images are 224x224
CH = 3
PATCH = 8                                  # args.patch_size
STRIDE = PATCH // 2                        # self.stride = patch_size // 2
N_PATCH_1D = (IMG - PATCH) // STRIDE + 1   # 3
K_SEQ = N_PATCH_1D ** 2                    # 9
Z_SIZE = CH * PATCH * PATCH                # 192 (self.z_size_new = 3*p*p)
INLAY_HEADS = 4                            # TODO(synk): original head_num=28; scaled so it divides Z_SIZE
NUM_ID = 8                                 # args.number_id

# small stand-in ViT encoder (VisionTransformer(**config_dict), hidden 768 -> 64)
VIT_PATCH = 8
VIT_TOKENS = (IMG // VIT_PATCH) ** 2       # 4
VIT_NTOK = VIT_TOKENS + 1                  # +1 CLS
VIT_DIM = 64                               # TODO(synk): original hidden 768 / head Linear(768, ...)
VIT_DEPTH = 2
VIT_HEADS = 4
VIT_MLP = 128
PE_IN = CH * VIT_PATCH * VIT_PATCH         # 192
HEAD_PAD = 128                             # lane-dense head output, sliced to NUM_ID outside
# TODO(synk): inlay feature dim A=192 leaves a masked 64-lane tail on every row
#             store; padding resident blocks to 256 is a small further win.

_PAR = pltpu.CompilerParams(dimension_semantics=("parallel",))


# ============================ in-kernel math helpers =========================
def _context_norm(z, g, b):
    # apply_context_norm: normalize over the sequence axis, torch.var (unbiased), eps=1e-8
    seq = z.shape[0]
    mu = jnp.mean(z, axis=0, keepdims=True)
    var = jnp.sum((z - mu) ** 2, axis=0, keepdims=True) / (seq - 1)
    return (z - mu) / jnp.sqrt(var + 1e-8) * g + b


def _layer_norm(x, g, b):
    mu = jnp.mean(x, axis=-1, keepdims=True)
    var = jnp.mean((x - mu) ** 2, axis=-1, keepdims=True)
    return (x - mu) * lax.rsqrt(var + 1e-6) * g + b


def _erf(x):
    # Abramowitz & Stegun 7.1.26 (|err| < 1.5e-7): exact-erf GELU parity with torch
    # nn.GELU without relying on an erf lowering (only abs/exp/mul/where).
    a1, a2, a3, a4, a5 = 0.254829592, -0.284496736, 1.421413741, -1.453152027, 1.061405429
    pp = 0.3275911
    ax = jnp.abs(x)
    t = 1.0 / (1.0 + pp * ax)
    poly = ((((a5 * t + a4) * t + a3) * t + a2) * t + a1) * t
    y = 1.0 - poly * jnp.exp(-ax * ax)
    return jnp.where(x >= 0, y, -y)


def _gelu_exact(x):
    return 0.5 * x * (1.0 + _erf(x * 0.7071067811865476))


def _attention_heads(q, k, v, heads):
    """Scaled dot-product attention per head; q/k/v are full-width (L, A) tensors
    produced by fused projections.  Heads are static lane slices; only the small
    (Lq, Lk) score / (Lq, dh) context matmuls are per-head (they are inherently
    per-head); projections and the output matmul stay full-width."""
    a = q.shape[-1]
    dh = a // heads
    scale = 1.0 / math.sqrt(dh)
    outs = []
    for h in range(heads):
        sl = slice(h * dh, (h + 1) * dh)
        qh, kh, vh = q[:, sl], k[:, sl], v[:, sl]
        s = lax.dot_general(qh, kh, (((1,), (1,)), ((), ())),
                            preferred_element_type=jnp.float32) * scale     # (Lq, Lk)
        p = jax.nn.softmax(s, axis=-1)
        outs.append(jnp.dot(p, vh, preferred_element_type=jnp.float32))     # (Lq, dh)
    return jnp.concatenate(outs, axis=-1)                                    # (Lq, A) == concat(heads)


# ============================ fused Pallas kernels ===========================
def _inlay_kernel(u_ref, zmem_ref, g1, b1, g2, b2,
                  wqk, bqk, wv, bv, wo, bo, o_ref, *, nb, heads):
    # context-norm -> MHA(q=z, k=z, v=z_memory) -> context-norm, all in VMEM.
    a = u_ref.shape[-1]
    # value projection of z_memory is batch-independent: compute once per step.
    v = jnp.dot(zmem_ref[...], wv[...], preferred_element_type=jnp.float32) + bv[...]
    for bi in range(nb):                                     # static unroll over batch
        z = _context_norm(u_ref[bi], g1[...], b1[...])
        qk = jnp.dot(z, wqk[...], preferred_element_type=jnp.float32) + bqk[...]   # fused Q|K
        q = qk[:, :a]
        k = qk[:, a:]
        # NOTE: probabilities (len L) contract against v (len K_SEQ); valid because
        #       L == K_SEQ == 9 at this config (same as the original module wiring).
        ctx = _attention_heads(q, k, v, heads)
        y = jnp.dot(ctx, wo[...], preferred_element_type=jnp.float32) + bo[...]
        o_ref[bi] = _context_norm(y, g2[...], b2[...])


def _encoder_kernel(tok_ref, pe_w, tok_bias,
                    l1g, l1b, wqkv, bqkv, wo, bo,
                    l2g, l2b, w1, b1, w2, b2,
                    lfg, lfb, hw, hb, o_ref, *, nb, depth, heads):
    dim = pe_w.shape[-1]
    for bi in range(nb):                                     # static unroll over batch
        # patch-embed (+ cls/pos/pe_b folded into tok_bias; row 0 of tok_ref is zeros)
        h = jnp.dot(tok_ref[bi], pe_w[...], preferred_element_type=jnp.float32) + tok_bias[...]
        for d in range(depth):                               # static unroll (depth=2)
            hn = _layer_norm(h, l1g[d], l1b[d])
            qkv = jnp.dot(hn, wqkv[d], preferred_element_type=jnp.float32) + bqkv[d]  # fused QKV
            q = qkv[:, 0:dim]
            k = qkv[:, dim:2 * dim]
            v = qkv[:, 2 * dim:3 * dim]
            ctx = _attention_heads(q, k, v, heads)
            h = h + jnp.dot(ctx, wo[d], preferred_element_type=jnp.float32) + bo[d]
            hn = _layer_norm(h, l2g[d], l2b[d])
            m = _gelu_exact(jnp.dot(hn, w1[d], preferred_element_type=jnp.float32) + b1[d])
            h = h + jnp.dot(m, w2[d], preferred_element_type=jnp.float32) + b2[d]
        hn = _layer_norm(h, lfg[...], lfb[...])
        cls_feat = hn[0:1, :]                                # CLS token
        o_ref[bi] = jnp.dot(cls_feat, hw[...], preferred_element_type=jnp.float32) + hb[...]


# ============================ grid-shape heuristic ===========================
@functools.lru_cache(maxsize=None)
def _num_tensorcores():
    # v7x has 2 TensorCores per chip; v5e / v6e have 1.
    try:
        kind = jax.devices()[0].device_kind.lower()
    except Exception:
        return 1
    return 2 if ("v7" in kind or "7x" in kind) else 1


def _batch_per_step(bsz):
    # Single-TC chips: the grid is a serial loop -> merge the whole batch into one
    # grid step.  v7x: one element per "parallel" step so both cores get work.
    nb = 1 if _num_tensorcores() > 1 else bsz
    return nb if (nb > 0 and bsz % nb == 0) else 1


def _rep(shape):
    # grid-invariant (resident) block: whole array, constant index map
    return pl.BlockSpec(shape, lambda i: (0,) * len(shape))


# ============================ kernel wrappers ================================
def inlay_attention(prep, u):
    bsz, L, A = u.shape
    nb = _batch_per_step(bsz)
    return pl.pallas_call(
        functools.partial(_inlay_kernel, nb=nb, heads=INLAY_HEADS),
        out_shape=jax.ShapeDtypeStruct((bsz, L, A), jnp.float32),
        grid=(bsz // nb,),
        in_specs=[
            pl.BlockSpec((nb, L, A), lambda i: (i, 0, 0)),
            _rep((K_SEQ, A)),                                # z_memory: resident, no batch broadcast
            _rep((1, A)), _rep((1, A)), _rep((1, A)), _rep((1, A)),
            _rep((A, 2 * A)), _rep((1, 2 * A)),              # fused Wq|Wk
            _rep((A, A)), _rep((1, A)),                      # Wv (applied to z_memory)
            _rep((A, A)), _rep((1, A)),                      # Wo
        ],
        out_specs=pl.BlockSpec((nb, L, A), lambda i: (i, 0, 0)),
        compiler_params=_PAR,
    )(u, prep["z_mem"], prep["gamma"], prep["beta"], prep["gamma_key"], prep["beta_key"],
      prep["inlay_wqk"], prep["inlay_bqk"], prep["inlay_wv"], prep["inlay_bv"],
      prep["inlay_wo"], prep["inlay_bo"])


def vit_encoder_and_head(prep, patches):
    bsz = patches.shape[0]
    nb = _batch_per_step(bsz)
    # prepend a zero row so the patch-embed matmul also "produces" the CLS slot;
    # cls/pos/pe_b were folded into one additive (NTOK, DIM) bias at prep time.
    patches_ext = jnp.pad(patches, ((0, 0), (1, 0), (0, 0)))       # (B, 5, 192)
    D, H = VIT_DEPTH, VIT_HEADS
    out = pl.pallas_call(
        functools.partial(_encoder_kernel, nb=nb, depth=D, heads=H),
        out_shape=jax.ShapeDtypeStruct((bsz, 1, HEAD_PAD), jnp.float32),
        grid=(bsz // nb,),
        in_specs=[
            pl.BlockSpec((nb, VIT_NTOK, PE_IN), lambda i: (i, 0, 0)),
            _rep((PE_IN, VIT_DIM)), _rep((VIT_NTOK, VIT_DIM)),
            _rep((D, 1, VIT_DIM)), _rep((D, 1, VIT_DIM)),
            _rep((D, VIT_DIM, 3 * VIT_DIM)), _rep((D, 1, 3 * VIT_DIM)),    # fused Wq|Wk|Wv
            _rep((D, VIT_DIM, VIT_DIM)), _rep((D, 1, VIT_DIM)),            # Wo
            _rep((D, 1, VIT_DIM)), _rep((D, 1, VIT_DIM)),
            _rep((D, VIT_DIM, VIT_MLP)), _rep((D, 1, VIT_MLP)),
            _rep((D, VIT_MLP, VIT_DIM)), _rep((D, 1, VIT_DIM)),
            _rep((1, VIT_DIM)), _rep((1, VIT_DIM)),
            _rep((VIT_DIM, HEAD_PAD)), _rep((1, HEAD_PAD)),
        ],
        out_specs=pl.BlockSpec((nb, 1, HEAD_PAD), lambda i: (i, 0, 0)),
        compiler_params=_PAR,
    )(patches_ext, prep["pe_w"], prep["tok_bias"],
      prep["l1g"], prep["l1b"], prep["wqkv"], prep["bqkv"], prep["wo"], prep["bo"],
      prep["l2g"], prep["l2b"], prep["w1"], prep["b1"], prep["w2"], prep["b2"],
      prep["lnf_g"], prep["lnf_b"], prep["head_w"], prep["head_b"])
    return out.reshape(bsz, HEAD_PAD)[:, :NUM_ID]


# ============================ JAX glue (pure layout, no gather/scatter) ======
def unfold_overlap(x, p):
    """F.unfold(x, kernel=p, stride=p//2).transpose(1, 2) via shifted slices."""
    b, c, h, w = x.shape
    s = p // 2
    gh, gw = h // s, w // s
    nh, nw = gh - 1, gw - 1
    cells = x.reshape(b, c, gh, s, gw, s).transpose(0, 1, 2, 4, 3, 5)   # (B,C,gh,gw,s,s)
    rows = []
    for a in range(2):
        cols = [cells[:, :, a:a + nh, bb:bb + nw] for bb in range(2)]
        rows.append(jnp.concatenate(cols, axis=-1))                     # (B,C,nh,nw,s,p)
    patches = jnp.concatenate(rows, axis=-2)                            # (B,C,nh,nw,p,p)
    patches = patches.transpose(0, 2, 3, 1, 4, 5)                       # (B,nh,nw,C,p,p)
    return patches.reshape(b, nh * nw, c * p * p)


def inlay_to_vit_patches(u, p):
    """F.fold(kernel=p, stride=p//2) overlap-add followed by the ViT's non-
    overlapping F.unfold(kernel=p), fused: (B, L, C*p*p) -> (B, T, C*p*p) as one
    reshape + 4-term padded add + one transpose — the intermediate (B, C, H, W)
    image is never materialized."""
    assert VIT_PATCH == p, "fused fold->unfold path assumes vit_patch == inlay patch"
    b, L, A = u.shape
    s = p // 2
    n = int(round(math.sqrt(L)))                 # overlapping patch grid (n x n)
    g = n + 1                                    # cell grid (g x g), cell = s x s
    c = A // (p * p)
    vals = u.reshape(b, n, n, c, p, p)           # L -> (nh, nw), A -> (c, ki, kj)
    pieces = []
    for aa in range(2):
        for bb in range(2):
            sub = vals[:, :, :, :, aa * s:(aa + 1) * s, bb * s:(bb + 1) * s]
            pieces.append(jnp.pad(sub, ((0, 0), (aa, 1 - aa), (bb, 1 - bb),
                                        (0, 0), (0, 0), (0, 0))))
    cells = pieces[0] + pieces[1] + pieces[2] + pieces[3]               # (B,g,g,C,s,s)
    th = g // 2                                                         # ViT patch grid
    t = cells.reshape(b, th, 2, th, 2, c, s, s)
    t = t.transpose(0, 1, 3, 5, 2, 6, 4, 7)                             # (B,th,tw,C,2,s,2,s)
    return t.reshape(b, th * th, c * p * p)                             # (B, T, C*p*p)


# ============================ parameters =====================================
def init_params(key):
    keys = iter(jax.random.split(key, 64))

    def nrm(shape, std=0.02):
        return (std * jax.random.normal(next(keys), shape)).astype(jnp.float32)

    def attn_params(dim):
        return dict(
            wq=nrm((dim, dim)), bq=jnp.zeros((1, dim), jnp.float32),
            wk=nrm((dim, dim)), bk=jnp.zeros((1, dim), jnp.float32),
            wv=nrm((dim, dim)), bv=jnp.zeros((1, dim), jnp.float32),
            wo=nrm((dim, dim)), bo=jnp.zeros((1, dim), jnp.float32),
        )

    p = {}
    # inlay parameters
    p["z_mem"] = jax.random.normal(next(keys), (K_SEQ, Z_SIZE), jnp.float32)
    p["gamma"] = jnp.ones((1, Z_SIZE), jnp.float32)
    p["beta"] = jnp.zeros((1, Z_SIZE), jnp.float32)
    p["gamma_key"] = jnp.ones((1, Z_SIZE), jnp.float32)
    p["beta_key"] = jnp.zeros((1, Z_SIZE), jnp.float32)
    p["inlay_attn"] = attn_params(Z_SIZE)
    # small ViT encoder (use_inlay == 0 branch)
    p["pe_w"] = nrm((PE_IN, VIT_DIM))
    p["pe_b"] = jnp.zeros((1, VIT_DIM), jnp.float32)
    p["cls"] = nrm((1, VIT_DIM))
    p["pos"] = nrm((VIT_NTOK, VIT_DIM))
    blocks = []
    for _ in range(VIT_DEPTH):
        blocks.append(dict(
            ln1_g=jnp.ones((1, VIT_DIM), jnp.float32), ln1_b=jnp.zeros((1, VIT_DIM), jnp.float32),
            attn=attn_params(VIT_DIM),
            ln2_g=jnp.ones((1, VIT_DIM), jnp.float32), ln2_b=jnp.zeros((1, VIT_DIM), jnp.float32),
            w1=nrm((VIT_DIM, VIT_MLP)), b1=jnp.zeros((1, VIT_MLP), jnp.float32),
            w2=nrm((VIT_MLP, VIT_DIM)), b2=jnp.zeros((1, VIT_DIM), jnp.float32),
        ))
    p["blocks"] = blocks
    p["lnf_g"] = jnp.ones((1, VIT_DIM), jnp.float32)
    p["lnf_b"] = jnp.zeros((1, VIT_DIM), jnp.float32)
    # head: nn.Linear(hidden, number_id)
    p["head_w"] = nrm((VIT_DIM, NUM_ID))
    p["head_b"] = jnp.zeros((1, NUM_ID), jnp.float32)
    return p


def prepare_params(params):
    """One-time host-side weight preparation (fused QK / QKV matrices, per-depth
    stacking, folded token bias, lane-padded head), hoisted OUT of the forward
    path so no per-call reshape/stack/pad ops run on device.
    TODO(synk): casting the fused weights to bf16 (keeping f32 accumulation and
                f32 layer-norm/GELU/softmax) is the next step when scaling up."""
    ap = params["inlay_attn"]
    blocks = params["blocks"]

    def stk(fn):
        return jnp.stack([fn(b) for b in blocks], axis=0)

    return dict(
        # ---- inlay ----
        z_mem=params["z_mem"],
        gamma=params["gamma"], beta=params["beta"],
        gamma_key=params["gamma_key"], beta_key=params["beta_key"],
        inlay_wqk=jnp.concatenate([ap["wq"], ap["wk"]], axis=1),   # (A, 2A)
        inlay_bqk=jnp.concatenate([ap["bq"], ap["bk"]], axis=1),   # (1, 2A)
        inlay_wv=ap["wv"], inlay_bv=ap["bv"],
        inlay_wo=ap["wo"], inlay_bo=ap["bo"],
        # ---- encoder ----
        pe_w=params["pe_w"],
        tok_bias=jnp.concatenate(
            [params["cls"] + params["pos"][:1],
             params["pos"][1:] + params["pe_b"]], axis=0),         # (NTOK, DIM)
        l1g=stk(lambda b: b["ln1_g"]), l1b=stk(lambda b: b["ln1_b"]),
        wqkv=stk(lambda b: jnp.concatenate(
            [b["attn"]["wq"], b["attn"]["wk"], b["attn"]["wv"]], axis=1)),   # (D, DIM, 3DIM)
        bqkv=stk(lambda b: jnp.concatenate(
            [b["attn"]["bq"], b["attn"]["bk"], b["attn"]["bv"]], axis=1)),   # (D, 1, 3DIM)
        wo=stk(lambda b: b["attn"]["wo"]), bo=stk(lambda b: b["attn"]["bo"]),
        l2g=stk(lambda b: b["ln2_g"]), l2b=stk(lambda b: b["ln2_b"]),
        w1=stk(lambda b: b["w1"]), b1=stk(lambda b: b["b1"]),
        w2=stk(lambda b: b["w2"]), b2=stk(lambda b: b["b2"]),
        lnf_g=params["lnf_g"], lnf_b=params["lnf_b"],
        head_w=jnp.pad(params["head_w"], ((0, 0), (0, HEAD_PAD - NUM_ID))),  # lane-dense head
        head_b=jnp.pad(params["head_b"], ((0, 0), (0, HEAD_PAD - NUM_ID))),
    )


# ============================ model ==========================================
def model_forward(prep, x):
    # _divide_patch: F.unfold(kernel=p, stride=p//2) + transpose(1, 2)
    u = unfold_overlap(x, PATCH)                                   # (B, L, 3*p*p)
    # _z_meta_attention (contextnorm -> MHA -> contextnorm) — one fused kernel
    u = inlay_attention(prep, u)
    # transpose(1,2) + F.fold + ViT patch unfold, collapsed into one layout map
    patches = inlay_to_vit_patches(u, PATCH)                       # (B, T, 3*p*p)
    # encoder + head — one fused kernel
    return vit_encoder_and_head(prep, patches)                     # (B, NUM_ID)


if __name__ == "__main__":
    root = jax.random.PRNGKey(0)
    pkey, xkey = jax.random.split(root)
    params = init_params(pkey)
    prep = prepare_params(params)                                  # hoisted one-time weight prep
    x = jax.random.normal(xkey, (BATCH, CH, IMG, IMG), jnp.float32)

    fwd = jax.jit(model_forward)
    y = fwd(prep, x)
    jax.block_until_ready(y)
    assert y.shape == (BATCH, NUM_ID) and y.dtype == jnp.float32
    print("KERNEL_OK")
</pallas_src>

<mosaic_0001>
module attributes {stable_mosaic.version = 11 : i64} {
  func.func @_inlay_kernel(%arg0: i32, %arg1: memref<2x9x192xf32, #tpu.memory_space<vmem>>, %arg2: memref<9x192xf32, #tpu.memory_space<vmem>>, %arg3: memref<1x192xf32, #tpu.memory_space<vmem>>, %arg4: memref<1x192xf32, #tpu.memory_space<vmem>>, %arg5: memref<1x192xf32, #tpu.memory_space<vmem>>, %arg6: memref<1x192xf32, #tpu.memory_space<vmem>>, %arg7: memref<192x384xf32, #tpu.memory_space<vmem>>, %arg8: memref<1x384xf32, #tpu.memory_space<vmem>>, %arg9: memref<192x192xf32, #tpu.memory_space<vmem>>, %arg10: memref<1x192xf32, #tpu.memory_space<vmem>>, %arg11: memref<192x192xf32, #tpu.memory_space<vmem>>, %arg12: memref<1x192xf32, #tpu.memory_space<vmem>>, %arg13: memref<2x9x192xf32, #tpu.memory_space<vmem>>) attributes {dimension_semantics = [#tpu.dimension_semantics<parallel>], iteration_bounds = array<i64: 1>, scalar_prefetch = 0 : i64, scratch_operands = 0 : i64, tpu.core_type = #tpu.core_type<tc>, window_params = [{transform_indices = @transform_0, window_bounds = array<i64: 2, 9, 192>}, {pipeline_mode = #tpu.pipeline_mode<synchronous>, transform_indices = @transform_1, window_bounds = array<i64: 9, 192>}, {pipeline_mode = #tpu.pipeline_mode<synchronous>, transform_indices = @transform_2, window_bounds = array<i64: 1, 192>}, {pipeline_mode = #tpu.pipeline_mode<synchronous>, transform_indices = @transform_3, window_bounds = array<i64: 1, 192>}, {pipeline_mode = #tpu.pipeline_mode<synchronous>, transform_indices = @transform_4, window_bounds = array<i64: 1, 192>}, {pipeline_mode = #tpu.pipeline_mode<synchronous>, transform_indices = @transform_5, window_bounds = array<i64: 1, 192>}, {pipeline_mode = #tpu.pipeline_mode<synchronous>, transform_indices = @transform_6, window_bounds = array<i64: 192, 384>}, {pipeline_mode = #tpu.pipeline_mode<synchronous>, transform_indices = @transform_7, window_bounds = array<i64: 1, 384>}, {pipeline_mode = #tpu.pipeline_mode<synchronous>, transform_indices = @transform_8, window_bounds = array<i64: 192, 192>}, {pipeline_mode = #tpu.pipeline_mode<synchronous>, transform_indices = @transform_9, window_bounds = array<i64: 1, 192>}, {pipeline_mode = #tpu.pipeline_mode<synchronous>, transform_indices = @transform_10, window_bounds = array<i64: 192, 192>}, {pipeline_mode = #tpu.pipeline_mode<synchronous>, transform_indices = @transform_11, window_bounds = array<i64: 1, 192>}, {transform_indices = @transform_12, window_bounds = array<i64: 2, 9, 192>}]} {
    %c0 = arith.constant 0 : index
    %c0_0 = arith.constant 0 : index
    %0 = vector.load %arg2[%c0, %c0_0] : memref<9x192xf32, #tpu.memory_space<vmem>>, vector<9x192xf32>
    %c0_1 = arith.constant 0 : index
    %c0_2 = arith.constant 0 : index
    %1 = vector.load %arg9[%c0_1, %c0_2] : memref<192x192xf32, #tpu.memory_space<vmem>>, vector<192x192xf32>
    %cst = arith.constant dense<0.000000e+00> : vector<9x192xf32>
    %2 = tpu.matmul %0, %1, %cst {dimension_numbers = #tpu.dot_dimension_numbers<[1], [0], [0], [1], [0, 0, 1, 1], [], []>} : vector<9x192xf32>, vector<192x192xf32>, vector<9x192xf32> -> vector<9x192xf32>
    %c0_3 = arith.constant 0 : index
    %c0_4 = arith.constant 0 : index
    %3 = vector.load %arg10[%c0_3, %c0_4] : memref<1x192xf32, #tpu.memory_space<vmem>>, vector<1x192xf32>
    %4 = vector.broadcast %3 : vector<1x192xf32> to vector<9x192xf32>
    %5 = arith.addf %2, %4 : vector<9x192xf32>
    %c0_5 = arith.constant 0 : index
    %c0_6 = arith.constant 0 : index
    %c0_7 = arith.constant 0 : index
    %6 = vector.load %arg1[%c0_5, %c0_6, %c0_7] : memref<2x9x192xf32, #tpu.memory_space<vmem>>, vector<1x9x192xf32>
    %7 = vector.shape_cast %6 : vector<1x9x192xf32> to vector<9x192xf32>
    %c0_8 = arith.constant 0 : index
    %c0_9 = arith.constant 0 : index
    %8 = vector.load %arg3[%c0_8, %c0_9] : memref<1x192xf32, #tpu.memory_space<vmem>>, vector<1x192xf32>
    %c0_10 = arith.constant 0 : index
    %c0_11 = arith.constant 0 : index
    %9 = vector.load %arg4[%c0_10, %c0_11] : memref<1x192xf32, #tpu.memory_space<vmem>>, vector<1x192xf32>
    %cst_12 = arith.constant dense<0.000000e+00> : vector<192xf32>
    %10 = vector.multi_reduction <add>, %7, %cst_12 [0] : vector<9x192xf32> to vector<192xf32>
    %11 = vector.shape_cast %10 : vector<192xf32> to vector<1x192xf32>
    %cst_13 = arith.constant 9.000000e+00 : f32
    %12 = vector.broadcast %cst_13 : f32 to vector<1x192xf32>
    %13 = arith.divf %11, %12 : vector<1x192xf32>
    %14 = vector.broadcast %13 : vector<1x192xf32> to vector<9x192xf32>
    %15 = arith.subf %7, %14 : vector<9x192xf32>
    %16 = arith.mulf %15, %15 : vector<9x192xf32>
    %cst_14 = arith.constant dense<0.000000e+00> : vector<192xf32>
    %17 = vector.multi_reduction <add>, %16, %cst_14 [0] : vector<9x192xf32> to vector<192xf32>
    %18 = vector.shape_cast %17 : vector<192xf32> to vector<1x192xf32>
    %cst_15 = arith.constant 8.000000e+00 : f32
    %19 = vector.broadcast %cst_15 : f32 to vector<1x192xf32>
    %20 = arith.divf %18, %19 : vector<1x192xf32>
    %21 = vector.broadcast %13 : vector<1x192xf32> to vector<9x192xf32>
    %22 = arith.subf %7, %21 : vector<9x192xf32>
    %cst_16 = arith.constant 9.99999993E-9 : f32
    %23 = vector.broadcast %cst_16 : f32 to vector<1x192xf32>
    %24 = arith.addf %20, %23 : vector<1x192xf32>
    %25 = math.sqrt %24 : vector<1x192xf32>
    %26 = vector.broadcast %25 : vector<1x192xf32> to vector<9x192xf32>
    %27 = arith.divf %22, %26 : vector<9x192xf32>
    %28 = vector.broadcast %8 : vector<1x192xf32> to vector<9x192xf32>
    %29 = arith.mulf %27, %28 : vector<9x192xf32>
    %30 = vector.broadcast %9 : vector<1x192xf32> to vector<9x192xf32>
    %31 = arith.addf %29, %30 : vector<9x192xf32>
    %c0_17 = arith.constant 0 : index
    %c0_18 = arith.constant 0 : index
    %32 = vector.load %arg7[%c0_17, %c0_18] : memref<192x384xf32, #tpu.memory_space<vmem>>, vector<192x384xf32>
    %cst_19 = arith.constant dense<0.000000e+00> : vector<9x384xf32>
    %33 = tpu.matmul %31, %32, %cst_19 {dimension_numbers = #tpu.dot_dimension_numbers<[1], [0], [0], [1], [0, 0, 1, 1], [], []>} : vector<9x192xf32>, vector<192x384xf32>, vector<9x384xf32> -> vector<9x384xf32>
    %c0_20 = arith.constant 0 : index
    %c0_21 = arith.constant 0 : index
    %34 = vector.load %arg8[%c0_20, %c0_21] : memref<1x384xf32, #tpu.memory_space<vmem>>, vector<1x384xf32>
    %35 = vector.broadcast %34 : vector<1x384xf32> to vector<9x384xf32>
    %36 = arith.addf %33, %35 : vector<9x384xf32>
    %37 = vector.extract_strided_slice %36 {offsets = [0, 0], sizes = [9, 192], strides = [1, 1]} : vector<9x384xf32> to vector<9x192xf32>
    %38 = vector.extract_strided_slice %36 {offsets = [0, 192], sizes = [9, 192], strides = [1, 1]} : vector<9x384xf32> to vector<9x192xf32>
    %39 = vector.extract_strided_slice %37 {offsets = [0, 0], sizes = [9, 48], strides = [1, 1]} : vector<9x192xf32> to vector<9x48xf32>
    %40 = vector.extract_strided_slice %38 {offsets = [0, 0], sizes = [9, 48], strides = [1, 1]} : vector<9x192xf32> to vector<9x48xf32>
    %41 = vector.extract_strided_slice %5 {offsets = [0, 0], sizes = [9, 48], strides = [1, 1]} : vector<9x192xf32> to vector<9x48xf32>
    %cst_22 = arith.constant dense<0.000000e+00> : vector<9x9xf32>
    %42 = tpu.matmul %39, %40, %cst_22 {dimension_numbers = #tpu.dot_dimension_numbers<[1], [1], [0], [0], [0, 0, 1, 0], [], []>} : vector<9x48xf32>, vector<9x48xf32>, vector<9x9xf32> -> vector<9x9xf32>
    %cst_23 = arith.constant 0.144337565 : f32
    %43 = vector.broadcast %cst_23 : f32 to vector<9x9xf32>
    %44 = arith.mulf %42, %43 : vector<9x9xf32>
    %cst_24 = arith.constant dense<0xFF800000> : vector<9xf32>
    %45 = vector.multi_reduction <maximumf>, %44, %cst_24 [1] : vector<9x9xf32> to vector<9xf32>
    %cst_25 = arith.constant 0xFF800000 : f32
    %46 = vector.broadcast %cst_25 : f32 to vector<9xf32>
    %47 = arith.maximumf %46, %45 : vector<9xf32>
    %48 = vector.shape_cast %47 : vector<9xf32> to vector<9x1xf32>
    %49 = vector.broadcast %48 : vector<9x1xf32> to vector<9x9xf32>
    %50 = arith.subf %44, %49 : vector<9x9xf32>
    %51 = math.exp %50 : vector<9x9xf32>
    %cst_26 = arith.constant dense<0.000000e+00> : vector<9xf32>
    %52 = vector.multi_reduction <add>, %51, %cst_26 [1] : vector<9x9xf32> to vector<9xf32>
    %53 = vector.shape_cast %52 : vector<9xf32> to vector<9x1xf32>
    %54 = vector.broadcast %53 : vector<9x1xf32> to vector<9x9xf32>
    %55 = arith.divf %51, %54 : vector<9x9xf32>
    %cst_27 = arith.constant dense<0.000000e+00> : vector<9x48xf32>
    %56 = tpu.matmul %55, %41, %cst_27 {dimension_numbers = #tpu.dot_dimension_numbers<[1], [0], [0], [1], [0, 0, 1, 1], [], []>} : vector<9x9xf32>, vector<9x48xf32>, vector<9x48xf32> -> vector<9x48xf32>
    %57 = vector.extract_strided_slice %37 {offsets = [0, 48], sizes = [9, 48], strides = [1, 1]} : vector<9x192xf32> to vector<9x48xf32>
    %58 = vector.extract_strided_slice %38 {offsets = [0, 48], sizes = [9, 48], strides = [1, 1]} : vector<9x192xf32> to vector<9x48xf32>
    %59 = vector.extract_strided_slice %5 {offsets = [0, 48], sizes = [9, 48], strides = [1, 1]} : vector<9x192xf32> to vector<9x48xf32>
    %cst_28 = arith.constant dense<0.000000e+00> : vector<9x9xf32>
    %60 = tpu.matmul %57, %58, %cst_28 {dimension_numbers = #tpu.dot_dimension_numbers<[1], [1], [0], [0], [0, 0, 1, 0], [], []>} : vector<9x48xf32>, vector<9x48xf32>, vector<9x9xf32> -> vector<9x9xf32>
    %cst_29 = arith.constant 0.144337565 : f32
    %61 = vector.broadcast %cst_29 : f32 to vector<9x9xf32>
    %62 = arith.mulf %60, %61 : vector<9x9xf32>
    %cst_30 = arith.constant dense<0xFF800000> : vector<9xf32>
    %63 = vector.multi_reduction <maximumf>, %62, %cst_30 [1] : vector<9x9xf32> to vector<9xf32>
    %cst_31 = arith.constant 0xFF800000 : f32
    %64 = vector.broadcast %cst_31 : f32 to vector<9xf32>
    %65 = arith.maximumf %64, %63 : vector<9xf32>
    %66 = vector.shape_cast %65 : vector<9xf32> to vector<9x1xf32>
    %67 = vector.broadcast %66 : vector<9x1xf32> to vector<9x9xf32>
    %68 = arith.subf %62, %67 : vector<9x9xf32>
    %69 = math.exp %68 : vector<9x9xf32>
    %cst_32 = arith.constant dense<0.000000e+00> : vector<9xf32>
    %70 = vector.multi_reduction <add>, %69, %cst_32 [1] : vector<9x9xf32> to vector<9xf32>
    %71 = vector.shape_cast %70 : vector<9xf32> to vector<9x1xf32>
    %72 = vector.broadcast %71 : vector<9x1xf32> to vector<9x9xf32>
    %73 = arith.divf %69, %72 : vector<9x9xf32>
    %cst_33 = arith.constant dense<0.000000e+00> : vector<9x48xf32>
    %74 = tpu.matmul %73, %59, %cst_33 {dimension_numbers = #tpu.dot_dimension_numbers<[1], [0], [0], [1], [0, 0, 1, 1], [], []>} : vector<9x9xf32>, vector<9x48xf32>, vector<9x48xf32> -> vector<9x48xf32>
    %75 = vector.extract_strided_slice %37 {offsets = [0, 96], sizes = [9, 48], strides = [1, 1]} : vector<9x192xf32> to vector<9x48xf32>
    %76 = vector.extract_strided_slice %38 {offsets = [0, 96], sizes = [9, 48], strides = [1, 1]} : vector<9x192xf32> to vector<9x48xf32>
    %77 = vector.extract_strided_slice %5 {offsets = [0, 96], sizes = [9, 48], strides = [1, 1]} : vector<9x192xf32> to vector<9x48xf32>
    %cst_34 = arith.constant dense<0.000000e+00> : vector<9x9xf32>
    %78 = tpu.matmul %75, %76, %cst_34 {dimension_numbers = #tpu.dot_dimension_numbers<[1], [1], [0], [0], [0, 0, 1, 0], [], []>} : vector<9x48xf32>, vector<9x48xf32>, vector<9x9xf32> -> vector<9x9xf32>
    %cst_35 = arith.constant 0.144337565 : f32
    %79 = vector.broadcast %cst_35 : f32 to vector<9x9xf32>
    %80 = arith.mulf %78, %79 : vector<9x9xf32>
    %cst_36 = arith.constant dense<0xFF800000> : vector<9xf32>
    %81 = vector.multi_reduction <maximumf>, %80, %cst_36 [1] : vector<9x9xf32> to vector<9xf32>
    %cst_37 = arith.constant 0xFF800000 : f32
    %82 = vector.broadcast %cst_37 : f32 to vector<9xf32>
    %83 = arith.maximumf %82, %81 : vector<9xf32>
    %84 = vector.shape_cast %83 : vector<9xf32> to vector<9x1xf32>
    %85 = vector.broadcast %84 : vector<9x1xf32> to vector<9x9xf32>
    %86 = arith.subf %80, %85 : vector<9x9xf32>
    %87 = math.exp %86 : vector<9x9xf32>
    %cst_38 = arith.constant dense<0.000000e+00> : vector<9xf32>
    %88 = vector.multi_reduction <add>, %87, %cst_38 [1] : vector<9x9xf32> to vector<9xf32>
    %89 = vector.shape_cast %88 : vector<9xf32> to vector<9x1xf32>
    %90 = vector.broadcast %89 : vector<9x1xf32> to vector<9x9xf32>
    %91 = arith.divf %87, %90 : vector<9x9xf32>
    %cst_39 = arith.constant dense<0.000000e+00> : vector<9x48xf32>
    %92 = tpu.matmul %91, %77, %cst_39 {dimension_numbers = #tpu.dot_dimension_numbers<[1], [0], [0], [1], [0, 0, 1, 1], [], []>} : vector<9x9xf32>, vector<9x48xf32>, vector<9x48xf32> -> vector<9x48xf32>
    %93 = vector.extract_strided_slice %37 {offsets = [0, 144], sizes = [9, 48], strides = [1, 1]} : vector<9x192xf32> to vector<9x48xf32>
    %94 = vector.extract_strided_slice %38 {offsets = [0, 144], sizes = [9, 48], strides = [1, 1]} : vector<9x192xf32> to vector<9x48xf32>
    %95 = vector.extract_strided_slice %5 {offsets = [0, 144], sizes = [9, 48], strides = [1, 1]} : vector<9x192xf32> to vector<9x48xf32>
    %cst_40 = arith.constant dense<0.000000e+00> : vector<9x9xf32>
    %96 = tpu.matmul %93, %94, %cst_40 {dimension_numbers = #tpu.dot_dimension_numbers<[1], [1], [0], [0], [0, 0, 1, 0], [], []>} : vector<9x48xf32>, vector<9x48xf32>, vector<9x9xf32> -> vector<9x9xf32>
    %cst_41 = arith.constant 0.144337565 : f32
    %97 = vector.broadcast %cst_41 : f32 to vector<9x9xf32>
    %98 = arith.mulf %96, %97 : vector<9x9xf32>
    %cst_42 = arith.constant dense<0xFF800000> : vector<9xf32>
    %99 = vector.multi_reduction <maximumf>, %98, %cst_42 [1] : vector<9x9xf32> to vector<9xf32>
    %cst_43 = arith.constant 0xFF800000 : f32
    %100 = vector.broadcast %cst_43 : f32 to vector<9xf32>
    %101 = arith.maximumf %100, %99 : vector<9xf32>
    %102 = vector.shape_cast %101 : vector<9xf32> to vector<9x1xf32>
    %103 = vector.broadcast %102 : vector<9x1xf32> to vector<9x9xf32>
    %104 = arith.subf %98, %103 : vector<9x9xf32>
    %105 = math.exp %104 : vector<9x9xf32>
    %cst_44 = arith.constant dense<0.000000e+00> : vector<9xf32>
    %106 = vector.multi_reduction <add>, %105, %cst_44 [1] : vector<9x9xf32> to vector<9xf32>
    %107 = vector.shape_cast %106 : vector<9xf32> to vector<9x1xf32>
    %108 = vector.broadcast %107 : vector<9x1xf32> to vector<9x9xf32>
    %109 = arith.divf %105, %108 : vector<9x9xf32>
    %cst_45 = arith.constant dense<0.000000e+00> : vector<9x48xf32>
    %110 = tpu.matmul %109, %95, %cst_45 {dimension_numbers = #tpu.dot_dimension_numbers<[1], [0], [0], [1], [0, 0, 1, 1], [], []>} : vector<9x9xf32>, vector<9x48xf32>, vector<9x48xf32> -> vector<9x48xf32>
    %111 = tpu.concatenate %56, %74, %92, %110 in 1 : vector<9x48xf32>, vector<9x48xf32>, vector<9x48xf32>, vector<9x48xf32> -> vector<9x192xf32>
    %c0_46 = arith.constant 0 : index
    %c0_47 = arith.constant 0 : index
    %112 = vector.load %arg11[%c0_46, %c0_47] : memref<192x192xf32, #tpu.memory_space<vmem>>, vector<192x192xf32>
    %cst_48 = arith.constant dense<0.000000e+00> : vector<9x192xf32>
    %113 = tpu.matmul %111, %112, %cst_48 {dimension_numbers = #tpu.dot_dimension_numbers<[1], [0], [0], [1], [0, 0, 1, 1], [], []>} : vector<9x192xf32>, vector<192x192xf32>, vector<9x192xf32> -> vector<9x192xf32>
    %c0_49 = arith.constant 0 : index
    %c0_50 = arith.constant 0 : index
    %114 = vector.load %arg12[%c0_49, %c0_50] : memref<1x192xf32, #tpu.memory_space<vmem>>, vector<1x192xf32>
    %115 = vector.broadcast %114 : vector<1x192xf32> to vector<9x192xf32>
    %116 = arith.addf %113, %115 : vector<9x192xf32>
    %c0_51 = arith.constant 0 : index
    %c0_52 = arith.constant 0 : index
    %117 = vector.load %arg5[%c0_51, %c0_52] : memref<1x192xf32, #tpu.memory_space<vmem>>, vector<1x192xf32>
    %c0_53 = arith.constant 0 : index
    %c0_54 = arith.constant 0 : index
    %118 = vector.load %arg6[%c0_53, %c0_54] : memref<1x192xf32, #tpu.memory_space<vmem>>, vector<1x192xf32>
    %cst_55 = arith.constant dense<0.000000e+00> : vector<192xf32>
    %119 = vector.multi_reduction <add>, %116, %cst_55 [0] : vector<9x192xf32> to vector<192xf32>
    %120 = vector.shape_cast %119 : vector<192xf32> to vector<1x192xf32>
    %cst_56 = arith.constant 9.000000e+00 : f32
    %121 = vector.broadcast %cst_56 : f32 to vector<1x192xf32>
    %122 = arith.divf %120, %121 : vector<1x192xf32>
    %123 = vector.broadcast %122 : vector<1x192xf32> to vector<9x192xf32>
    %124 = arith.subf %116, %123 : vector<9x192xf32>
    %125 = arith.mulf %124, %124 : vector<9x192xf32>
    %cst_57 = arith.constant dense<0.000000e+00> : vector<192xf32>
    %126 = vector.multi_reduction <add>, %125, %cst_57 [0] : vector<9x192xf32> to vector<192xf32>
    %127 = vector.shape_cast %126 : vector<192xf32> to vector<1x192xf32>
    %cst_58 = arith.constant 8.000000e+00 : f32
    %128 = vector.broadcast %cst_58 : f32 to vector<1x192xf32>
    %129 = arith.divf %127, %128 : vector<1x192xf32>
    %130 = vector.broadcast %122 : vector<1x192xf32> to vector<9x192xf32>
    %131 = arith.subf %116, %130 : vector<9x192xf32>
    %cst_59 = arith.constant 9.99999993E-9 : f32
    %132 = vector.broadcast %cst_59 : f32 to vector<1x192xf32>
    %133 = arith.addf %129, %132 : vector<1x192xf32>
    %134 = math.sqrt %133 : vector<1x192xf32>
    %135 = vector.broadcast %134 : vector<1x192xf32> to vector<9x192xf32>
    %136 = arith.divf %131, %135 : vector<9x192xf32>
    %137 = vector.broadcast %117 : vector<1x192xf32> to vector<9x192xf32>
    %138 = arith.mulf %136, %137 : vector<9x192xf32>
    %139 = vector.broadcast %118 : vector<1x192xf32> to vector<9x192xf32>
    %140 = arith.addf %138, %139 : vector<9x192xf32>
    %c0_60 = arith.constant 0 : index
    %c0_61 = arith.constant 0 : index
    %c0_62 = arith.constant 0 : index
    %141 = vector.load %arg13[%c0_60, %c0_61, %c0_62] : memref<2x9x192xf32, #tpu.memory_space<vmem>>, vector<1x9x192xf32>
    %142 = vector.shape_cast %141 : vector<1x9x192xf32> to vector<9x192xf32>
    %143 = vector.shape_cast %140 : vector<9x192xf32> to vector<1x9x192xf32>
    tpu.vector_store %arg13[%c0_60, %c0_61, %c0_62], %143 {strides = array<i32>} : memref<2x9x192xf32, #tpu.memory_space<vmem>>, vector<1x9x192xf32>,
    %c1 = arith.constant 1 : index
    %c0_63 = arith.constant 0 : index
    %c0_64 = arith.constant 0 : index
    %144 = vector.load %arg1[%c1, %c0_63, %c0_64] : memref<2x9x192xf32, #tpu.memory_space<vmem>>, vector<1x9x192xf32>
    %145 = vector.shape_cast %144 : vector<1x9x192xf32> to vector<9x192xf32>
    %c0_65 = arith.constant 0 : index
    %c0_66 = arith.constant 0 : index
    %146 = vector.load %arg3[%c0_65, %c0_66] : memref<1x192xf32, #tpu.memory_space<vmem>>, vector<1x192xf32>
    %c0_67 = arith.constant 0 : index
    %c0_68 = arith.constant 0 : index
    %147 = vector.load %arg4[%c0_67, %c0_68] : memref<1x192xf32, #tpu.memory_space<vmem>>, vector<1x192xf32>
    %cst_69 = arith.constant dense<0.000000e+00> : vector<192xf32>
    %148 = vector.multi_reduction <add>, %145, %cst_69 [0] : vector<9x192xf32> to vector<192xf32>
    %149 = vector.shape_cast %148 : vector<192xf32> to vector<1x192xf32>
    %cst_70 = arith.constant 9.000000e+00 : f32
    %150 = vector.broadcast %cst_70 : f32 to vector<1x192xf32>
    %151 = arith.divf %149, %150 : vector<1x192xf32>
    %152 = vector.broadcast %151 : vector<1x192xf32> to vector<9x192xf32>
    %153 = arith.subf %145, %152 : vector<9x192xf32>
    %154 = arith.mulf %153, %153 : vector<9x192xf32>
    %cst_71 = arith.constant dense<0.000000e+00> : vector<192xf32>
    %155 = vector.multi_reduction <add>, %154, %cst_71 [0] : vector<9x192xf32> to vector<192xf32>
    %156 = vector.shape_cast %155 : vector<192xf32> to vector<1x192xf32>
    %cst_72 = arith.constant 8.000000e+00 : f32
    %157 = vector.broadcast %cst_72 : f32 to vector<1x192xf32>
    %158 = arith.divf %156, %157 : vector<1x192xf32>
    %159 = vector.broadcast %151 : vector<1x192xf32> to vector<9x192xf32>
    %160 = arith.subf %145, %159 : vector<9x192xf32>
    %cst_73 = arith.constant 9.99999993E-9 : f32
    %161 = vector.broadcast %cst_73 : f32 to vector<1x192xf32>
    %162 = arith.addf %158, %161 : vector<1x192xf32>
    %163 = math.sqrt %162 : vector<1x192xf32>
    %164 = vector.broadcast %163 : vector<1x192xf32> to vector<9x192xf32>
    %165 = arith.divf %160, %164 : vector<9x192xf32>
    %166 = vector.broadcast %146 : vector<1x192xf32> to vector<9x192xf32>
    %167 = arith.mulf %165, %166 : vector<9x192xf32>
    %168 = vector.broadcast %147 : vector<1x192xf32> to vector<9x192xf32>
    %169 = arith.addf %167, %168 : vector<9x192xf32>
    %c0_74 = arith.constant 0 : index
    %c0_75 = arith.constant 0 : index
    %170 = vector.load %arg7[%c0_74, %c0_75] : memref<192x384xf32, #tpu.memory_space<vmem>>, vector<192x384xf32>
    %cst_76 = arith.constant dense<0.000000e+00> : vector<9x384xf32>
    %171 = tpu.matmul %169, %170, %cst_76 {dimension_numbers = #tpu.dot_dimension_numbers<[1], [0], [0], [1], [0, 0, 1, 1], [], []>} : vector<9x192xf32>, vector<192x384xf32>, vector<9x384xf32> -> vector<9x384xf32>
    %c0_77 = arith.constant 0 : index
    %c0_78 = arith.constant 0 : index
    %172 = vector.load %arg8[%c0_77, %c0_78] : memref<1x384xf32, #tpu.memory_space<vmem>>, vector<1x384xf32>
    %173 = vector.broadcast %172 : vector<1x384xf32> to vector<9x384xf32>
    %174 = arith.addf %171, %173 : vector<9x384xf32>
    %175 = vector.extract_strided_slice %174 {offsets = [0, 0], sizes = [9, 192], strides = [1, 1]} : vector<9x384xf32> to vector<9x192xf32>
    %176 = vector.extract_strided_slice %174 {offsets = [0, 192], sizes = [9, 192], strides = [1, 1]} : vector<9x384xf32> to vector<9x192xf32>
    %177 = vector.extract_strided_slice %175 {offsets = [0, 0], sizes = [9, 48], strides = [1, 1]} : vector<9x192xf32> to vector<9x48xf32>
    %178 = vector.extract_strided_slice %176 {offsets = [0, 0], sizes = [9, 48], strides = [1, 1]} : vector<9x192xf32> to vector<9x48xf32>
    %179 = vector.extract_strided_slice %5 {offsets = [0, 0], sizes = [9, 48], strides = [1, 1]} : vector<9x192xf32> to vector<9x48xf32>
    %cst_79 = arith.constant dense<0.000000e+00> : vector<9x9xf32>
    %180 = tpu.matmul %177, %178, %cst_79 {dimension_numbers = #tpu.dot_dimension_numbers<[1], [1], [0], [0], [0, 0, 1, 0], [], []>} : vector<9x48xf32>, vector<9x48xf32>, vector<9x9xf32> -> vector<9x9xf32>
    %cst_80 = arith.constant 0.144337565 : f32
    %181 = vector.broadcast %cst_80 : f32 to vector<9x9xf32>
    %182 = arith.mulf %180, %181 : vector<9x9xf32>
    %cst_81 = arith.constant dense<0xFF800000> : vector<9xf32>
    %183 = vector.multi_reduction <maximumf>, %182, %cst_81 [1] : vector<9x9xf32> to vector<9xf32>
    %cst_82 = arith.constant 0xFF800000 : f32
    %184 = vector.broadcast %cst_82 : f32 to vector<9xf32>
    %185 = arith.maximumf %184, %183 : vector<9xf32>
    %186 = vector.shape_cast %185 : vector<9xf32> to vector<9x1xf32>
    %187 = vector.broadcast %186 : vector<9x1xf32> to vector<9x9xf32>
    %188 = arith.subf %182, %187 : vector<9x9xf32>
    %189 = math.exp %188 : vector<9x9xf32>
    %cst_83 = arith.constant dense<0.000000e+00> : vector<9xf32>
    %190 = vector.multi_reduction <add>, %189, %cst_83 [1] : vector<9x9xf32> to vector<9xf32>
    %191 = vector.shape_cast %190 : vector<9xf32> to vector<9x1xf32>
    %192 = vector.broadcast %191 : vector<9x1xf32> to vector<9x9xf32>
    %193 = arith.divf %189, %192 : vector<9x9xf32>
    %cst_84 = arith.constant dense<0.000000e+00> : vector<9x48xf32>
    %194 = tpu.matmul %193, %179, %cst_84 {dimension_numbers = #tpu.dot_dimension_numbers<[1], [0], [0], [1], [0, 0, 1, 1], [], []>} : vector<9x9xf32>, vector<9x48xf32>, vector<9x48xf32> -> vector<9x48xf32>
    %195 = vector.extract_strided_slice %175 {offsets = [0, 48], sizes = [9, 48], strides = [1, 1]} : vector<9x192xf32> to vector<9x48xf32>
    %196 = vector.extract_strided_slice %176 {offsets = [0, 48], sizes = [9, 48], strides = [1, 1]} : vector<9x192xf32> to vector<9x48xf32>
    %197 = vector.extract_strided_slice %5 {offsets = [0, 48], sizes = [9, 48], strides = [1, 1]} : vector<9x192xf32> to vector<9x48xf32>
    %cst_85 = arith.constant dense<0.000000e+00> : vector<9x9xf32>
    %198 = tpu.matmul %195, %196, %cst_85 {dimension_numbers = #tpu.dot_dimension_numbers<[1], [1], [0], [0], [0, 0, 1, 0], [], []>} : vector<9x48xf32>, vector<9x48xf32>, vector<9x9xf32> -> vector<9x9xf32>
    %cst_86 = arith.constant 0.144337565 : f32
    %199 = vector.broadcast %cst_86 : f32 to vector<9x9xf32>
    %200 = arith.mulf %198, %199 : vector<9x9xf32>
    %cst_87 = arith.constant dense<0xFF800000> : vector<9xf32>
    %201 = vector.multi_reduction <maximumf>, %200, %cst_87 [1] : vector<9x9xf32> to vector<9xf32>
    %cst_88 = arith.constant 0xFF800000 : f32
    %202 = vector.broadcast %cst_88 : f32 to vector<9xf32>
    %203 = arith.maximumf %202, %201 : vector<9xf32>
    %204 = vector.shape_cast %203 : vector<9xf32> to vector<9x1xf32>
    %205 = vector.broadcast %204 : vector<9x1xf32> to vector<9x9xf32>
    %206 = arith.subf %200, %205 : vector<9x9xf32>
    %207 = math.exp %206 : vector<9x9xf32>
    %cst_89 = arith.constant dense<0.000000e+00> : vector<9xf32>
    %208 = vector.multi_reduction <add>, %207, %cst_89 [1] : vector<9x9xf32> to vector<9xf32>
    %209 = vector.shape_cast %208 : vector<9xf32> to vector<9x1xf32>
    %210 = vector.broadcast %209 : vector<9x1xf32> to vector<9x9xf32>
    %211 = arith.divf %207, %210 : vector<9x9xf32>
    %cst_90 = arith.constant dense<0.000000e+00> : vector<9x48xf32>
    %212 = tpu.matmul %211, %197, %cst_90 {dimension_numbers = #tpu.dot_dimension_numbers<[1], [0], [0], [1], [0, 0, 1, 1], [], []>} : vector<9x9xf32>, vector<9x48xf32>, vector<9x48xf32> -> vector<9x48xf32>
    %213 = vector.extract_strided_slice %175 {offsets = [0, 96], sizes = [9, 48], strides = [1, 1]} : vector<9x192xf32> to vector<9x48xf32>
    %214 = vector.extract_strided_slice %176 {offsets = [0, 96], sizes = [9, 48], strides = [1, 1]} : vector<9x192xf32> to vector<9x48xf32>
    %215 = vector.extract_strided_slice %5 {offsets = [0, 96], sizes = [9, 48], strides = [1, 1]} : vector<9x192xf32> to vector<9x48xf32>
    %cst_91 = arith.constant dense<0.000000e+00> : vector<9x9xf32>
    %216 = tpu.matmul %213, %214, %cst_91 {dimension_numbers = #tpu.dot_dimension_numbers<[1], [1], [0], [0], [0, 0, 1, 0], [], []>} : vector<9x48xf32>, vector<9x48xf32>, vector<9x9xf32> -> vector<9x9xf32>
    %cst_92 = arith.constant 0.144337565 : f32
    %217 = vector.broadcast %cst_92 : f32 to vector<9x9xf32>
    %218 = arith.mulf %216, %217 : vector<9x9xf32>
    %cst_93 = arith.constant dense<0xFF800000> : vector<9xf32>
    %219 = vector.multi_reduction <maximumf>, %218, %cst_93 [1] : vector<9x9xf32> to vector<9xf32>
    %cst_94 = arith.constant 0xFF800000 : f32
    %220 = vector.broadcast %cst_94 : f32 to vector<9xf32>
    %221 = arith.maximumf %220, %219 : vector<9xf32>
    %222 = vector.shape_cast %221 : vector<9xf32> to vector<9x1xf32>
    %223 = vector.broadcast %222 : vector<9x1xf32> to vector<9x9xf32>
    %224 = arith.subf %218, %223 : vector<9x9xf32>
    %225 = math.exp %224 : vector<9x9xf32>
    %cst_95 = arith.constant dense<0.000000e+00> : vector<9xf32>
    %226 = vector.multi_reduction <add>, %225, %cst_95 [1] : vector<9x9xf32> to vector<9xf32>
    %227 = vector.shape_cast %226 : vector<9xf32> to vector<9x1xf32>
    %228 = vector.broadcast %227 : vector<9x1xf32> to vector<9x9xf32>
    %229 = arith.divf %225, %228 : vector<9x9xf32>
    %cst_96 = arith.constant dense<0.000000e+00> : vector<9x48xf32>
    %230 = tpu.matmul %229, %215, %cst_96 {dimension_numbers = #tpu.dot_dimension_numbers<[1], [0], [0], [1], [0, 0, 1, 1], [], []>} : vector<9x9xf32>, vector<9x48xf32>, vector<9x48xf32> -> vector<9x48xf32>
    %231 = vector.extract_strided_slice %175 {offsets = [0, 144], sizes = [9, 48], strides = [1, 1]} : vector<9x192xf32> to vector<9x48xf32>
    %232 = vector.extract_strided_slice %176 {offsets = [0, 144], sizes = [9, 48], strides = [1, 1]} : vector<9x192xf32> to vector<9x48xf32>
    %233 = vector.extract_strided_slice %5 {offsets = [0, 144], sizes = [9, 48], strides = [1, 1]} : vector<9x192xf32> to vector<9x48xf32>
    %cst_97 = arith.constant dense<0.000000e+00> : vector<9x9xf32>
    %234 = tpu.matmul %231, %232, %cst_97 {dimension_numbers = #tpu.dot_dimension_numbers<[1], [1], [0], [0], [0, 0, 1, 0], [], []>} : vector<9x48xf32>, vector<9x48xf32>, vector<9x9xf32> -> vector<9x9xf32>
    %cst_98 = arith.constant 0.144337565 : f32
    %235 = vector.broadcast %cst_98 : f32 to vector<9x9xf32>
    %236 = arith.mulf %234, %235 : vector<9x9xf32>
    %cst_99 = arith.constant dense<0xFF800000> : vector<9xf32>
    %237 = vector.multi_reduction <maximumf>, %236, %cst_99 [1] : vector<9x9xf32> to vector<9xf32>
    %cst_100 = arith.constant 0xFF800000 : f32
    %238 = vector.broadcast %cst_100 : f32 to vector<9xf32>
    %239 = arith.maximumf %238, %237 : vector<9xf32>
    %240 = vector.shape_cast %239 : vector<9xf32> to vector<9x1xf32>
    %241 = vector.broadcast %240 : vector<9x1xf32> to vector<9x9xf32>
    %242 = arith.subf %236, %241 : vector<9x9xf32>
    %243 = math.exp %242 : vector<9x9xf32>
    %cst_101 = arith.constant dense<0.000000e+00> : vector<9xf32>
    %244 = vector.multi_reduction <add>, %243, %cst_101 [1] : vector<9x9xf32> to vector<9xf32>
    %245 = vector.shape_cast %244 : vector<9xf32> to vector<9x1xf32>
    %246 = vector.broadcast %245 : vector<9x1xf32> to vector<9x9xf32>
    %247 = arith.divf %243, %246 : vector<9x9xf32>
    %cst_102 = arith.constant dense<0.000000e+00> : vector<9x48xf32>
    %248 = tpu.matmul %247, %233, %cst_102 {dimension_numbers = #tpu.dot_dimension_numbers<[1], [0], [0], [1], [0, 0, 1, 1], [], []>} : vector<9x9xf32>, vector<9x48xf32>, vector<9x48xf32> -> vector<9x48xf32>
    %249 = tpu.concatenate %194, %212, %230, %248 in 1 : vector<9x48xf32>, vector<9x48xf32>, vector<9x48xf32>, vector<9x48xf32> -> vector<9x192xf32>
    %c0_103 = arith.constant 0 : index
    %c0_104 = arith.constant 0 : index
    %250 = vector.load %arg11[%c0_103, %c0_104] : memref<192x192xf32, #tpu.memory_space<vmem>>, vector<192x192xf32>
    %cst_105 = arith.constant dense<0.000000e+00> : vector<9x192xf32>
    %251 = tpu.matmul %249, %250, %cst_105 {dimension_numbers = #tpu.dot_dimension_numbers<[1], [0], [0], [1], [0, 0, 1, 1], [], []>} : vector<9x192xf32>, vector<192x192xf32>, vector<9x192xf32> -> vector<9x192xf32>
    %c0_106 = arith.constant 0 : index
    %c0_107 = arith.constant 0 : index
    %252 = vector.load %arg12[%c0_106, %c0_107] : memref<1x192xf32, #tpu.memory_space<vmem>>, vector<1x192xf32>
    %253 = vector.broadcast %252 : vector<1x192xf32> to vector<9x192xf32>
    %254 = arith.addf %251, %253 : vector<9x192xf32>
    %c0_108 = arith.constant 0 : index
    %c0_109 = arith.constant 0 : index
    %255 = vector.load %arg5[%c0_108, %c0_109] : memref<1x192xf32, #tpu.memory_space<vmem>>, vector<1x192xf32>
    %c0_110 = arith.constant 0 : index
    %c0_111 = arith.constant 0 : index
    %256 = vector.load %arg6[%c0_110, %c0_111] : memref<1x192xf32, #tpu.memory_space<vmem>>, vector<1x192xf32>
    %cst_112 = arith.constant dense<0.000000e+00> : vector<192xf32>
    %257 = vector.multi_reduction <add>, %254, %cst_112 [0] : vector<9x192xf32> to vector<192xf32>
    %258 = vector.shape_cast %257 : vector<192xf32> to vector<1x192xf32>
    %cst_113 = arith.constant 9.000000e+00 : f32
    %259 = vector.broadcast %cst_113 : f32 to vector<1x192xf32>
    %260 = arith.divf %258, %259 : vector<1x192xf32>
    %261 = vector.broadcast %260 : vector<1x192xf32> to vector<9x192xf32>
    %262 = arith.subf %254, %261 : vector<9x192xf32>
    %263 = arith.mulf %262, %262 : vector<9x192xf32>
    %cst_114 = arith.constant dense<0.000000e+00> : vector<192xf32>
    %264 = vector.multi_reduction <add>, %263, %cst_114 [0] : vector<9x192xf32> to vector<192xf32>
    %265 = vector.shape_cast %264 : vector<192xf32> to vector<1x192xf32>
    %cst_115 = arith.constant 8.000000e+00 : f32
    %266 = vector.broadcast %cst_115 : f32 to vector<1x192xf32>
    %267 = arith.divf %265, %266 : vector<1x192xf32>
    %268 = vector.broadcast %260 : vector<1x192xf32> to vector<9x192xf32>
    %269 = arith.subf %254, %268 : vector<9x192xf32>
    %cst_116 = arith.constant 9.99999993E-9 : f32
    %270 = vector.broadcast %cst_116 : f32 to vector<1x192xf32>
    %271 = arith.addf %267, %270 : vector<1x192xf32>
    %272 = math.sqrt %271 : vector<1x192xf32>
    %273 = vector.broadcast %272 : vector<1x192xf32> to vector<9x192xf32>
    %274 = arith.divf %269, %273 : vector<9x192xf32>
    %275 = vector.broadcast %255 : vector<1x192xf32> to vector<9x192xf32>
    %276 = arith.mulf %274, %275 : vector<9x192xf32>
    %277 = vector.broadcast %256 : vector<1x192xf32> to vector<9x192xf32>
    %278 = arith.addf %276, %277 : vector<9x192xf32>
    %c1_117 = arith.constant 1 : index
    %c0_118 = arith.constant 0 : index
    %c0_119 = arith.constant 0 : index
    %279 = vector.load %arg13[%c1_117, %c0_118, %c0_119] : memref<2x9x192xf32, #tpu.memory_space<vmem>>, vector<1x9x192xf32>
    %280 = vector.shape_cast %279 : vector<1x9x192xf32> to vector<9x192xf32>
    %281 = vector.shape_cast %278 : vector<9x192xf32> to vector<1x9x192xf32>
    tpu.vector_store %arg13[%c1_117, %c0_118, %c0_119], %281 {strides = array<i32>} : memref<2x9x192xf32, #tpu.memory_space<vmem>>, vector<1x9x192xf32>,
    return
  }
  func.func @transform_0(%arg0: i32) -> (i32, i32, i32) {
    %c0_i32 = arith.constant 0 : i32
    %c0_i32_0 = arith.constant 0 : i32
    %c0_i32_1 = arith.constant 0 : i32
    return %arg0, %c0_i32, %c0_i32_0 : i32, i32, i32
  }
  func.func @transform_1(%arg0: i32) -> (i32, i32) {
    %c0_i32 = arith.constant 0 : i32
    %c0_i32_0 = arith.constant 0 : i32
    %c0_i32_1 = arith.constant 0 : i32
    return %c0_i32, %c0_i32_0 : i32, i32
  }
  func.func @transform_2(%arg0: i32) -> (i32, i32) {
    %c0_i32 = arith.constant 0 : i32
    %c0_i32_0 = arith.constant 0 : i32
    %c0_i32_1 = arith.constant 0 : i32
    return %c0_i32, %c0_i32_0 : i32, i32
  }
  func.func @transform_3(%arg0: i32) -> (i32, i32) {
    %c0_i32 = arith.constant 0 : i32
    %c0_i32_0 = arith.constant 0 : i32
    %c0_i32_1 = arith.constant 0 : i32
    return %c0_i32, %c0_i32_0 : i32, i32
  }
  func.func @transform_4(%arg0: i32) -> (i32, i32) {
    %c0_i32 = arith.constant 0 : i32
    %c0_i32_0 = arith.constant 0 : i32
    %c0_i32_1 = arith.constant 0 : i32
    return %c0_i32, %c0_i32_0 : i32, i32
  }
  func.func @transform_5(%arg0: i32) -> (i32, i32) {
    %c0_i32 = arith.constant 0 : i32
    %c0_i32_0 = arith.constant 0 : i32
    %c0_i32_1 = arith.constant 0 : i32
    return %c0_i32, %c0_i32_0 : i32, i32
  }
  func.func @transform_6(%arg0: i32) -> (i32, i32) {
    %c0_i32 = arith.constant 0 : i32
    %c0_i32_0 = arith.constant 0 : i32
    %c0_i32_1 = arith.constant 0 : i32
    return %c0_i32, %c0_i32_0 : i32, i32
  }
  func.func @transform_7(%arg0: i32) -> (i32, i32) {
    %c0_i32 = arith.constant 0 : i32
    %c0_i32_0 = arith.constant 0 : i32
    %c0_i32_1 = arith.constant 0 : i32
    return %c0_i32, %c0_i32_0 : i32, i32
  }
  func.func @transform_8(%arg0: i32) -> (i32, i32) {
    %c0_i32 = arith.constant 0 : i32
    %c0_i32_0 = arith.constant 0 : i32
    %c0_i32_1 = arith.constant 0 : i32
    return %c0_i32, %c0_i32_0 : i32, i32
  }
  func.func @transform_9(%arg0: i32) -> (i32, i32) {
    %c0_i32 = arith.constant 0 : i32
    %c0_i32_0 = arith.constant 0 : i32
    %c0_i32_1 = arith.constant 0 : i32
    return %c0_i32, %c0_i32_0 : i32, i32
  }
  func.func @transform_10(%arg0: i32) -> (i32, i32) {
    %c0_i32 = arith.constant 0 : i32
    %c0_i32_0 = arith.constant 0 : i32
    %c0_i32_1 = arith.constant 0 : i32
    return %c0_i32, %c0_i32_0 : i32, i32
  }
  func.func @transform_11(%arg0: i32) -> (i32, i32) {
    %c0_i32 = arith.constant 0 : i32
    %c0_i32_0 = arith.constant 0 : i32
    %c0_i32_1 = arith.constant 0 : i32
    return %c0_i32, %c0_i32_0 : i32, i32
  }
  func.func @transform_12(%arg0: i32) -> (i32, i32, i32) {
    %c0_i32 = arith.constant 0 : i32
    %c0_i32_0 = arith.constant 0 : i32
    %c0_i32_1 = arith.constant 0 : i32
    return %arg0, %c0_i32, %c0_i32_0 : i32, i32, i32
  }
}

module attributes {stable_mosaic.version = 11 : i64} {
  func.func @_encoder_kernel(%arg0: i32, %arg1: memref<2x5x192xf32, #tpu.memory_space<vmem>>, %arg2: memref<192x64xf32, #tpu.memory_space<vmem>>, %arg3: memref<5x64xf32, #tpu.memory_space<vmem>>, %arg4: memref<2x1x64xf32, #tpu.memory_space<vmem>>, %arg5: memref<2x1x64xf32, #tpu.memory_space<vmem>>, %arg6: memref<2x64x192xf32, #tpu.memory_space<vmem>>, %arg7: memref<2x1x192xf32, #tpu.memory_space<vmem>>, %arg8: memref<2x64x64xf32, #tpu.memory_space<vmem>>, %arg9: memref<2x1x64xf32, #tpu.memory_space<vmem>>, %arg10: memref<2x1x64xf32, #tpu.memory_space<vmem>>, %arg11: memref<2x1x64xf32, #tpu.memory_space<vmem>>, %arg12: memref<2x64x128xf32, #tpu.memory_space<vmem>>, %arg13: memref<2x1x128xf32, #tpu.memory_space<vmem>>, %arg14: memref<2x128x64xf32, #tpu.memory_space<vmem>>, %arg15: memref<2x1x64xf32, #tpu.memory_space<vmem>>, %arg16: memref<1x64xf32, #tpu.memory_space<vmem>>, %arg17: memref<1x64xf32, #tpu.memory_space<vmem>>, %arg18: memref<64x128xf32, #tpu.memory_space<vmem>>, %arg19: memref<1x128xf32, #tpu.memory_space<vmem>>, %arg20: memref<2x1x128xf32, #tpu.memory_space<vmem>>) attributes {dimension_semantics = [#tpu.dimension_semantics<parallel>], iteration_bounds = array<i64: 1>, scalar_prefetch = 0 : i64, scratch_operands = 0 : i64, tpu.core_type = #tpu.core_type<tc>, window_params = [{transform_indices = @transform_0, window_bounds = array<i64: 2, 5, 192>}, {pipeline_mode = #tpu.pipeline_mode<synchronous>, transform_indices = @transform_1, window_bounds = array<i64: 192, 64>}, {pipeline_mode = #tpu.pipeline_mode<synchronous>, transform_indices = @transform_2, window_bounds = array<i64: 5, 64>}, {pipeline_mode = #tpu.pipeline_mode<synchronous>, transform_indices = @transform_3, window_bounds = array<i64: 2, 1, 64>}, {pipeline_mode = #tpu.pipeline_mode<synchronous>, transform_indices = @transform_4, window_bounds = array<i64: 2, 1, 64>}, {pipeline_mode = #tpu.pipeline_mode<synchronous>, transform_indices = @transform_5, window_bounds = array<i64: 2, 64, 192>}, {pipeline_mode = #tpu.pipeline_mode<synchronous>, transform_indices = @transform_6, window_bounds = array<i64: 2, 1, 192>}, {pipeline_mode = #tpu.pipeline_mode<synchronous>, transform_indices = @transform_7, window_bounds = array<i64: 2, 64, 64>}, {pipeline_mode = #tpu.pipeline_mode<synchronous>, transform_indices = @transform_8, window_bounds = array<i64: 2, 1, 64>}, {pipeline_mode = #tpu.pipeline_mode<synchronous>, transform_indices = @transform_9, window_bounds = array<i64: 2, 1, 64>}, {pipeline_mode = #tpu.pipeline_mode<synchronous>, transform_indices = @transform_10, window_bounds = array<i64: 2, 1, 64>}, {pipeline_mode = #tpu.pipeline_mode<synchronous>, transform_indices = @transform_11, window_bounds = array<i64: 2, 64, 128>}, {pipeline_mode = #tpu.pipeline_mode<synchronous>, transform_indices = @transform_12, window_bounds = array<i64: 2, 1, 128>}, {pipeline_mode = #tpu.pipeline_mode<synchronous>, transform_indices = @transform_13, window_bounds = array<i64: 2, 128, 64>}, {pipeline_mode = #tpu.pipeline_mode<synchronous>, transform_indices = @transform_14, window_bounds = array<i64: 2, 1, 64>}, {pipeline_mode = #tpu.pipeline_mode<synchronous>, transform_indices = @transform_15, window_bounds = array<i64: 1, 64>}, {pipeline_mode = #tpu.pipeline_mode<synchronous>, transform_indices = @transform_16, window_bounds = array<i64: 1, 64>}, {pipeline_mode = #tpu.pipeline_mode<synchronous>, transform_indices = @transform_17, window_bounds = array<i64: 64, 128>}, {pipeline_mode = #tpu.pipeline_mode<synchronous>, transform_indices = @transform_18, window_bounds = array<i64: 1, 128>}, {transform_indices = @transform_19, window_bounds = array<i64: 2, 1, 128>}]} {
    %c0 = arith.constant 0 : index
    %c0_0 = arith.constant 0 : index
    %c0_1 = arith.constant 0 : index
    %0 = vector.load %arg1[%c0, %c0_0, %c0_1] : memref<2x5x192xf32, #tpu.memory_space<vmem>>, vector<1x5x192xf32>
    %1 = vector.shape_cast %0 : vector<1x5x192xf32> to vector<5x192xf32>
    %c0_2 = arith.constant 0 : index
    %c0_3 = arith.constant 0 : index
    %2 = vector.load %arg2[%c0_2, %c0_3] : memref<192x64xf32, #tpu.memory_space<vmem>>, vector<192x64xf32>
    %cst = arith.constant dense<0.000000e+00> : vector<5x64xf32>
    %3 = tpu.matmul %1, %2, %cst {dimension_numbers = #tpu.dot_dimension_numbers<[1], [0], [0], [1], [0, 0, 1, 1], [], []>} : vector<5x192xf32>, vector<192x64xf32>, vector<5x64xf32> -> vector<5x64xf32>
    %c0_4 = arith.constant 0 : index
    %c0_5 = arith.constant 0 : index
    %4 = vector.load %arg3[%c0_4, %c0_5] : memref<5x64xf32, #tpu.memory_space<vmem>>, vector<5x64xf32>
    %5 = arith.addf %3, %4 : vector<5x64xf32>
    %c0_6 = arith.constant 0 : index
    %c0_7 = arith.constant 0 : index
    %c0_8 = arith.constant 0 : index
    %6 = vector.load %arg4[%c0_6, %c0_7, %c0_8] : memref<2x1x64xf32, #tpu.memory_space<vmem>>, vector<1x1x64xf32>
    %7 = vector.shape_cast %6 : vector<1x1x64xf32> to vector<1x64xf32>
    %c0_9 = arith.constant 0 : index
    %c0_10 = arith.constant 0 : index
    %c0_11 = arith.constant 0 : index
    %8 = vector.load %arg5[%c0_9, %c0_10, %c0_11] : memref<2x1x64xf32, #tpu.memory_space<vmem>>, vector<1x1x64xf32>
    %9 = vector.shape_cast %8 : vector<1x1x64xf32> to vector<1x64xf32>
    %cst_12 = arith.constant dense<0.000000e+00> : vector<5xf32>
    %10 = vector.multi_reduction <add>, %5, %cst_12 [1] : vector<5x64xf32> to vector<5xf32>
    %11 = vector.shape_cast %10 : vector<5xf32> to vector<5x1xf32>
    %cst_13 = arith.constant 6.400000e+01 : f32
    %12 = vector.broadcast %cst_13 : f32 to vector<5x1xf32>
    %13 = arith.divf %11, %12 : vector<5x1xf32>
    %14 = vector.broadcast %13 : vector<5x1xf32> to vector<5x64xf32>
    %15 = arith.subf %5, %14 : vector<5x64xf32>
    %16 = arith.mulf %15, %15 : vector<5x64xf32>
    %cst_14 = arith.constant dense<0.000000e+00> : vector<5xf32>
    %17 = vector.multi_reduction <add>, %16, %cst_14 [1] : vector<5x64xf32> to vector<5xf32>
    %18 = vector.shape_cast %17 : vector<5xf32> to vector<5x1xf32>
    %cst_15 = arith.constant 6.400000e+01 : f32
    %19 = vector.broadcast %cst_15 : f32 to vector<5x1xf32>
    %20 = arith.divf %18, %19 : vector<5x1xf32>
    %21 = vector.broadcast %13 : vector<5x1xf32> to vector<5x64xf32>
    %22 = arith.subf %5, %21 : vector<5x64xf32>
    %cst_16 = arith.constant 9.99999997E-7 : f32
    %23 = vector.broadcast %cst_16 : f32 to vector<5x1xf32>
    %24 = arith.addf %20, %23 : vector<5x1xf32>
    %25 = math.rsqrt %24 : vector<5x1xf32>
    %26 = vector.broadcast %25 : vector<5x1xf32> to vector<5x64xf32>
    %27 = arith.mulf %22, %26 : vector<5x64xf32>
    %28 = vector.broadcast %7 : vector<1x64xf32> to vector<5x64xf32>
    %29 = arith.mulf %27, %28 : vector<5x64xf32>
    %30 = vector.broadcast %9 : vector<1x64xf32> to vector<5x64xf32>
    %31 = arith.addf %29, %30 : vector<5x64xf32>
    %c0_17 = arith.constant 0 : index
    %c0_18 = arith.constant 0 : index
    %c0_19 = arith.constant 0 : index
    %32 = vector.load %arg6[%c0_17, %c0_18, %c0_19] : memref<2x64x192xf32, #tpu.memory_space<vmem>>, vector<1x64x192xf32>
    %33 = vector.shape_cast %32 : vector<1x64x192xf32> to vector<64x192xf32>
    %cst_20 = arith.constant dense<0.000000e+00> : vector<5x192xf32>
    %34 = tpu.matmul %31, %33, %cst_20 {dimension_numbers = #tpu.dot_dimension_numbers<[1], [0], [0], [1], [0, 0, 1, 1], [], []>} : vector<5x64xf32>, vector<64x192xf32>, vector<5x192xf32> -> vector<5x192xf32>
    %c0_21 = arith.constant 0 : index
    %c0_22 = arith.constant 0 : index
    %c0_23 = arith.constant 0 : index
    %35 = vector.load %arg7[%c0_21, %c0_22, %c0_23] : memref<2x1x192xf32, #tpu.memory_space<vmem>>, vector<1x1x192xf32>
    %36 = vector.shape_cast %35 : vector<1x1x192xf32> to vector<1x192xf32>
    %37 = vector.broadcast %36 : vector<1x192xf32> to vector<5x192xf32>
    %38 = arith.addf %34, %37 : vector<5x192xf32>
    %39 = vector.extract_strided_slice %38 {offsets = [0, 0], sizes = [5, 64], strides = [1, 1]} : vector<5x192xf32> to vector<5x64xf32>
    %40 = vector.extract_strided_slice %38 {offsets = [0, 64], sizes = [5, 64], strides = [1, 1]} : vector<5x192xf32> to vector<5x64xf32>
    %41 = vector.extract_strided_slice %38 {offsets = [0, 128], sizes = [5, 64], strides = [1, 1]} : vector<5x192xf32> to vector<5x64xf32>
    %42 = vector.extract_strided_slice %39 {offsets = [0, 0], sizes = [5, 16], strides = [1, 1]} : vector<5x64xf32> to vector<5x16xf32>
    %43 = vector.extract_strided_slice %40 {offsets = [0, 0], sizes = [5, 16], strides = [1, 1]} : vector<5x64xf32> to vector<5x16xf32>
    %44 = vector.extract_strided_slice %41 {offsets = [0, 0], sizes = [5, 16], strides = [1, 1]} : vector<5x64xf32> to vector<5x16xf32>
    %cst_24 = arith.constant dense<0.000000e+00> : vector<5x5xf32>
    %45 = tpu.matmul %42, %43, %cst_24 {dimension_numbers = #tpu.dot_dimension_numbers<[1], [1], [0], [0], [0, 0, 1, 0], [], []>} : vector<5x16xf32>, vector<5x16xf32>, vector<5x5xf32> -> vector<5x5xf32>
    %cst_25 = arith.constant 2.500000e-01 : f32
    %46 = vector.broadcast %cst_25 : f32 to vector<5x5xf32>
    %47 = arith.mulf %45, %46 : vector<5x5xf32>
    %cst_26 = arith.constant dense<0xFF800000> : vector<5xf32>
    %48 = vector.multi_reduction <maximumf>, %47, %cst_26 [1] : vector<5x5xf32> to vector<5xf32>
    %cst_27 = arith.constant 0xFF800000 : f32
    %49 = vector.broadcast %cst_27 : f32 to vector<5xf32>
    %50 = arith.maximumf %49, %48 : vector<5xf32>
    %51 = vector.shape_cast %50 : vector<5xf32> to vector<5x1xf32>
    %52 = vector.broadcast %51 : vector<5x1xf32> to vector<5x5xf32>
    %53 = arith.subf %47, %52 : vector<5x5xf32>
    %54 = math.exp %53 : vector<5x5xf32>
    %cst_28 = arith.constant dense<0.000000e+00> : vector<5xf32>
    %55 = vector.multi_reduction <add>, %54, %cst_28 [1] : vector<5x5xf32> to vector<5xf32>
    %56 = vector.shape_cast %55 : vector<5xf32> to vector<5x1xf32>
    %57 = vector.broadcast %56 : vector<5x1xf32> to vector<5x5xf32>
    %58 = arith.divf %54, %57 : vector<5x5xf32>
    %cst_29 = arith.constant dense<0.000000e+00> : vector<5x16xf32>
    %59 = tpu.matmul %58, %44, %cst_29 {dimension_numbers = #tpu.dot_dimension_numbers<[1], [0], [0], [1], [0, 0, 1, 1], [], []>} : vector<5x5xf32>, vector<5x16xf32>, vector<5x16xf32> -> vector<5x16xf32>
    %60 = vector.extract_strided_slice %39 {offsets = [0, 16], sizes = [5, 16], strides = [1, 1]} : vector<5x64xf32> to vector<5x16xf32>
    %61 = vector.extract_strided_slice %40 {offsets = [0, 16], sizes = [5, 16], strides = [1, 1]} : vector<5x64xf32> to vector<5x16xf32>
    %62 = vector.extract_strided_slice %41 {offsets = [0, 16], sizes = [5, 16], strides = [1, 1]} : vector<5x64xf32> to vector<5x16xf32>
    %cst_30 = arith.constant dense<0.000000e+00> : vector<5x5xf32>
    %63 = tpu.matmul %60, %61, %cst_30 {dimension_numbers = #tpu.dot_dimension_numbers<[1], [1], [0], [0], [0, 0, 1, 0], [], []>} : vector<5x16xf32>, vector<5x16xf32>, vector<5x5xf32> -> vector<5x5xf32>
    %cst_31 = arith.constant 2.500000e-01 : f32
    %64 = vector.broadcast %cst_31 : f32 to vector<5x5xf32>
    %65 = arith.mulf %63, %64 : vector<5x5xf32>
    %cst_32 = arith.constant dense<0xFF800000> : vector<5xf32>
    %66 = vector.multi_reduction <maximumf>, %65, %cst_32 [1] : vector<5x5xf32> to vector<5xf32>
    %cst_33 = arith.constant 0xFF800000 : f32
    %67 = vector.broadcast %cst_33 : f32 to vector<5xf32>
    %68 = arith.maximumf %67, %66 : vector<5xf32>
    %69 = vector.shape_cast %68 : vector<5xf32> to vector<5x1xf32>
    %70 = vector.broadcast %69 : vector<5x1xf32> to vector<5x5xf32>
    %71 = arith.subf %65, %70 : vector<5x5xf32>
    %72 = math.exp %71 : vector<5x5xf32>
    %cst_34 = arith.constant dense<0.000000e+00> : vector<5xf32>
    %73 = vector.multi_reduction <add>, %72, %cst_34 [1] : vector<5x5xf32> to vector<5xf32>
    %74 = vector.shape_cast %73 : vector<5xf32> to vector<5x1xf32>
    %75 = vector.broadcast %74 : vector<5x1xf32> to vector<5x5xf32>
    %76 = arith.divf %72, %75 : vector<5x5xf32>
    %cst_35 = arith.constant dense<0.000000e+00> : vector<5x16xf32>
    %77 = tpu.matmul %76, %62, %cst_35 {dimension_numbers = #tpu.dot_dimension_numbers<[1], [0], [0], [1], [0, 0, 1, 1], [], []>} : vector<5x5xf32>, vector<5x16xf32>, vector<5x16xf32> -> vector<5x16xf32>
    %78 = vector.extract_strided_slice %39 {offsets = [0, 32], sizes = [5, 16], strides = [1, 1]} : vector<5x64xf32> to vector<5x16xf32>
    %79 = vector.extract_strided_slice %40 {offsets = [0, 32], sizes = [5, 16], strides = [1, 1]} : vector<5x64xf32> to vector<5x16xf32>
    %80 = vector.extract_strided_slice %41 {offsets = [0, 32], sizes = [5, 16], strides = [1, 1]} : vector<5x64xf32> to vector<5x16xf32>
    %cst_36 = arith.constant dense<0.000000e+00> : vector<5x5xf32>
    %81 = tpu.matmul %78, %79, %cst_36 {dimension_numbers = #tpu.dot_dimension_numbers<[1], [1], [0], [0], [0, 0, 1, 0], [], []>} : vector<5x16xf32>, vector<5x16xf32>, vector<5x5xf32> -> vector<5x5xf32>
    %cst_37 = arith.constant 2.500000e-01 : f32
    %82 = vector.broadcast %cst_37 : f32 to vector<5x5xf32>
    %83 = arith.mulf %81, %82 : vector<5x5xf32>
    %cst_38 = arith.constant dense<0xFF800000> : vector<5xf32>
    %84 = vector.multi_reduction <maximumf>, %83, %cst_38 [1] : vector<5x5xf32> to vector<5xf32>
    %cst_39 = arith.constant 0xFF800000 : f32
    %85 = vector.broadcast %cst_39 : f32 to vector<5xf32>
    %86 = arith.maximumf %85, %84 : vector<5xf32>
    %87 = vector.shape_cast %86 : vector<5xf32> to vector<5x1xf32>
    %88 = vector.broadcast %87 : vector<5x1xf32> to vector<5x5xf32>
    %89 = arith.subf %83, %88 : vector<5x5xf32>
    %90 = math.exp %89 : vector<5x5xf32>
    %cst_40 = arith.constant dense<0.000000e+00> : vector<5xf32>
    %91 = vector.multi_reduction <add>, %90, %cst_40 [1] : vector<5x5xf32> to vector<5xf32>
    %92 = vector.shape_cast %91 : vector<5xf32> to vector<5x1xf32>
    %93 = vector.broadcast %92 : vector<5x1xf32> to vector<5x5xf32>
    %94 = arith.divf %90, %93 : vector<5x5xf32>
    %cst_41 = arith.constant dense<0.000000e+00> : vector<5x16xf32>
    %95 = tpu.matmul %94, %80, %cst_41 {dimension_numbers = #tpu.dot_dimension_numbers<[1], [0], [0], [1], [0, 0, 1, 1], [], []>} : vector<5x5xf32>, vector<5x16xf32>, vector<5x16xf32> -> vector<5x16xf32>
    %96 = vector.extract_strided_slice %39 {offsets = [0, 48], sizes = [5, 16], strides = [1, 1]} : vector<5x64xf32> to vector<5x16xf32>
    %97 = vector.extract_strided_slice %40 {offsets = [0, 48], sizes = [5, 16], strides = [1, 1]} : vector<5x64xf32> to vector<5x16xf32>
    %98 = vector.extract_strided_slice %41 {offsets = [0, 48], sizes = [5, 16], strides = [1, 1]} : vector<5x64xf32> to vector<5x16xf32>
    %cst_42 = arith.constant dense<0.000000e+00> : vector<5x5xf32>
    %99 = tpu.matmul %96, %97, %cst_42 {dimension_numbers = #tpu.dot_dimension_numbers<[1], [1], [0], [0], [0, 0, 1, 0], [], []>} : vector<5x16xf32>, vector<5x16xf32>, vector<5x5xf32> -> vector<5x5xf32>
    %cst_43 = arith.constant 2.500000e-01 : f32
    %100 = vector.broadcast %cst_43 : f32 to vector<5x5xf32>
    %101 = arith.mulf %99, %100 : vector<5x5xf32>
    %cst_44 = arith.constant dense<0xFF800000> : vector<5xf32>
    %102 = vector.multi_reduction <maximumf>, %101, %cst_44 [1] : vector<5x5xf32> to vector<5xf32>
    %cst_45 = arith.constant 0xFF800000 : f32
    %103 = vector.broadcast %cst_45 : f32 to vector<5xf32>
    %104 = arith.maximumf %103, %102 : vector<5xf32>
    %105 = vector.shape_cast %104 : vector<5xf32> to vector<5x1xf32>
    %106 = vector.broadcast %105 : vector<5x1xf32> to vector<5x5xf32>
    %107 = arith.subf %101, %106 : vector<5x5xf32>
    %108 = math.exp %107 : vector<5x5xf32>
    %cst_46 = arith.constant dense<0.000000e+00> : vector<5xf32>
    %109 = vector.multi_reduction <add>, %108, %cst_46 [1] : vector<5x5xf32> to vector<5xf32>
    %110 = vector.shape_cast %109 : vector<5xf32> to vector<5x1xf32>
    %111 = vector.broadcast %110 : vector<5x1xf32> to vector<5x5xf32>
    %112 = arith.divf %108, %111 : vector<5x5xf32>
    %cst_47 = arith.constant dense<0.000000e+00> : vector<5x16xf32>
    %113 = tpu.matmul %112, %98, %cst_47 {dimension_numbers = #tpu.dot_dimension_numbers<[1], [0], [0], [1], [0, 0, 1, 1], [], []>} : vector<5x5xf32>, vector<5x16xf32>, vector<5x16xf32> -> vector<5x16xf32>
    %114 = tpu.concatenate %59, %77, %95, %113 in 1 : vector<5x16xf32>, vector<5x16xf32>, vector<5x16xf32>, vector<5x16xf32> -> vector<5x64xf32>
    %c0_48 = arith.constant 0 : index
    %c0_49 = arith.constant 0 : index
    %c0_50 = arith.constant 0 : index
    %115 = vector.load %arg8[%c0_48, %c0_49, %c0_50] : memref<2x64x64xf32, #tpu.memory_space<vmem>>, vector<1x64x64xf32>
    %116 = vector.shape_cast %115 : vector<1x64x64xf32> to vector<64x64xf32>
    %cst_51 = arith.constant dense<0.000000e+00> : vector<5x64xf32>
    %117 = tpu.matmul %114, %116, %cst_51 {dimension_numbers = #tpu.dot_dimension_numbers<[1], [0], [0], [1], [0, 0, 1, 1], [], []>} : vector<5x64xf32>, vector<64x64xf32>, vector<5x64xf32> -> vector<5x64xf32>
    %118 = arith.addf %5, %117 : vector<5x64xf32>
    %c0_52 = arith.constant 0 : index
    %c0_53 = arith.constant 0 : index
    %c0_54 = arith.constant 0 : index
    %119 = vector.load %arg9[%c0_52, %c0_53, %c0_54] : memref<2x1x64xf32, #tpu.memory_space<vmem>>, vector<1x1x64xf32>
    %120 = vector.shape_cast %119 : vector<1x1x64xf32> to vector<1x64xf32>
    %121 = vector.broadcast %120 : vector<1x64xf32> to vector<5x64xf32>
    %122 = arith.addf %118, %121 : vector<5x64xf32>
    %c0_55 = arith.constant 0 : index
    %c0_56 = arith.constant 0 : index
    %c0_57 = arith.constant 0 : index
    %123 = vector.load %arg10[%c0_55, %c0_56, %c0_57] : memref<2x1x64xf32, #tpu.memory_space<vmem>>, vector<1x1x64xf32>
    %124 = vector.shape_cast %123 : vector<1x1x64xf32> to vector<1x64xf32>
    %c0_58 = arith.constant 0 : index
    %c0_59 = arith.constant 0 : index
    %c0_60 = arith.constant 0 : index
    %125 = vector.load %arg11[%c0_58, %c0_59, %c0_60] : memref<2x1x64xf32, #tpu.memory_space<vmem>>, vector<1x1x64xf32>
    %126 = vector.shape_cast %125 : vector<1x1x64xf32> to vector<1x64xf32>
    %cst_61 = arith.constant dense<0.000000e+00> : vector<5xf32>
    %127 = vector.multi_reduction <add>, %122, %cst_61 [1] : vector<5x64xf32> to vector<5xf32>
    %128 = vector.shape_cast %127 : vector<5xf32> to vector<5x1xf32>
    %cst_62 = arith.constant 6.400000e+01 : f32
    %129 = vector.broadcast %cst_62 : f32 to vector<5x1xf32>
    %130 = arith.divf %128, %129 : vector<5x1xf32>
    %131 = vector.broadcast %130 : vector<5x1xf32> to vector<5x64xf32>
    %132 = arith.subf %122, %131 : vector<5x64xf32>
    %133 = arith.mulf %132, %132 : vector<5x64xf32>
    %cst_63 = arith.constant dense<0.000000e+00> : vector<5xf32>
    %134 = vector.multi_reduction <add>, %133, %cst_63 [1] : vector<5x64xf32> to vector<5xf32>
    %135 = vector.shape_cast %134 : vector<5xf32> to vector<5x1xf32>
    %cst_64 = arith.constant 6.400000e+01 : f32
    %136 = vector.broadcast %cst_64 : f32 to vector<5x1xf32>
    %137 = arith.divf %135, %136 : vector<5x1xf32>
    %138 = vector.broadcast %130 : vector<5x1xf32> to vector<5x64xf32>
    %139 = arith.subf %122, %138 : vector<5x64xf32>
    %cst_65 = arith.constant 9.99999997E-7 : f32
    %140 = vector.broadcast %cst_65 : f32 to vector<5x1xf32>
    %141 = arith.addf %137, %140 : vector<5x1xf32>
    %142 = math.rsqrt %141 : vector<5x1xf32>
    %143 = vector.broadcast %142 : vector<5x1xf32> to vector<5x64xf32>
    %144 = arith.mulf %139, %143 : vector<5x64xf32>
    %145 = vector.broadcast %124 : vector<1x64xf32> to vector<5x64xf32>
    %146 = arith.mulf %144, %145 : vector<5x64xf32>
    %147 = vector.broadcast %126 : vector<1x64xf32> to vector<5x64xf32>
    %148 = arith.addf %146, %147 : vector<5x64xf32>
    %c0_66 = arith.constant 0 : index
    %c0_67 = arith.constant 0 : index
    %c0_68 = arith.constant 0 : index
    %149 = vector.load %arg12[%c0_66, %c0_67, %c0_68] : memref<2x64x128xf32, #tpu.memory_space<vmem>>, vector<1x64x128xf32>
    %150 = vector.shape_cast %149 : vector<1x64x128xf32> to vector<64x128xf32>
    %cst_69 = arith.constant dense<0.000000e+00> : vector<5x128xf32>
    %151 = tpu.matmul %148, %150, %cst_69 {dimension_numbers = #tpu.dot_dimension_numbers<[1], [0], [0], [1], [0, 0, 1, 1], [], []>} : vector<5x64xf32>, vector<64x128xf32>, vector<5x128xf32> -> vector<5x128xf32>
    %c0_70 = arith.constant 0 : index
    %c0_71 = arith.constant 0 : index
    %c0_72 = arith.constant 0 : index
    %152 = vector.load %arg13[%c0_70, %c0_71, %c0_72] : memref<2x1x128xf32, #tpu.memory_space<vmem>>, vector<1x1x128xf32>
    %153 = vector.shape_cast %152 : vector<1x1x128xf32> to vector<1x128xf32>
    %154 = vector.broadcast %153 : vector<1x128xf32> to vector<5x128xf32>
    %155 = arith.addf %151, %154 : vector<5x128xf32>
    %cst_73 = arith.constant 5.000000e-01 : f32
    %156 = vector.broadcast %cst_73 : f32 to vector<5x128xf32>
    %157 = arith.mulf %156, %155 : vector<5x128xf32>
    %cst_74 = arith.constant 0.707106769 : f32
    %158 = vector.broadcast %cst_74 : f32 to vector<5x128xf32>
    %159 = arith.mulf %155, %158 : vector<5x128xf32>
    %160 = math.absf %159 : vector<5x128xf32>
    %cst_75 = arith.constant 0.327591091 : f32
    %161 = vector.broadcast %cst_75 : f32 to vector<5x128xf32>
    %162 = arith.mulf %161, %160 : vector<5x128xf32>
    %cst_76 = arith.constant 1.000000e+00 : f32
    %163 = vector.broadcast %cst_76 : f32 to vector<5x128xf32>
    %164 = arith.addf %163, %162 : vector<5x128xf32>
    %cst_77 = arith.constant 1.000000e+00 : f32
    %165 = vector.broadcast %cst_77 : f32 to vector<5x128xf32>
    %166 = arith.divf %165, %164 : vector<5x128xf32>
    %cst_78 = arith.constant 1.06140542 : f32
    %167 = vector.broadcast %cst_78 : f32 to vector<5x128xf32>
    %168 = arith.mulf %167, %166 : vector<5x128xf32>
    %cst_79 = arith.constant -1.45315206 : f32
    %169 = vector.broadcast %cst_79 : f32 to vector<5x128xf32>
    %170 = arith.addf %168, %169 : vector<5x128xf32>
    %171 = arith.mulf %170, %166 : vector<5x128xf32>
    %cst_80 = arith.constant 1.42141378 : f32
    %172 = vector.broadcast %cst_80 : f32 to vector<5x128xf32>
    %173 = arith.addf %171, %172 : vector<5x128xf32>
    %174 = arith.mulf %173, %166 : vector<5x128xf32>
    %cst_81 = arith.constant -0.284496725 : f32
    %175 = vector.broadcast %cst_81 : f32 to vector<5x128xf32>
    %176 = arith.addf %174, %175 : vector<5x128xf32>
    %177 = arith.mulf %176, %166 : vector<5x128xf32>
    %cst_82 = arith.constant 0.254829586 : f32
    %178 = vector.broadcast %cst_82 : f32 to vector<5x128xf32>
    %179 = arith.addf %177, %178 : vector<5x128xf32>
    %180 = arith.mulf %179, %166 : vector<5x128xf32>
    %cst_83 = arith.constant 0.000000e+00 : f32
    %181 = vector.broadcast %cst_83 : f32 to vector<5x128xf32>
    %182 = arith.subf %181, %160 : vector<5x128xf32>
    %183 = arith.mulf %182, %160 : vector<5x128xf32>
    %184 = math.exp %183 : vector<5x128xf32>
    %185 = arith.mulf %180, %184 : vector<5x128xf32>
    %cst_84 = arith.constant 1.000000e+00 : f32
    %186 = vector.broadcast %cst_84 : f32 to vector<5x128xf32>
    %187 = arith.subf %186, %185 : vector<5x128xf32>
    %cst_85 = arith.constant 0.000000e+00 : f32
    %188 = vector.broadcast %cst_85 : f32 to vector<5x128xf32>
    %189 = arith.cmpf oge, %159, %188 : vector<5x128xf32>
    %cst_86 = arith.constant 0.000000e+00 : f32
    %190 = vector.broadcast %cst_86 : f32 to vector<5x128xf32>
    %191 = arith.subf %190, %187 : vector<5x128xf32>
    %192 = arith.select %189, %187, %191 : vector<5x128xi1>, vector<5x128xf32>
    %cst_87 = arith.constant 1.000000e+00 : f32
    %193 = vector.broadcast %cst_87 : f32 to vector<5x128xf32>
    %194 = arith.addf %193, %192 : vector<5x128xf32>
    %195 = arith.mulf %157, %194 : vector<5x128xf32>
    %c0_88 = arith.constant 0 : index
    %c0_89 = arith.constant 0 : index
    %c0_90 = arith.constant 0 : index
    %196 = vector.load %arg14[%c0_88, %c0_89, %c0_90] : memref<2x128x64xf32, #tpu.memory_space<vmem>>, vector<1x128x64xf32>
    %197 = vector.shape_cast %196 : vector<1x128x64xf32> to vector<128x64xf32>
    %cst_91 = arith.constant dense<0.000000e+00> : vector<5x64xf32>
    %198 = tpu.matmul %195, %197, %cst_91 {dimension_numbers = #tpu.dot_dimension_numbers<[1], [0], [0], [1], [0, 0, 1, 1], [], []>} : vector<5x128xf32>, vector<128x64xf32>, vector<5x64xf32> -> vector<5x64xf32>
    %199 = arith.addf %122, %198 : vector<5x64xf32>
    %c0_92 = arith.constant 0 : index
    %c0_93 = arith.constant 0 : index
    %c0_94 = arith.constant 0 : index
    %200 = vector.load %arg15[%c0_92, %c0_93, %c0_94] : memref<2x1x64xf32, #tpu.memory_space<vmem>>, vector<1x1x64xf32>
    %201 = vector.shape_cast %200 : vector<1x1x64xf32> to vector<1x64xf32>
    %202 = vector.broadcast %201 : vector<1x64xf32> to vector<5x64xf32>
    %203 = arith.addf %199, %202 : vector<5x64xf32>
    %c1 = arith.constant 1 : index
    %c0_95 = arith.constant 0 : index
    %c0_96 = arith.constant 0 : index
    %204 = vector.load %arg4[%c1, %c0_95, %c0_96] : memref<2x1x64xf32, #tpu.memory_space<vmem>>, vector<1x1x64xf32>
    %205 = vector.shape_cast %204 : vector<1x1x64xf32> to vector<1x64xf32>
    %c1_97 = arith.constant 1 : index
    %c0_98 = arith.constant 0 : index
    %c0_99 = arith.constant 0 : index
    %206 = vector.load %arg5[%c1_97, %c0_98, %c0_99] : memref<2x1x64xf32, #tpu.memory_space<vmem>>, vector<1x1x64xf32>
    %207 = vector.shape_cast %206 : vector<1x1x64xf32> to vector<1x64xf32>
    %cst_100 = arith.constant dense<0.000000e+00> : vector<5xf32>
    %208 = vector.multi_reduction <add>, %203, %cst_100 [1] : vector<5x64xf32> to vector<5xf32>
    %209 = vector.shape_cast %208 : vector<5xf32> to vector<5x1xf32>
    %cst_101 = arith.constant 6.400000e+01 : f32
    %210 = vector.broadcast %cst_101 : f32 to vector<5x1xf32>
    %211 = arith.divf %209, %210 : vector<5x1xf32>
    %212 = vector.broadcast %211 : vector<5x1xf32> to vector<5x64xf32>
    %213 = arith.subf %203, %212 : vector<5x64xf32>
    %214 = arith.mulf %213, %213 : vector<5x64xf32>
    %cst_102 = arith.constant dense<0.000000e+00> : vector<5xf32>
    %215 = vector.multi_reduction <add>, %214, %cst_102 [1] : vector<5x64xf32> to vector<5xf32>
    %216 = vector.shape_cast %215 : vector<5xf32> to vector<5x1xf32>
    %cst_103 = arith.constant 6.400000e+01 : f32
    %217 = vector.broadcast %cst_103 : f32 to vector<5x1xf32>
    %218 = arith.divf %216, %217 : vector<5x1xf32>
    %219 = vector.broadcast %211 : vector<5x1xf32> to vector<5x64xf32>
    %220 = arith.subf %203, %219 : vector<5x64xf32>
    %cst_104 = arith.constant 9.99999997E-7 : f32
    %221 = vector.broadcast %cst_104 : f32 to vector<5x1xf32>
    %222 = arith.addf %218, %221 : vector<5x1xf32>
    %223 = math.rsqrt %222 : vector<5x1xf32>
    %224 = vector.broadcast %223 : vector<5x1xf32> to vector<5x64xf32>
    %225 = arith.mulf %220, %224 : vector<5x64xf32>
    %226 = vector.broadcast %205 : vector<1x64xf32> to vector<5x64xf32>
    %227 = arith.mulf %225, %226 : vector<5x64xf32>
    %228 = vector.broadcast %207 : vector<1x64xf32> to vector<5x64xf32>
    %229 = arith.addf %227, %228 : vector<5x64xf32>
    %c1_105 = arith.constant 1 : index
    %c0_106 = arith.constant 0 : index
    %c0_107 = arith.constant 0 : index
    %230 = vector.load %arg6[%c1_105, %c0_106, %c0_107] : memref<2x64x192xf32, #tpu.memory_space<vmem>>, vector<1x64x192xf32>
    %231 = vector.shape_cast %230 : vector<1x64x192xf32> to vector<64x192xf32>
    %cst_108 = arith.constant dense<0.000000e+00> : vector<5x192xf32>
    %232 = tpu.matmul %229, %231, %cst_108 {dimension_numbers = #tpu.dot_dimension_numbers<[1], [0], [0], [1], [0, 0, 1, 1], [], []>} : vector<5x64xf32>, vector<64x192xf32>, vector<5x192xf32> -> vector<5x192xf32>
    %c1_109 = arith.constant 1 : index
    %c0_110 = arith.constant 0 : index
    %c0_111 = arith.constant 0 : index
    %233 = vector.load %arg7[%c1_109, %c0_110, %c0_111] : memref<2x1x192xf32, #tpu.memory_space<vmem>>, vector<1x1x192xf32>
    %234 = vector.shape_cast %233 : vector<1x1x192xf32> to vector<1x192xf32>
    %235 = vector.broadcast %234 : vector<1x192xf32> to vector<5x192xf32>
    %236 = arith.addf %232, %235 : vector<5x192xf32>
    %237 = vector.extract_strided_slice %236 {offsets = [0, 0], sizes = [5, 64], strides = [1, 1]} : vector<5x192xf32> to vector<5x64xf32>
    %238 = vector.extract_strided_slice %236 {offsets = [0, 64], sizes = [5, 64], strides = [1, 1]} : vector<5x192xf32> to vector<5x64xf32>
    %239 = vector.extract_strided_slice %236 {offsets = [0, 128], sizes = [5, 64], strides = [1, 1]} : vector<5x192xf32> to vector<5x64xf32>
    %240 = vector.extract_strided_slice %237 {offsets = [0, 0], sizes = [5, 16], strides = [1, 1]} : vector<5x64xf32> to vector<5x16xf32>
    %241 = vector.extract_strided_slice %238 {offsets = [0, 0], sizes = [5, 16], strides = [1, 1]} : vector<5x64xf32> to vector<5x16xf32>
    %242 = vector.extract_strided_slice %239 {offsets = [0, 0], sizes = [5, 16], strides = [1, 1]} : vector<5x64xf32> to vector<5x16xf32>
    %cst_112 = arith.constant dense<0.000000e+00> : vector<5x5xf32>
    %243 = tpu.matmul %240, %241, %cst_112 {dimension_numbers = #tpu.dot_dimension_numbers<[1], [1], [0], [0], [0, 0, 1, 0], [], []>} : vector<5x16xf32>, vector<5x16xf32>, vector<5x5xf32> -> vector<5x5xf32>
    %cst_113 = arith.constant 2.500000e-01 : f32
    %244 = vector.broadcast %cst_113 : f32 to vector<5x5xf32>
    %245 = arith.mulf %243, %244 : vector<5x5xf32>
    %cst_114 = arith.constant dense<0xFF800000> : vector<5xf32>
    %246 = vector.multi_reduction <maximumf>, %245, %cst_114 [1] : vector<5x5xf32> to vector<5xf32>
    %cst_115 = arith.constant 0xFF800000 : f32
    %247 = vector.broadcast %cst_115 : f32 to vector<5xf32>
    %248 = arith.maximumf %247, %246 : vector<5xf32>
    %249 = vector.shape_cast %248 : vector<5xf32> to vector<5x1xf32>
    %250 = vector.broadcast %249 : vector<5x1xf32> to vector<5x5xf32>
    %251 = arith.subf %245, %250 : vector<5x5xf32>
    %252 = math.exp %251 : vector<5x5xf32>
    %cst_116 = arith.constant dense<0.000000e+00> : vector<5xf32>
    %253 = vector.multi_reduction <add>, %252, %cst_116 [1] : vector<5x5xf32> to vector<5xf32>
    %254 = vector.shape_cast %253 : vector<5xf32> to vector<5x1xf32>
    %255 = vector.broadcast %254 : vector<5x1xf32> to vector<5x5xf32>
    %256 = arith.divf %252, %255 : vector<5x5xf32>
    %cst_117 = arith.constant dense<0.000000e+00> : vector<5x16xf32>
    %257 = tpu.matmul %256, %242, %cst_117 {dimension_numbers = #tpu.dot_dimension_numbers<[1], [0], [0], [1], [0, 0, 1, 1], [], []>} : vector<5x5xf32>, vector<5x16xf32>, vector<5x16xf32> -> vector<5x16xf32>
    %258 = vector.extract_strided_slice %237 {offsets = [0, 16], sizes = [5, 16], strides = [1, 1]} : vector<5x64xf32> to vector<5x16xf32>
    %259 = vector.extract_strided_slice %238 {offsets = [0, 16], sizes = [5, 16], strides = [1, 1]} : vector<5x64xf32> to vector<5x16xf32>
    %260 = vector.extract_strided_slice %239 {offsets = [0, 16], sizes = [5, 16], strides = [1, 1]} : vector<5x64xf32> to vector<5x16xf32>
    %cst_118 = arith.constant dense<0.000000e+00> : vector<5x5xf32>
    %261 = tpu.matmul %258, %259, %cst_118 {dimension_numbers = #tpu.dot_dimension_numbers<[1], [1], [0], [0], [0, 0, 1, 0], [], []>} : vector<5x16xf32>, vector<5x16xf32>, vector<5x5xf32> -> vector<5x5xf32>
    %cst_119 = arith.constant 2.500000e-01 : f32
    %262 = vector.broadcast %cst_119 : f32 to vector<5x5xf32>
    %263 = arith.mulf %261, %262 : vector<5x5xf32>
    %cst_120 = arith.constant dense<0xFF800000> : vector<5xf32>
    %264 = vector.multi_reduction <maximumf>, %263, %cst_120 [1] : vector<5x5xf32> to vector<5xf32>
    %cst_121 = arith.constant 0xFF800000 : f32
    %265 = vector.broadcast %cst_121 : f32 to vector<5xf32>
    %266 = arith.maximumf %265, %264 : vector<5xf32>
    %267 = vector.shape_cast %266 : vector<5xf32> to vector<5x1xf32>
    %268 = vector.broadcast %267 : vector<5x1xf32> to vector<5x5xf32>
    %269 = arith.subf %263, %268 : vector<5x5xf32>
    %270 = math.exp %269 : vector<5x5xf32>
    %cst_122 = arith.constant dense<0.000000e+00> : vector<5xf32>
    %271 = vector.multi_reduction <add>, %270, %cst_122 [1] : vector<5x5xf32> to vector<5xf32>
    %272 = vector.shape_cast %271 : vector<5xf32> to vector<5x1xf32>
    %273 = vector.broadcast %272 : vector<5x1xf32> to vector<5x5xf32>
    %274 = arith.divf %270, %273 : vector<5x5xf32>
    %cst_123 = arith.constant dense<0.000000e+00> : vector<5x16xf32>
    %275 = tpu.matmul %274, %260, %cst_123 {dimension_numbers = #tpu.dot_dimension_numbers<[1], [0], [0], [1], [0, 0, 1, 1], [], []>} : vector<5x5xf32>, vector<5x16xf32>, vector<5x16xf32> -> vector<5x16xf32>
    %276 = vector.extract_strided_slice %237 {offsets = [0, 32], sizes = [5, 16], strides = [1, 1]} : vector<5x64xf32> to vector<5x16xf32>
    %277 = vector.extract_strided_slice %238 {offsets = [0, 32], sizes = [5, 16], strides = [1, 1]} : vector<5x64xf32> to vector<5x16xf32>
    %278 = vector.extract_strided_slice %239 {offsets = [0, 32], sizes = [5, 16], strides = [1, 1]} : vector<5x64xf32> to vector<5x16xf32>
    %cst_124 = arith.constant dense<0.000000e+00> : vector<5x5xf32>
    %279 = tpu.matmul %276, %277, %cst_124 {dimension_numbers = #tpu.dot_dimension_numbers<[1], [1], [0], [0], [0, 0, 1, 0], [], []>} : vector<5x16xf32>, vector<5x16xf32>, vector<5x5xf32> -> vector<5x5xf32>
    %cst_125 = arith.constant 2.500000e-01 : f32
    %280 = vector.broadcast %cst_125 : f32 to vector<5x5xf32>
    %281 = arith.mulf %279, %280 : vector<5x5xf32>
    %cst_126 = arith.constant dense<0xFF800000> : vector<5xf32>
    %282 = vector.multi_reduction <maximumf>, %281, %cst_126 [1] : vector<5x5xf32> to vector<5xf32>
    %cst_127 = arith.constant 0xFF800000 : f32
    %283 = vector.broadcast %cst_127 : f32 to vector<5xf32>
    %284 = arith.maximumf %283, %282 : vector<5xf32>
    %285 = vector.shape_cast %284 : vector<5xf32> to vector<5x1xf32>
    %286 = vector.broadcast %285 : vector<5x1xf32> to vector<5x5xf32>
    %287 = arith.subf %281, %286 : vector<5x5xf32>
    %288 = math.exp %287 : vector<5x5xf32>
    %cst_128 = arith.constant dense<0.000000e+00> : vector<5xf32>
    %289 = vector.multi_reduction <add>, %288, %cst_128 [1] : vector<5x5xf32> to vector<5xf32>
    %290 = vector.shape_cast %289 : vector<5xf32> to vector<5x1xf32>
    %291 = vector.broadcast %290 : vector<5x1xf32> to vector<5x5xf32>
    %292 = arith.divf %288, %291 : vector<5x5xf32>
    %cst_129 = arith.constant dense<0.000000e+00> : vector<5x16xf32>
    %293 = tpu.matmul %292, %278, %cst_129 {dimension_numbers = #tpu.dot_dimension_numbers<[1], [0], [0], [1], [0, 0, 1, 1], [], []>} : vector<5x5xf32>, vector<5x16xf32>, vector<5x16xf32> -> vector<5x16xf32>
    %294 = vector.extract_strided_slice %237 {offsets = [0, 48], sizes = [5, 16], strides = [1, 1]} : vector<5x64xf32> to vector<5x16xf32>
    %295 = vector.extract_strided_slice %238 {offsets = [0, 48], sizes = [5, 16], strides = [1, 1]} : vector<5x64xf32> to vector<5x16xf32>
    %296 = vector.extract_strided_slice %239 {offsets = [0, 48], sizes = [5, 16], strides = [1, 1]} : vector<5x64xf32> to vector<5x16xf32>
    %cst_130 = arith.constant dense<0.000000e+00> : vector<5x5xf32>
    %297 = tpu.matmul %294, %295, %cst_130 {dimension_numbers = #tpu.dot_dimension_numbers<[1], [1], [0], [0], [0, 0, 1, 0], [], []>} : vector<5x16xf32>, vector<5x16xf32>, vector<5x5xf32> -> vector<5x5xf32>
    %cst_131 = arith.constant 2.500000e-01 : f32
    %298 = vector.broadcast %cst_131 : f32 to vector<5x5xf32>
    %299 = arith.mulf %297, %298 : vector<5x5xf32>
    %cst_132 = arith.constant dense<0xFF800000> : vector<5xf32>
    %300 = vector.multi_reduction <maximumf>, %299, %cst_132 [1] : vector<5x5xf32> to vector<5xf32>
    %cst_133 = arith.constant 0xFF800000 : f32
    %301 = vector.broadcast %cst_133 : f32 to vector<5xf32>
    %302 = arith.maximumf %301, %300 : vector<5xf32>
    %303 = vector.shape_cast %302 : vector<5xf32> to vector<5x1xf32>
    %304 = vector.broadcast %303 : vector<5x1xf32> to vector<5x5xf32>
    %305 = arith.subf %299, %304 : vector<5x5xf32>
    %306 = math.exp %305 : vector<5x5xf32>
    %cst_134 = arith.constant dense<0.000000e+00> : vector<5xf32>
    %307 = vector.multi_reduction <add>, %306, %cst_134 [1] : vector<5x5xf32> to vector<5xf32>
    %308 = vector.shape_cast %307 : vector<5xf32> to vector<5x1xf32>
    %309 = vector.broadcast %308 : vector<5x1xf32> to vector<5x5xf32>
    %310 = arith.divf %306, %309 : vector<5x5xf32>
    %cst_135 = arith.constant dense<0.000000e+00> : vector<5x16xf32>
    %311 = tpu.matmul %310, %296, %cst_135 {dimension_numbers = #tpu.dot_dimension_numbers<[1], [0], [0], [1], [0, 0, 1, 1], [], []>} : vector<5x5xf32>, vector<5x16xf32>, vector<5x16xf32> -> vector<5x16xf32>
    %312 = tpu.concatenate %257, %275, %293, %311 in 1 : vector<5x16xf32>, vector<5x16xf32>, vector<5x16xf32>, vector<5x16xf32> -> vector<5x64xf32>
    %c1_136 = arith.constant 1 : index
    %c0_137 = arith.constant 0 : index
    %c0_138 = arith.constant 0 : index
    %313 = vector.load %arg8[%c1_136, %c0_137, %c0_138] : memref<2x64x64xf32, #tpu.memory_space<vmem>>, vector<1x64x64xf32>
    %314 = vector.shape_cast %313 : vector<1x64x64xf32> to vector<64x64xf32>
    %cst_139 = arith.constant dense<0.000000e+00> : vector<5x64xf32>
    %315 = tpu.matmul %312, %314, %cst_139 {dimension_numbers = #tpu.dot_dimension_numbers<[1], [0], [0], [1], [0, 0, 1, 1], [], []>} : vector<5x64xf32>, vector<64x64xf32>, vector<5x64xf32> -> vector<5x64xf32>
    %316 = arith.addf %203, %315 : vector<5x64xf32>
    %c1_140 = arith.constant 1 : index
    %c0_141 = arith.constant 0 : index
    %c0_142 = arith.constant 0 : index
    %317 = vector.load %arg9[%c1_140, %c0_141, %c0_142] : memref<2x1x64xf32, #tpu.memory_space<vmem>>, vector<1x1x64xf32>
    %318 = vector.shape_cast %317 : vector<1x1x64xf32> to vector<1x64xf32>
    %319 = vector.broadcast %318 : vector<1x64xf32> to vector<5x64xf32>
    %320 = arith.addf %316, %319 : vector<5x64xf32>
    %c1_143 = arith.constant 1 : index
    %c0_144 = arith.constant 0 : index
    %c0_145 = arith.constant 0 : index
    %321 = vector.load %arg10[%c1_143, %c0_144, %c0_145] : memref<2x1x64xf32, #tpu.memory_space<vmem>>, vector<1x1x64xf32>
    %322 = vector.shape_cast %321 : vector<1x1x64xf32> to vector<1x64xf32>
    %c1_146 = arith.constant 1 : index
    %c0_147 = arith.constant 0 : index
    %c0_148 = arith.constant 0 : index
    %323 = vector.load %arg11[%c1_146, %c0_147, %c0_148] : memref<2x1x64xf32, #tpu.memory_space<vmem>>, vector<1x1x64xf32>
    %324 = vector.shape_cast %323 : vector<1x1x64xf32> to vector<1x64xf32>
    %cst_149 = arith.constant dense<0.000000e+00> : vector<5xf32>
    %325 = vector.multi_reduction <add>, %320, %cst_149 [1] : vector<5x64xf32> to vector<5xf32>
    %326 = vector.shape_cast %325 : vector<5xf32> to vector<5x1xf32>
    %cst_150 = arith.constant 6.400000e+01 : f32
    %327 = vector.broadcast %cst_150 : f32 to vector<5x1xf32>
    %328 = arith.divf %326, %327 : vector<5x1xf32>
    %329 = vector.broadcast %328 : vector<5x1xf32> to vector<5x64xf32>
    %330 = arith.subf %320, %329 : vector<5x64xf32>
    %331 = arith.mulf %330, %330 : vector<5x64xf32>
    %cst_151 = arith.constant dense<0.000000e+00> : vector<5xf32>
    %332 = vector.multi_reduction <add>, %331, %cst_151 [1] : vector<5x64xf32> to vector<5xf32>
    %333 = vector.shape_cast %332 : vector<5xf32> to vector<5x1xf32>
    %cst_152 = arith.constant 6.400000e+01 : f32
    %334 = vector.broadcast %cst_152 : f32 to vector<5x1xf32>
    %335 = arith.divf %333, %334 : vector<5x1xf32>
    %336 = vector.broadcast %328 : vector<5x1xf32> to vector<5x64xf32>
    %337 = arith.subf %320, %336 : vector<5x64xf32>
    %cst_153 = arith.constant 9.99999997E-7 : f32
    %338 = vector.broadcast %cst_153 : f32 to vector<5x1xf32>
    %339 = arith.addf %335, %338 : vector<5x1xf32>
    %340 = math.rsqrt %339 : vector<5x1xf32>
    %341 = vector.broadcast %340 : vector<5x1xf32> to vector<5x64xf32>
    %342 = arith.mulf %337, %341 : vector<5x64xf32>
    %343 = vector.broadcast %322 : vector<1x64xf32> to vector<5x64xf32>
    %344 = arith.mulf %342, %343 : vector<5x64xf32>
    %345 = vector.broadcast %324 : vector<1x64xf32> to vector<5x64xf32>
    %346 = arith.addf %344, %345 : vector<5x64xf32>
    %c1_154 = arith.constant 1 : index
    %c0_155 = arith.constant 0 : index
    %c0_156 = arith.constant 0 : index
    %347 = vector.load %arg12[%c1_154, %c0_155, %c0_156] : memref<2x64x128xf32, #tpu.memory_space<vmem>>, vector<1x64x128xf32>
    %348 = vector.shape_cast %347 : vector<1x64x128xf32> to vector<64x128xf32>
    %cst_157 = arith.constant dense<0.000000e+00> : vector<5x128xf32>
    %349 = tpu.matmul %346, %348, %cst_157 {dimension_numbers = #tpu.dot_dimension_numbers<[1], [0], [0], [1], [0, 0, 1, 1], [], []>} : vector<5x64xf32>, vector<64x128xf32>, vector<5x128xf32> -> vector<5x128xf32>
    %c1_158 = arith.constant 1 : index
    %c0_159 = arith.constant 0 : index
    %c0_160 = arith.constant 0 : index
    %350 = vector.load %arg13[%c1_158, %c0_159, %c0_160] : memref<2x1x128xf32, #tpu.memory_space<vmem>>, vector<1x1x128xf32>
    %351 = vector.shape_cast %350 : vector<1x1x128xf32> to vector<1x128xf32>
    %352 = vector.broadcast %351 : vector<1x128xf32> to vector<5x128xf32>
    %353 = arith.addf %349, %352 : vector<5x128xf32>
    %cst_161 = arith.constant 5.000000e-01 : f32
    %354 = vector.broadcast %cst_161 : f32 to vector<5x128xf32>
    %355 = arith.mulf %354, %353 : vector<5x128xf32>
    %cst_162 = arith.constant 0.707106769 : f32
    %356 = vector.broadcast %cst_162 : f32 to vector<5x128xf32>
    %357 = arith.mulf %353, %356 : vector<5x128xf32>
    %358 = math.absf %357 : vector<5x128xf32>
    %cst_163 = arith.constant 0.327591091 : f32
    %359 = vector.broadcast %cst_163 : f32 to vector<5x128xf32>
    %360 = arith.mulf %359, %358 : vector<5x128xf32>
    %cst_164 = arith.constant 1.000000e+00 : f32
    %361 = vector.broadcast %cst_164 : f32 to vector<5x128xf32>
    %362 = arith.addf %361, %360 : vector<5x128xf32>
    %cst_165 = arith.constant 1.000000e+00 : f32
    %363 = vector.broadcast %cst_165 : f32 to vector<5x128xf32>
    %364 = arith.divf %363, %362 : vector<5x128xf32>
    %cst_166 = arith.constant 1.06140542 : f32
    %365 = vector.broadcast %cst_166 : f32 to vector<5x128xf32>
    %366 = arith.mulf %365, %364 : vector<5x128xf32>
    %cst_167 = arith.constant -1.45315206 : f32
    %367 = vector.broadcast %cst_167 : f32 to vector<5x128xf32>
    %368 = arith.addf %366, %367 : vector<5x128xf32>
    %369 = arith.mulf %368, %364 : vector<5x128xf32>
    %cst_168 = arith.constant 1.42141378 : f32
    %370 = vector.broadcast %cst_168 : f32 to vector<5x128xf32>
    %371 = arith.addf %369, %370 : vector<5x128xf32>
    %372 = arith.mulf %371, %364 : vector<5x128xf32>
    %cst_169 = arith.constant -0.284496725 : f32
    %373 = vector.broadcast %cst_169 : f32 to vector<5x128xf32>
    %374 = arith.addf %372, %373 : vector<5x128xf32>
    %375 = arith.mulf %374, %364 : vector<5x128xf32>
    %cst_170 = arith.constant 0.254829586 : f32
    %376 = vector.broadcast %cst_170 : f32 to vector<5x128xf32>
    %377 = arith.addf %375, %376 : vector<5x128xf32>
    %378 = arith.mulf %377, %364 : vector<5x128xf32>
    %cst_171 = arith.constant 0.000000e+00 : f32
    %379 = vector.broadcast %cst_171 : f32 to vector<5x128xf32>
    %380 = arith.subf %379, %358 : vector<5x128xf32>
    %381 = arith.mulf %380, %358 : vector<5x128xf32>
    %382 = math.exp %381 : vector<5x128xf32>
    %383 = arith.mulf %378, %382 : vector<5x128xf32>
    %cst_172 = arith.constant 1.000000e+00 : f32
    %384 = vector.broadcast %cst_172 : f32 to vector<5x128xf32>
    %385 = arith.subf %384, %383 : vector<5x128xf32>
    %cst_173 = arith.constant 0.000000e+00 : f32
    %386 = vector.broadcast %cst_173 : f32 to vector<5x128xf32>
    %387 = arith.cmpf oge, %357, %386 : vector<5x128xf32>
    %cst_174 = arith.constant 0.000000e+00 : f32
    %388 = vector.broadcast %cst_174 : f32 to vector<5x128xf32>
    %389 = arith.subf %388, %385 : vector<5x128xf32>
    %390 = arith.select %387, %385, %389 : vector<5x128xi1>, vector<5x128xf32>
    %cst_175 = arith.constant 1.000000e+00 : f32
    %391 = vector.broadcast %cst_175 : f32 to vector<5x128xf32>
    %392 = arith.addf %391, %390 : vector<5x128xf32>
    %393 = arith.mulf %355, %392 : vector<5x128xf32>
    %c1_176 = arith.constant 1 : index
    %c0_177 = arith.constant 0 : index
    %c0_178 = arith.constant 0 : index
    %394 = vector.load %arg14[%c1_176, %c0_177, %c0_178] : memref<2x128x64xf32, #tpu.memory_space<vmem>>, vector<1x128x64xf32>
    %395 = vector.shape_cast %394 : vector<1x128x64xf32> to vector<128x64xf32>
    %cst_179 = arith.constant dense<0.000000e+00> : vector<5x64xf32>
    %396 = tpu.matmul %393, %395, %cst_179 {dimension_numbers = #tpu.dot_dimension_numbers<[1], [0], [0], [1], [0, 0, 1, 1], [], []>} : vector<5x128xf32>, vector<128x64xf32>, vector<5x64xf32> -> vector<5x64xf32>
    %397 = arith.addf %320, %396 : vector<5x64xf32>
    %c1_180 = arith.constant 1 : index
    %c0_181 = arith.constant 0 : index
    %c0_182 = arith.constant 0 : index
    %398 = vector.load %arg15[%c1_180, %c0_181, %c0_182] : memref<2x1x64xf32, #tpu.memory_space<vmem>>, vector<1x1x64xf32>
    %399 = vector.shape_cast %398 : vector<1x1x64xf32> to vector<1x64xf32>
    %400 = vector.broadcast %399 : vector<1x64xf32> to vector<5x64xf32>
    %401 = arith.addf %397, %400 : vector<5x64xf32>
    %c0_183 = arith.constant 0 : index
    %c0_184 = arith.constant 0 : index
    %402 = vector.load %arg16[%c0_183, %c0_184] : memref<1x64xf32, #tpu.memory_space<vmem>>, vector<1x64xf32>
    %c0_185 = arith.constant 0 : index
    %c0_186 = arith.constant 0 : index
    %403 = vector.load %arg17[%c0_185, %c0_186] : memref<1x64xf32, #tpu.memory_space<vmem>>, vector<1x64xf32>
    %cst_187 = arith.constant dense<0.000000e+00> : vector<5xf32>
    %404 = vector.multi_reduction <add>, %401, %cst_187 [1] : vector<5x64xf32> to vector<5xf32>
    %405 = vector.shape_cast %404 : vector<5xf32> to vector<5x1xf32>
    %cst_188 = arith.constant 6.400000e+01 : f32
    %406 = vector.broadcast %cst_188 : f32 to vector<5x1xf32>
    %407 = arith.divf %405, %406 : vector<5x1xf32>
    %408 = vector.broadcast %407 : vector<5x1xf32> to vector<5x64xf32>
    %409 = arith.subf %401, %408 : vector<5x64xf32>
    %410 = arith.mulf %409, %409 : vector<5x64xf32>
    %cst_189 = arith.constant dense<0.000000e+00> : vector<5xf32>
    %411 = vector.multi_reduction <add>, %410, %cst_189 [1] : vector<5x64xf32> to vector<5xf32>
    %412 = vector.shape_cast %411 : vector<5xf32> to vector<5x1xf32>
    %cst_190 = arith.constant 6.400000e+01 : f32
    %413 = vector.broadcast %cst_190 : f32 to vector<5x1xf32>
    %414 = arith.divf %412, %413 : vector<5x1xf32>
    %415 = vector.broadcast %407 : vector<5x1xf32> to vector<5x64xf32>
    %416 = arith.subf %401, %415 : vector<5x64xf32>
    %cst_191 = arith.constant 9.99999997E-7 : f32
    %417 = vector.broadcast %cst_191 : f32 to vector<5x1xf32>
    %418 = arith.addf %414, %417 : vector<5x1xf32>
    %419 = math.rsqrt %418 : vector<5x1xf32>
    %420 = vector.broadcast %419 : vector<5x1xf32> to vector<5x64xf32>
    %421 = arith.mulf %416, %420 : vector<5x64xf32>
    %422 = vector.broadcast %402 : vector<1x64xf32> to vector<5x64xf32>
    %423 = arith.mulf %421, %422 : vector<5x64xf32>
    %424 = vector.broadcast %403 : vector<1x64xf32> to vector<5x64xf32>
    %425 = arith.addf %423, %424 : vector<5x64xf32>
    %426 = vector.extract_strided_slice %425 {offsets = [0, 0], sizes = [1, 64], strides = [1, 1]} : vector<5x64xf32> to vector<1x64xf32>
    %c0_192 = arith.constant 0 : index
    %c0_193 = arith.constant 0 : index
    %427 = vector.load %arg18[%c0_192, %c0_193] : memref<64x128xf32, #tpu.memory_space<vmem>>, vector<64x128xf32>
    %cst_194 = arith.constant dense<0.000000e+00> : vector<1x128xf32>
    %428 = tpu.matmul %426, %427, %cst_194 {dimension_numbers = #tpu.dot_dimension_numbers<[1], [0], [0], [1], [0, 0, 1, 1], [], []>} : vector<1x64xf32>, vector<64x128xf32>, vector<1x128xf32> -> vector<1x128xf32>
    %c0_195 = arith.constant 0 : index
    %c0_196 = arith.constant 0 : index
    %429 = vector.load %arg19[%c0_195, %c0_196] : memref<1x128xf32, #tpu.memory_space<vmem>>, vector<1x128xf32>
    %430 = arith.addf %428, %429 : vector<1x128xf32>
    %c0_197 = arith.constant 0 : index
    %c0_198 = arith.constant 0 : index
    %c0_199 = arith.constant 0 : index
    %431 = vector.load %arg20[%c0_197, %c0_198, %c0_199] : memref<2x1x128xf32, #tpu.memory_space<vmem>>, vector<1x1x128xf32>
    %432 = vector.shape_cast %431 : vector<1x1x128xf32> to vector<1x128xf32>
    %433 = vector.shape_cast %430 : vector<1x128xf32> to vector<1x1x128xf32>
    tpu.vector_store %arg20[%c0_197, %c0_198, %c0_199], %433 {strides = array<i32>} : memref<2x1x128xf32, #tpu.memory_space<vmem>>, vector<1x1x128xf32>,
    %c1_200 = arith.constant 1 : index
    %c0_201 = arith.constant 0 : index
    %c0_202 = arith.constant 0 : index
    %434 = vector.load %arg1[%c1_200, %c0_201, %c0_202] : memref<2x5x192xf32, #tpu.memory_space<vmem>>, vector<1x5x192xf32>
    %435 = vector.shape_cast %434 : vector<1x5x192xf32> to vector<5x192xf32>
    %c0_203 = arith.constant 0 : index
    %c0_204 = arith.constant 0 : index
    %436 = vector.load %arg2[%c0_203, %c0_204] : memref<192x64xf32, #tpu.memory_space<vmem>>, vector<192x64xf32>
    %cst_205 = arith.constant dense<0.000000e+00> : vector<5x64xf32>
    %437 = tpu.matmul %435, %436, %cst_205 {dimension_numbers = #tpu.dot_dimension_numbers<[1], [0], [0], [1], [0, 0, 1, 1], [], []>} : vector<5x192xf32>, vector<192x64xf32>, vector<5x64xf32> -> vector<5x64xf32>
    %c0_206 = arith.constant 0 : index
    %c0_207 = arith.constant 0 : index
    %438 = vector.load %arg3[%c0_206, %c0_207] : memref<5x64xf32, #tpu.memory_space<vmem>>, vector<5x64xf32>
    %439 = arith.addf %437, %438 : vector<5x64xf32>
    %c0_208 = arith.constant 0 : index
    %c0_209 = arith.constant 0 : index
    %c0_210 = arith.constant 0 : index
    %440 = vector.load %arg4[%c0_208, %c0_209, %c0_210] : memref<2x1x64xf32, #tpu.memory_space<vmem>>, vector<1x1x64xf32>
    %441 = vector.shape_cast %440 : vector<1x1x64xf32> to vector<1x64xf32>
    %c0_211 = arith.constant 0 : index
    %c0_212 = arith.constant 0 : index
    %c0_213 = arith.constant 0 : index
    %442 = vector.load %arg5[%c0_211, %c0_212, %c0_213] : memref<2x1x64xf32, #tpu.memory_space<vmem>>, vector<1x1x64xf32>
    %443 = vector.shape_cast %442 : vector<1x1x64xf32> to vector<1x64xf32>
    %cst_214 = arith.constant dense<0.000000e+00> : vector<5xf32>
    %444 = vector.multi_reduction <add>, %439, %cst_214 [1] : vector<5x64xf32> to vector<5xf32>
    %445 = vector.shape_cast %444 : vector<5xf32> to vector<5x1xf32>
    %cst_215 = arith.constant 6.400000e+01 : f32
    %446 = vector.broadcast %cst_215 : f32 to vector<5x1xf32>
    %447 = arith.divf %445, %446 : vector<5x1xf32>
    %448 = vector.broadcast %447 : vector<5x1xf32> to vector<5x64xf32>
    %449 = arith.subf %439, %448 : vector<5x64xf32>
    %450 = arith.mulf %449, %449 : vector<5x64xf32>
    %cst_216 = arith.constant dense<0.000000e+00> : vector<5xf32>
    %451 = vector.multi_reduction <add>, %450, %cst_216 [1] : vector<5x64xf32> to vector<5xf32>
    %452 = vector.shape_cast %451 : vector<5xf32> to vector<5x1xf32>
    %cst_217 = arith.constant 6.400000e+01 : f32
    %453 = vector.broadcast %cst_217 : f32 to vector<5x1xf32>
    %454 = arith.divf %452, %453 : vector<5x1xf32>
    %455 = vector.broadcast %447 : vector<5x1xf32> to vector<5x64xf32>
    %456 = arith.subf %439, %455 : vector<5x64xf32>
    %cst_218 = arith.constant 9.99999997E-7 : f32
    %457 = vector.broadcast %cst_218 : f32 to vector<5x1xf32>
    %458 = arith.addf %454, %457 : vector<5x1xf32>
    %459 = math.rsqrt %458 : vector<5x1xf32>
    %460 = vector.broadcast %459 : vector<5x1xf32> to vector<5x64xf32>
    %461 = arith.mulf %456, %460 : vector<5x64xf32>
    %462 = vector.broadcast %441 : vector<1x64xf32> to vector<5x64xf32>
    %463 = arith.mulf %461, %462 : vector<5x64xf32>
    %464 = vector.broadcast %443 : vector<1x64xf32> to vector<5x64xf32>
    %465 = arith.addf %463, %464 : vector<5x64xf32>
    %c0_219 = arith.constant 0 : index
    %c0_220 = arith.constant 0 : index
    %c0_221 = arith.constant 0 : index
    %466 = vector.load %arg6[%c0_219, %c0_220, %c0_221] : memref<2x64x192xf32, #tpu.memory_space<vmem>>, vector<1x64x192xf32>
    %467 = vector.shape_cast %466 : vector<1x64x192xf32> to vector<64x192xf32>
    %cst_222 = arith.constant dense<0.000000e+00> : vector<5x192xf32>
    %468 = tpu.matmul %465, %467, %cst_222 {dimension_numbers = #tpu.dot_dimension_numbers<[1], [0], [0], [1], [0, 0, 1, 1], [], []>} : vector<5x64xf32>, vector<64x192xf32>, vector<5x192xf32> -> vector<5x192xf32>
    %c0_223 = arith.constant 0 : index
    %c0_224 = arith.constant 0 : index
    %c0_225 = arith.constant 0 : index
    %469 = vector.load %arg7[%c0_223, %c0_224, %c0_225] : memref<2x1x192xf32, #tpu.memory_space<vmem>>, vector<1x1x192xf32>
    %470 = vector.shape_cast %469 : vector<1x1x192xf32> to vector<1x192xf32>
    %471 = vector.broadcast %470 : vector<1x192xf32> to vector<5x192xf32>
    %472 = arith.addf %468, %471 : vector<5x192xf32>
    %473 = vector.extract_strided_slice %472 {offsets = [0, 0], sizes = [5, 64], strides = [1, 1]} : vector<5x192xf32> to vector<5x64xf32>
    %474 = vector.extract_strided_slice %472 {offsets = [0, 64], sizes = [5, 64], strides = [1, 1]} : vector<5x192xf32> to vector<5x64xf32>
    %475 = vector.extract_strided_slice %472 {offsets = [0, 128], sizes = [5, 64], strides = [1, 1]} : vector<5x192xf32> to vector<5x64xf32>
    %476 = vector.extract_strided_slice %473 {offsets = [0, 0], sizes = [5, 16], strides = [1, 1]} : vector<5x64xf32> to vector<5x16xf32>
    %477 = vector.extract_strided_slice %474 {offsets = [0, 0], sizes = [5, 16], strides = [1, 1]} : vector<5x64xf32> to vector<5x16xf32>
    %478 = vector.extract_strided_slice %475 {offsets = [0, 0], sizes = [5, 16], strides = [1, 1]} : vector<5x64xf32> to vector<5x16xf32>
    %cst_226 = arith.constant dense<0.000000e+00> : vector<5x5xf32>
    %479 = tpu.matmul %476, %477, %cst_226 {dimension_numbers = #tpu.dot_dimension_numbers<[1], [1], [0], [0], [0, 0, 1, 0], [], []>} : vector<5x16xf32>, vector<5x16xf32>, vector<5x5xf32> -> vector<5x5xf32>
    %cst_227 = arith.constant 2.500000e-01 : f32
    %480 = vector.broadcast %cst_227 : f32 to vector<5x5xf32>
    %481 = arith.mulf %479, %480 : vector<5x5xf32>
    %cst_228 = arith.constant dense<0xFF800000> : vector<5xf32>
    %482 = vector.multi_reduction <maximumf>, %481, %cst_228 [1] : vector<5x5xf32> to vector<5xf32>
    %cst_229 = arith.constant 0xFF800000 : f32
    %483 = vector.broadcast %cst_229 : f32 to vector<5xf32>
    %484 = arith.maximumf %483, %482 : vector<5xf32>
    %485 = vector.shape_cast %484 : vector<5xf32> to vector<5x1xf32>
    %486 = vector.broadcast %485 : vector<5x1xf32> to vector<5x5xf32>
    %487 = arith.subf %481, %486 : vector<5x5xf32>
    %488 = math.exp %487 : vector<5x5xf32>
    %cst_230 = arith.constant dense<0.000000e+00> : vector<5xf32>
    %489 = vector.multi_reduction <add>, %488, %cst_230 [1] : vector<5x5xf32> to vector<5xf32>
    %490 = vector.shape_cast %489 : vector<5xf32> to vector<5x1xf32>
    %491 = vector.broadcast %490 : vector<5x1xf32> to vector<5x5xf32>
    %492 = arith.divf %488, %491 : vector<5x5xf32>
    %cst_231 = arith.constant dense<0.000000e+00> : vector<5x16xf32>
    %493 = tpu.matmul %492, %478, %cst_231 {dimension_numbers = #tpu.dot_dimension_numbers<[1], [0], [0], [1], [0, 0, 1, 1], [], []>} : vector<5x5xf32>, vector<5x16xf32>, vector<5x16xf32> -> vector<5x16xf32>
    %494 = vector.extract_strided_slice %473 {offsets = [0, 16], sizes = [5, 16], strides = [1, 1]} : vector<5x64xf32> to vector<5x16xf32>
    %495 = vector.extract_strided_slice %474 {offsets = [0, 16], sizes = [5, 16], strides = [1, 1]} : vector<5x64xf32> to vector<5x16xf32>
    %496 = vector.extract_strided_slice %475 {offsets = [0, 16], sizes = [5, 16], strides = [1, 1]} : vector<5x64xf32> to vector<5x16xf32>
    %cst_232 = arith.constant dense<0.000000e+00> : vector<5x5xf32>
    %497 = tpu.matmul %494, %495, %cst_232 {dimension_numbers = #tpu.dot_dimension_numbers<[1], [1], [0], [0], [0, 0, 1, 0], [], []>} : vector<5x16xf32>, vector<5x16xf32>, vector<5x5xf32> -> vector<5x5xf32>
    %cst_233 = arith.constant 2.500000e-01 : f32
    %498 = vector.broadcast %cst_233 : f32 to vector<5x5xf32>
    %499 = arith.mulf %497, %498 : vector<5x5xf32>
    %cst_234 = arith.constant dense<0xFF800000> : vector<5xf32>
    %500 = vector.multi_reduction <maximumf>, %499, %cst_234 [1] : vector<5x5xf32> to vector<5xf32>
    %cst_235 = arith.constant 0xFF800000 : f32
    %501 = vector.broadcast %cst_235 : f32 to vector<5xf32>
    %502 = arith.maximumf %501, %500 : vector<5xf32>
    %503 = vector.shape_cast %502 : vector<5xf32> to vector<5x1xf32>
    %504 = vector.broadcast %503 : vector<5x1xf32> to vector<5x5xf32>
    %505 = arith.subf %499, %504 : vector<5x5xf32>
    %506 = math.exp %505 : vector<5x5xf32>
    %cst_236 = arith.constant dense<0.000000e+00> : vector<5xf32>
    %507 = vector.multi_reduction <add>, %506, %cst_236 [1] : vector<5x5xf32> to vector<5xf32>
    %508 = vector.shape_cast %507 : vector<5xf32> to vector<5x1xf32>
    %509 = vector.broadcast %508 : vector<5x1xf32> to vector<5x5xf32>
    %510 = arith.divf %506, %509 : vector<5x5xf32>
    %cst_237 = arith.constant dense<0.000000e+00> : vector<5x16xf32>
    %511 = tpu.matmul %510, %496, %cst_237 {dimension_numbers = #tpu.dot_dimension_numbers<[1], [0], [0], [1], [0, 0, 1, 1], [], []>} : vector<5x5xf32>, vector<5x16xf32>, vector<5x16xf32> -> vector<5x16xf32>
    %512 = vector.extract_strided_slice %473 {offsets = [0, 32], sizes = [5, 16], strides = [1, 1]} : vector<5x64xf32> to vector<5x16xf32>
    %513 = vector.extract_strided_slice %474 {offsets = [0, 32], sizes = [5, 16], strides = [1, 1]} : vector<5x64xf32> to vector<5x16xf32>
    %514 = vector.extract_strided_slice %475 {offsets = [0, 32], sizes = [5, 16], strides = [1, 1]} : vector<5x64xf32> to vector<5x16xf32>
    %cst_238 = arith.constant dense<0.000000e+00> : vector<5x5xf32>
    %515 = tpu.matmul %512, %513, %cst_238 {dimension_numbers = #tpu.dot_dimension_numbers<[1], [1], [0], [0], [0, 0, 1, 0], [], []>} : vector<5x16xf32>, vector<5x16xf32>, vector<5x5xf32> -> vector<5x5xf32>
    %cst_239 = arith.constant 2.500000e-01 : f32
    %516 = vector.broadcast %cst_239 : f32 to vector<5x5xf32>
    %517 = arith.mulf %515, %516 : vector<5x5xf32>
    %cst_240 = arith.constant dense<0xFF800000> : vector<5xf32>
    %518 = vector.multi_reduction <maximumf>, %517, %cst_240 [1] : vector<5x5xf32> to vector<5xf32>
    %cst_241 = arith.constant 0xFF800000 : f32
    %519 = vector.broadcast %cst_241 : f32 to vector<5xf32>
    %520 = arith.maximumf %519, %518 : vector<5xf32>
    %521 = vector.shape_cast %520 : vector<5xf32> to vector<5x1xf32>
    %522 = vector.broadcast %521 : vector<5x1xf32> to vector<5x5xf32>
    %523 = arith.subf %517, %522 : vector<5x5xf32>
    %524 = math.exp %523 : vector<5x5xf32>
    %cst_242 = arith.constant dense<0.000000e+00> : vector<5xf32>
    %525 = vector.multi_reduction <add>, %524, %cst_242 [1] : vector<5x5xf32> to vector<5xf32>
    %526 = vector.shape_cast %525 : vector<5xf32> to vector<5x1xf32>
    %527 = vector.broadcast %526 : vector<5x1xf32> to vector<5x5xf32>
    %528 = arith.divf %524, %527 : vector<5x5xf32>
    %cst_243 = arith.constant dense<0.000000e+00> : vector<5x16xf32>
    %529 = tpu.matmul %528, %514, %cst_243 {dimension_numbers = #tpu.dot_dimension_numbers<[1], [0], [0], [1], [0, 0, 1, 1], [], []>} : vector<5x5xf32>, vector<5x16xf32>, vector<5x16xf32> -> vector<5x16xf32>
    %530 = vector.extract_strided_slice %473 {offsets = [0, 48], sizes = [5, 16], strides = [1, 1]} : vector<5x64xf32> to vector<5x16xf32>
    %531 = vector.extract_strided_slice %474 {offsets = [0, 48], sizes = [5, 16], strides = [1, 1]} : vector<5x64xf32> to vector<5x16xf32>
    %532 = vector.extract_strided_slice %475 {offsets = [0, 48], sizes = [5, 16], strides = [1, 1]} : vector<5x64xf32> to vector<5x16xf32>
    %cst_244 = arith.constant dense<0.000000e+00> : vector<5x5xf32>
    %533 = tpu.matmul %530, %531, %cst_244 {dimension_numbers = #tpu.dot_dimension_numbers<[1], [1], [0], [0], [0, 0, 1, 0], [], []>} : vector<5x16xf32>, vector<5x16xf32>, vector<5x5xf32> -> vector<5x5xf32>
    %cst_245 = arith.constant 2.500000e-01 : f32
    %534 = vector.broadcast %cst_245 : f32 to vector<5x5xf32>
    %535 = arith.mulf %533, %534 : vector<5x5xf32>
    %cst_246 = arith.constant dense<0xFF800000> : vector<5xf32>
    %536 = vector.multi_reduction <maximumf>, %535, %cst_246 [1] : vector<5x5xf32> to vector<5xf32>
    %cst_247 = arith.constant 0xFF800000 : f32
    %537 = vector.broadcast %cst_247 : f32 to vector<5xf32>
    %538 = arith.maximumf %537, %536 : vector<5xf32>
    %539 = vector.shape_cast %538 : vector<5xf32> to vector<5x1xf32>
    %540 = vector.broadcast %539 : vector<5x1xf32> to vector<5x5xf32>
    %541 = arith.subf %535, %540 : vector<5x5xf32>
    %542 = math.exp %541 : vector<5x5xf32>
    %cst_248 = arith.constant dense<0.000000e+00> : vector<5xf32>
    %543 = vector.multi_reduction <add>, %542, %cst_248 [1] : vector<5x5xf32> to vector<5xf32>
    %544 = vector.shape_cast %543 : vector<5xf32> to vector<5x1xf32>
    %545 = vector.broadcast %544 : vector<5x1xf32> to vector<5x5xf32>
    %546 = arith.divf %542, %545 : vector<5x5xf32>
    %cst_249 = arith.constant dense<0.000000e+00> : vector<5x16xf32>
    %547 = tpu.matmul %546, %532, %cst_249 {dimension_numbers = #tpu.dot_dimension_numbers<[1], [0], [0], [1], [0, 0, 1, 1], [], []>} : vector<5x5xf32>, vector<5x16xf32>, vector<5x16xf32> -> vector<5x16xf32>
    %548 = tpu.concatenate %493, %511, %529, %547 in 1 : vector<5x16xf32>, vector<5x16xf32>, vector<5x16xf32>, vector<5x16xf32> -> vector<5x64xf32>
    %c0_250 = arith.constant 0 : index
    %c0_251 = arith.constant 0 : index
    %c0_252 = arith.constant 0 : index
    %549 = vector.load %arg8[%c0_250, %c0_251, %c0_252] : memref<2x64x64xf32, #tpu.memory_space<vmem>>, vector<1x64x64xf32>
    %550 = vector.shape_cast %549 : vector<1x64x64xf32> to vector<64x64xf32>
    %cst_253 = arith.constant dense<0.000000e+00> : vector<5x64xf32>
    %551 = tpu.matmul %548, %550, %cst_253 {dimension_numbers = #tpu.dot_dimension_numbers<[1], [0], [0], [1], [0, 0, 1, 1], [], []>} : vector<5x64xf32>, vector<64x64xf32>, vector<5x64xf32> -> vector<5x64xf32>
    %552 = arith.addf %439, %551 : vector<5x64xf32>
    %c0_254 = arith.constant 0 : index
    %c0_255 = arith.constant 0 : index
    %c0_256 = arith.constant 0 : index
    %553 = vector.load %arg9[%c0_254, %c0_255, %c0_256] : memref<2x1x64xf32, #tpu.memory_space<vmem>>, vector<1x1x64xf32>
    %554 = vector.shape_cast %553 : vector<1x1x64xf32> to vector<1x64xf32>
    %555 = vector.broadcast %554 : vector<1x64xf32> to vector<5x64xf32>
    %556 = arith.addf %552, %555 : vector<5x64xf32>
    %c0_257 = arith.constant 0 : index
    %c0_258 = arith.constant 0 : index
    %c0_259 = arith.constant 0 : index
    %557 = vector.load %arg10[%c0_257, %c0_258, %c0_259] : memref<2x1x64xf32, #tpu.memory_space<vmem>>, vector<1x1x64xf32>
    %558 = vector.shape_cast %557 : vector<1x1x64xf32> to vector<1x64xf32>
    %c0_260 = arith.constant 0 : index
    %c0_261 = arith.constant 0 : index
    %c0_262 = arith.constant 0 : index
    %559 = vector.load %arg11[%c0_260, %c0_261, %c0_262] : memref<2x1x64xf32, #tpu.memory_space<vmem>>, vector<1x1x64xf32>
    %560 = vector.shape_cast %559 : vector<1x1x64xf32> to vector<1x64xf32>
    %cst_263 = arith.constant dense<0.000000e+00> : vector<5xf32>
    %561 = vector.multi_reduction <add>, %556, %cst_263 [1] : vector<5x64xf32> to vector<5xf32>
    %562 = vector.shape_cast %561 : vector<5xf32> to vector<5x1xf32>
    %cst_264 = arith.constant 6.400000e+01 : f32
    %563 = vector.broadcast %cst_264 : f32 to vector<5x1xf32>
    %564 = arith.divf %562, %563 : vector<5x1xf32>
    %565 = vector.broadcast %564 : vector<5x1xf32> to vector<5x64xf32>
    %566 = arith.subf %556, %565 : vector<5x64xf32>
    %567 = arith.mulf %566, %566 : vector<5x64xf32>
    %cst_265 = arith.constant dense<0.000000e+00> : vector<5xf32>
    %568 = vector.multi_reduction <add>, %567, %cst_265 [1] : vector<5x64xf32> to vector<5xf32>
    %569 = vector.shape_cast %568 : vector<5xf32> to vector<5x1xf32>
    %cst_266 = arith.constant 6.400000e+01 : f32
    %570 = vector.broadcast %cst_266 : f32 to vector<5x1xf32>
    %571 = arith.divf %569, %570 : vector<5x1xf32>
    %572 = vector.broadcast %564 : vector<5x1xf32> to vector<5x64xf32>
    %573 = arith.subf %556, %572 : vector<5x64xf32>
    %cst_267 = arith.constant 9.99999997E-7 : f32
    %574 = vector.broadcast %cst_267 : f32 to vector<5x1xf32>
    %575 = arith.addf %571, %574 : vector<5x1xf32>
    %576 = math.rsqrt %575 : vector<5x1xf32>
    %577 = vector.broadcast %576 : vector<5x1xf32> to vector<5x64xf32>
    %578 = arith.mulf %573, %577 : vector<5x64xf32>
    %579 = vector.broadcast %558 : vector<1x64xf32> to vector<5x64xf32>
    %580 = arith.mulf %578, %579 : vector<5x64xf32>
    %581 = vector.broadcast %560 : vector<1x64xf32> to vector<5x64xf32>
    %582 = arith.addf %580, %581 : vector<5x64xf32>
    %c0_268 = arith.constant 0 : index
    %c0_269 = arith.constant 0 : index
    %c0_270 = arith.constant 0 : index
    %583 = vector.load %arg12[%c0_268, %c0_269, %c0_270] : memref<2x64x128xf32, #tpu.memory_space<vmem>>, vector<1x64x128xf32>
    %584 = vector.shape_cast %583 : vector<1x64x128xf32> to vector<64x128xf32>
    %cst_271 = arith.constant dense<0.000000e+00> : vector<5x128xf32>
    %585 = tpu.matmul %582, %584, %cst_271 {dimension_numbers = #tpu.dot_dimension_numbers<[1], [0], [0], [1], [0, 0, 1, 1], [], []>} : vector<5x64xf32>, vector<64x128xf32>, vector<5x128xf32> -> vector<5x128xf32>
    %c0_272 = arith.constant 0 : index
    %c0_273 = arith.constant 0 : index
    %c0_274 = arith.constant 0 : index
    %586 = vector.load %arg13[%c0_272, %c0_273, %c0_274] : memref<2x1x128xf32, #tpu.memory_space<vmem>>, vector<1x1x128xf32>
    %587 = vector.shape_cast %586 : vector<1x1x128xf32> to vector<1x128xf32>
    %588 = vector.broadcast %587 : vector<1x128xf32> to vector<5x128xf32>
    %589 = arith.addf %585, %588 : vector<5x128xf32>
    %cst_275 = arith.constant 5.000000e-01 : f32
    %590 = vector.broadcast %cst_275 : f32 to vector<5x128xf32>
    %591 = arith.mulf %590, %589 : vector<5x128xf32>
    %cst_276 = arith.constant 0.707106769 : f32
    %592 = vector.broadcast %cst_276 : f32 to vector<5x128xf32>
    %593 = arith.mulf %589, %592 : vector<5x128xf32>
    %594 = math.absf %593 : vector<5x128xf32>
    %cst_277 = arith.constant 0.327591091 : f32
    %595 = vector.broadcast %cst_277 : f32 to vector<5x128xf32>
    %596 = arith.mulf %595, %594 : vector<5x128xf32>
    %cst_278 = arith.constant 1.000000e+00 : f32
    %597 = vector.broadcast %cst_278 : f32 to vector<5x128xf32>
    %598 = arith.addf %597, %596 : vector<5x128xf32>
    %cst_279 = arith.constant 1.000000e+00 : f32
    %599 = vector.broadcast %cst_279 : f32 to vector<5x128xf32>
    %600 = arith.divf %599, %598 : vector<5x128xf32>
    %cst_280 = arith.constant 1.06140542 : f32
    %601 = vector.broadcast %cst_280 : f32 to vector<5x128xf32>
    %602 = arith.mulf %601, %600 : vector<5x128xf32>
    %cst_281 = arith.constant -1.45315206 : f32
    %603 = vector.broadcast %cst_281 : f32 to vector<5x128xf32>
    %604 = arith.addf %602, %603 : vector<5x128xf32>
    %605 = arith.mulf %604, %600 : vector<5x128xf32>
    %cst_282 = arith.constant 1.42141378 : f32
    %606 = vector.broadcast %cst_282 : f32 to vector<5x128xf32>
    %607 = arith.addf %605, %606 : vector<5x128xf32>
    %608 = arith.mulf %607, %600 : vector<5x128xf32>
    %cst_283 = arith.constant -0.284496725 : f32
    %609 = vector.broadcast %cst_283 : f32 to vector<5x128xf32>
    %610 = arith.addf %608, %609 : vector<5x128xf32>
    %611 = arith.mulf %610, %600 : vector<5x128xf32>
    %cst_284 = arith.constant 0.254829586 : f32
    %612 = vector.broadcast %cst_284 : f32 to vector<5x128xf32>
    %613 = arith.addf %611, %612 : vector<5x128xf32>
    %614 = arith.mulf %613, %600 : vector<5x128xf32>
    %cst_285 = arith.constant 0.000000e+00 : f32
    %615 = vector.broadcast %cst_285 : f32 to vector<5x128xf32>
    %616 = arith.subf %615, %594 : vector<5x128xf32>
    %617 = arith.mulf %616, %594 : vector<5x128xf32>
    %618 = math.exp %617 : vector<5x128xf32>
    %619 = arith.mulf %614, %618 : vector<5x128xf32>
    %cst_286 = arith.constant 1.000000e+00 : f32
    %620 = vector.broadcast %cst_286 : f32 to vector<5x128xf32>
    %621 = arith.subf %620, %619 : vector<5x128xf32>
    %cst_287 = arith.constant 0.000000e+00 : f32
    %622 = vector.broadcast %cst_287 : f32 to vector<5x128xf32>
    %623 = arith.cmpf oge, %593, %622 : vector<5x128xf32>
    %cst_288 = arith.constant 0.000000e+00 : f32
    %624 = vector.broadcast %cst_288 : f32 to vector<5x128xf32>
    %625 = arith.subf %624, %621 : vector<5x128xf32>
    %626 = arith.select %623, %621, %625 : vector<5x128xi1>, vector<5x128xf32>
    %cst_289 = arith.constant 1.000000e+00 : f32
    %627 = vector.broadcast %cst_289 : f32 to vector<5x128xf32>
    %628 = arith.addf %627, %626 : vector<5x128xf32>
    %629 = arith.mulf %591, %628 : vector<5x128xf32>
    %c0_290 = arith.constant 0 : index
    %c0_291 = arith.constant 0 : index
    %c0_292 = arith.constant 0 : index
    %630 = vector.load %arg14[%c0_290, %c0_291, %c0_292] : memref<2x128x64xf32, #tpu.memory_space<vmem>>, vector<1x128x64xf32>
    %631 = vector.shape_cast %630 : vector<1x128x64xf32> to vector<128x64xf32>
    %cst_293 = arith.constant dense<0.000000e+00> : vector<5x64xf32>
    %632 = tpu.matmul %629, %631, %cst_293 {dimension_numbers = #tpu.dot_dimension_numbers<[1], [0], [0], [1], [0, 0, 1, 1], [], []>} : vector<5x128xf32>, vector<128x64xf32>, vector<5x64xf32> -> vector<5x64xf32>
    %633 = arith.addf %556, %632 : vector<5x64xf32>
    %c0_294 = arith.constant 0 : index
    %c0_295 = arith.constant 0 : index
    %c0_296 = arith.constant 0 : index
    %634 = vector.load %arg15[%c0_294, %c0_295, %c0_296] : memref<2x1x64xf32, #tpu.memory_space<vmem>>, vector<1x1x64xf32>
    %635 = vector.shape_cast %634 : vector<1x1x64xf32> to vector<1x64xf32>
    %636 = vector.broadcast %635 : vector<1x64xf32> to vector<5x64xf32>
    %637 = arith.addf %633, %636 : vector<5x64xf32>
    %c1_297 = arith.constant 1 : index
    %c0_298 = arith.constant 0 : index
    %c0_299 = arith.constant 0 : index
    %638 = vector.load %arg4[%c1_297, %c0_298, %c0_299] : memref<2x1x64xf32, #tpu.memory_space<vmem>>, vector<1x1x64xf32>
    %639 = vector.shape_cast %638 : vector<1x1x64xf32> to vector<1x64xf32>
    %c1_300 = arith.constant 1 : index
    %c0_301 = arith.constant 0 : index
    %c0_302 = arith.constant 0 : index
    %640 = vector.load %arg5[%c1_300, %c0_301, %c0_302] : memref<2x1x64xf32, #tpu.memory_space<vmem>>, vector<1x1x64xf32>
    %641 = vector.shape_cast %640 : vector<1x1x64xf32> to vector<1x64xf32>
    %cst_303 = arith.constant dense<0.000000e+00> : vector<5xf32>
    %642 = vector.multi_reduction <add>, %637, %cst_303 [1] : vector<5x64xf32> to vector<5xf32>
    %643 = vector.shape_cast %642 : vector<5xf32> to vector<5x1xf32>
    %cst_304 = arith.constant 6.400000e+01 : f32
    %644 = vector.broadcast %cst_304 : f32 to vector<5x1xf32>
    %645 = arith.divf %643, %644 : vector<5x1xf32>
    %646 = vector.broadcast %645 : vector<5x1xf32> to vector<5x64xf32>
    %647 = arith.subf %637, %646 : vector<5x64xf32>
    %648 = arith.mulf %647, %647 : vector<5x64xf32>
    %cst_305 = arith.constant dense<0.000000e+00> : vector<5xf32>
    %649 = vector.multi_reduction <add>, %648, %cst_305 [1] : vector<5x64xf32> to vector<5xf32>
    %650 = vector.shape_cast %649 : vector<5xf32> to vector<5x1xf32>
    %cst_306 = arith.constant 6.400000e+01 : f32
    %651 = vector.broadcast %cst_306 : f32 to vector<5x1xf32>
    %652 = arith.divf %650, %651 : vector<5x1xf32>
    %653 = vector.broadcast %645 : vector<5x1xf32> to vector<5x64xf32>
    %654 = arith.subf %637, %653 : vector<5x64xf32>
    %cst_307 = arith.constant 9.99999997E-7 : f32
    %655 = vector.broadcast %cst_307 : f32 to vector<5x1xf32>
    %656 = arith.addf %652, %655 : vector<5x1xf32>
    %657 = math.rsqrt %656 : vector<5x1xf32>
    %658 = vector.broadcast %657 : vector<5x1xf32> to vector<5x64xf32>
    %659 = arith.mulf %654, %658 : vector<5x64xf32>
    %660 = vector.broadcast %639 : vector<1x64xf32> to vector<5x64xf32>
    %661 = arith.mulf %659, %660 : vector<5x64xf32>
    %662 = vector.broadcast %641 : vector<1x64xf32> to vector<5x64xf32>
    %663 = arith.addf %661, %662 : vector<5x64xf32>
    %c1_308 = arith.constant 1 : index
    %c0_309 = arith.constant 0 : index
    %c0_310 = arith.constant 0 : index
    %664 = vector.load %arg6[%c1_308, %c0_309, %c0_310] : memref<2x64x192xf32, #tpu.memory_space<vmem>>, vector<1x64x192xf32>
    %665 = vector.shape_cast %664 : vector<1x64x192xf32> to vector<64x192xf32>
    %cst_311 = arith.constant dense<0.000000e+00> : vector<5x192xf32>
    %666 = tpu.matmul %663, %665, %cst_311 {dimension_numbers = #tpu.dot_dimension_numbers<[1], [0], [0], [1], [0, 0, 1, 1], [], []>} : vector<5x64xf32>, vector<64x192xf32>, vector<5x192xf32> -> vector<5x192xf32>
    %c1_312 = arith.constant 1 : index
    %c0_313 = arith.constant 0 : index
    %c0_314 = arith.constant 0 : index
    %667 = vector.load %arg7[%c1_312, %c0_313, %c0_314] : memref<2x1x192xf32, #tpu.memory_space<vmem>>, vector<1x1x192xf32>
    %668 = vector.shape_cast %667 : vector<1x1x192xf32> to vector<1x192xf32>
    %669 = vector.broadcast %668 : vector<1x192xf32> to vector<5x192xf32>
    %670 = arith.addf %666, %669 : vector<5x192xf32>
    %671 = vector.extract_strided_slice %670 {offsets = [0, 0], sizes = [5, 64], strides = [1, 1]} : vector<5x192xf32> to vector<5x64xf32>
    %672 = vector.extract_strided_slice %670 {offsets = [0, 64], sizes = [5, 64], strides = [1, 1]} : vector<5x192xf32> to vector<5x64xf32>
    %673 = vector.extract_strided_slice %670 {offsets = [0, 128], sizes = [5, 64], strides = [1, 1]} : vector<5x192xf32> to vector<5x64xf32>
    %674 = vector.extract_strided_slice %671 {offsets = [0, 0], sizes = [5, 16], strides = [1, 1]} : vector<5x64xf32> to vector<5x16xf32>
    %675 = vector.extract_strided_slice %672 {offsets = [0, 0], sizes = [5, 16], strides = [1, 1]} : vector<5x64xf32> to vector<5x16xf32>
    %676 = vector.extract_strided_slice %673 {offsets = [0, 0], sizes = [5, 16], strides = [1, 1]} : vector<5x64xf32> to vector<5x16xf32>
    %cst_315 = arith.constant dense<0.000000e+00> : vector<5x5xf32>
    %677 = tpu.matmul %674, %675, %cst_315 {dimension_numbers = #tpu.dot_dimension_numbers<[1], [1], [0], [0], [0, 0, 1, 0], [], []>} : vector<5x16xf32>, vector<5x16xf32>, vector<5x5xf32> -> vector<5x5xf32>
    %cst_316 = arith.constant 2.500000e-01 : f32
    %678 = vector.broadcast %cst_316 : f32 to vector<5x5xf32>
    %679 = arith.mulf %677, %678 : vector<5x5xf32>
    %cst_317 = arith.constant dense<0xFF800000> : vector<5xf32>
    %680 = vector.multi_reduction <maximumf>, %679, %cst_317 [1] : vector<5x5xf32> to vector<5xf32>
    %cst_318 = arith.constant 0xFF800000 : f32
    %681 = vector.broadcast %cst_318 : f32 to vector<5xf32>
    %682 = arith.maximumf %681, %680 : vector<5xf32>
    %683 = vector.shape_cast %682 : vector<5xf32> to vector<5x1xf32>
    %684 = vector.broadcast %683 : vector<5x1xf32> to vector<5x5xf32>
    %685 = arith.subf %679, %684 : vector<5x5xf32>
    %686 = math.exp %685 : vector<5x5xf32>
    %cst_319 = arith.constant dense<0.000000e+00> : vector<5xf32>
    %687 = vector.multi_reduction <add>, %686, %cst_319 [1] : vector<5x5xf32> to vector<5xf32>
    %688 = vector.shape_cast %687 : vector<5xf32> to vector<5x1xf32>
    %689 = vector.broadcast %688 : vector<5x1xf32> to vector<5x5xf32>
    %690 = arith.divf %686, %689 : vector<5x5xf32>
    %cst_320 = arith.constant dense<0.000000e+00> : vector<5x16xf32>
    %691 = tpu.matmul %690, %676, %cst_320 {dimension_numbers = #tpu.dot_dimension_numbers<[1], [0], [0], [1], [0, 0, 1, 1], [], []>} : vector<5x5xf32>, vector<5x16xf32>, vector<5x16xf32> -> vector<5x16xf32>
    %692 = vector.extract_strided_slice %671 {offsets = [0, 16], sizes = [5, 16], strides = [1, 1]} : vector<5x64xf32> to vector<5x16xf32>
    %693 = vector.extract_strided_slice %672 {offsets = [0, 16], sizes = [5, 16], strides = [1, 1]} : vector<5x64xf32> to vector<5x16xf32>
    %694 = vector.extract_strided_slice %673 {offsets = [0, 16], sizes = [5, 16], strides = [1, 1]} : vector<5x64xf32> to vector<5x16xf32>
    %cst_321 = arith.constant dense<0.000000e+00> : vector<5x5xf32>
    %695 = tpu.matmul %692, %693, %cst_321 {dimension_numbers = #tpu.dot_dimension_numbers<[1], [1], [0], [0], [0, 0, 1, 0], [], []>} : vector<5x16xf32>, vector<5x16xf32>, vector<5x5xf32> -> vector<5x5xf32>
    %cst_322 = arith.constant 2.500000e-01 : f32
    %696 = vector.broadcast %cst_322 : f32 to vector<5x5xf32>
    %697 = arith.mulf %695, %696 : vector<5x5xf32>
    %cst_323 = arith.constant dense<0xFF800000> : vector<5xf32>
    %698 = vector.multi_reduction <maximumf>, %697, %cst_323 [1] : vector<5x5xf32> to vector<5xf32>
    %cst_324 = arith.constant 0xFF800000 : f32
    %699 = vector.broadcast %cst_324 : f32 to vector<5xf32>
    %700 = arith.maximumf %699, %698 : vector<5xf32>
    %701 = vector.shape_cast %700 : vector<5xf32> to vector<5x1xf32>
    %702 = vector.broadcast %701 : vector<5x1xf32> to vector<5x5xf32>
    %703 = arith.subf %697, %702 : vector<5x5xf32>
    %704 = math.exp %703 : vector<5x5xf32>
    %cst_325 = arith.constant dense<0.000000e+00> : vector<5xf32>
    %705 = vector.multi_reduction <add>, %704, %cst_325 [1] : vector<5x5xf32> to vector<5xf32>
    %706 = vector.shape_cast %705 : vector<5xf32> to vector<5x1xf32>
    %707 = vector.broadcast %706 : vector<5x1xf32> to vector<5x5xf32>
    %708 = arith.divf %704, %707 : vector<5x5xf32>
    %cst_326 = arith.constant dense<0.000000e+00> : vector<5x16xf32>
    %709 = tpu.matmul %708, %694, %cst_326 {dimension_numbers = #tpu.dot_dimension_numbers<[1], [0], [0], [1], [0, 0, 1, 1], [], []>} : vector<5x5xf32>, vector<5x16xf32>, vector<5x16xf32> -> vector<5x16xf32>
    %710 = vector.extract_strided_slice %671 {offsets = [0, 32], sizes = [5, 16], strides = [1, 1]} : vector<5x64xf32> to vector<5x16xf32>
    %711 = vector.extract_strided_slice %672 {offsets = [0, 32], sizes = [5, 16], strides = [1, 1]} : vector<5x64xf32> to vector<5x16xf32>
    %712 = vector.extract_strided_slice %673 {offsets = [0, 32], sizes = [5, 16], strides = [1, 1]} : vector<5x64xf32> to vector<5x16xf32>
    %cst_327 = arith.constant dense<0.000000e+00> : vector<5x5xf32>
    %713 = tpu.matmul %710, %711, %cst_327 {dimension_numbers = #tpu.dot_dimension_numbers<[1], [1], [0], [0], [0, 0, 1, 0], [], []>} : vector<5x16xf32>, vector<5x16xf32>, vector<5x5xf32> -> vector<5x5xf32>
    %cst_328 = arith.constant 2.500000e-01 : f32
    %714 = vector.broadcast %cst_328 : f32 to vector<5x5xf32>
    %715 = arith.mulf %713, %714 : vector<5x5xf32>
    %cst_329 = arith.constant dense<0xFF800000> : vector<5xf32>
    %716 = vector.multi_reduction <maximumf>, %715, %cst_329 [1] : vector<5x5xf32> to vector<5xf32>
    %cst_330 = arith.constant 0xFF800000 : f32
    %717 = vector.broadcast %cst_330 : f32 to vector<5xf32>
    %718 = arith.maximumf %717, %716 : vector<5xf32>
    %719 = vector.shape_cast %718 : vector<5xf32> to vector<5x1xf32>
    %720 = vector.broadcast %719 : vector<5x1xf32> to vector<5x5xf32>
    %721 = arith.subf %715, %720 : vector<5x5xf32>
    %722 = math.exp %721 : vector<5x5xf32>
    %cst_331 = arith.constant dense<0.000000e+00> : vector<5xf32>
    %723 = vector.multi_reduction <add>, %722, %cst_331 [1] : vector<5x5xf32> to vector<5xf32>
    %724 = vector.shape_cast %723 : vector<5xf32> to vector<5x1xf32>
    %725 = vector.broadcast %724 : vector<5x1xf32> to vector<5x5xf32>
    %726 = arith.divf %722, %725 : vector<5x5xf32>
    %cst_332 = arith.constant dense<0.000000e+00> : vector<5x16xf32>
    %727 = tpu.matmul %726, %712, %cst_332 {dimension_numbers = #tpu.dot_dimension_numbers<[1], [0], [0], [1], [0, 0, 1, 1], [], []>} : vector<5x5xf32>, vector<5x16xf32>, vector<5x16xf32> -> vector<5x16xf32>
    %728 = vector.extract_strided_slice %671 {offsets = [0, 48], sizes = [5, 16], strides = [1, 1]} : vector<5x64xf32> to vector<5x16xf32>
    %729 = vector.extract_strided_slice %672 {offsets = [0, 48], sizes = [5, 16], strides = [1, 1]} : vector<5x64xf32> to vector<5x16xf32>
    %730 = vector.extract_strided_slice %673 {offsets = [0, 48], sizes = [5, 16], strides = [1, 1]} : vector<5x64xf32> to vector<5x16xf32>
    %cst_333 = arith.constant dense<0.000000e+00> : vector<5x5xf32>
    %731 = tpu.matmul %728, %729, %cst_333 {dimension_numbers = #tpu.dot_dimension_numbers<[1], [1], [0], [0], [0, 0, 1, 0], [], []>} : vector<5x16xf32>, vector<5x16xf32>, vector<5x5xf32> -> vector<5x5xf32>
    %cst_334 = arith.constant 2.500000e-01 : f32
    %732 = vector.broadcast %cst_334 : f32 to vector<5x5xf32>
    %733 = arith.mulf %731, %732 : vector<5x5xf32>
    %cst_335 = arith.constant dense<0xFF800000> : vector<5xf32>
    %734 = vector.multi_reduction <maximumf>, %733, %cst_335 [1] : vector<5x5xf32> to vector<5xf32>
    %cst_336 = arith.constant 0xFF800000 : f32
    %735 = vector.broadcast %cst_336 : f32 to vector<5xf32>
    %736 = arith.maximumf %735, %734 : vector<5xf32>
    %737 = vector.shape_cast %736 : vector<5xf32> to vector<5x1xf32>
    %738 = vector.broadcast %737 : vector<5x1xf32> to vector<5x5xf32>
    %739 = arith.subf %733, %738 : vector<5x5xf32>
    %740 = math.exp %739 : vector<5x5xf32>
    %cst_337 = arith.constant dense<0.000000e+00> : vector<5xf32>
    %741 = vector.multi_reduction <add>, %740, %cst_337 [1] : vector<5x5xf32> to vector<5xf32>
    %742 = vector.shape_cast %741 : vector<5xf32> to vector<5x1xf32>
    %743 = vector.broadcast %742 : vector<5x1xf32> to vector<5x5xf32>
    %744 = arith.divf %740, %743 : vector<5x5xf32>
    %cst_338 = arith.constant dense<0.000000e+00> : vector<5x16xf32>
    %745 = tpu.matmul %744, %730, %cst_338 {dimension_numbers = #tpu.dot_dimension_numbers<[1], [0], [0], [1], [0, 0, 1, 1], [], []>} : vector<5x5xf32>, vector<5x16xf32>, vector<5x16xf32> -> vector<5x16xf32>
    %746 = tpu.concatenate %691, %709, %727, %745 in 1 : vector<5x16xf32>, vector<5x16xf32>, vector<5x16xf32>, vector<5x16xf32> -> vector<5x64xf32>
    %c1_339 = arith.constant 1 : index
    %c0_340 = arith.constant 0 : index
    %c0_341 = arith.constant 0 : index
    %747 = vector.load %arg8[%c1_339, %c0_340, %c0_341] : memref<2x64x64xf32, #tpu.memory_space<vmem>>, vector<1x64x64xf32>
    %748 = vector.shape_cast %747 : vector<1x64x64xf32> to vector<64x64xf32>
    %cst_342 = arith.constant dense<0.000000e+00> : vector<5x64xf32>
    %749 = tpu.matmul %746, %748, %cst_342 {dimension_numbers = #tpu.dot_dimension_numbers<[1], [0], [0], [1], [0, 0, 1, 1], [], []>} : vector<5x64xf32>, vector<64x64xf32>, vector<5x64xf32> -> vector<5x64xf32>
    %750 = arith.addf %637, %749 : vector<5x64xf32>
    %c1_343 = arith.constant 1 : index
    %c0_344 = arith.constant 0 : index
    %c0_345 = arith.constant 0 : index
    %751 = vector.load %arg9[%c1_343, %c0_344, %c0_345] : memref<2x1x64xf32, #tpu.memory_space<vmem>>, vector<1x1x64xf32>
    %752 = vector.shape_cast %751 : vector<1x1x64xf32> to vector<1x64xf32>
    %753 = vector.broadcast %752 : vector<1x64xf32> to vector<5x64xf32>
    %754 = arith.addf %750, %753 : vector<5x64xf32>
    %c1_346 = arith.constant 1 : index
    %c0_347 = arith.constant 0 : index
    %c0_348 = arith.constant 0 : index
    %755 = vector.load %arg10[%c1_346, %c0_347, %c0_348] : memref<2x1x64xf32, #tpu.memory_space<vmem>>, vector<1x1x64xf32>
    %756 = vector.shape_cast %755 : vector<1x1x64xf32> to vector<1x64xf32>
    %c1_349 = arith.constant 1 : index
    %c0_350 = arith.constant 0 : index
    %c0_351 = arith.constant 0 : index
    %757 = vector.load %arg11[%c1_349, %c0_350, %c0_351] : memref<2x1x64xf32, #tpu.memory_space<vmem>>, vector<1x1x64xf32>
    %758 = vector.shape_cast %757 : vector<1x1x64xf32> to vector<1x64xf32>
    %cst_352 = arith.constant dense<0.000000e+00> : vector<5xf32>
    %759 = vector.multi_reduction <add>, %754, %cst_352 [1] : vector<5x64xf32> to vector<5xf32>
    %760 = vector.shape_cast %759 : vector<5xf32> to vector<5x1xf32>
    %cst_353 = arith.constant 6.400000e+01 : f32
    %761 = vector.broadcast %cst_353 : f32 to vector<5x1xf32>
    %762 = arith.divf %760, %761 : vector<5x1xf32>
    %763 = vector.broadcast %762 : vector<5x1xf32> to vector<5x64xf32>
    %764 = arith.subf %754, %763 : vector<5x64xf32>
    %765 = arith.mulf %764, %764 : vector<5x64xf32>
    %cst_354 = arith.constant dense<0.000000e+00> : vector<5xf32>
    %766 = vector.multi_reduction <add>, %765, %cst_354 [1] : vector<5x64xf32> to vector<5xf32>
    %767 = vector.shape_cast %766 : vector<5xf32> to vector<5x1xf32>
    %cst_355 = arith.constant 6.400000e+01 : f32
    %768 = vector.broadcast %cst_355 : f32 to vector<5x1xf32>
    %769 = arith.divf %767, %768 : vector<5x1xf32>
    %770 = vector.broadcast %762 : vector<5x1xf32> to vector<5x64xf32>
    %771 = arith.subf %754, %770 : vector<5x64xf32>
    %cst_356 = arith.constant 9.99999997E-7 : f32
    %772 = vector.broadcast %cst_356 : f32 to vector<5x1xf32>
    %773 = arith.addf %769, %772 : vector<5x1xf32>
    %774 = math.rsqrt %773 : vector<5x1xf32>
    %775 = vector.broadcast %774 : vector<5x1xf32> to vector<5x64xf32>
    %776 = arith.mulf %771, %775 : vector<5x64xf32>
    %777 = vector.broadcast %756 : vector<1x64xf32> to vector<5x64xf32>
    %778 = arith.mulf %776, %777 : vector<5x64xf32>
    %779 = vector.broadcast %758 : vector<1x64xf32> to vector<5x64xf32>
    %780 = arith.addf %778, %779 : vector<5x64xf32>
    %c1_357 = arith.constant 1 : index
    %c0_358 = arith.constant 0 : index
    %c0_359 = arith.constant 0 : index
    %781 = vector.load %arg12[%c1_357, %c0_358, %c0_359] : memref<2x64x128xf32, #tpu.memory_space<vmem>>, vector<1x64x128xf32>
    %782 = vector.shape_cast %781 : vector<1x64x128xf32> to vector<64x128xf32>
    %cst_360 = arith.constant dense<0.000000e+00> : vector<5x128xf32>
    %783 = tpu.matmul %780, %782, %cst_360 {dimension_numbers = #tpu.dot_dimension_numbers<[1], [0], [0], [1], [0, 0, 1, 1], [], []>} : vector<5x64xf32>, vector<64x128xf32>, vector<5x128xf32> -> vector<5x128xf32>
    %c1_361 = arith.constant 1 : index
    %c0_362 = arith.constant 0 : index
    %c0_363 = arith.constant 0 : index
    %784 = vector.load %arg13[%c1_361, %c0_362, %c0_363] : memref<2x1x128xf32, #tpu.memory_space<vmem>>, vector<1x1x128xf32>
    %785 = vector.shape_cast %784 : vector<1x1x128xf32> to vector<1x128xf32>
    %786 = vector.broadcast %785 : vector<1x128xf32> to vector<5x128xf32>
    %787 = arith.addf %783, %786 : vector<5x128xf32>
    %cst_364 = arith.constant 5.000000e-01 : f32
    %788 = vector.broadcast %cst_364 : f32 to vector<5x128xf32>
    %789 = arith.mulf %788, %787 : vector<5x128xf32>
    %cst_365 = arith.constant 0.707106769 : f32
    %790 = vector.broadcast %cst_365 : f32 to vector<5x128xf32>
    %791 = arith.mulf %787, %790 : vector<5x128xf32>
    %792 = math.absf %791 : vector<5x128xf32>
    %cst_366 = arith.constant 0.327591091 : f32
    %793 = vector.broadcast %cst_366 : f32 to vector<5x128xf32>
    %794 = arith.mulf %793, %792 : vector<5x128xf32>
    %cst_367 = arith.constant 1.000000e+00 : f32
    %795 = vector.broadcast %cst_367 : f32 to vector<5x128xf32>
    %796 = arith.addf %795, %794 : vector<5x128xf32>
    %cst_368 = arith.constant 1.000000e+00 : f32
    %797 = vector.broadcast %cst_368 : f32 to vector<5x128xf32>
    %798 = arith.divf %797, %796 : vector<5x128xf32>
    %cst_369 = arith.constant 1.06140542 : f32
    %799 = vector.broadcast %cst_369 : f32 to vector<5x128xf32>
    %800 = arith.mulf %799, %798 : vector<5x128xf32>
    %cst_370 = arith.constant -1.45315206 : f32
    %801 = vector.broadcast %cst_370 : f32 to vector<5x128xf32>
    %802 = arith.addf %800, %801 : vector<5x128xf32>
    %803 = arith.mulf %802, %798 : vector<5x128xf32>
    %cst_371 = arith.constant 1.42141378 : f32
    %804 = vector.broadcast %cst_371 : f32 to vector<5x128xf32>
    %805 = arith.addf %803, %804 : vector<5x128xf32>
    %806 = arith.mulf %805, %798 : vector<5x128xf32>
    %cst_372 = arith.constant -0.284496725 : f32
    %807 = vector.broadcast %cst_372 : f32 to vector<5x128xf32>
    %808 = arith.addf %806, %807 : vector<5x128xf32>
    %809 = arith.mulf %808, %798 : vector<5x128xf32>
    %cst_373 = arith.constant 0.254829586 : f32
    %810 = vector.broadcast %cst_373 : f32 to vector<5x128xf32>
    %811 = arith.addf %809, %810 : vector<5x128xf32>
    %812 = arith.mulf %811, %798 : vector<5x128xf32>
    %cst_374 = arith.constant 0.000000e+00 : f32
    %813 = vector.broadcast %cst_374 : f32 to vector<5x128xf32>
    %814 = arith.subf %813, %792 : vector<5x128xf32>
    %815 = arith.mulf %814, %792 : vector<5x128xf32>
    %816 = math.exp %815 : vector<5x128xf32>
    %817 = arith.mulf %812, %816 : vector<5x128xf32>
    %cst_375 = arith.constant 1.000000e+00 : f32
    %818 = vector.broadcast %cst_375 : f32 to vector<5x128xf32>
    %819 = arith.subf %818, %817 : vector<5x128xf32>
    %cst_376 = arith.constant 0.000000e+00 : f32
    %820 = vector.broadcast %cst_376 : f32 to vector<5x128xf32>
    %821 = arith.cmpf oge, %791, %820 : vector<5x128xf32>
    %cst_377 = arith.constant 0.000000e+00 : f32
    %822 = vector.broadcast %cst_377 : f32 to vector<5x128xf32>
    %823 = arith.subf %822, %819 : vector<5x128xf32>
    %824 = arith.select %821, %819, %823 : vector<5x128xi1>, vector<5x128xf32>
    %cst_378 = arith.constant 1.000000e+00 : f32
    %825 = vector.broadcast %cst_378 : f32 to vector<5x128xf32>
    %826 = arith.addf %825, %824 : vector<5x128xf32>
    %827 = arith.mulf %789, %826 : vector<5x128xf32>
    %c1_379 = arith.constant 1 : index
    %c0_380 = arith.constant 0 : index
    %c0_381 = arith.constant 0 : index
    %828 = vector.load %arg14[%c1_379, %c0_380, %c0_381] : memref<2x128x64xf32, #tpu.memory_space<vmem>>, vector<1x128x64xf32>
    %829 = vector.shape_cast %828 : vector<1x128x64xf32> to vector<128x64xf32>
    %cst_382 = arith.constant dense<0.000000e+00> : vector<5x64xf32>
    %830 = tpu.matmul %827, %829, %cst_382 {dimension_numbers = #tpu.dot_dimension_numbers<[1], [0], [0], [1], [0, 0, 1, 1], [], []>} : vector<5x128xf32>, vector<128x64xf32>, vector<5x64xf32> -> vector<5x64xf32>
    %831 = arith.addf %754, %830 : vector<5x64xf32>
    %c1_383 = arith.constant 1 : index
    %c0_384 = arith.constant 0 : index
    %c0_385 = arith.constant 0 : index
    %832 = vector.load %arg15[%c1_383, %c0_384, %c0_385] : memref<2x1x64xf32, #tpu.memory_space<vmem>>, vector<1x1x64xf32>
    %833 = vector.shape_cast %832 : vector<1x1x64xf32> to vector<1x64xf32>
    %834 = vector.broadcast %833 : vector<1x64xf32> to vector<5x64xf32>
    %835 = arith.addf %831, %834 : vector<5x64xf32>
    %c0_386 = arith.constant 0 : index
    %c0_387 = arith.constant 0 : index
    %836 = vector.load %arg16[%c0_386, %c0_387] : memref<1x64xf32, #tpu.memory_space<vmem>>, vector<1x64xf32>
    %c0_388 = arith.constant 0 : index
    %c0_389 = arith.constant 0 : index
    %837 = vector.load %arg17[%c0_388, %c0_389] : memref<1x64xf32, #tpu.memory_space<vmem>>, vector<1x64xf32>
    %cst_390 = arith.constant dense<0.000000e+00> : vector<5xf32>
    %838 = vector.multi_reduction <add>, %835, %cst_390 [1] : vector<5x64xf32> to vector<5xf32>
    %839 = vector.shape_cast %838 : vector<5xf32> to vector<5x1xf32>
    %cst_391 = arith.constant 6.400000e+01 : f32
    %840 = vector.broadcast %cst_391 : f32 to vector<5x1xf32>
    %841 = arith.divf %839, %840 : vector<5x1xf32>
    %842 = vector.broadcast %841 : vector<5x1xf32> to vector<5x64xf32>
    %843 = arith.subf %835, %842 : vector<5x64xf32>
    %844 = arith.mulf %843, %843 : vector<5x64xf32>
    %cst_392 = arith.constant dense<0.000000e+00> : vector<5xf32>
    %845 = vector.multi_reduction <add>, %844, %cst_392 [1] : vector<5x64xf32> to vector<5xf32>
    %846 = vector.shape_cast %845 : vector<5xf32> to vector<5x1xf32>
    %cst_393 = arith.constant 6.400000e+01 : f32
    %847 = vector.broadcast %cst_393 : f32 to vector<5x1xf32>
    %848 = arith.divf %846, %847 : vector<5x1xf32>
    %849 = vector.broadcast %841 : vector<5x1xf32> to vector<5x64xf32>
    %850 = arith.subf %835, %849 : vector<5x64xf32>
    %cst_394 = arith.constant 9.99999997E-7 : f32
    %851 = vector.broadcast %cst_394 : f32 to vector<5x1xf32>
    %852 = arith.addf %848, %851 : vector<5x1xf32>
    %853 = math.rsqrt %852 : vector<5x1xf32>
    %854 = vector.broadcast %853 : vector<5x1xf32> to vector<5x64xf32>
    %855 = arith.mulf %850, %854 : vector<5x64xf32>
    %856 = vector.broadcast %836 : vector<1x64xf32> to vector<5x64xf32>
    %857 = arith.mulf %855, %856 : vector<5x64xf32>
    %858 = vector.broadcast %837 : vector<1x64xf32> to vector<5x64xf32>
    %859 = arith.addf %857, %858 : vector<5x64xf32>
    %860 = vector.extract_strided_slice %859 {offsets = [0, 0], sizes = [1, 64], strides = [1, 1]} : vector<5x64xf32> to vector<1x64xf32>
    %c0_395 = arith.constant 0 : index
    %c0_396 = arith.constant 0 : index
    %861 = vector.load %arg18[%c0_395, %c0_396] : memref<64x128xf32, #tpu.memory_space<vmem>>, vector<64x128xf32>
    %cst_397 = arith.constant dense<0.000000e+00> : vector<1x128xf32>
    %862 = tpu.matmul %860, %861, %cst_397 {dimension_numbers = #tpu.dot_dimension_numbers<[1], [0], [0], [1], [0, 0, 1, 1], [], []>} : vector<1x64xf32>, vector<64x128xf32>, vector<1x128xf32> -> vector<1x128xf32>
    %c0_398 = arith.constant 0 : index
    %c0_399 = arith.constant 0 : index
    %863 = vector.load %arg19[%c0_398, %c0_399] : memref<1x128xf32, #tpu.memory_space<vmem>>, vector<1x128xf32>
    %864 = arith.addf %862, %863 : vector<1x128xf32>
    %c1_400 = arith.constant 1 : index
    %c0_401 = arith.constant 0 : index
    %c0_402 = arith.constant 0 : index
    %865 = vector.load %arg20[%c1_400, %c0_401, %c0_402] : memref<2x1x128xf32, #tpu.memory_space<vmem>>, vector<1x1x128xf32>
    %866 = vector.shape_cast %865 : vector<1x1x128xf32> to vector<1x128xf32>
    %867 = vector.shape_cast %864 : vector<1x128xf32> to vector<1x1x128xf32>
    tpu.vector_store %arg20[%c1_400, %c0_401, %c0_402], %867 {strides = array<i32>} : memref<2x1x128xf32, #tpu.memory_space<vmem>>, vector<1x1x128xf32>,
    return
  }
  func.func @transform_0(%arg0: i32) -> (i32, i32, i32) {
    %c0_i32 = arith.constant 0 : i32
    %c0_i32_0 = arith.constant 0 : i32
    %c0_i32_1 = arith.constant 0 : i32
    return %arg0, %c0_i32, %c0_i32_0 : i32, i32, i32
  }
  func.func @transform_1(%arg0: i32) -> (i32, i32) {
    %c0_i32 = arith.constant 0 : i32
    %c0_i32_0 = arith.constant 0 : i32
    %c0_i32_1 = arith.constant 0 : i32
    return %c0_i32, %c0_i32_0 : i32, i32
  }
  func.func @transform_2(%arg0: i32) -> (i32, i32) {
    %c0_i32 = arith.constant 0 : i32
    %c0_i32_0 = arith.constant 0 : i32
    %c0_i32_1 = arith.constant 0 : i32
    return %c0_i32, %c0_i32_0 : i32, i32
  }
  func.func @transform_3(%arg0: i32) -> (i32, i32, i32) {
    %c0_i32 = arith.constant 0 : i32
    %c0_i32_0 = arith.constant 0 : i32
    %c0_i32_1 = arith.constant 0 : i32
    %c0_i32_2 = arith.constant 0 : i32
    return %c0_i32, %c0_i32_0, %c0_i32_1 : i32, i32, i32
  }
  func.func @transform_4(%arg0: i32) -> (i32, i32, i32) {
    %c0_i32 = arith.constant 0 : i32
    %c0_i32_0 = arith.constant 0 : i32
    %c0_i32_1 = arith.constant 0 : i32
    %c0_i32_2 = arith.constant 0 : i32
    return %c0_i32, %c0_i32_0, %c0_i32_1 : i32, i32, i32
  }
  func.func @transform_5(%arg0: i32) -> (i32, i32, i32) {
    %c0_i32 = arith.constant 0 : i32
    %c0_i32_0 = arith.constant 0 : i32
    %c0_i32_1 = arith.constant 0 : i32
    %c0_i32_2 = arith.constant 0 : i32
    return %c0_i32, %c0_i32_0, %c0_i32_1 : i32, i32, i32
  }
  func.func @transform_6(%arg0: i32) -> (i32, i32, i32) {
    %c0_i32 = arith.constant 0 : i32
    %c0_i32_0 = arith.constant 0 : i32
    %c0_i32_1 = arith.constant 0 : i32
    %c0_i32_2 = arith.constant 0 : i32
    return %c0_i32, %c0_i32_0, %c0_i32_1 : i32, i32, i32
  }
  func.func @transform_7(%arg0: i32) -> (i32, i32, i32) {
    %c0_i32 = arith.constant 0 : i32
    %c0_i32_0 = arith.constant 0 : i32
    %c0_i32_1 = arith.constant 0 : i32
    %c0_i32_2 = arith.constant 0 : i32
    return %c0_i32, %c0_i32_0, %c0_i32_1 : i32, i32, i32
  }
  func.func @transform_8(%arg0: i32) -> (i32, i32, i32) {
    %c0_i32 = arith.constant 0 : i32
    %c0_i32_0 = arith.constant 0 : i32
    %c0_i32_1 = arith.constant 0 : i32
    %c0_i32_2 = arith.constant 0 : i32
    return %c0_i32, %c0_i32_0, %c0_i32_1 : i32, i32, i32
  }
  func.func @transform_9(%arg0: i32) -> (i32, i32, i32) {
    %c0_i32 = arith.constant 0 : i32
    %c0_i32_0 = arith.constant 0 : i32
    %c0_i32_1 = arith.constant 0 : i32
    %c0_i32_2 = arith.constant 0 : i32
    return %c0_i32, %c0_i32_0, %c0_i32_1 : i32, i32, i32
  }
  func.func @transform_10(%arg0: i32) -> (i32, i32, i32) {
    %c0_i32 = arith.constant 0 : i32
    %c0_i32_0 = arith.constant 0 : i32
    %c0_i32_1 = arith.constant 0 : i32
    %c0_i32_2 = arith.constant 0 : i32
    return %c0_i32, %c0_i32_0, %c0_i32_1 : i32, i32, i32
  }
  func.func @transform_11(%arg0: i32) -> (i32, i32, i32) {
    %c0_i32 = arith.constant 0 : i32
    %c0_i32_0 = arith.constant 0 : i32
    %c0_i32_1 = arith.constant 0 : i32
    %c0_i32_2 = arith.constant 0 : i32
    return %c0_i32, %c0_i32_0, %c0_i32_1 : i32, i32, i32
  }
  func.func @transform_12(%arg0: i32) -> (i32, i32, i32) {
    %c0_i32 = arith.constant 0 : i32
    %c0_i32_0 = arith.constant 0 : i32
    %c0_i32_1 = arith.constant 0 : i32
    %c0_i32_2 = arith.constant 0 : i32
    return %c0_i32, %c0_i32_0, %c0_i32_1 : i32, i32, i32
  }
  func.func @transform_13(%arg0: i32) -> (i32, i32, i32) {
    %c0_i32 = arith.constant 0 : i32
    %c0_i32_0 = arith.constant 0 : i32
    %c0_i32_1 = arith.constant 0 : i32
    %c0_i32_2 = arith.constant 0 : i32
    return %c0_i32, %c0_i32_0, %c0_i32_1 : i32, i32, i32
  }
  func.func @transform_14(%arg0: i32) -> (i32, i32, i32) {
    %c0_i32 = arith.constant 0 : i32
    %c0_i32_0 = arith.constant 0 : i32
    %c0_i32_1 = arith.constant 0 : i32
    %c0_i32_2 = arith.constant 0 : i32
    return %c0_i32, %c0_i32_0, %c0_i32_1 : i32, i32, i32
  }
  func.func @transform_15(%arg0: i32) -> (i32, i32) {
    %c0_i32 = arith.constant 0 : i32
    %c0_i32_0 = arith.constant 0 : i32
    %c0_i32_1 = arith.constant 0 : i32
    return %c0_i32, %c0_i32_0 : i32, i32
  }
  func.func @transform_16(%arg0: i32) -> (i32, i32) {
    %c0_i32 = arith.constant 0 : i32
    %c0_i32_0 = arith.constant 0 : i32
    %c0_i32_1 = arith.constant 0 : i32
    return %c0_i32, %c0_i32_0 : i32, i32
  }
  func.func @transform_17(%arg0: i32) -> (i32, i32) {
    %c0_i32 = arith.constant 0 : i32
    %c0_i32_0 = arith.constant 0 : i32
    %c0_i32_1 = arith.constant 0 : i32
    return %c0_i32, %c0_i32_0 : i32, i32
  }
  func.func @transform_18(%arg0: i32) -> (i32, i32) {
    %c0_i32 = arith.constant 0 : i32
    %c0_i32_0 = arith.constant 0 : i32
    %c0_i32_1 = arith.constant 0 : i32
    return %c0_i32, %c0_i32_0 : i32, i32
  }
  func.func @transform_19(%arg0: i32) -> (i32, i32, i32) {
    %c0_i32 = arith.constant 0 : i32
    %c0_i32_0 = arith.constant 0 : i32
    %c0_i32_1 = arith.constant 0 : i32
    return %arg0, %c0_i32, %c0_i32_0 : i32, i32, i32
  }
}

</mosaic_0001>

<llo_original>
// kernel: model_forward.2
$region0: #{model_forward.2}
  #allocation0 [shape = 'u32[]', space=smem, size = 0x4, offset = 0x4, fixed_abs, tag = 'smem constant byte address 0x4 - core index']
  #allocation1 [shape = 'u32[144,128]{1,0:T(1,128)}', space=vmem, size = 0x12000, scoped, tag = 'internal scratch']
  %s0 = inlined_call_operand.vmem [shape: f32[2,9,192], index: 0, kind: input, shape index: {}]
  %s1 = inlined_call_operand.vmem [shape: f32[9,192], index: 1, kind: input, shape index: {}]
  %s2 = inlined_call_operand.vmem [shape: f32[1,192], index: 2, kind: input, shape index: {}]
  %s3 = inlined_call_operand.vmem [shape: f32[1,192], index: 3, kind: input, shape index: {}]
  %s4 = inlined_call_operand.vmem [shape: f32[1,192], index: 4, kind: input, shape index: {}]
  %s5 = inlined_call_operand.vmem [shape: f32[1,192], index: 5, kind: input, shape index: {}]
  %s6 = inlined_call_operand.vmem [shape: f32[192,384], index: 6, kind: input, shape index: {}]
  %s7 = inlined_call_operand.vmem [shape: f32[1,384], index: 7, kind: input, shape index: {}]
  %s8 = inlined_call_operand.vmem [shape: f32[192,192], index: 8, kind: input, shape index: {}]
  %s9 = inlined_call_operand.vmem [shape: f32[1,192], index: 9, kind: input, shape index: {}]
  %s10 = inlined_call_operand.vmem [shape: f32[192,192], index: 10, kind: input, shape index: {}]
  %s11 = inlined_call_operand.vmem [shape: f32[1,192], index: 11, kind: input, shape index: {}]
  %s12 = inlined_call_operand.vmem [shape: f32[2,9,192], index: 12, kind: output, shape index: {}]
  %s13 = sld [smem:[#allocation0]]
  $region58: #{model_forward.2} parent=0
    _
  %s15 = ssub.s32 1, %s13
  %s16 = scalar_select 0, %s15, %s13
  // Predicated region
  $region2: #{model_forward.2} parent=0 // pred_check
    _
  $region3: #{model_forward.2} parent=0 // pred_check_branch
    %18 = sbr.rel (0) target = $region5
  $region4: #{model_forward.2} parent=0 // pred_region
    _
  $region5: #{model_forward.2} parent=0 // pred_fallthru
    _
  // Predicated region
  $region6: #{model_forward.2} parent=0 // pred_check
    _
  $region7: #{model_forward.2} parent=0 // pred_check_branch
    %20 = sbr.rel (0) target = $region9
  $region8: #{model_forward.2} parent=0 // pred_region
    _
  $region9: #{model_forward.2} parent=0 // pred_fallthru
    _
  // Predicated region
  $region10: #{model_forward.2} parent=0 // pred_check
    _
  $region11: #{model_forward.2} parent=0 // pred_check_branch
    %22 = sbr.rel (0) target = $region13
  $region12: #{model_forward.2} parent=0 // pred_region
    _
  $region13: #{model_forward.2} parent=0 // pred_fallthru
    _
  // Predicated region
  $region14: #{model_forward.2} parent=0 // pred_check
    _
  $region15: #{model_forward.2} parent=0 // pred_check_branch
    %24 = sbr.rel (0) target = $region17
  $region16: #{model_forward.2} parent=0 // pred_region
    _
  $region17: #{model_forward.2} parent=0 // pred_fallthru
    _
  // Predicated region
  $region18: #{model_forward.2} parent=0 // pred_check
    _
  $region19: #{model_forward.2} parent=0 // pred_check_branch
    %26 = sbr.rel (0) target = $region21
  $region20: #{model_forward.2} parent=0 // pred_region
    _
  $region21: #{model_forward.2} parent=0 // pred_fallthru
    _
  // Predicated region
  $region22: #{model_forward.2} parent=0 // pred_check
    _
  $region23: #{model_forward.2} parent=0 // pred_check_branch
    %28 = sbr.rel (0) target = $region25
  $region24: #{model_forward.2} parent=0 // pred_region
    _
  $region25: #{model_forward.2} parent=0 // pred_fallthru
    _
  // Predicated region
  $region26: #{model_forward.2} parent=0 // pred_check
    _
  $region27: #{model_forward.2} parent=0 // pred_check_branch
    %30 = sbr.rel (0) target = $region29
  $region28: #{model_forward.2} parent=0 // pred_region
    _
  $region29: #{model_forward.2} parent=0 // pred_fallthru
    _
  // Predicated region
  $region30: #{model_forward.2} parent=0 // pred_check
    _
  $region31: #{model_forward.2} parent=0 // pred_check_branch
    %32 = sbr.rel (0) target = $region33
  $region32: #{model_forward.2} parent=0 // pred_region
    _
  $region33: #{model_forward.2} parent=0 // pred_fallthru
    _
  // Predicated region
  $region34: #{model_forward.2} parent=0 // pred_check
    _
  $region35: #{model_forward.2} parent=0 // pred_check_branch
    %34 = sbr.rel (0) target = $region37
  $region36: #{model_forward.2} parent=0 // pred_region
    _
  $region37: #{model_forward.2} parent=0 // pred_fallthru
    _
  // Predicated region
  $region38: #{model_forward.2} parent=0 // pred_check
    _
  $region39: #{model_forward.2} parent=0 // pred_check_branch
    %36 = sbr.rel (0) target = $region41
  $region40: #{model_forward.2} parent=0 // pred_region
    _
  $region41: #{model_forward.2} parent=0 // pred_fallthru
    _
  // Predicated region
  $region42: #{model_forward.2} parent=0 // pred_check
    _
  $region43: #{model_forward.2} parent=0 // pred_check_branch
    %38 = sbr.rel (0) target = $region45
  $region44: #{model_forward.2} parent=0 // pred_region
    _
  $region45: #{model_forward.2} parent=0 // pred_fallthru
    _
  // Predicated region
  $region46: #{model_forward.2} parent=0 // pred_check
    _
  $region47: #{model_forward.2} parent=0 // pred_check_branch
    %40 = sbr.rel (0) target = $region49
  $region48: #{model_forward.2} parent=0 // pred_region
    _
  $region49: #{model_forward.2} parent=0 // pred_fallthru
    _
  %v41 = vld [vmem:[%s1] sm:$0xff]
  %v42 = vld [vmem:[%s1 + $0x8] sm:$0xff]
  %v43 = vld [vmem:[%s1 + $0x10] sm:$0x1]
  %v44 = vld [vmem:[%s1 + $0x18] sm:$0x1]
  %v45 = vld [vmem:[%s8] sm:$0xff]
  %v46 = vld [vmem:[%s8 + $0x8] sm:$0xff]
  %v47 = vld [vmem:[%s8 + $0x10] sm:$0xff]
  %v48 = vld [vmem:[%s8 + $0x18] sm:$0xff]
  %v49 = vld [vmem:[%s8 + $0x20] sm:$0xff]
  %v50 = vld [vmem:[%s8 + $0x28] sm:$0xff]
  %v51 = vld [vmem:[%s8 + $0x30] sm:$0xff]
  %v52 = vld [vmem:[%s8 + $0x38] sm:$0xff]
  %v53 = vld [vmem:[%s8 + $0x40] sm:$0xff]
  %v54 = vld [vmem:[%s8 + $0x48] sm:$0xff]
  %v55 = vld [vmem:[%s8 + $0x50] sm:$0xff]
  %v56 = vld [vmem:[%s8 + $0x58] sm:$0xff]
  %v57 = vld [vmem:[%s8 + $0x60] sm:$0xff]
  %v58 = vld [vmem:[%s8 + $0x68] sm:$0xff]
  %v59 = vld [vmem:[%s8 + $0x70] sm:$0xff]
  %v60 = vld [vmem:[%s8 + $0x78] sm:$0xff]
  %v61 = vld [vmem:[%s8 + $0x80] sm:$0xff]
  %v62 = vld [vmem:[%s8 + $0x88] sm:$0xff]
  %v63 = vld [vmem:[%s8 + $0x90] sm:$0xff]
  %v64 = vld [vmem:[%s8 + $0x98] sm:$0xff]
  %v65 = vld [vmem:[%s8 + $0xa0] sm:$0xff]
  %v66 = vld [vmem:[%s8 + $0xa8] sm:$0xff]
  %v67 = vld [vmem:[%s8 + $0xb0] sm:$0xff]
  %v68 = vld [vmem:[%s8 + $0xb8] sm:$0xff]
  %v69 = vld [vmem:[%s8 + $0xc0] sm:$0xff]
  %v70 = vld [vmem:[%s8 + $0xc8] sm:$0xff]
  %v71 = vld [vmem:[%s8 + $0xd0] sm:$0xff]
  %v72 = vld [vmem:[%s8 + $0xd8] sm:$0xff]
  %v73 = vld [vmem:[%s8 + $0xe0] sm:$0xff]
  %v74 = vld [vmem:[%s8 + $0xe8] sm:$0xff]
  %v75 = vld [vmem:[%s8 + $0xf0] sm:$0xff]
  %v76 = vld [vmem:[%s8 + $0xf8] sm:$0xff]
  %v77 = vld [vmem:[%s8 + $0x100] sm:$0xff]
  %v78 = vld [vmem:[%s8 + $0x108] sm:$0xff]
  %v79 = vld [vmem:[%s8 + $0x110] sm:$0xff]
  %v80 = vld [vmem:[%s8 + $0x118] sm:$0xff]
  %v81 = vld [vmem:[%s8 + $0x120] sm:$0xff]
  %v82 = vld [vmem:[%s8 + $0x128] sm:$0xff]
  %v83 = vld [vmem:[%s8 + $0x130] sm:$0xff]
  %v84 = vld [vmem:[%s8 + $0x138] sm:$0xff]
  %v85 = vld [vmem:[%s8 + $0x140] sm:$0xff]
  %v86 = vld [vmem:[%s8 + $0x148] sm:$0xff]
  %v87 = vld [vmem:[%s8 + $0x150] sm:$0xff]
  %v88 = vld [vmem:[%s8 + $0x158] sm:$0xff]
  %v89 = vld [vmem:[%s8 + $0x160] sm:$0xff]
  %v90 = vld [vmem:[%s8 + $0x168] sm:$0xff]
  %v91 = vld [vmem:[%s8 + $0x170] sm:$0xff]
  %v92 = vld [vmem:[%s8 + $0x178] sm:$0xff]
  %v93 = vld [vmem:[%s9] sm:$0x3]
  %v95 = vlaneseq
  %v96 = vshrl.u32 %v95, 7
  %v97 = vsub.s32 0, %v96
  %v98 = vrot.slane %v93, %v97
  %v99 = vlaneseq
  %v100 = vshrl.u32 %v99, 7
  %v101 = vsub.s32 1, %v100
  %v102 = vrot.slane %v93, %v101
  %vm105 = vcmask 523264
  %v107 = vsel %vm105, %v42, 0
  %v110 = vsel %vm105, %v44, 0
  %112 = vmatprep.subr.mxu0 %v46
  %113 = vmatpush1.msra.mxu0 %v45
  %114 = vmatprep.subr.mxu0 %v48
  %115 = vmatpush1.msra.mxu0 %v47
  %116 = vmatprep.subr.mxu0 %v50
  %117 = vmatpush1.msra.mxu0 %v49
  %118 = vmatprep.subr.mxu0 %v52
  %119 = vmatpush1.msra.mxu0 %v51
  %120 = vmatprep.subr.mxu0 %v54
  %121 = vmatpush1.msra.mxu0 %v53
  %122 = vmatprep.subr.mxu0 %v56
  %123 = vmatpush1.msra.mxu0 %v55
  %124 = vmatprep.subr.mxu0 %v58
  %125 = vmatpush1.msra.mxu0 %v57
  %126 = vmatprep.subr.mxu0 %v60
  %127 = vmatpush1.msra.mxu0 %v59
  %128 = vmatprep.subr.mxu0 %v62
  %129 = vmatpush1.msra.mxu0 %v61
  %130 = vmatprep.subr.mxu0 %v64
  %131 = vmatpush1.msra.mxu0 %v63
  %132 = vmatprep.subr.mxu0 %v66
  %133 = vmatpush1.msra.mxu0 %v65
  %134 = vmatprep.subr.mxu0 %v68
  %135 = vmatpush1.msra.mxu0 %v67
  %136 = vmatprep.subr.mxu0 %v70
  %137 = vmatpush1.msra.mxu0 %v69
  %138 = vmatprep.subr.mxu0 %v72
  %139 = vmatpush1.msra.mxu0 %v71
  %140 = vmatprep.subr.mxu0 %v74
  %141 = vmatpush1.msra.mxu0 %v73
  %142 = vmatprep.subr.mxu0 %v76
  %143 = vmatpush1.msra.mxu0 %v75
  %144 = vmatprep.subr.mxu0 %v78
  %145 = vmatpush1.msra.mxu0 %v77
  %146 = vmatprep.subr.mxu0 %v80
  %147 = vmatpush1.msra.mxu0 %v79
  %148 = vmatprep.subr.mxu0 %v82
  %149 = vmatpush1.msra.mxu0 %v81
  %150 = vmatprep.subr.mxu0 %v84
  %151 = vmatpush1.msra.mxu0 %v83
  %152 = vmatprep.subr.mxu0 %v86
  %153 = vmatpush1.msra.mxu0 %v85
  %154 = vmatprep.subr.mxu0 %v88
  %155 = vmatpush1.msra.mxu0 %v87
  %156 = vmatprep.subr.mxu0 %v90
  %157 = vmatpush1.msra.mxu0 %v89
  %158 = vmatprep.subr.mxu0 %v92
  %159 = vmatpush1.msra.mxu0 %v91
  %160 = vmatprep.subr.mxu0 0.0
  %161 = vmatpush1.msra.mxu0 0.0
  %162 = vmatprep.subr.mxu0 0.0
  %163 = vmatpush1.msra.mxu0 0.0
  %164 = vmatprep.subr.mxu0 0.0
  %165 = vmatpush1.msra.mxu0 0.0
  %166 = vmatprep.subr.mxu0 0.0
  %167 = vmatpush1.msra.mxu0 0.0
  %168 = vmatprep.subr.mxu0 0.0
  %169 = vmatpush1.msra.mxu0 0.0
  %170 = vmatprep.subr.mxu0 0.0
  %171 = vmatpush1.msra.mxu0 0.0
  %172 = vmatprep.subr.mxu0 0.0
  %173 = vmatpush1.msra.mxu0 0.0
  %174 = vmatprep.subr.mxu0 0.0
  %175 = vmatpush1.msra.mxu0 0.0
  %176 = vmatprep.mubr.f32.mxu0 %v107
  %177 = vmatmul.mubr.f32.gmra.mrb[0].mxu0 %v41
  %v178 = vpop.f32.mrb[0].mxu0
  %v179 = vadd.f32 %v98, %v178
  %v180 = vpop.f32.mrb[0].mxu0
  %v181 = vadd.f32 %v102, %v180
  %182 = vmatprep.mubr.f32.mxu0 %v110
  %183 = vmatmul.mubr.f32.gmra.mrb[0].mxu0 %v43
  %v184 = vpop.f32.mrb[0].mxu0
  %v185 = vadd.f32 %v98, %v184
  %v186 = vpop.f32.mrb[0].mxu0
  %v187 = vadd.f32 %v102, %v186
  %188 = vdwg.mxu0
  %v189 = vld [vmem:[%s0] sm:$0xff]
  %v190 = vld [vmem:[%s0 + $0x8] sm:$0xff]
  %v191 = vld [vmem:[%s0 + $0x10] sm:$0x1]
  %v192 = vld [vmem:[%s0 + $0x18] sm:$0x1]
  %v193 = vld [vmem:[%s2] sm:$0x3]
  %v194 = vld [vmem:[%s3] sm:$0x3]
  %vm195 = vcmask 1040384
  %v196 = vsel %vm195, %v191, 0.0
  %v197 = vadd.f32 %v189, %v196
  %v198 = vrot.slane %v197, 4
  %v199 = vadd.f32 %v197, %v198
  %v200 = vrot.slane %v199, 2
  %v201 = vadd.f32 %v199, %v200
  %v202 = vrot.slane %v201, 1
  %v203 = vadd.f32 %v201, %v202
  %v204 = vsel %vm105, %v190, 0.0
  %vm205 = vcmask 516096
  %v206 = vsel %vm205, %v192, 0.0
  %v207 = vadd.f32 %v204, %v206
  %v208 = vrot.slane %v207, 4
  %v209 = vadd.f32 %v207, %v208
  %v210 = vrot.slane %v209, 2
  %v211 = vadd.f32 %v209, %v210
  %v212 = vrot.slane %v211, 1
  %v213 = vadd.f32 %v211, %v212
  %v214 = vrcp.pop 9.0
  %v215 = vmul.f32 %v203, %v214
  %v216 = vmul.f32 %v213, %v214
  %v217 = vsub.f32 %v189, %v215
  %v218 = vsub.f32 %v190, %v216
  %v219 = vsub.f32 %v191, %v215
  %v220 = vsub.f32 %v192, %v216
  %v221 = vmul.f32 %v217, %v217
  %v222 = vmul.f32 %v218, %v218
  %v223 = vmul.f32 %v219, %v219
  %v224 = vmul.f32 %v220, %v220
  %v225 = vsel %vm195, %v223, 0.0
  %v226 = vadd.f32 %v221, %v225
  %v227 = vrot.slane %v226, 4
  %v228 = vadd.f32 %v226, %v227
  %v229 = vrot.slane %v228, 2
  %v230 = vadd.f32 %v228, %v229
  %v231 = vrot.slane %v230, 1
  %v232 = vadd.f32 %v230, %v231
  %v233 = vsel %vm105, %v222, 0.0
  %v234 = vsel %vm205, %v224, 0.0
  %v235 = vadd.f32 %v233, %v234
  %v236 = vrot.slane %v235, 4
  %v237 = vadd.f32 %v235, %v236
  %v238 = vrot.slane %v237, 2
  %v239 = vadd.f32 %v237, %v238
  %v240 = vrot.slane %v239, 1
  %v241 = vadd.f32 %v239, %v240
  %v242 = vrcp.pop 8.0
  %v243 = vmul.f32 %v232, %v242
  %v244 = vmul.f32 %v241, %v242
  %v245 = vadd.f32 %v243, 1e-08
  %v246 = vadd.f32 %v244, 1e-08
  %v247 = vrsqrt.pop %v245
  %v248 = vmul.f32 %v245, %v247
  %vm249 = vcmp.eq.f32.partialorder %v245, inf
  %v250 = vsel %vm249, %v245, %v248
  %vm251 = vcmp.eq.f32.partialorder %v245, 0.0
  %v252 = vand.u32 %v245, 2147483648
  %v253 = vsel %vm251, %v252, %v250
  %v254 = vrsqrt.pop %v246
  %v255 = vmul.f32 %v246, %v254
  %vm256 = vcmp.eq.f32.partialorder %v246, inf
  %v257 = vsel %vm256, %v246, %v255
  %vm258 = vcmp.eq.f32.partialorder %v246, 0.0
  %v259 = vand.u32 %v246, 2147483648
  %v260 = vsel %vm258, %v259, %v257
  %v261 = vrcp.pop %v253
  %v262 = vmul.f32 %v217, %v261
  %v263 = vrcp.pop %v260
  %v264 = vmul.f32 %v218, %v263
  %v265 = vmul.f32 %v219, %v261
  %v266 = vmul.f32 %v220, %v263
  %v268 = vlaneseq
  %v269 = vshrl.u32 %v268, 7
  %v270 = vsub.s32 0, %v269
  %v271 = vrot.slane %v193, %v270
  %v272 = vlaneseq
  %v273 = vshrl.u32 %v272, 7
  %v274 = vsub.s32 1, %v273
  %v275 = vrot.slane %v193, %v274
  %v278 = vmul.f32 %v262, %v271
  %v279 = vmul.f32 %v264, %v275
  %v280 = vmul.f32 %v265, %v271
  %v281 = vmul.f32 %v266, %v275
  %v283 = vlaneseq
  %v284 = vshrl.u32 %v283, 7
  %v285 = vsub.s32 0, %v284
  %v286 = vrot.slane %v194, %v285
  %v287 = vlaneseq
  %v288 = vshrl.u32 %v287, 7
  %v289 = vsub.s32 1, %v288
  %v290 = vrot.slane %v194, %v289
  %v293 = vadd.f32 %v278, %v286
  %v294 = vadd.f32 %v279, %v290
  %v295 = vadd.f32 %v280, %v286
  %v296 = vadd.f32 %v281, %v290
  %v297 = vld [vmem:[%s6] sm:$0xff]
  %v298 = vld [vmem:[%s6 + $0x8] sm:$0xff]
  %v299 = vld [vmem:[%s6 + $0x10] sm:$0xff]
  %v300 = vld [vmem:[%s6 + $0x18] sm:$0xff]
  %v301 = vld [vmem:[%s6 + $0x20] sm:$0xff]
  %v302 = vld [vmem:[%s6 + $0x28] sm:$0xff]
  %v303 = vld [vmem:[%s6 + $0x30] sm:$0xff]
  %v304 = vld [vmem:[%s6 + $0x38] sm:$0xff]
  %v305 = vld [vmem:[%s6 + $0x40] sm:$0xff]
  %v306 = vld [vmem:[%s6 + $0x48] sm:$0xff]
  %v307 = vld [vmem:[%s6 + $0x50] sm:$0xff]
  %v308 = vld [vmem:[%s6 + $0x58] sm:$0xff]
  %v309 = vld [vmem:[%s6 + $0x60] sm:$0xff]
  %v310 = vld [vmem:[%s6 + $0x68] sm:$0xff]
  %v311 = vld [vmem:[%s6 + $0x70] sm:$0xff]
  %v312 = vld [vmem:[%s6 + $0x78] sm:$0xff]
  %v313 = vld [vmem:[%s6 + $0x80] sm:$0xff]
  %v314 = vld [vmem:[%s6 + $0x88] sm:$0xff]
  %v315 = vld [vmem:[%s6 + $0x90] sm:$0xff]
  %v316 = vld [vmem:[%s6 + $0x98] sm:$0xff]
  %v317 = vld [vmem:[%s6 + $0xa0] sm:$0xff]
  %v318 = vld [vmem:[%s6 + $0xa8] sm:$0xff]
  %v319 = vld [vmem:[%s6 + $0xb0] sm:$0xff]
  %v320 = vld [vmem:[%s6 + $0xb8] sm:$0xff]
  %v321 = vld [vmem:[%s6 + $0xc0] sm:$0xff]
  %v322 = vld [vmem:[%s6 + $0xc8] sm:$0xff]
  %v323 = vld [vmem:[%s6 + $0xd0] sm:$0xff]
  %v324 = vld [vmem:[%s6 + $0xd8] sm:$0xff]
  %v325 = vld [vmem:[%s6 + $0xe0] sm:$0xff]
  %v326 = vld [vmem:[%s6 + $0xe8] sm:$0xff]
  %v327 = vld [vmem:[%s6 + $0xf0] sm:$0xff]
  %v328 = vld [vmem:[%s6 + $0xf8] sm:$0xff]
  %v329 = vld [vmem:[%s6 + $0x100] sm:$0xff]
  %v330 = vld [vmem:[%s6 + $0x108] sm:$0xff]
  %v331 = vld [vmem:[%s6 + $0x110] sm:$0xff]
  %v332 = vld [vmem:[%s6 + $0x118] sm:$0xff]
  %v333 = vld [vmem:[%s6 + $0x120] sm:$0xff]
  %v334 = vld [vmem:[%s6 + $0x128] sm:$0xff]
  %v335 = vld [vmem:[%s6 + $0x130] sm:$0xff]
  %v336 = vld [vmem:[%s6 + $0x138] sm:$0xff]
  %v337 = vld [vmem:[%s6 + $0x140] sm:$0xff]
  %v338 = vld [vmem:[%s6 + $0x148] sm:$0xff]
  %v339 = vld [vmem:[%s6 + $0x150] sm:$0xff]
  %v340 = vld [vmem:[%s6 + $0x158] sm:$0xff]
  %v341 = vld [vmem:[%s6 + $0x160] sm:$0xff]
  %v342 = vld [vmem:[%s6 + $0x168] sm:$0xff]
  %v343 = vld [vmem:[%s6 + $0x170] sm:$0xff]
  %v344 = vld [vmem:[%s6 + $0x178] sm:$0xff]
  %v345 = vld [vmem:[%s6 + $0x180] sm:$0xff]
  %v346 = vld [vmem:[%s6 + $0x188] sm:$0xff]
  %v347 = vld [vmem:[%s6 + $0x190] sm:$0xff]
  %v348 = vld [vmem:[%s6 + $0x198] sm:$0xff]
  %v349 = vld [vmem:[%s6 + $0x1a0] sm:$0xff]
  %v350 = vld [vmem:[%s6 + $0x1a8] sm:$0xff]
  %v351 = vld [vmem:[%s6 + $0x1b0] sm:$0xff]
  %v352 = vld [vmem:[%s6 + $0x1b8] sm:$0xff]
  %v353 = vld [vmem:[%s6 + $0x1c0] sm:$0xff]
  %v354 = vld [vmem:[%s6 + $0x1c8] sm:$0xff]
  %v355 = vld [vmem:[%s6 + $0x1d0] sm:$0xff]
  %v356 = vld [vmem:[%s6 + $0x1d8] sm:$0xff]
  %v357 = vld [vmem:[%s6 + $0x1e0] sm:$0xff]
  %v358 = vld [vmem:[%s6 + $0x1e8] sm:$0xff]
  %v359 = vld [vmem:[%s6 + $0x1f0] sm:$0xff]
  %v360 = vld [vmem:[%s6 + $0x1f8] sm:$0xff]
  %v361 = vld [vmem:[%s6 + $0x200] sm:$0xff]
  %v362 = vld [vmem:[%s6 + $0x208] sm:$0xff]
  %v363 = vld [vmem:[%s6 + $0x210] sm:$0xff]
  %v364 = vld [vmem:[%s6 + $0x218] sm:$0xff]
  %v365 = vld [vmem:[%s6 + $0x220] sm:$0xff]
  %v366 = vld [vmem:[%s6 + $0x228] sm:$0xff]
  %v367 = vld [vmem:[%s6 + $0x230] sm:$0xff]
  %v368 = vld [vmem:[%s6 + $0x238] sm:$0xff]
  %v369 = vld [vmem:[%s7] sm:$0x7]
  %v371 = vlaneseq
  %v372 = vshrl.u32 %v371, 7
  %v373 = vsub.s32 0, %v372
  %v374 = vrot.slane %v369, %v373
  %v375 = vlaneseq
  %v376 = vshrl.u32 %v375, 7
  %v377 = vsub.s32 1, %v376
  %v378 = vrot.slane %v369, %v377
  %v379 = vlaneseq
  %v380 = vshrl.u32 %v379, 7
  %v381 = vsub.s32 2, %v380
  %v382 = vrot.slane %v369, %v381
  %v387 = vsel %vm105, %v294, 0
  %v390 = vsel %vm105, %v296, 0
  %392 = vmatprep.subr.mxu0 %v298
  %393 = vmatpush1.msra.mxu0 %v297
  %394 = vmatprep.subr.mxu0 %v301
  %395 = vmatpush1.msra.mxu0 %v300
  %396 = vmatprep.subr.mxu0 %v304
  %397 = vmatpush1.msra.mxu0 %v303
  %398 = vmatprep.subr.mxu0 %v307
  %399 = vmatpush1.msra.mxu0 %v306
  %400 = vmatprep.subr.mxu0 %v310
  %401 = vmatpush1.msra.mxu0 %v309
  %402 = vmatprep.subr.mxu0 %v313
  %403 = vmatpush1.msra.mxu0 %v312
  %404 = vmatprep.subr.mxu0 %v316
  %405 = vmatpush1.msra.mxu0 %v315
  %406 = vmatprep.subr.mxu0 %v319
  %407 = vmatpush1.msra.mxu0 %v318
  %408 = vmatprep.subr.mxu0 %v322
  %409 = vmatpush1.msra.mxu0 %v321
  %410 = vmatprep.subr.mxu0 %v325
  %411 = vmatpush1.msra.mxu0 %v324
  %412 = vmatprep.subr.mxu0 %v328
  %413 = vmatpush1.msra.mxu0 %v327
  %414 = vmatprep.subr.mxu0 %v331
  %415 = vmatpush1.msra.mxu0 %v330
  %416 = vmatprep.subr.mxu0 %v334
  %417 = vmatpush1.msra.mxu0 %v333
  %418 = vmatprep.subr.mxu0 %v337
  %419 = vmatpush1.msra.mxu0 %v336
  %420 = vmatprep.subr.mxu0 %v340
  %421 = vmatpush1.msra.mxu0 %v339
  %422 = vmatprep.subr.mxu0 %v343
  %423 = vmatpush1.msra.mxu0 %v342
  %424 = vmatprep.subr.mxu0 %v346
  %425 = vmatpush1.msra.mxu0 %v345
  %426 = vmatprep.subr.mxu0 %v349
  %427 = vmatpush1.msra.mxu0 %v348
  %428 = vmatprep.subr.mxu0 %v352
  %429 = vmatpush1.msra.mxu0 %v351
  %430 = vmatprep.subr.mxu0 %v355
  %431 = vmatpush1.msra.mxu0 %v354
  %432 = vmatprep.subr.mxu0 %v358
  %433 = vmatpush1.msra.mxu0 %v357
  %434 = vmatprep.subr.mxu0 %v361
  %435 = vmatpush1.msra.mxu0 %v360
  %436 = vmatprep.subr.mxu0 %v364
  %437 = vmatpush1.msra.mxu0 %v363
  %438 = vmatprep.subr.mxu0 %v367
  %439 = vmatpush1.msra.mxu0 %v366
  %440 = vmatprep.subr.mxu0 0.0
  %441 = vmatpush1.msra.mxu0 0.0
  %442 = vmatprep.subr.mxu0 0.0
  %443 = vmatpush1.msra.mxu0 0.0
  %444 = vmatprep.subr.mxu0 0.0
  %445 = vmatpush1.msra.mxu0 0.0
  %446 = vmatprep.subr.mxu0 0.0
  %447 = vmatpush1.msra.mxu0 0.0
  %448 = vmatprep.subr.mxu0 0.0
  %449 = vmatpush1.msra.mxu0 0.0
  %450 = vmatprep.subr.mxu0 0.0
  %451 = vmatpush1.msra.mxu0 0.0
  %452 = vmatprep.subr.mxu0 0.0
  %453 = vmatpush1.msra.mxu0 0.0
  %454 = vmatprep.subr.mxu0 0.0
  %455 = vmatpush1.msra.mxu0 0.0
  %456 = vmatprep.mubr.f32.mxu0 %v387
  %457 = vmatmul.mubr.f32.gmra.mrb[0].mxu0 %v293
  %v458 = vpop.f32.mrb[0].mxu0
  %v459 = vadd.f32 %v374, %v458
  %v460 = vpop.f32.mrb[0].mxu0
  %v461 = vadd.f32 %v378, %v460
  %462 = vmatprep.mubr.f32.mxu0 %v390
  %463 = vmatmul.mubr.f32.gmra.mrb[0].mxu0 %v295
  %v464 = vpop.f32.mrb[0].mxu0
  %v465 = vadd.f32 %v374, %v464
  %v466 = vpop.f32.mrb[0].mxu0
  %v467 = vadd.f32 %v378, %v466
  %468 = vdwg.mxu0
  %469 = vmatprep.subr.mxu0 0.0
  %470 = vmatpush1.msra.mxu0 %v299
  %471 = vmatprep.subr.mxu0 0.0
  %472 = vmatpush1.msra.mxu0 %v302
  %473 = vmatprep.subr.mxu0 0.0
  %474 = vmatpush1.msra.mxu0 %v305
  %475 = vmatprep.subr.mxu0 0.0
  %476 = vmatpush1.msra.mxu0 %v308
  %477 = vmatprep.subr.mxu0 0.0
  %478 = vmatpush1.msra.mxu0 %v311
  %479 = vmatprep.subr.mxu0 0.0
  %480 = vmatpush1.msra.mxu0 %v314
  %481 = vmatprep.subr.mxu0 0.0
  %482 = vmatpush1.msra.mxu0 %v317
  %483 = vmatprep.subr.mxu0 0.0
  %484 = vmatpush1.msra.mxu0 %v320
  %485 = vmatprep.subr.mxu0 0.0
  %486 = vmatpush1.msra.mxu0 %v323
  %487 = vmatprep.subr.mxu0 0.0
  %488 = vmatpush1.msra.mxu0 %v326
  %489 = vmatprep.subr.mxu0 0.0
  %490 = vmatpush1.msra.mxu0 %v329
  %491 = vmatprep.subr.mxu0 0.0
  %492 = vmatpush1.msra.mxu0 %v332
  %493 = vmatprep.subr.mxu0 0.0
  %494 = vmatpush1.msra.mxu0 %v335
  %495 = vmatprep.subr.mxu0 0.0
  %496 = vmatpush1.msra.mxu0 %v338
  %497 = vmatprep.subr.mxu0 0.0
  %498 = vmatpush1.msra.mxu0 %v341
  %499 = vmatprep.subr.mxu0 0.0
  %500 = vmatpush1.msra.mxu0 %v344
  %501 = vmatprep.subr.mxu0 0.0
  %502 = vmatpush1.msra.mxu0 %v347
  %503 = vmatprep.subr.mxu0 0.0
  %504 = vmatpush1.msra.mxu0 %v350
  %505 = vmatprep.subr.mxu0 0.0
  %506 = vmatpush1.msra.mxu0 %v353
  %507 = vmatprep.subr.mxu0 0.0
  %508 = vmatpush1.msra.mxu0 %v356
  %509 = vmatprep.subr.mxu0 0.0
  %510 = vmatpush1.msra.mxu0 %v359
  %511 = vmatprep.subr.mxu0 0.0
  %512 = vmatpush1.msra.mxu0 %v362
  %513 = vmatprep.subr.mxu0 0.0
  %514 = vmatpush1.msra.mxu0 %v365
  %515 = vmatprep.subr.mxu0 0.0
  %516 = vmatpush1.msra.mxu0 %v368
  %517 = vmatprep.subr.mxu0 0.0
  %518 = vmatpush1.msra.mxu0 0.0
  %519 = vmatprep.subr.mxu0 0.0
  %520 = vmatpush1.msra.mxu0 0.0
  %521 = vmatprep.subr.mxu0 0.0
  %522 = vmatpush1.msra.mxu0 0.0
  %523 = vmatprep.subr.mxu0 0.0
  %524 = vmatpush1.msra.mxu0 0.0
  %525 = vmatprep.subr.mxu0 0.0
  %526 = vmatpush1.msra.mxu0 0.0
  %527 = vmatprep.subr.mxu0 0.0
  %528 = vmatpush1.msra.mxu0 0.0
  %529 = vmatprep.subr.mxu0 0.0
  %530 = vmatpush1.msra.mxu0 0.0
  %531 = vmatprep.subr.mxu0 0.0
  %532 = vmatpush1.msra.mxu0 0.0
  %533 = vmatprep.mubr.f32.mxu0 %v387
  %534 = vmatmul.mubr.f32.gmra.mrb[0].mxu0 %v293
  %v535 = vpop.f32.mrb[0].mxu0
  %v536 = vadd.f32 %v382, %v535
  %v537 = vpop.f32.mrb[0].mxu0
  %538 = vmatprep.mubr.f32.mxu0 %v390
  %539 = vmatmul.mubr.f32.gmra.mrb[0].mxu0 %v295
  %v540 = vpop.f32.mrb[0].mxu0
  %v541 = vadd.f32 %v382, %v540
  %v542 = vpop.f32.mrb[0].mxu0
  %543 = vdwg.mxu0
  %546 = vrot.lane.b32.xlu0 %v461, 64
  %v547 = vpop.permute.xlu0 %546
  %548 = vrot.lane.b32.xlu0 %v467, 64
  %v549 = vpop.permute.xlu0 %548
  %vm550 = vcmask 392192
  %v552 = vsel %vm550, %v459, 0
  %v555 = vsel %vm550, %v465, 0
  %v557 = vsel %vm550, %v547, 0
  %v559 = vsel %vm550, %v549, 0
  %561 = vmatprep.subr.mxu0 0.0
  %562 = vmatpush1.xpose.msra.mxu0 %v557
  %563 = vmatprep.subr.mxu0 0.0
  %564 = vmatpush1.xpose.msra.mxu0 %v559
  %565 = vmatprep.subr.mxu0 0.0
  %566 = vmatpush1.xpose.msra.mxu0 0.0
  %567 = vmatprep.subr.mxu0 0.0
  %568 = vmatpush1.xpose.msra.mxu0 0.0
  %569 = vmatprep.subr.mxu0 0.0
  %570 = vmatpush1.xpose.msra.mxu0 0.0
  %571 = vmatprep.subr.mxu0 0.0
  %572 = vmatpush1.xpose.msra.mxu0 0.0
  %573 = vmatprep.subr.mxu0 0.0
  %574 = vmatpush1.xpose.msra.mxu0 0.0
  %575 = vmatprep.subr.mxu0 0.0
  %576 = vmatpush1.xpose.msra.mxu0 0.0
  %577 = vmatprep.subr.mxu0 0.0
  %578 = vmatpush1.xpose.msra.mxu0 0.0
  %579 = vmatprep.subr.mxu0 0.0
  %580 = vmatpush1.xpose.msra.mxu0 0.0
  %581 = vmatprep.subr.mxu0 0.0
  %582 = vmatpush1.xpose.msra.mxu0 0.0
  %583 = vmatprep.subr.mxu0 0.0
  %584 = vmatpush1.xpose.msra.mxu0 0.0
  %585 = vmatprep.subr.mxu0 0.0
  %586 = vmatpush1.xpose.msra.mxu0 0.0
  %587 = vmatprep.subr.mxu0 0.0
  %588 = vmatpush1.xpose.msra.mxu0 0.0
  %589 = vmatprep.subr.mxu0 0.0
  %590 = vmatpush1.xpose.msra.mxu0 0.0
  %591 = vmatprep.subr.mxu0 0.0
  %592 = vmatpush1.xpose.msra.mxu0 0.0
  %593 = vmatprep.subr.mxu0 0.0
  %594 = vmatpush1.xpose.msra.mxu0 0.0
  %595 = vmatprep.subr.mxu0 0.0
  %596 = vmatpush1.xpose.msra.mxu0 0.0
  %597 = vmatprep.subr.mxu0 0.0
  %598 = vmatpush1.xpose.msra.mxu0 0.0
  %599 = vmatprep.subr.mxu0 0.0
  %600 = vmatpush1.xpose.msra.mxu0 0.0
  %601 = vmatprep.subr.mxu0 0.0
  %602 = vmatpush1.xpose.msra.mxu0 0.0
  %603 = vmatprep.subr.mxu0 0.0
  %604 = vmatpush1.xpose.msra.mxu0 0.0
  %605 = vmatprep.subr.mxu0 0.0
  %606 = vmatpush1.xpose.msra.mxu0 0.0
  %607 = vmatprep.subr.mxu0 0.0
  %608 = vmatpush1.xpose.msra.mxu0 0.0
  %609 = vmatprep.subr.mxu0 0.0
  %610 = vmatpush1.xpose.msra.mxu0 0.0
  %611 = vmatprep.subr.mxu0 0.0
  %612 = vmatpush1.xpose.msra.mxu0 0.0
  %613 = vmatprep.subr.mxu0 0.0
  %614 = vmatpush1.xpose.msra.mxu0 0.0
  %615 = vmatprep.subr.mxu0 0.0
  %616 = vmatpush1.xpose.msra.mxu0 0.0
  %617 = vmatprep.subr.mxu0 0.0
  %618 = vmatpush1.xpose.msra.mxu0 0.0
  %619 = vmatprep.subr.mxu0 0.0
  %620 = vmatpush1.xpose.msra.mxu0 0.0
  %621 = vmatprep.subr.mxu0 0.0
  %622 = vmatpush1.xpose.msra.mxu0 0.0
  %623 = vmatprep.subr.mxu0 0.0
  %624 = vmatpush1.xpose.msra.mxu0 0.0
  %625 = vmatprep.mubr.f32.mxu0 0.0
  %626 = vmatmul.mubr.f32.gmra.mrb[0].mxu0 %v552
  %v627 = vpop.f32.mrb[0].mxu0
  %v628 = vadd.f32 0.0, %v627
  %v629 = vpop.f32.mrb[0].mxu0
  %630 = vmatprep.mubr.f32.mxu0 0.0
  %631 = vmatmul.mubr.f32.gmra.mrb[0].mxu0 %v555
  %v632 = vpop.f32.mrb[0].mxu0
  %v633 = vadd.f32 0.0, %v632
  %v634 = vpop.f32.mrb[0].mxu0
  %635 = vdwg.mxu0
  %v636 = vmul.f32 %v628, 0.14433756
  %v637 = vmul.f32 %v633, 0.14433756
  %vm638 = vcmask 72704
  %v639 = vsel %vm638, %v636, -inf
  %640 = vmax.xlane.f32.xlu0 %v639
  %v641 = vpop.xlane.xlu0 %640
  %vm642 = vcmask 65536
  %v643 = vsel %vm642, %v637, -inf
  %644 = vmax.xlane.f32.xlu0 %v643
  %v645 = vpop.xlane.xlu0 %644
  %v646 = vsub.f32 %v636, %v641
  %v647 = vsub.f32 %v637, %v645
  %v648 = vmul.f32 %v646, 1.442695
  %v649 = vpow.pop %v648
  %v650 = vmul.f32 %v647, 1.442695
  %v651 = vpow.pop %v650
  %v652 = vsel %vm638, %v649, 0.0
  %653 = vadd.xlane.f32.xlu0 %v652
  %v654 = vpop.xlane.xlu0 %653
  %v655 = vsel %vm642, %v651, 0.0
  %656 = vadd.xlane.f32.xlu0 %v655
  %v657 = vpop.xlane.xlu0 %656
  %v658 = vrcp.pop %v654
  %v659 = vmul.f32 %v649, %v658
  %v660 = vrcp.pop %v657
  %v661 = vmul.f32 %v651, %v660
  %v663 = vsel %vm638, %v659, 0
  %v666 = vsel %vm638, %v661, 0
  %v669 = vsel %vm195, %v185, 0
  %671 = vmatprep.subr.mxu0 0.0
  %672 = vmatpush1.msra.mxu0 %v179
  %673 = vmatprep.subr.mxu0 0.0
  %674 = vmatpush1.msra.mxu0 %v669
  %675 = vmatprep.subr.mxu0 0.0
  %676 = vmatpush1.msra.mxu0 0.0
  %677 = vmatprep.subr.mxu0 0.0
  %678 = vmatpush1.msra.mxu0 0.0
  %679 = vmatprep.subr.mxu0 0.0
  %680 = vmatpush1.msra.mxu0 0.0
  %681 = vmatprep.subr.mxu0 0.0
  %682 = vmatpush1.msra.mxu0 0.0
  %683 = vmatprep.subr.mxu0 0.0
  %684 = vmatpush1.msra.mxu0 0.0
  %685 = vmatprep.subr.mxu0 0.0
  %686 = vmatpush1.msra.mxu0 0.0
  %687 = vmatprep.subr.mxu0 0.0
  %688 = vmatpush1.msra.mxu0 0.0
  %689 = vmatprep.subr.mxu0 0.0
  %690 = vmatpush1.msra.mxu0 0.0
  %691 = vmatprep.subr.mxu0 0.0
  %692 = vmatpush1.msra.mxu0 0.0
  %693 = vmatprep.subr.mxu0 0.0
  %694 = vmatpush1.msra.mxu0 0.0
  %695 = vmatprep.subr.mxu0 0.0
  %696 = vmatpush1.msra.mxu0 0.0
  %697 = vmatprep.subr.mxu0 0.0
  %698 = vmatpush1.msra.mxu0 0.0
  %699 = vmatprep.subr.mxu0 0.0
  %700 = vmatpush1.msra.mxu0 0.0
  %701 = vmatprep.subr.mxu0 0.0
  %702 = vmatpush1.msra.mxu0 0.0
  %703 = vmatprep.subr.mxu0 0.0
  %704 = vmatpush1.msra.mxu0 0.0
  %705 = vmatprep.subr.mxu0 0.0
  %706 = vmatpush1.msra.mxu0 0.0
  %707 = vmatprep.subr.mxu0 0.0
  %708 = vmatpush1.msra.mxu0 0.0
  %709 = vmatprep.subr.mxu0 0.0
  %710 = vmatpush1.msra.mxu0 0.0
  %711 = vmatprep.subr.mxu0 0.0
  %712 = vmatpush1.msra.mxu0 0.0
  %713 = vmatprep.subr.mxu0 0.0
  %714 = vmatpush1.msra.mxu0 0.0
  %715 = vmatprep.subr.mxu0 0.0
  %716 = vmatpush1.msra.mxu0 0.0
  %717 = vmatprep.subr.mxu0 0.0
  %718 = vmatpush1.msra.mxu0 0.0
  %719 = vmatprep.subr.mxu0 0.0
  %720 = vmatpush1.msra.mxu0 0.0
  %721 = vmatprep.subr.mxu0 0.0
  %722 = vmatpush1.msra.mxu0 0.0
  %723 = vmatprep.subr.mxu0 0.0
  %724 = vmatpush1.msra.mxu0 0.0
  %725 = vmatprep.subr.mxu0 0.0
  %726 = vmatpush1.msra.mxu0 0.0
  %727 = vmatprep.subr.mxu0 0.0
  %728 = vmatpush1.msra.mxu0 0.0
  %729 = vmatprep.subr.mxu0 0.0
  %730 = vmatpush1.msra.mxu0 0.0
  %731 = vmatprep.subr.mxu0 0.0
  %732 = vmatpush1.msra.mxu0 0.0
  %733 = vmatprep.subr.mxu0 0.0
  %734 = vmatpush1.msra.mxu0 0.0
  %735 = vmatprep.mubr.f32.mxu0 0.0
  %736 = vmatmul.mubr.f32.gmra.mrb[0].mxu0 %v663
  %v737 = vpop.f32.mrb[0].mxu0
  %v738 = vadd.f32 0.0, %v737
  %v739 = vpop.f32.mrb[0].mxu0
  %740 = vmatprep.mubr.f32.mxu0 0.0
  %741 = vmatmul.mubr.f32.gmra.mrb[0].mxu0 %v666
  %v742 = vpop.f32.mrb[0].mxu0
  %v743 = vadd.f32 0.0, %v742
  %v744 = vpop.f32.mrb[0].mxu0
  %745 = vdwg.mxu0
  %746 = vrot.lane.b32.xlu0 %v459, 80
  %v747 = vpop.permute.xlu0 %746
  %748 = vrot.lane.b32.xlu0 %v465, 80
  %v749 = vpop.permute.xlu0 %748
  %752 = vrot.lane.b32.xlu0 %v461, 16
  %v753 = vpop.permute.xlu0 %752
  %754 = vrot.lane.b32.xlu0 %v536, 16
  %v755 = vpop.permute.xlu0 %754
  %756 = vrot.lane.b32.xlu0 %v467, 16
  %v757 = vpop.permute.xlu0 %756
  %758 = vrot.lane.b32.xlu0 %v541, 16
  %v759 = vpop.permute.xlu0 %758
  %vm760 = vcmask 130048
  %v761 = vsel %vm760, %v753, %v755
  %v762 = vsel %vm760, %v757, %v759
  %v763 = vsel %vm550, %v747, 0
  %v765 = vsel %vm550, %v749, 0
  %v767 = vsel %vm550, %v761, 0
  %v769 = vsel %vm550, %v762, 0
  %771 = vmatprep.subr.mxu0 0.0
  %772 = vmatpush1.xpose.msra.mxu0 %v767
  %773 = vmatprep.subr.mxu0 0.0
  %774 = vmatpush1.xpose.msra.mxu0 %v769
  %775 = vmatprep.subr.mxu0 0.0
  %776 = vmatpush1.xpose.msra.mxu0 0.0
  %777 = vmatprep.subr.mxu0 0.0
  %778 = vmatpush1.xpose.msra.mxu0 0.0
  %779 = vmatprep.subr.mxu0 0.0
  %780 = vmatpush1.xpose.msra.mxu0 0.0
  %781 = vmatprep.subr.mxu0 0.0
  %782 = vmatpush1.xpose.msra.mxu0 0.0
  %783 = vmatprep.subr.mxu0 0.0
  %784 = vmatpush1.xpose.msra.mxu0 0.0
  %785 = vmatprep.subr.mxu0 0.0
  %786 = vmatpush1.xpose.msra.mxu0 0.0
  %787 = vmatprep.subr.mxu0 0.0
  %788 = vmatpush1.xpose.msra.mxu0 0.0
  %789 = vmatprep.subr.mxu0 0.0
  %790 = vmatpush1.xpose.msra.mxu0 0.0
  %791 = vmatprep.subr.mxu0 0.0
  %792 = vmatpush1.xpose.msra.mxu0 0.0
  %793 = vmatprep.subr.mxu0 0.0
  %794 = vmatpush1.xpose.msra.mxu0 0.0
  %795 = vmatprep.subr.mxu0 0.0
  %796 = vmatpush1.xpose.msra.mxu0 0.0
  %797 = vmatprep.subr.mxu0 0.0
  %798 = vmatpush1.xpose.msra.mxu0 0.0
  %799 = vmatprep.subr.mxu0 0.0
  %800 = vmatpush1.xpose.msra.mxu0 0.0
  %801 = vmatprep.subr.mxu0 0.0
  %802 = vmatpush1.xpose.msra.mxu0 0.0
  %803 = vmatprep.subr.mxu0 0.0
  %804 = vmatpush1.xpose.msra.mxu0 0.0
  %805 = vmatprep.subr.mxu0 0.0
  %806 = vmatpush1.xpose.msra.mxu0 0.0
  %807 = vmatprep.subr.mxu0 0.0
  %808 = vmatpush1.xpose.msra.mxu0 0.0
  %809 = vmatprep.subr.mxu0 0.0
  %810 = vmatpush1.xpose.msra.mxu0 0.0
  %811 = vmatprep.subr.mxu0 0.0
  %812 = vmatpush1.xpose.msra.mxu0 0.0
  %813 = vmatprep.subr.mxu0 0.0
  %814 = vmatpush1.xpose.msra.mxu0 0.0
  %815 = vmatprep.subr.mxu0 0.0
  %816 = vmatpush1.xpose.msra.mxu0 0.0
  %817 = vmatprep.subr.mxu0 0.0
  %818 = vmatpush1.xpose.msra.mxu0 0.0
  %819 = vmatprep.subr.mxu0 0.0
  %820 = vmatpush1.xpose.msra.mxu0 0.0
  %821 = vmatprep.subr.mxu0 0.0
  %822 = vmatpush1.xpose.msra.mxu0 0.0
  %823 = vmatprep.subr.mxu0 0.0
  %824 = vmatpush1.xpose.msra.mxu0 0.0
  %825 = vmatprep.subr.mxu0 0.0
  %826 = vmatpush1.xpose.msra.mxu0 0.0
  %827 = vmatprep.subr.mxu0 0.0
  %828 = vmatpush1.xpose.msra.mxu0 0.0
  %829 = vmatprep.subr.mxu0 0.0
  %830 = vmatpush1.xpose.msra.mxu0 0.0
  %831 = vmatprep.subr.mxu0 0.0
  %832 = vmatpush1.xpose.msra.mxu0 0.0
  %833 = vmatprep.subr.mxu0 0.0
  %834 = vmatpush1.xpose.msra.mxu0 0.0
  %835 = vmatprep.mubr.f32.mxu0 0.0
  %836 = vmatmul.mubr.f32.gmra.mrb[0].mxu0 %v763
  %v837 = vpop.f32.mrb[0].mxu0
  %v838 = vadd.f32 0.0, %v837
  %v839 = vpop.f32.mrb[0].mxu0
  %840 = vmatprep.mubr.f32.mxu0 0.0
  %841 = vmatmul.mubr.f32.gmra.mrb[0].mxu0 %v765
  %v842 = vpop.f32.mrb[0].mxu0
  %v843 = vadd.f32 0.0, %v842
  %v844 = vpop.f32.mrb[0].mxu0
  %845 = vdwg.mxu0
  %v846 = vmul.f32 %v838, 0.14433756
  %v847 = vmul.f32 %v843, 0.14433756
  %v848 = vsel %vm638, %v846, -inf
  %849 = vmax.xlane.f32.xlu0 %v848
  %v850 = vpop.xlane.xlu0 %849
  %v851 = vsel %vm642, %v847, -inf
  %852 = vmax.xlane.f32.xlu0 %v851
  %v853 = vpop.xlane.xlu0 %852
  %v854 = vsub.f32 %v846, %v850
  %v855 = vsub.f32 %v847, %v853
  %v856 = vmul.f32 %v854, 1.442695
  %v857 = vpow.pop %v856
  %v858 = vmul.f32 %v855, 1.442695
  %v859 = vpow.pop %v858
  %v860 = vsel %vm638, %v857, 0.0
  %861 = vadd.xlane.f32.xlu0 %v860
  %v862 = vpop.xlane.xlu0 %861
  %v863 = vsel %vm642, %v859, 0.0
  %864 = vadd.xlane.f32.xlu0 %v863
  %v865 = vpop.xlane.xlu0 %864
  %v866 = vrcp.pop %v862
  %v867 = vmul.f32 %v857, %v866
  %v868 = vrcp.pop %v865
  %v869 = vmul.f32 %v859, %v868
  %871 = vrot.lane.b32.xlu0 %v179, 80
  %v872 = vpop.permute.xlu0 %871
  %873 = vrot.lane.b32.xlu0 %v185, 80
  %v874 = vpop.permute.xlu0 %873
  %v877 = vsel %vm638, %v867, 0
  %v880 = vsel %vm638, %v869, 0
  %v882 = vsel %vm195, %v874, 0
  %884 = vmatprep.subr.mxu0 0.0
  %885 = vmatpush1.msra.mxu0 %v872
  %886 = vmatprep.subr.mxu0 0.0
  %887 = vmatpush1.msra.mxu0 %v882
  %888 = vmatprep.subr.mxu0 0.0
  %889 = vmatpush1.msra.mxu0 0.0
  %890 = vmatprep.subr.mxu0 0.0
  %891 = vmatpush1.msra.mxu0 0.0
  %892 = vmatprep.subr.mxu0 0.0
  %893 = vmatpush1.msra.mxu0 0.0
  %894 = vmatprep.subr.mxu0 0.0
  %895 = vmatpush1.msra.mxu0 0.0
  %896 = vmatprep.subr.mxu0 0.0
  %897 = vmatpush1.msra.mxu0 0.0
  %898 = vmatprep.subr.mxu0 0.0
  %899 = vmatpush1.msra.mxu0 0.0
  %900 = vmatprep.subr.mxu0 0.0
  %901 = vmatpush1.msra.mxu0 0.0
  %902 = vmatprep.subr.mxu0 0.0
  %903 = vmatpush1.msra.mxu0 0.0
  %904 = vmatprep.subr.mxu0 0.0
  %905 = vmatpush1.msra.mxu0 0.0
  %906 = vmatprep.subr.mxu0 0.0
  %907 = vmatpush1.msra.mxu0 0.0
  %908 = vmatprep.subr.mxu0 0.0
  %909 = vmatpush1.msra.mxu0 0.0
  %910 = vmatprep.subr.mxu0 0.0
  %911 = vmatpush1.msra.mxu0 0.0
  %912 = vmatprep.subr.mxu0 0.0
  %913 = vmatpush1.msra.mxu0 0.0
  %914 = vmatprep.subr.mxu0 0.0
  %915 = vmatpush1.msra.mxu0 0.0
  %916 = vmatprep.subr.mxu0 0.0
  %917 = vmatpush1.msra.mxu0 0.0
  %918 = vmatprep.subr.mxu0 0.0
  %919 = vmatpush1.msra.mxu0 0.0
  %920 = vmatprep.subr.mxu0 0.0
  %921 = vmatpush1.msra.mxu0 0.0
  %922 = vmatprep.subr.mxu0 0.0
  %923 = vmatpush1.msra.mxu0 0.0
  %924 = vmatprep.subr.mxu0 0.0
  %925 = vmatpush1.msra.mxu0 0.0
  %926 = vmatprep.subr.mxu0 0.0
  %927 = vmatpush1.msra.mxu0 0.0
  %928 = vmatprep.subr.mxu0 0.0
  %929 = vmatpush1.msra.mxu0 0.0
  %930 = vmatprep.subr.mxu0 0.0
  %931 = vmatpush1.msra.mxu0 0.0
  %932 = vmatprep.subr.mxu0 0.0
  %933 = vmatpush1.msra.mxu0 0.0
  %934 = vmatprep.subr.mxu0 0.0
  %935 = vmatpush1.msra.mxu0 0.0
  %936 = vmatprep.subr.mxu0 0.0
  %937 = vmatpush1.msra.mxu0 0.0
  %938 = vmatprep.subr.mxu0 0.0
  %939 = vmatpush1.msra.mxu0 0.0
  %940 = vmatprep.subr.mxu0 0.0
  %941 = vmatpush1.msra.mxu0 0.0
  %942 = vmatprep.subr.mxu0 0.0
  %943 = vmatpush1.msra.mxu0 0.0
  %944 = vmatprep.subr.mxu0 0.0
  %945 = vmatpush1.msra.mxu0 0.0
  %946 = vmatprep.subr.mxu0 0.0
  %947 = vmatpush1.msra.mxu0 0.0
  %948 = vmatprep.mubr.f32.mxu0 0.0
  %949 = vmatmul.mubr.f32.gmra.mrb[0].mxu0 %v877
  %v950 = vpop.f32.mrb[0].mxu0
  %v951 = vadd.f32 0.0, %v950
  %v952 = vpop.f32.mrb[0].mxu0
  %953 = vmatprep.mubr.f32.mxu0 0.0
  %954 = vmatmul.mubr.f32.gmra.mrb[0].mxu0 %v880
  %v955 = vpop.f32.mrb[0].mxu0
  %v956 = vadd.f32 0.0, %v955
  %v957 = vpop.f32.mrb[0].mxu0
  %958 = vdwg.mxu0
  %959 = vrot.lane.b32.xlu0 %v459, 32
  %v960 = vpop.permute.xlu0 %959
  %961 = vrot.lane.b32.xlu0 %v461, 32
  %v962 = vpop.permute.xlu0 %961
  %963 = vrot.lane.b32.xlu0 %v465, 32
  %v964 = vpop.permute.xlu0 %963
  %965 = vrot.lane.b32.xlu0 %v467, 32
  %v966 = vpop.permute.xlu0 %965
  %vm967 = vcmask 261120
  %v968 = vsel %vm967, %v960, %v962
  %v969 = vsel %vm967, %v964, %v966
  %970 = vrot.lane.b32.xlu0 %v536, 96
  %v971 = vpop.permute.xlu0 %970
  %972 = vrot.lane.b32.xlu0 %v541, 96
  %v973 = vpop.permute.xlu0 %972
  %v974 = vsel %vm550, %v968, 0
  %v976 = vsel %vm550, %v969, 0
  %v978 = vsel %vm550, %v971, 0
  %v980 = vsel %vm550, %v973, 0
  %982 = vmatprep.subr.mxu0 0.0
  %983 = vmatpush1.xpose.msra.mxu0 %v978
  %984 = vmatprep.subr.mxu0 0.0
  %985 = vmatpush1.xpose.msra.mxu0 %v980
  %986 = vmatprep.subr.mxu0 0.0
  %987 = vmatpush1.xpose.msra.mxu0 0.0
  %988 = vmatprep.subr.mxu0 0.0
  %989 = vmatpush1.xpose.msra.mxu0 0.0
  %990 = vmatprep.subr.mxu0 0.0
  %991 = vmatpush1.xpose.msra.mxu0 0.0
  %992 = vmatprep.subr.mxu0 0.0
  %993 = vmatpush1.xpose.msra.mxu0 0.0
  %994 = vmatprep.subr.mxu0 0.0
  %995 = vmatpush1.xpose.msra.mxu0 0.0
  %996 = vmatprep.subr.mxu0 0.0
  %997 = vmatpush1.xpose.msra.mxu0 0.0
  %998 = vmatprep.subr.mxu0 0.0
  %999 = vmatpush1.xpose.msra.mxu0 0.0
  %1000 = vmatprep.subr.mxu0 0.0
  %1001 = vmatpush1.xpose.msra.mxu0 0.0
  %1002 = vmatprep.subr.mxu0 0.0
  %1003 = vmatpush1.xpose.msra.mxu0 0.0
  %1004 = vmatprep.subr.mxu0 0.0
  %1005 = vmatpush1.xpose.msra.mxu0 0.0
  %1006 = vmatprep.subr.mxu0 0.0
  %1007 = vmatpush1.xpose.msra.mxu0 0.0
  %1008 = vmatprep.subr.mxu0 0.0
  %1009 = vmatpush1.xpose.msra.mxu0 0.0
  %1010 = vmatprep.subr.mxu0 0.0
  %1011 = vmatpush1.xpose.msra.mxu0 0.0
  %1012 = vmatprep.subr.mxu0 0.0
  %1013 = vmatpush1.xpose.msra.mxu0 0.0
  %1014 = vmatprep.subr.mxu0 0.0
  %1015 = vmatpush1.xpose.msra.mxu0 0.0
  %1016 = vmatprep.subr.mxu0 0.0
  %1017 = vmatpush1.xpose.msra.mxu0 0.0
  %1018 = vmatprep.subr.mxu0 0.0
  %1019 = vmatpush1.xpose.msra.mxu0 0.0
  %1020 = vmatprep.subr.mxu0 0.0
  %1021 = vmatpush1.xpose.msra.mxu0 0.0
  %1022 = vmatprep.subr.mxu0 0.0
  %1023 = vmatpush1.xpose.msra.mxu0 0.0
  %1024 = vmatprep.subr.mxu0 0.0
  %1025 = vmatpush1.xpose.msra.mxu0 0.0
  %1026 = vmatprep.subr.mxu0 0.0
  %1027 = vmatpush1.xpose.msra.mxu0 0.0
  %1028 = vmatprep.subr.mxu0 0.0
  %1029 = vmatpush1.xpose.msra.mxu0 0.0
  %1030 = vmatprep.subr.mxu0 0.0
  %1031 = vmatpush1.xpose.msra.mxu0 0.0
  %1032 = vmatprep.subr.mxu0 0.0
  %1033 = vmatpush1.xpose.msra.mxu0 0.0
  %1034 = vmatprep.subr.mxu0 0.0
  %1035 = vmatpush1.xpose.msra.mxu0 0.0
  %1036 = vmatprep.subr.mxu0 0.0
  %1037 = vmatpush1.xpose.msra.mxu0 0.0
  %1038 = vmatprep.subr.mxu0 0.0
  %1039 = vmatpush1.xpose.msra.mxu0 0.0
  %1040 = vmatprep.subr.mxu0 0.0
  %1041 = vmatpush1.xpose.msra.mxu0 0.0
  %1042 = vmatprep.subr.mxu0 0.0
  %1043 = vmatpush1.xpose.msra.mxu0 0.0
  %1044 = vmatprep.subr.mxu0 0.0
  %1045 = vmatpush1.xpose.msra.mxu0 0.0
  %1046 = vmatprep.mubr.f32.mxu0 0.0
  %1047 = vmatmul.mubr.f32.gmra.mrb[0].mxu0 %v974
  %v1048 = vpop.f32.mrb[0].mxu0
  %v1049 = vadd.f32 0.0, %v1048
  %v1050 = vpop.f32.mrb[0].mxu0
  %1051 = vmatprep.mubr.f32.mxu0 0.0
  %1052 = vmatmul.mubr.f32.gmra.mrb[0].mxu0 %v976
  %v1053 = vpop.f32.mrb[0].mxu0
  %v1054 = vadd.f32 0.0, %v1053
  %v1055 = vpop.f32.mrb[0].mxu0
  %1056 = vdwg.mxu0
  %v1057 = vmul.f32 %v1049, 0.14433756
  %v1058 = vmul.f32 %v1054, 0.14433756
  %v1059 = vsel %vm638, %v1057, -inf
  %1060 = vmax.xlane.f32.xlu0 %v1059
  %v1061 = vpop.xlane.xlu0 %1060
  %v1062 = vsel %vm642, %v1058, -inf
  %1063 = vmax.xlane.f32.xlu0 %v1062
  %v1064 = vpop.xlane.xlu0 %1063
  %v1065 = vsub.f32 %v1057, %v1061
  %v1066 = vsub.f32 %v1058, %v1064
  %v1067 = vmul.f32 %v1065, 1.442695
  %v1068 = vpow.pop %v1067
  %v1069 = vmul.f32 %v1066, 1.442695
  %v1070 = vpow.pop %v1069
  %v1071 = vsel %vm638, %v1068, 0.0
  %1072 = vadd.xlane.f32.xlu0 %v1071
  %v1073 = vpop.xlane.xlu0 %1072
  %v1074 = vsel %vm642, %v1070, 0.0
  %1075 = vadd.xlane.f32.xlu0 %v1074
  %v1076 = vpop.xlane.xlu0 %1075
  %v1077 = vrcp.pop %v1073
  %v1078 = vmul.f32 %v1068, %v1077
  %v1079 = vrcp.pop %v1076
  %v1080 = vmul.f32 %v1070, %v1079
  %1083 = vrot.lane.b32.xlu0 %v179, 32
  %v1084 = vpop.permute.xlu0 %1083
  %1085 = vrot.lane.b32.xlu0 %v181, 32
  %v1086 = vpop.permute.xlu0 %1085
  %1087 = vrot.lane.b32.xlu0 %v185, 32
  %v1088 = vpop.permute.xlu0 %1087
  %1089 = vrot.lane.b32.xlu0 %v187, 32
  %v1090 = vpop.permute.xlu0 %1089
  %v1091 = vsel %vm967, %v1084, %v1086
  %v1092 = vsel %vm967, %v1088, %v1090
  %v1095 = vsel %vm638, %v1078, 0
  %v1098 = vsel %vm638, %v1080, 0
  %v1100 = vsel %vm195, %v1092, 0
  %1102 = vmatprep.subr.mxu0 0.0
  %1103 = vmatpush1.msra.mxu0 %v1091
  %1104 = vmatprep.subr.mxu0 0.0
  %1105 = vmatpush1.msra.mxu0 %v1100
  %1106 = vmatprep.subr.mxu0 0.0
  %1107 = vmatpush1.msra.mxu0 0.0
  %1108 = vmatprep.subr.mxu0 0.0
  %1109 = vmatpush1.msra.mxu0 0.0
  %1110 = vmatprep.subr.mxu0 0.0
  %1111 = vmatpush1.msra.mxu0 0.0
  %1112 = vmatprep.subr.mxu0 0.0
  %1113 = vmatpush1.msra.mxu0 0.0
  %1114 = vmatprep.subr.mxu0 0.0
  %1115 = vmatpush1.msra.mxu0 0.0
  %1116 = vmatprep.subr.mxu0 0.0
  %1117 = vmatpush1.msra.mxu0 0.0
  %1118 = vmatprep.subr.mxu0 0.0
  %1119 = vmatpush1.msra.mxu0 0.0
  %1120 = vmatprep.subr.mxu0 0.0
  %1121 = vmatpush1.msra.mxu0 0.0
  %1122 = vmatprep.subr.mxu0 0.0
  %1123 = vmatpush1.msra.mxu0 0.0
  %1124 = vmatprep.subr.mxu0 0.0
  %1125 = vmatpush1.msra.mxu0 0.0
  %1126 = vmatprep.subr.mxu0 0.0
  %1127 = vmatpush1.msra.mxu0 0.0
  %1128 = vmatprep.subr.mxu0 0.0
  %1129 = vmatpush1.msra.mxu0 0.0
  %1130 = vmatprep.subr.mxu0 0.0
  %1131 = vmatpush1.msra.mxu0 0.0
  %1132 = vmatprep.subr.mxu0 0.0
  %1133 = vmatpush1.msra.mxu0 0.0
  %1134 = vmatprep.subr.mxu0 0.0
  %1135 = vmatpush1.msra.mxu0 0.0
  %1136 = vmatprep.subr.mxu0 0.0
  %1137 = vmatpush1.msra.mxu0 0.0
  %1138 = vmatprep.subr.mxu0 0.0
  %1139 = vmatpush1.msra.mxu0 0.0
  %1140 = vmatprep.subr.mxu0 0.0
  %1141 = vmatpush1.msra.mxu0 0.0
  %1142 = vmatprep.subr.mxu0 0.0
  %1143 = vmatpush1.msra.mxu0 0.0
  %1144 = vmatprep.subr.mxu0 0.0
  %1145 = vmatpush1.msra.mxu0 0.0
  %1146 = vmatprep.subr.mxu0 0.0
  %1147 = vmatpush1.msra.mxu0 0.0
  %1148 = vmatprep.subr.mxu0 0.0
  %1149 = vmatpush1.msra.mxu0 0.0
  %1150 = vmatprep.subr.mxu0 0.0
  %1151 = vmatpush1.msra.mxu0 0.0
  %1152 = vmatprep.subr.mxu0 0.0
  %1153 = vmatpush1.msra.mxu0 0.0
  %1154 = vmatprep.subr.mxu0 0.0
  %1155 = vmatpush1.msra.mxu0 0.0
  %1156 = vmatprep.subr.mxu0 0.0
  %1157 = vmatpush1.msra.mxu0 0.0
  %1158 = vmatprep.subr.mxu0 0.0
  %1159 = vmatpush1.msra.mxu0 0.0
  %1160 = vmatprep.subr.mxu0 0.0
  %1161 = vmatpush1.msra.mxu0 0.0
  %1162 = vmatprep.subr.mxu0 0.0
  %1163 = vmatpush1.msra.mxu0 0.0
  %1164 = vmatprep.subr.mxu0 0.0
  %1165 = vmatpush1.msra.mxu0 0.0
  %1166 = vmatprep.mubr.f32.mxu0 0.0
  %1167 = vmatmul.mubr.f32.gmra.mrb[0].mxu0 %v1095
  %v1168 = vpop.f32.mrb[0].mxu0
  %v1169 = vadd.f32 0.0, %v1168
  %v1170 = vpop.f32.mrb[0].mxu0
  %1171 = vmatprep.mubr.f32.mxu0 0.0
  %1172 = vmatmul.mubr.f32.gmra.mrb[0].mxu0 %v1098
  %v1173 = vpop.f32.mrb[0].mxu0
  %v1174 = vadd.f32 0.0, %v1173
  %v1175 = vpop.f32.mrb[0].mxu0
  %1176 = vdwg.mxu0
  %1177 = vrot.lane.b32.xlu0 %v461, 112
  %v1178 = vpop.permute.xlu0 %1177
  %1179 = vrot.lane.b32.xlu0 %v467, 112
  %v1180 = vpop.permute.xlu0 %1179
  %1181 = vrot.lane.b32.xlu0 %v536, 48
  %v1182 = vpop.permute.xlu0 %1181
  %1183 = vrot.lane.b32.xlu0 %v541, 48
  %v1184 = vpop.permute.xlu0 %1183
  %v1185 = vsel %vm550, %v1178, 0
  %v1187 = vsel %vm550, %v1180, 0
  %v1189 = vsel %vm550, %v1182, 0
  %v1191 = vsel %vm550, %v1184, 0
  %1193 = vmatprep.subr.mxu0 0.0
  %1194 = vmatpush1.xpose.msra.mxu0 %v1189
  %1195 = vmatprep.subr.mxu0 0.0
  %1196 = vmatpush1.xpose.msra.mxu0 %v1191
  %1197 = vmatprep.subr.mxu0 0.0
  %1198 = vmatpush1.xpose.msra.mxu0 0.0
  %1199 = vmatprep.subr.mxu0 0.0
  %1200 = vmatpush1.xpose.msra.mxu0 0.0
  %1201 = vmatprep.subr.mxu0 0.0
  %1202 = vmatpush1.xpose.msra.mxu0 0.0
  %1203 = vmatprep.subr.mxu0 0.0
  %1204 = vmatpush1.xpose.msra.mxu0 0.0
  %1205 = vmatprep.subr.mxu0 0.0
  %1206 = vmatpush1.xpose.msra.mxu0 0.0
  %1207 = vmatprep.subr.mxu0 0.0
  %1208 = vmatpush1.xpose.msra.mxu0 0.0
  %1209 = vmatprep.subr.mxu0 0.0
  %1210 = vmatpush1.xpose.msra.mxu0 0.0
  %1211 = vmatprep.subr.mxu0 0.0
  %1212 = vmatpush1.xpose.msra.mxu0 0.0
  %1213 = vmatprep.subr.mxu0 0.0
  %1214 = vmatpush1.xpose.msra.mxu0 0.0
  %1215 = vmatprep.subr.mxu0 0.0
  %1216 = vmatpush1.xpose.msra.mxu0 0.0
  %1217 = vmatprep.subr.mxu0 0.0
  %1218 = vmatpush1.xpose.msra.mxu0 0.0
  %1219 = vmatprep.subr.mxu0 0.0
  %1220 = vmatpush1.xpose.msra.mxu0 0.0
  %1221 = vmatprep.subr.mxu0 0.0
  %1222 = vmatpush1.xpose.msra.mxu0 0.0
  %1223 = vmatprep.subr.mxu0 0.0
  %1224 = vmatpush1.xpose.msra.mxu0 0.0
  %1225 = vmatprep.subr.mxu0 0.0
  %1226 = vmatpush1.xpose.msra.mxu0 0.0
  %1227 = vmatprep.subr.mxu0 0.0
  %1228 = vmatpush1.xpose.msra.mxu0 0.0
  %1229 = vmatprep.subr.mxu0 0.0
  %1230 = vmatpush1.xpose.msra.mxu0 0.0
  %1231 = vmatprep.subr.mxu0 0.0
  %1232 = vmatpush1.xpose.msra.mxu0 0.0
  %1233 = vmatprep.subr.mxu0 0.0
  %1234 = vmatpush1.xpose.msra.mxu0 0.0
  %1235 = vmatprep.subr.mxu0 0.0
  %1236 = vmatpush1.xpose.msra.mxu0 0.0
  %1237 = vmatprep.subr.mxu0 0.0
  %1238 = vmatpush1.xpose.msra.mxu0 0.0
  %1239 = vmatprep.subr.mxu0 0.0
  %1240 = vmatpush1.xpose.msra.mxu0 0.0
  %1241 = vmatprep.subr.mxu0 0.0
  %1242 = vmatpush1.xpose.msra.mxu0 0.0
  %1243 = vmatprep.subr.mxu0 0.0
  %1244 = vmatpush1.xpose.msra.mxu0 0.0
  %1245 = vmatprep.subr.mxu0 0.0
  %1246 = vmatpush1.xpose.msra.mxu0 0.0
  %1247 = vmatprep.subr.mxu0 0.0
  %1248 = vmatpush1.xpose.msra.mxu0 0.0
  %1249 = vmatprep.subr.mxu0 0.0
  %1250 = vmatpush1.xpose.msra.mxu0 0.0
  %1251 = vmatprep.subr.mxu0 0.0
  %1252 = vmatpush1.xpose.msra.mxu0 0.0
  %1253 = vmatprep.subr.mxu0 0.0
  %1254 = vmatpush1.xpose.msra.mxu0 0.0
  %1255 = vmatprep.subr.mxu0 0.0
  %1256 = vmatpush1.xpose.msra.mxu0 0.0
  %1257 = vmatprep.mubr.f32.mxu0 0.0
  %1258 = vmatmul.mubr.f32.gmra.mrb[0].mxu0 %v1185
  %v1259 = vpop.f32.mrb[0].mxu0
  %v1260 = vadd.f32 0.0, %v1259
  %v1261 = vpop.f32.mrb[0].mxu0
  %1262 = vmatprep.mubr.f32.mxu0 0.0
  %1263 = vmatmul.mubr.f32.gmra.mrb[0].mxu0 %v1187
  %v1264 = vpop.f32.mrb[0].mxu0
  %v1265 = vadd.f32 0.0, %v1264
  %v1266 = vpop.f32.mrb[0].mxu0
  %1267 = vdwg.mxu0
  %v1268 = vmul.f32 %v1260, 0.14433756
  %v1269 = vmul.f32 %v1265, 0.14433756
  %v1270 = vsel %vm638, %v1268, -inf
  %1271 = vmax.xlane.f32.xlu0 %v1270
  %v1272 = vpop.xlane.xlu0 %1271
  %v1273 = vsel %vm642, %v1269, -inf
  %1274 = vmax.xlane.f32.xlu0 %v1273
  %v1275 = vpop.xlane.xlu0 %1274
  %v1276 = vsub.f32 %v1268, %v1272
  %v1277 = vsub.f32 %v1269, %v1275
  %v1278 = vmul.f32 %v1276, 1.442695
  %v1279 = vpow.pop %v1278
  %v1280 = vmul.f32 %v1277, 1.442695
  %v1281 = vpow.pop %v1280
  %v1282 = vsel %vm638, %v1279, 0.0
  %1283 = vadd.xlane.f32.xlu0 %v1282
  %v1284 = vpop.xlane.xlu0 %1283
  %v1285 = vsel %vm642, %v1281, 0.0
  %1286 = vadd.xlane.f32.xlu0 %v1285
  %v1287 = vpop.xlane.xlu0 %1286
  %v1288 = vrcp.pop %v1284
  %v1289 = vmul.f32 %v1279, %v1288
  %v1290 = vrcp.pop %v1287
  %v1291 = vmul.f32 %v1281, %v1290
  %1292 = vrot.lane.b32.xlu0 %v181, 112
  %v1293 = vpop.permute.xlu0 %1292
  %1294 = vrot.lane.b32.xlu0 %v187, 112
  %v1295 = vpop.permute.xlu0 %1294
  %v1298 = vsel %vm638, %v1289, 0
  %v1301 = vsel %vm638, %v1291, 0
  %v1303 = vsel %vm195, %v1295, 0
  %1305 = vmatprep.subr.mxu0 0.0
  %1306 = vmatpush1.msra.mxu0 %v1293
  %1307 = vmatprep.subr.mxu0 0.0
  %1308 = vmatpush1.msra.mxu0 %v1303
  %1309 = vmatprep.subr.mxu0 0.0
  %1310 = vmatpush1.msra.mxu0 0.0
  %1311 = vmatprep.subr.mxu0 0.0
  %1312 = vmatpush1.msra.mxu0 0.0
  %1313 = vmatprep.subr.mxu0 0.0
  %1314 = vmatpush1.msra.mxu0 0.0
  %1315 = vmatprep.subr.mxu0 0.0
  %1316 = vmatpush1.msra.mxu0 0.0
  %1317 = vmatprep.subr.mxu0 0.0
  %1318 = vmatpush1.msra.mxu0 0.0
  %1319 = vmatprep.subr.mxu0 0.0
  %1320 = vmatpush1.msra.mxu0 0.0
  %1321 = vmatprep.subr.mxu0 0.0
  %1322 = vmatpush1.msra.mxu0 0.0
  %1323 = vmatprep.subr.mxu0 0.0
  %1324 = vmatpush1.msra.mxu0 0.0
  %1325 = vmatprep.subr.mxu0 0.0
  %1326 = vmatpush1.msra.mxu0 0.0
  %1327 = vmatprep.subr.mxu0 0.0
  %1328 = vmatpush1.msra.mxu0 0.0
  %1329 = vmatprep.subr.mxu0 0.0
  %1330 = vmatpush1.msra.mxu0 0.0
  %1331 = vmatprep.subr.mxu0 0.0
  %1332 = vmatpush1.msra.mxu0 0.0
  %1333 = vmatprep.subr.mxu0 0.0
  %1334 = vmatpush1.msra.mxu0 0.0
  %1335 = vmatprep.subr.mxu0 0.0
  %1336 = vmatpush1.msra.mxu0 0.0
  %1337 = vmatprep.subr.mxu0 0.0
  %1338 = vmatpush1.msra.mxu0 0.0
  %1339 = vmatprep.subr.mxu0 0.0
  %1340 = vmatpush1.msra.mxu0 0.0
  %1341 = vmatprep.subr.mxu0 0.0
  %1342 = vmatpush1.msra.mxu0 0.0
  %1343 = vmatprep.subr.mxu0 0.0
  %1344 = vmatpush1.msra.mxu0 0.0
  %1345 = vmatprep.subr.mxu0 0.0
  %1346 = vmatpush1.msra.mxu0 0.0
  %1347 = vmatprep.subr.mxu0 0.0
  %1348 = vmatpush1.msra.mxu0 0.0
  %1349 = vmatprep.subr.mxu0 0.0
  %1350 = vmatpush1.msra.mxu0 0.0
  %1351 = vmatprep.subr.mxu0 0.0
  %1352 = vmatpush1.msra.mxu0 0.0
  %1353 = vmatprep.subr.mxu0 0.0
  %1354 = vmatpush1.msra.mxu0 0.0
  %1355 = vmatprep.subr.mxu0 0.0
  %1356 = vmatpush1.msra.mxu0 0.0
  %1357 = vmatprep.subr.mxu0 0.0
  %1358 = vmatpush1.msra.mxu0 0.0
  %1359 = vmatprep.subr.mxu0 0.0
  %1360 = vmatpush1.msra.mxu0 0.0
  %1361 = vmatprep.subr.mxu0 0.0
  %1362 = vmatpush1.msra.mxu0 0.0
  %1363 = vmatprep.subr.mxu0 0.0
  %1364 = vmatpush1.msra.mxu0 0.0
  %1365 = vmatprep.subr.mxu0 0.0
  %1366 = vmatpush1.msra.mxu0 0.0
  %1367 = vmatprep.subr.mxu0 0.0
  %1368 = vmatpush1.msra.mxu0 0.0
  %1369 = vmatprep.mubr.f32.mxu0 0.0
  %1370 = vmatmul.mubr.f32.gmra.mrb[0].mxu0 %v1298
  %v1371 = vpop.f32.mrb[0].mxu0
  %v1372 = vadd.f32 0.0, %v1371
  %v1373 = vpop.f32.mrb[0].mxu0
  %1374 = vmatprep.mubr.f32.mxu0 0.0
  %1375 = vmatmul.mubr.f32.gmra.mrb[0].mxu0 %v1301
  %v1376 = vpop.f32.mrb[0].mxu0
  %v1377 = vadd.f32 0.0, %v1376
  %v1378 = vpop.f32.mrb[0].mxu0
  %1379 = vdwg.mxu0
  %1382 = vrot.lane.b32.xlu0 %v951, 48
  %v1383 = vpop.permute.xlu0 %1382
  %1384 = vrot.lane.b32.xlu0 %v956, 48
  %v1385 = vpop.permute.xlu0 %1384
  %1390 = vrot.lane.b32.xlu0 %v1169, 96
  %v1391 = vpop.permute.xlu0 %1390
  %1392 = vrot.lane.b32.xlu0 %v1174, 96
  %v1393 = vpop.permute.xlu0 %1392
  %1398 = vrot.lane.b32.xlu0 %v1372, 16
  %v1399 = vpop.permute.xlu0 %1398
  %1400 = vrot.lane.b32.xlu0 %v1377, 16
  %v1401 = vpop.permute.xlu0 %1400
  %v1404 = vsel %vm550, %v738, %v1383
  %v1405 = vsel %vm550, %v743, %v1385
  %vm1406 = vcmask 785408
  %v1407 = vsel %vm1406, %v1404, %v1391
  %v1408 = vsel %vm1406, %v1405, %v1393
  %v1409 = vsel %vm760, %v1391, %v1399
  %v1410 = vsel %vm760, %v1393, %v1401
  %v1411 = vld [vmem:[%s10] sm:$0xff]
  %v1412 = vld [vmem:[%s10 + $0x8] sm:$0xff]
  %v1413 = vld [vmem:[%s10 + $0x10] sm:$0xff]
  %v1414 = vld [vmem:[%s10 + $0x18] sm:$0xff]
  %v1415 = vld [vmem:[%s10 + $0x20] sm:$0xff]
  %v1416 = vld [vmem:[%s10 + $0x28] sm:$0xff]
  %v1417 = vld [vmem:[%s10 + $0x30] sm:$0xff]
  %v1418 = vld [vmem:[%s10 + $0x38] sm:$0xff]
  %v1419 = vld [vmem:[%s10 + $0x40] sm:$0xff]
  %v1420 = vld [vmem:[%s10 + $0x48] sm:$0xff]
  %v1421 = vld [vmem:[%s10 + $0x50] sm:$0xff]
  %v1422 = vld [vmem:[%s10 + $0x58] sm:$0xff]
  %v1423 = vld [vmem:[%s10 + $0x60] sm:$0xff]
  %v1424 = vld [vmem:[%s10 + $0x68] sm:$0xff]
  %v1425 = vld [vmem:[%s10 + $0x70] sm:$0xff]
  %v1426 = vld [vmem:[%s10 + $0x78] sm:$0xff]
  %v1427 = vld [vmem:[%s10 + $0x80] sm:$0xff]
  %v1428 = vld [vmem:[%s10 + $0x88] sm:$0xff]
  %v1429 = vld [vmem:[%s10 + $0x90] sm:$0xff]
  %v1430 = vld [vmem:[%s10 + $0x98] sm:$0xff]
  %v1431 = vld [vmem:[%s10 + $0xa0] sm:$0xff]
  %v1432 = vld [vmem:[%s10 + $0xa8] sm:$0xff]
  %v1433 = vld [vmem:[%s10 + $0xb0] sm:$0xff]
  %v1434 = vld [vmem:[%s10 + $0xb8] sm:$0xff]
  %v1435 = vld [vmem:[%s10 + $0xc0] sm:$0xff]
  %v1436 = vld [vmem:[%s10 + $0xc8] sm:$0xff]
  %v1437 = vld [vmem:[%s10 + $0xd0] sm:$0xff]
  %v1438 = vld [vmem:[%s10 + $0xd8] sm:$0xff]
  %v1439 = vld [vmem:[%s10 + $0xe0] sm:$0xff]
  %v1440 = vld [vmem:[%s10 + $0xe8] sm:$0xff]
  %v1441 = vld [vmem:[%s10 + $0xf0] sm:$0xff]
  %v1442 = vld [vmem:[%s10 + $0xf8] sm:$0xff]
  %v1443 = vld [vmem:[%s10 + $0x100] sm:$0xff]
  %v1444 = vld [vmem:[%s10 + $0x108] sm:$0xff]
  %v1445 = vld [vmem:[%s10 + $0x110] sm:$0xff]
  %v1446 = vld [vmem:[%s10 + $0x118] sm:$0xff]
  %v1447 = vld [vmem:[%s10 + $0x120] sm:$0xff]
  %v1448 = vld [vmem:[%s10 + $0x128] sm:$0xff]
  %v1449 = vld [vmem:[%s10 + $0x130] sm:$0xff]
  %v1450 = vld [vmem:[%s10 + $0x138] sm:$0xff]
  %v1451 = vld [vmem:[%s10 + $0x140] sm:$0xff]
  %v1452 = vld [vmem:[%s10 + $0x148] sm:$0xff]
  %v1453 = vld [vmem:[%s10 + $0x150] sm:$0xff]
  %v1454 = vld [vmem:[%s10 + $0x158] sm:$0xff]
  %v1455 = vld [vmem:[%s10 + $0x160] sm:$0xff]
  %v1456 = vld [vmem:[%s10 + $0x168] sm:$0xff]
  %v1457 = vld [vmem:[%s10 + $0x170] sm:$0xff]
  %v1458 = vld [vmem:[%s10 + $0x178] sm:$0xff]
  %v1459 = vld [vmem:[%s11] sm:$0x3]
  %v1461 = vlaneseq
  %v1462 = vshrl.u32 %v1461, 7
  %v1463 = vsub.s32 0, %v1462
  %v1464 = vrot.slane %v1459, %v1463
  %v1465 = vlaneseq
  %v1466 = vshrl.u32 %v1465, 7
  %v1467 = vsub.s32 1, %v1466
  %v1468 = vrot.slane %v1459, %v1467
  %v1472 = vsel %vm105, %v1409, 0
  %v1475 = vsel %vm105, %v1410, 0
  %1477 = vmatprep.subr.mxu0 %v1412
  %1478 = vmatpush1.msra.mxu0 %v1411
  %1479 = vmatprep.subr.mxu0 %v1414
  %1480 = vmatpush1.msra.mxu0 %v1413
  %1481 = vmatprep.subr.mxu0 %v1416
  %1482 = vmatpush1.msra.mxu0 %v1415
  %1483 = vmatprep.subr.mxu0 %v1418
  %1484 = vmatpush1.msra.mxu0 %v1417
  %1485 = vmatprep.subr.mxu0 %v1420
  %1486 = vmatpush1.msra.mxu0 %v1419
  %1487 = vmatprep.subr.mxu0 %v1422
  %1488 = vmatpush1.msra.mxu0 %v1421
  %1489 = vmatprep.subr.mxu0 %v1424
  %1490 = vmatpush1.msra.mxu0 %v1423
  %1491 = vmatprep.subr.mxu0 %v1426
  %1492 = vmatpush1.msra.mxu0 %v1425
  %1493 = vmatprep.subr.mxu0 %v1428
  %1494 = vmatpush1.msra.mxu0 %v1427
  %1495 = vmatprep.subr.mxu0 %v1430
  %1496 = vmatpush1.msra.mxu0 %v1429
  %1497 = vmatprep.subr.mxu0 %v1432
  %1498 = vmatpush1.msra.mxu0 %v1431
  %1499 = vmatprep.subr.mxu0 %v1434
  %1500 = vmatpush1.msra.mxu0 %v1433
  %1501 = vmatprep.subr.mxu0 %v1436
  %1502 = vmatpush1.msra.mxu0 %v1435
  %1503 = vmatprep.subr.mxu0 %v1438
  %1504 = vmatpush1.msra.mxu0 %v1437
  %1505 = vmatprep.subr.mxu0 %v1440
  %1506 = vmatpush1.msra.mxu0 %v1439
  %1507 = vmatprep.subr.mxu0 %v1442
  %1508 = vmatpush1.msra.mxu0 %v1441
  %1509 = vmatprep.subr.mxu0 %v1444
  %1510 = vmatpush1.msra.mxu0 %v1443
  %1511 = vmatprep.subr.mxu0 %v1446
  %1512 = vmatpush1.msra.mxu0 %v1445
  %1513 = vmatprep.subr.mxu0 %v1448
  %1514 = vmatpush1.msra.mxu0 %v1447
  %1515 = vmatprep.subr.mxu0 %v1450
  %1516 = vmatpush1.msra.mxu0 %v1449
  %1517 = vmatprep.subr.mxu0 %v1452
  %1518 = vmatpush1.msra.mxu0 %v1451
  %1519 = vmatprep.subr.mxu0 %v1454
  %1520 = vmatpush1.msra.mxu0 %v1453
  %1521 = vmatprep.subr.mxu0 %v1456
  %1522 = vmatpush1.msra.mxu0 %v1455
  %1523 = vmatprep.subr.mxu0 %v1458
  %1524 = vmatpush1.msra.mxu0 %v1457
  %1525 = vmatprep.subr.mxu0 0.0
  %1526 = vmatpush1.msra.mxu0 0.0
  %1527 = vmatprep.subr.mxu0 0.0
  %1528 = vmatpush1.msra.mxu0 0.0
  %1529 = vmatprep.subr.mxu0 0.0
  %1530 = vmatpush1.msra.mxu0 0.0
  %1531 = vmatprep.subr.mxu0 0.0
  %1532 = vmatpush1.msra.mxu0 0.0
  %1533 = vmatprep.subr.mxu0 0.0
  %1534 = vmatpush1.msra.mxu0 0.0
  %1535 = vmatprep.subr.mxu0 0.0
  %1536 = vmatpush1.msra.mxu0 0.0
  %1537 = vmatprep.subr.mxu0 0.0
  %1538 = vmatpush1.msra.mxu0 0.0
  %1539 = vmatprep.subr.mxu0 0.0
  %1540 = vmatpush1.msra.mxu0 0.0
  %1541 = vmatprep.mubr.f32.mxu0 %v1472
  %1542 = vmatmul.mubr.f32.gmra.mrb[0].mxu0 %v1407
  %v1543 = vpop.f32.mrb[0].mxu0
  %v1544 = vadd.f32 %v1464, %v1543
  %v1545 = vpop.f32.mrb[0].mxu0
  %v1546 = vadd.f32 %v1468, %v1545
  %1547 = vmatprep.mubr.f32.mxu0 %v1475
  %1548 = vmatmul.mubr.f32.gmra.mrb[0].mxu0 %v1408
  %v1549 = vpop.f32.mrb[0].mxu0
  %v1550 = vadd.f32 %v1464, %v1549
  %v1551 = vpop.f32.mrb[0].mxu0
  %v1552 = vadd.f32 %v1468, %v1551
  %1553 = vdwg.mxu0
  %v1554 = vld [vmem:[%s4] sm:$0x3]
  %v1555 = vld [vmem:[%s5] sm:$0x3]
  %v1556 = vsel %vm195, %v1550, 0.0
  %v1557 = vadd.f32 %v1544, %v1556
  %v1558 = vrot.slane %v1557, 4
  %v1559 = vadd.f32 %v1557, %v1558
  %v1560 = vrot.slane %v1559, 2
  %v1561 = vadd.f32 %v1559, %v1560
  %v1562 = vrot.slane %v1561, 1
  %v1563 = vadd.f32 %v1561, %v1562
  %v1564 = vsel %vm105, %v1546, 0.0
  %v1565 = vsel %vm205, %v1552, 0.0
  %v1566 = vadd.f32 %v1564, %v1565
  %v1567 = vrot.slane %v1566, 4
  %v1568 = vadd.f32 %v1566, %v1567
  %v1569 = vrot.slane %v1568, 2
  %v1570 = vadd.f32 %v1568, %v1569
  %v1571 = vrot.slane %v1570, 1
  %v1572 = vadd.f32 %v1570, %v1571
  %v1573 = vmul.f32 %v1563, %v214
  %v1574 = vmul.f32 %v1572, %v214
  %v1575 = vsub.f32 %v1544, %v1573
  %v1576 = vsub.f32 %v1546, %v1574
  %v1577 = vsub.f32 %v1550, %v1573
  %v1578 = vsub.f32 %v1552, %v1574
  %v1579 = vmul.f32 %v1575, %v1575
  %v1580 = vmul.f32 %v1576, %v1576
  %v1581 = vmul.f32 %v1577, %v1577
  %v1582 = vmul.f32 %v1578, %v1578
  %v1583 = vsel %vm195, %v1581, 0.0
  %v1584 = vadd.f32 %v1579, %v1583
  %v1585 = vrot.slane %v1584, 4
  %v1586 = vadd.f32 %v1584, %v1585
  %v1587 = vrot.slane %v1586, 2
  %v1588 = vadd.f32 %v1586, %v1587
  %v1589 = vrot.slane %v1588, 1
  %v1590 = vadd.f32 %v1588, %v1589
  %v1591 = vsel %vm105, %v1580, 0.0
  %v1592 = vsel %vm205, %v1582, 0.0
  %v1593 = vadd.f32 %v1591, %v1592
  %v1594 = vrot.slane %v1593, 4
  %v1595 = vadd.f32 %v1593, %v1594
  %v1596 = vrot.slane %v1595, 2
  %v1597 = vadd.f32 %v1595, %v1596
  %v1598 = vrot.slane %v1597, 1
  %v1599 = vadd.f32 %v1597, %v1598
  %v1600 = vmul.f32 %v1590, %v242
  %v1601 = vmul.f32 %v1599, %v242
  %v1602 = vadd.f32 %v1600, 1e-08
  %v1603 = vadd.f32 %v1601, 1e-08
  %v1604 = vrsqrt.pop %v1602
  %v1605 = vmul.f32 %v1602, %v1604
  %vm1606 = vcmp.eq.f32.partialorder %v1602, inf
  %v1607 = vsel %vm1606, %v1602, %v1605
  %vm1608 = vcmp.eq.f32.partialorder %v1602, 0.0
  %v1609 = vand.u32 %v1602, 2147483648
  %v1610 = vsel %vm1608, %v1609, %v1607
  %v1611 = vrsqrt.pop %v1603
  %v1612 = vmul.f32 %v1603, %v1611
  %vm1613 = vcmp.eq.f32.partialorder %v1603, inf
  %v1614 = vsel %vm1613, %v1603, %v1612
  %vm1615 = vcmp.eq.f32.partialorder %v1603, 0.0
  %v1616 = vand.u32 %v1603, 2147483648
  %v1617 = vsel %vm1615, %v1616, %v1614
  %v1618 = vrcp.pop %v1610
  %v1619 = vmul.f32 %v1575, %v1618
  %v1620 = vrcp.pop %v1617
  %v1621 = vmul.f32 %v1576, %v1620
  %v1622 = vmul.f32 %v1577, %v1618
  %v1623 = vmul.f32 %v1578, %v1620
  %v1625 = vlaneseq
  %v1626 = vshrl.u32 %v1625, 7
  %v1627 = vsub.s32 0, %v1626
  %v1628 = vrot.slane %v1554, %v1627
  %v1629 = vlaneseq
  %v1630 = vshrl.u32 %v1629, 7
  %v1631 = vsub.s32 1, %v1630
  %v1632 = vrot.slane %v1554, %v1631
  %v1635 = vmul.f32 %v1619, %v1628
  %v1636 = vmul.f32 %v1621, %v1632
  %v1637 = vmul.f32 %v1622, %v1628
  %v1638 = vmul.f32 %v1623, %v1632
  %v1640 = vlaneseq
  %v1641 = vshrl.u32 %v1640, 7
  %v1642 = vsub.s32 0, %v1641
  %v1643 = vrot.slane %v1555, %v1642
  %v1644 = vlaneseq
  %v1645 = vshrl.u32 %v1644, 7
  %v1646 = vsub.s32 1, %v1645
  %v1647 = vrot.slane %v1555, %v1646
  %v1650 = vadd.f32 %v1635, %v1643
  %v1651 = vadd.f32 %v1636, %v1647
  %v1652 = vadd.f32 %v1637, %v1643
  %v1653 = vadd.f32 %v1638, %v1647
  %1654 = vst [vmem:[%s12] sm:$0xff] %v1650
  %1655 = vst.msk [vmem:[%s12 + $0x8] sm:$0xff] %vm105, %v1651
  %1656 = vst [vmem:[%s12 + $0x10] sm:$0x1] %v1652
  %1657 = vst.msk [vmem:[%s12 + $0x18] sm:$0x1] %vm205, %v1653
  %s1658 = scalar_lea.vmem %s0, 32
  %v1659 = vld [vmem:[%s1658] sm:$0xff]
  %v1660 = vld [vmem:[%s1658 + $0x8] sm:$0xff]
  %v1661 = vld [vmem:[%s1658 + $0x10] sm:$0x1]
  %v1662 = vld [vmem:[%s1658 + $0x18] sm:$0x1]
  %v1663 = vld [vmem:[%s2] sm:$0x3]
  %v1664 = vld [vmem:[%s3] sm:$0x3]
  %v1665 = vsel %vm195, %v1661, 0.0
  %v1666 = vadd.f32 %v1659, %v1665
  %v1667 = vrot.slane %v1666, 4
  %v1668 = vadd.f32 %v1666, %v1667
  %v1669 = vrot.slane %v1668, 2
  %v1670 = vadd.f32 %v1668, %v1669
  %v1671 = vrot.slane %v1670, 1
  %v1672 = vadd.f32 %v1670, %v1671
  %v1673 = vsel %vm105, %v1660, 0.0
  %v1674 = vsel %vm205, %v1662, 0.0
  %v1675 = vadd.f32 %v1673, %v1674
  %v1676 = vrot.slane %v1675, 4
  %v1677 = vadd.f32 %v1675, %v1676
  %v1678 = vrot.slane %v1677, 2
  %v1679 = vadd.f32 %v1677, %v1678
  %v1680 = vrot.slane %v1679, 1
  %v1681 = vadd.f32 %v1679, %v1680
  %v1682 = vmul.f32 %v1672, %v214
  %v1683 = vmul.f32 %v1681, %v214
  %v1684 = vsub.f32 %v1659, %v1682
  %v1685 = vsub.f32 %v1660, %v1683
  %v1686 = vsub.f32 %v1661, %v1682
  %v1687 = vsub.f32 %v1662, %v1683
  %v1688 = vmul.f32 %v1684, %v1684
  %v1689 = vmul.f32 %v1685, %v1685
  %v1690 = vmul.f32 %v1686, %v1686
  %v1691 = vmul.f32 %v1687, %v1687
  %v1692 = vsel %vm195, %v1690, 0.0
  %v1693 = vadd.f32 %v1688, %v1692
  %v1694 = vrot.slane %v1693, 4
  %v1695 = vadd.f32 %v1693, %v1694
  %v1696 = vrot.slane %v1695, 2
  %v1697 = vadd.f32 %v1695, %v1696
  %v1698 = vrot.slane %v1697, 1
  %v1699 = vadd.f32 %v1697, %v1698
  %v1700 = vsel %vm105, %v1689, 0.0
  %v1701 = vsel %vm205, %v1691, 0.0
  %v1702 = vadd.f32 %v1700, %v1701
  %v1703 = vrot.slane %v1702, 4
  %v1704 = vadd.f32 %v1702, %v1703
  %v1705 = vrot.slane %v1704, 2
  %v1706 = vadd.f32 %v1704, %v1705
  %v1707 = vrot.slane %v1706, 1
  %v1708 = vadd.f32 %v1706, %v1707
  %v1709 = vmul.f32 %v1699, %v242
  %v1710 = vmul.f32 %v1708, %v242
  %v1711 = vadd.f32 %v1709, 1e-08
  %v1712 = vadd.f32 %v1710, 1e-08
  %v1713 = vrsqrt.pop %v1711
  %v1714 = vmul.f32 %v1711, %v1713
  %vm1715 = vcmp.eq.f32.partialorder %v1711, inf
  %v1716 = vsel %vm1715, %v1711, %v1714
  %vm1717 = vcmp.eq.f32.partialorder %v1711, 0.0
  %v1718 = vand.u32 %v1711, 2147483648
  %v1719 = vsel %vm1717, %v1718, %v1716
  %v1720 = vrsqrt.pop %v1712
  %v1721 = vmul.f32 %v1712, %v1720
  %vm1722 = vcmp.eq.f32.partialorder %v1712, inf
  %v1723 = vsel %vm1722, %v1712, %v1721
  %vm1724 = vcmp.eq.f32.partialorder %v1712, 0.0
  %v1725 = vand.u32 %v1712, 2147483648
  %v1726 = vsel %vm1724, %v1725, %v1723
  %v1727 = vrcp.pop %v1719
  %v1728 = vmul.f32 %v1684, %v1727
  %v1729 = vrcp.pop %v1726
  %v1730 = vmul.f32 %v1685, %v1729
  %v1731 = vmul.f32 %v1686, %v1727
  %v1732 = vmul.f32 %v1687, %v1729
  %v1734 = vlaneseq
  %v1735 = vshrl.u32 %v1734, 7
  %v1736 = vsub.s32 0, %v1735
  %v1737 = vrot.slane %v1663, %v1736
  %v1738 = vlaneseq
  %v1739 = vshrl.u32 %v1738, 7
  %v1740 = vsub.s32 1, %v1739
  %v1741 = vrot.slane %v1663, %v1740
  %v1744 = vmul.f32 %v1728, %v1737
  %v1745 = vmul.f32 %v1730, %v1741
  %v1746 = vmul.f32 %v1731, %v1737
  %v1747 = vmul.f32 %v1732, %v1741
  %v1749 = vlaneseq
  %v1750 = vshrl.u32 %v1749, 7
  %v1751 = vsub.s32 0, %v1750
  %v1752 = vrot.slane %v1664, %v1751
  %v1753 = vlaneseq
  %v1754 = vshrl.u32 %v1753, 7
  %v1755 = vsub.s32 1, %v1754
  %v1756 = vrot.slane %v1664, %v1755
  %v1759 = vadd.f32 %v1744, %v1752
  %v1760 = vadd.f32 %v1745, %v1756
  %v1761 = vadd.f32 %v1746, %v1752
  %v1762 = vadd.f32 %v1747, %v1756
  %v1763 = vld [vmem:[%s6] sm:$0xff]
  %v1764 = vld [vmem:[%s6 + $0x8] sm:$0xff]
  %v1765 = vld [vmem:[%s6 + $0x10] sm:$0xff]
  %v1766 = vld [vmem:[%s6 + $0x18] sm:$0xff]
  %v1767 = vld [vmem:[%s6 + $0x20] sm:$0xff]
  %v1768 = vld [vmem:[%s6 + $0x28] sm:$0xff]
  %v1769 = vld [vmem:[%s6 + $0x30] sm:$0xff]
  %v1770 = vld [vmem:[%s6 + $0x38] sm:$0xff]
  %v1771 = vld [vmem:[%s6 + $0x40] sm:$0xff]
  %v1772 = vld [vmem:[%s6 + $0x48] sm:$0xff]
  %v1773 = vld [vmem:[%s6 + $0x50] sm:$0xff]
  %v1774 = vld [vmem:[%s6 + $0x58] sm:$0xff]
  %v1775 = vld [vmem:[%s6 + $0x60] sm:$0xff]
  %v1776 = vld [vmem:[%s6 + $0x68] sm:$0xff]
  %v1777 = vld [vmem:[%s6 + $0x70] sm:$0xff]
  %v1778 = vld [vmem:[%s6 + $0x78] sm:$0xff]
  %v1779 = vld [vmem:[%s6 + $0x80] sm:$0xff]
  %v1780 = vld [vmem:[%s6 + $0x88] sm:$0xff]
  %v1781 = vld [vmem:[%s6 + $0x90] sm:$0xff]
  %v1782 = vld [vmem:[%s6 + $0x98] sm:$0xff]
  %v1783 = vld [vmem:[%s6 + $0xa0] sm:$0xff]
  %v1784 = vld [vmem:[%s6 + $0xa8] sm:$0xff]
  %v1785 = vld [vmem:[%s6 + $0xb0] sm:$0xff]
  %v1786 = vld [vmem:[%s6 + $0xb8] sm:$0xff]
  %v1787 = vld [vmem:[%s6 + $0xc0] sm:$0xff]
  %v1788 = vld [vmem:[%s6 + $0xc8] sm:$0xff]
  %v1789 = vld [vmem:[%s6 + $0xd0] sm:$0xff]
  %v1790 = vld [vmem:[%s6 + $0xd8] sm:$0xff]
  %v1791 = vld [vmem:[%s6 + $0xe0] sm:$0xff]
  %v1792 = vld [vmem:[%s6 + $0xe8] sm:$0xff]
  %v1793 = vld [vmem:[%s6 + $0xf0] sm:$0xff]
  %v1794 = vld [vmem:[%s6 + $0xf8] sm:$0xff]
  %v1795 = vld [vmem:[%s6 + $0x100] sm:$0xff]
  %v1796 = vld [vmem:[%s6 + $0x108] sm:$0xff]
  %v1797 = vld [vmem:[%s6 + $0x110] sm:$0xff]
  %v1798 = vld [vmem:[%s6 + $0x118] sm:$0xff]
  %v1799 = vld [vmem:[%s6 + $0x120] sm:$0xff]
  %v1800 = vld [vmem:[%s6 + $0x128] sm:$0xff]
  %v1801 = vld [vmem:[%s6 + $0x130] sm:$0xff]
  %v1802 = vld [vmem:[%s6 + $0x138] sm:$0xff]
  %v1803 = vld [vmem:[%s6 + $0x140] sm:$0xff]
  %v1804 = vld [vmem:[%s6 + $0x148] sm:$0xff]
  %v1805 = vld [vmem:[%s6 + $0x150] sm:$0xff]
  %v1806 = vld [vmem:[%s6 + $0x158] sm:$0xff]
  %v1807 = vld [vmem:[%s6 + $0x160] sm:$0xff]
  %v1808 = vld [vmem:[%s6 + $0x168] sm:$0xff]
  %v1809 = vld [vmem:[%s6 + $0x170] sm:$0xff]
  %v1810 = vld [vmem:[%s6 + $0x178] sm:$0xff]
  %v1811 = vld [vmem:[%s6 + $0x180] sm:$0xff]
  %v1812 = vld [vmem:[%s6 + $0x188] sm:$0xff]
  %v1813 = vld [vmem:[%s6 + $0x190] sm:$0xff]
  %v1814 = vld [vmem:[%s6 + $0x198] sm:$0xff]
  %v1815 = vld [vmem:[%s6 + $0x1a0] sm:$0xff]
  %v1816 = vld [vmem:[%s6 + $0x1a8] sm:$0xff]
  %v1817 = vld [vmem:[%s6 + $0x1b0] sm:$0xff]
  %v1818 = vld [vmem:[%s6 + $0x1b8] sm:$0xff]
  %v1819 = vld [vmem:[%s6 + $0x1c0] sm:$0xff]
  %v1820 = vld [vmem:[%s6 + $0x1c8] sm:$0xff]
  %v1821 = vld [vmem:[%s6 + $0x1d0] sm:$0xff]
  %v1822 = vld [vmem:[%s6 + $0x1d8] sm:$0xff]
  %v1823 = vld [vmem:[%s6 + $0x1e0] sm:$0xff]
  %v1824 = vld [vmem:[%s6 + $0x1e8] sm:$0xff]
  %v1825 = vld [vmem:[%s6 + $0x1f0] sm:$0xff]
  %v1826 = vld [vmem:[%s6 + $0x1f8] sm:$0xff]
  %v1827 = vld [vmem:[%s6 + $0x200] sm:$0xff]
  %v1828 = vld [vmem:[%s6 + $0x208] sm:$0xff]
  %v1829 = vld [vmem:[%s6 + $0x210] sm:$0xff]
  %v1830 = vld [vmem:[%s6 + $0x218] sm:$0xff]
  %v1831 = vld [vmem:[%s6 + $0x220] sm:$0xff]
  %v1832 = vld [vmem:[%s6 + $0x228] sm:$0xff]
  %v1833 = vld [vmem:[%s6 + $0x230] sm:$0xff]
  %v1834 = vld [vmem:[%s6 + $0x238] sm:$0xff]
  %v1835 = vld [vmem:[%s7] sm:$0x7]
  %v1837 = vlaneseq
  %v1838 = vshrl.u32 %v1837, 7
  %v1839 = vsub.s32 0, %v1838
  %v1840 = vrot.slane %v1835, %v1839
  %v1841 = vlaneseq
  %v1842 = vshrl.u32 %v1841, 7
  %v1843 = vsub.s32 1, %v1842
  %v1844 = vrot.slane %v1835, %v1843
  %v1845 = vlaneseq
  %v1846 = vshrl.u32 %v1845, 7
  %v1847 = vsub.s32 2, %v1846
  %v1848 = vrot.slane %v1835, %v1847
  %v1853 = vsel %vm105, %v1760, 0
  %v1856 = vsel %vm105, %v1762, 0
  %1858 = vmatprep.subr.mxu0 %v1764
  %1859 = vmatpush1.msra.mxu0 %v1763
  %1860 = vmatprep.subr.mxu0 %v1767
  %1861 = vmatpush1.msra.mxu0 %v1766
  %1862 = vmatprep.subr.mxu0 %v1770
  %1863 = vmatpush1.msra.mxu0 %v1769
  %1864 = vmatprep.subr.mxu0 %v1773
  %1865 = vmatpush1.msra.mxu0 %v1772
  %1866 = vmatprep.subr.mxu0 %v1776
  %1867 = vmatpush1.msra.mxu0 %v1775
  %1868 = vmatprep.subr.mxu0 %v1779
  %1869 = vmatpush1.msra.mxu0 %v1778
  %1870 = vmatprep.subr.mxu0 %v1782
  %1871 = vmatpush1.msra.mxu0 %v1781
  %1872 = vmatprep.subr.mxu0 %v1785
  %1873 = vmatpush1.msra.mxu0 %v1784
  %1874 = vmatprep.subr.mxu0 %v1788
  %1875 = vmatpush1.msra.mxu0 %v1787
  %1876 = vmatprep.subr.mxu0 %v1791
  %1877 = vmatpush1.msra.mxu0 %v1790
  %1878 = vmatprep.subr.mxu0 %v1794
  %1879 = vmatpush1.msra.mxu0 %v1793
  %1880 = vmatprep.subr.mxu0 %v1797
  %1881 = vmatpush1.msra.mxu0 %v1796
  %1882 = vmatprep.subr.mxu0 %v1800
  %1883 = vmatpush1.msra.mxu0 %v1799
  %1884 = vmatprep.subr.mxu0 %v1803
  %1885 = vmatpush1.msra.mxu0 %v1802
  %1886 = vmatprep.subr.mxu0 %v1806
  %1887 = vmatpush1.msra.mxu0 %v1805
  %1888 = vmatprep.subr.mxu0 %v1809
  %1889 = vmatpush1.msra.mxu0 %v1808
  %1890 = vmatprep.subr.mxu0 %v1812
  %1891 = vmatpush1.msra.mxu0 %v1811
  %1892 = vmatprep.subr.mxu0 %v1815
  %1893 = vmatpush1.msra.mxu0 %v1814
  %1894 = vmatprep.subr.mxu0 %v1818
  %1895 = vmatpush1.msra.mxu0 %v1817
  %1896 = vmatprep.subr.mxu0 %v1821
  %1897 = vmatpush1.msra.mxu0 %v1820
  %1898 = vmatprep.subr.mxu0 %v1824
  %1899 = vmatpush1.msra.mxu0 %v1823
  %1900 = vmatprep.subr.mxu0 %v1827
  %1901 = vmatpush1.msra.mxu0 %v1826
  %1902 = vmatprep.subr.mxu0 %v1830
  %1903 = vmatpush1.msra.mxu0 %v1829
  %1904 = vmatprep.subr.mxu0 %v1833
  %1905 = vmatpush1.msra.mxu0 %v1832
  %1906 = vmatprep.subr.mxu0 0.0
  %1907 = vmatpush1.msra.mxu0 0.0
  %1908 = vmatprep.subr.mxu0 0.0
  %1909 = vmatpush1.msra.mxu0 0.0
  %1910 = vmatprep.subr.mxu0 0.0
  %1911 = vmatpush1.msra.mxu0 0.0
  %1912 = vmatprep.subr.mxu0 0.0
  %1913 = vmatpush1.msra.mxu0 0.0
  %1914 = vmatprep.subr.mxu0 0.0
  %1915 = vmatpush1.msra.mxu0 0.0
  %1916 = vmatprep.subr.mxu0 0.0
  %1917 = vmatpush1.msra.mxu0 0.0
  %1918 = vmatprep.subr.mxu0 0.0
  %1919 = vmatpush1.msra.mxu0 0.0
  %1920 = vmatprep.subr.mxu0 0.0
  %1921 = vmatpush1.msra.mxu0 0.0
  %1922 = vmatprep.mubr.f32.mxu0 %v1853
  %1923 = vmatmul.mubr.f32.gmra.mrb[0].mxu0 %v1759
  %v1924 = vpop.f32.mrb[0].mxu0
  %v1925 = vadd.f32 %v1840, %v1924
  %v1926 = vpop.f32.mrb[0].mxu0
  %v1927 = vadd.f32 %v1844, %v1926
  %1928 = vmatprep.mubr.f32.mxu0 %v1856
  %1929 = vmatmul.mubr.f32.gmra.mrb[0].mxu0 %v1761
  %v1930 = vpop.f32.mrb[0].mxu0
  %v1931 = vadd.f32 %v1840, %v1930
  %v1932 = vpop.f32.mrb[0].mxu0
  %v1933 = vadd.f32 %v1844, %v1932
  %1934 = vdwg.mxu0
  %1935 = vmatprep.subr.mxu0 0.0
  %1936 = vmatpush1.msra.mxu0 %v1765
  %1937 = vmatprep.subr.mxu0 0.0
  %1938 = vmatpush1.msra.mxu0 %v1768
  %1939 = vmatprep.subr.mxu0 0.0
  %1940 = vmatpush1.msra.mxu0 %v1771
  %1941 = vmatprep.subr.mxu0 0.0
  %1942 = vmatpush1.msra.mxu0 %v1774
  %1943 = vmatprep.subr.mxu0 0.0
  %1944 = vmatpush1.msra.mxu0 %v1777
  %1945 = vmatprep.subr.mxu0 0.0
  %1946 = vmatpush1.msra.mxu0 %v1780
  %1947 = vmatprep.subr.mxu0 0.0
  %1948 = vmatpush1.msra.mxu0 %v1783
  %1949 = vmatprep.subr.mxu0 0.0
  %1950 = vmatpush1.msra.mxu0 %v1786
  %1951 = vmatprep.subr.mxu0 0.0
  %1952 = vmatpush1.msra.mxu0 %v1789
  %1953 = vmatprep.subr.mxu0 0.0
  %1954 = vmatpush1.msra.mxu0 %v1792
  %1955 = vmatprep.subr.mxu0 0.0
  %1956 = vmatpush1.msra.mxu0 %v1795
  %1957 = vmatprep.subr.mxu0 0.0
  %1958 = vmatpush1.msra.mxu0 %v1798
  %1959 = vmatprep.subr.mxu0 0.0
  %1960 = vmatpush1.msra.mxu0 %v1801
  %1961 = vmatprep.subr.mxu0 0.0
  %1962 = vmatpush1.msra.mxu0 %v1804
  %1963 = vmatprep.subr.mxu0 0.0
  %1964 = vmatpush1.msra.mxu0 %v1807
  %1965 = vmatprep.subr.mxu0 0.0
  %1966 = vmatpush1.msra.mxu0 %v1810
  %1967 = vmatprep.subr.mxu0 0.0
  %1968 = vmatpush1.msra.mxu0 %v1813
  %1969 = vmatprep.subr.mxu0 0.0
  %1970 = vmatpush1.msra.mxu0 %v1816
  %1971 = vmatprep.subr.mxu0 0.0
  %1972 = vmatpush1.msra.mxu0 %v1819
  %1973 = vmatprep.subr.mxu0 0.0
  %1974 = vmatpush1.msra.mxu0 %v1822
  %1975 = vmatprep.subr.mxu0 0.0
  %1976 = vmatpush1.msra.mxu0 %v1825
  %1977 = vmatprep.subr.mxu0 0.0
  %1978 = vmatpush1.msra.mxu0 %v1828
  %1979 = vmatprep.subr.mxu0 0.0
  %1980 = vmatpush1.msra.mxu0 %v1831
  %1981 = vmatprep.subr.mxu0 0.0
  %1982 = vmatpush1.msra.mxu0 %v1834
  %1983 = vmatprep.subr.mxu0 0.0
  %1984 = vmatpush1.msra.mxu0 0.0
  %1985 = vmatprep.subr.mxu0 0.0
  %1986 = vmatpush1.msra.mxu0 0.0
  %1987 = vmatprep.subr.mxu0 0.0
  %1988 = vmatpush1.msra.mxu0 0.0
  %1989 = vmatprep.subr.mxu0 0.0
  %1990 = vmatpush1.msra.mxu0 0.0
  %1991 = vmatprep.subr.mxu0 0.0
  %1992 = vmatpush1.msra.mxu0 0.0
  %1993 = vmatprep.subr.mxu0 0.0
  %1994 = vmatpush1.msra.mxu0 0.0
  %1995 = vmatprep.subr.mxu0 0.0
  %1996 = vmatpush1.msra.mxu0 0.0
  %1997 = vmatprep.subr.mxu0 0.0
  %1998 = vmatpush1.msra.mxu0 0.0
  %1999 = vmatprep.mubr.f32.mxu0 %v1853
  %2000 = vmatmul.mubr.f32.gmra.mrb[0].mxu0 %v1759
  %v2001 = vpop.f32.mrb[0].mxu0
  %v2002 = vadd.f32 %v1848, %v2001
  %v2003 = vpop.f32.mrb[0].mxu0
  %2004 = vmatprep.mubr.f32.mxu0 %v1856
  %2005 = vmatmul.mubr.f32.gmra.mrb[0].mxu0 %v1761
  %v2006 = vpop.f32.mrb[0].mxu0
  %v2007 = vadd.f32 %v1848, %v2006
  %v2008 = vpop.f32.mrb[0].mxu0
  %2009 = vdwg.mxu0
  %2012 = vrot.lane.b32.xlu0 %v1927, 64
  %v2013 = vpop.permute.xlu0 %2012
  %2014 = vrot.lane.b32.xlu0 %v1933, 64
  %v2015 = vpop.permute.xlu0 %2014
  %v2017 = vsel %vm550, %v1925, 0
  %v2020 = vsel %vm550, %v1931, 0
  %v2022 = vsel %vm550, %v2013, 0
  %v2024 = vsel %vm550, %v2015, 0
  %2026 = vmatprep.subr.mxu0 0.0
  %2027 = vmatpush1.xpose.msra.mxu0 %v2022
  %2028 = vmatprep.subr.mxu0 0.0
  %2029 = vmatpush1.xpose.msra.mxu0 %v2024
  %2030 = vmatprep.subr.mxu0 0.0
  %2031 = vmatpush1.xpose.msra.mxu0 0.0
  %2032 = vmatprep.subr.mxu0 0.0
  %2033 = vmatpush1.xpose.msra.mxu0 0.0
  %2034 = vmatprep.subr.mxu0 0.0
  %2035 = vmatpush1.xpose.msra.mxu0 0.0
  %2036 = vmatprep.subr.mxu0 0.0
  %2037 = vmatpush1.xpose.msra.mxu0 0.0
  %2038 = vmatprep.subr.mxu0 0.0
  %2039 = vmatpush1.xpose.msra.mxu0 0.0
  %2040 = vmatprep.subr.mxu0 0.0
  %2041 = vmatpush1.xpose.msra.mxu0 0.0
  %2042 = vmatprep.subr.mxu0 0.0
  %2043 = vmatpush1.xpose.msra.mxu0 0.0
  %2044 = vmatprep.subr.mxu0 0.0
  %2045 = vmatpush1.xpose.msra.mxu0 0.0
  %2046 = vmatprep.subr.mxu0 0.0
  %2047 = vmatpush1.xpose.msra.mxu0 0.0
  %2048 = vmatprep.subr.mxu0 0.0
  %2049 = vmatpush1.xpose.msra.mxu0 0.0
  %2050 = vmatprep.subr.mxu0 0.0
  %2051 = vmatpush1.xpose.msra.mxu0 0.0
  %2052 = vmatprep.subr.mxu0 0.0
  %2053 = vmatpush1.xpose.msra.mxu0 0.0
  %2054 = vmatprep.subr.mxu0 0.0
  %2055 = vmatpush1.xpose.msra.mxu0 0.0
  %2056 = vmatprep.subr.mxu0 0.0
  %2057 = vmatpush1.xpose.msra.mxu0 0.0
  %2058 = vmatprep.subr.mxu0 0.0
  %2059 = vmatpush1.xpose.msra.mxu0 0.0
  %2060 = vmatprep.subr.mxu0 0.0
  %2061 = vmatpush1.xpose.msra.mxu0 0.0
  %2062 = vmatprep.subr.mxu0 0.0
  %2063 = vmatpush1.xpose.msra.mxu0 0.0
  %2064 = vmatprep.subr.mxu0 0.0
  %2065 = vmatpush1.xpose.msra.mxu0 0.0
  %2066 = vmatprep.subr.mxu0 0.0
  %2067 = vmatpush1.xpose.msra.mxu0 0.0
  %2068 = vmatprep.subr.mxu0 0.0
  %2069 = vmatpush1.xpose.msra.mxu0 0.0
  %2070 = vmatprep.subr.mxu0 0.0
  %2071 = vmatpush1.xpose.msra.mxu0 0.0
  %2072 = vmatprep.subr.mxu0 0.0
  %2073 = vmatpush1.xpose.msra.mxu0 0.0
  %2074 = vmatprep.subr.mxu0 0.0
  %2075 = vmatpush1.xpose.msra.mxu0 0.0
  %2076 = vmatprep.subr.mxu0 0.0
  %2077 = vmatpush1.xpose.msra.mxu0 0.0
  %2078 = vmatprep.subr.mxu0 0.0
  %2079 = vmatpush1.xpose.msra.mxu0 0.0
  %2080 = vmatprep.subr.mxu0 0.0
  %2081 = vmatpush1.xpose.msra.mxu0 0.0
  %2082 = vmatprep.subr.mxu0 0.0
  %2083 = vmatpush1.xpose.msra.mxu0 0.0
  %2084 = vmatprep.subr.mxu0 0.0
  %2085 = vmatpush1.xpose.msra.mxu0 0.0
  %2086 = vmatprep.subr.mxu0 0.0
  %2087 = vmatpush1.xpose.msra.mxu0 0.0
  %2088 = vmatprep.subr.mxu0 0.0
  %2089 = vmatpush1.xpose.msra.mxu0 0.0
  %2090 = vmatprep.mubr.f32.mxu0 0.0
  %2091 = vmatmul.mubr.f32.gmra.mrb[0].mxu0 %v2017
  %v2092 = vpop.f32.mrb[0].mxu0
  %v2093 = vadd.f32 0.0, %v2092
  %v2094 = vpop.f32.mrb[0].mxu0
  %2095 = vmatprep.mubr.f32.mxu0 0.0
  %2096 = vmatmul.mubr.f32.gmra.mrb[0].mxu0 %v2020
  %v2097 = vpop.f32.mrb[0].mxu0
  %v2098 = vadd.f32 0.0, %v2097
  %v2099 = vpop.f32.mrb[0].mxu0
  %2100 = vdwg.mxu0
  %v2101 = vmul.f32 %v2093, 0.14433756
  %v2102 = vmul.f32 %v2098, 0.14433756
  %v2103 = vsel %vm638, %v2101, -inf
  %2104 = vmax.xlane.f32.xlu0 %v2103
  %v2105 = vpop.xlane.xlu0 %2104
  %v2106 = vsel %vm642, %v2102, -inf
  %2107 = vmax.xlane.f32.xlu0 %v2106
  %v2108 = vpop.xlane.xlu0 %2107
  %v2109 = vsub.f32 %v2101, %v2105
  %v2110 = vsub.f32 %v2102, %v2108
  %v2111 = vmul.f32 %v2109, 1.442695
  %v2112 = vpow.pop %v2111
  %v2113 = vmul.f32 %v2110, 1.442695
  %v2114 = vpow.pop %v2113
  %v2115 = vsel %vm638, %v2112, 0.0
  %2116 = vadd.xlane.f32.xlu0 %v2115
  %v2117 = vpop.xlane.xlu0 %2116
  %v2118 = vsel %vm642, %v2114, 0.0
  %2119 = vadd.xlane.f32.xlu0 %v2118
  %v2120 = vpop.xlane.xlu0 %2119
  %v2121 = vrcp.pop %v2117
  %v2122 = vmul.f32 %v2112, %v2121
  %v2123 = vrcp.pop %v2120
  %v2124 = vmul.f32 %v2114, %v2123
  %v2126 = vsel %vm638, %v2122, 0
  %v2129 = vsel %vm638, %v2124, 0
  %2131 = vmatprep.subr.mxu0 0.0
  %2132 = vmatpush1.msra.mxu0 %v179
  %2133 = vmatprep.subr.mxu0 0.0
  %2134 = vmatpush1.msra.mxu0 %v669
  %2135 = vmatprep.subr.mxu0 0.0
  %2136 = vmatpush1.msra.mxu0 0.0
  %2137 = vmatprep.subr.mxu0 0.0
  %2138 = vmatpush1.msra.mxu0 0.0
  %2139 = vmatprep.subr.mxu0 0.0
  %2140 = vmatpush1.msra.mxu0 0.0
  %2141 = vmatprep.subr.mxu0 0.0
  %2142 = vmatpush1.msra.mxu0 0.0
  %2143 = vmatprep.subr.mxu0 0.0
  %2144 = vmatpush1.msra.mxu0 0.0
  %2145 = vmatprep.subr.mxu0 0.0
  %2146 = vmatpush1.msra.mxu0 0.0
  %2147 = vmatprep.subr.mxu0 0.0
  %2148 = vmatpush1.msra.mxu0 0.0
  %2149 = vmatprep.subr.mxu0 0.0
  %2150 = vmatpush1.msra.mxu0 0.0
  %2151 = vmatprep.subr.mxu0 0.0
  %2152 = vmatpush1.msra.mxu0 0.0
  %2153 = vmatprep.subr.mxu0 0.0
  %2154 = vmatpush1.msra.mxu0 0.0
  %2155 = vmatprep.subr.mxu0 0.0
  %2156 = vmatpush1.msra.mxu0 0.0
  %2157 = vmatprep.subr.mxu0 0.0
  %2158 = vmatpush1.msra.mxu0 0.0
  %2159 = vmatprep.subr.mxu0 0.0
  %2160 = vmatpush1.msra.mxu0 0.0
  %2161 = vmatprep.subr.mxu0 0.0
  %2162 = vmatpush1.msra.mxu0 0.0
  %2163 = vmatprep.subr.mxu0 0.0
  %2164 = vmatpush1.msra.mxu0 0.0
  %2165 = vmatprep.subr.mxu0 0.0
  %2166 = vmatpush1.msra.mxu0 0.0
  %2167 = vmatprep.subr.mxu0 0.0
  %2168 = vmatpush1.msra.mxu0 0.0
  %2169 = vmatprep.subr.mxu0 0.0
  %2170 = vmatpush1.msra.mxu0 0.0
  %2171 = vmatprep.subr.mxu0 0.0
  %2172 = vmatpush1.msra.mxu0 0.0
  %2173 = vmatprep.subr.mxu0 0.0
  %2174 = vmatpush1.msra.mxu0 0.0
  %2175 = vmatprep.subr.mxu0 0.0
  %2176 = vmatpush1.msra.mxu0 0.0
  %2177 = vmatprep.subr.mxu0 0.0
  %2178 = vmatpush1.msra.mxu0 0.0
  %2179 = vmatprep.subr.mxu0 0.0
  %2180 = vmatpush1.msra.mxu0 0.0
  %2181 = vmatprep.subr.mxu0 0.0
  %2182 = vmatpush1.msra.mxu0 0.0
  %2183 = vmatprep.subr.mxu0 0.0
  %2184 = vmatpush1.msra.mxu0 0.0
  %2185 = vmatprep.subr.mxu0 0.0
  %2186 = vmatpush1.msra.mxu0 0.0
  %2187 = vmatprep.subr.mxu0 0.0
  %2188 = vmatpush1.msra.mxu0 0.0
  %2189 = vmatprep.subr.mxu0 0.0
  %2190 = vmatpush1.msra.mxu0 0.0
  %2191 = vmatprep.subr.mxu0 0.0
  %2192 = vmatpush1.msra.mxu0 0.0
  %2193 = vmatprep.subr.mxu0 0.0
  %2194 = vmatpush1.msra.mxu0 0.0
  %2195 = vmatprep.mubr.f32.mxu0 0.0
  %2196 = vmatmul.mubr.f32.gmra.mrb[0].mxu0 %v2126
  %v2197 = vpop.f32.mrb[0].mxu0
  %v2198 = vadd.f32 0.0, %v2197
  %v2199 = vpop.f32.mrb[0].mxu0
  %2200 = vmatprep.mubr.f32.mxu0 0.0
  %2201 = vmatmul.mubr.f32.gmra.mrb[0].mxu0 %v2129
  %v2202 = vpop.f32.mrb[0].mxu0
  %v2203 = vadd.f32 0.0, %v2202
  %v2204 = vpop.f32.mrb[0].mxu0
  %2205 = vdwg.mxu0
  %2206 = vrot.lane.b32.xlu0 %v1925, 80
  %v2207 = vpop.permute.xlu0 %2206
  %2208 = vrot.lane.b32.xlu0 %v1931, 80
  %v2209 = vpop.permute.xlu0 %2208
  %2212 = vrot.lane.b32.xlu0 %v1927, 16
  %v2213 = vpop.permute.xlu0 %2212
  %2214 = vrot.lane.b32.xlu0 %v2002, 16
  %v2215 = vpop.permute.xlu0 %2214
  %2216 = vrot.lane.b32.xlu0 %v1933, 16
  %v2217 = vpop.permute.xlu0 %2216
  %2218 = vrot.lane.b32.xlu0 %v2007, 16
  %v2219 = vpop.permute.xlu0 %2218
  %v2220 = vsel %vm760, %v2213, %v2215
  %v2221 = vsel %vm760, %v2217, %v2219
  %v2222 = vsel %vm550, %v2207, 0
  %v2224 = vsel %vm550, %v2209, 0
  %v2226 = vsel %vm550, %v2220, 0
  %v2228 = vsel %vm550, %v2221, 0
  %2230 = vmatprep.subr.mxu0 0.0
  %2231 = vmatpush1.xpose.msra.mxu0 %v2226
  %2232 = vmatprep.subr.mxu0 0.0
  %2233 = vmatpush1.xpose.msra.mxu0 %v2228
  %2234 = vmatprep.subr.mxu0 0.0
  %2235 = vmatpush1.xpose.msra.mxu0 0.0
  %2236 = vmatprep.subr.mxu0 0.0
  %2237 = vmatpush1.xpose.msra.mxu0 0.0
  %2238 = vmatprep.subr.mxu0 0.0
  %2239 = vmatpush1.xpose.msra.mxu0 0.0
  %2240 = vmatprep.subr.mxu0 0.0
  %2241 = vmatpush1.xpose.msra.mxu0 0.0
  %2242 = vmatprep.subr.mxu0 0.0
  %2243 = vmatpush1.xpose.msra.mxu0 0.0
  %2244 = vmatprep.subr.mxu0 0.0
  %2245 = vmatpush1.xpose.msra.mxu0 0.0
  %2246 = vmatprep.subr.mxu0 0.0
  %2247 = vmatpush1.xpose.msra.mxu0 0.0
  %2248 = vmatprep.subr.mxu0 0.0
  %2249 = vmatpush1.xpose.msra.mxu0 0.0
  %2250 = vmatprep.subr.mxu0 0.0
  %2251 = vmatpush1.xpose.msra.mxu0 0.0
  %2252 = vmatprep.subr.mxu0 0.0
  %2253 = vmatpush1.xpose.msra.mxu0 0.0
  %2254 = vmatprep.subr.mxu0 0.0
  %2255 = vmatpush1.xpose.msra.mxu0 0.0
  %2256 = vmatprep.subr.mxu0 0.0
  %2257 = vmatpush1.xpose.msra.mxu0 0.0
  %2258 = vmatprep.subr.mxu0 0.0
  %2259 = vmatpush1.xpose.msra.mxu0 0.0
  %2260 = vmatprep.subr.mxu0 0.0
  %2261 = vmatpush1.xpose.msra.mxu0 0.0
  %2262 = vmatprep.subr.mxu0 0.0
  %2263 = vmatpush1.xpose.msra.mxu0 0.0
  %2264 = vmatprep.subr.mxu0 0.0
  %2265 = vmatpush1.xpose.msra.mxu0 0.0
  %2266 = vmatprep.subr.mxu0 0.0
  %2267 = vmatpush1.xpose.msra.mxu0 0.0
  %2268 = vmatprep.subr.mxu0 0.0
  %2269 = vmatpush1.xpose.msra.mxu0 0.0
  %2270 = vmatprep.subr.mxu0 0.0
  %2271 = vmatpush1.xpose.msra.mxu0 0.0
  %2272 = vmatprep.subr.mxu0 0.0
  %2273 = vmatpush1.xpose.msra.mxu0 0.0
  %2274 = vmatprep.subr.mxu0 0.0
  %2275 = vmatpush1.xpose.msra.mxu0 0.0
  %2276 = vmatprep.subr.mxu0 0.0
  %2277 = vmatpush1.xpose.msra.mxu0 0.0
  %2278 = vmatprep.subr.mxu0 0.0
  %2279 = vmatpush1.xpose.msra.mxu0 0.0
  %2280 = vmatprep.subr.mxu0 0.0
  %2281 = vmatpush1.xpose.msra.mxu0 0.0
  %2282 = vmatprep.subr.mxu0 0.0
  %2283 = vmatpush1.xpose.msra.mxu0 0.0
  %2284 = vmatprep.subr.mxu0 0.0
  %2285 = vmatpush1.xpose.msra.mxu0 0.0
  %2286 = vmatprep.subr.mxu0 0.0
  %2287 = vmatpush1.xpose.msra.mxu0 0.0
  %2288 = vmatprep.subr.mxu0 0.0
  %2289 = vmatpush1.xpose.msra.mxu0 0.0
  %2290 = vmatprep.subr.mxu0 0.0
  %2291 = vmatpush1.xpose.msra.mxu0 0.0
  %2292 = vmatprep.subr.mxu0 0.0
  %2293 = vmatpush1.xpose.msra.mxu0 0.0
  %2294 = vmatprep.mubr.f32.mxu0 0.0
  %2295 = vmatmul.mubr.f32.gmra.mrb[0].mxu0 %v2222
  %v2296 = vpop.f32.mrb[0].mxu0
  %v2297 = vadd.f32 0.0, %v2296
  %v2298 = vpop.f32.mrb[0].mxu0
  %2299 = vmatprep.mubr.f32.mxu0 0.0
  %2300 = vmatmul.mubr.f32.gmra.mrb[0].mxu0 %v2224
  %v2301 = vpop.f32.mrb[0].mxu0
  %v2302 = vadd.f32 0.0, %v2301
  %v2303 = vpop.f32.mrb[0].mxu0
  %2304 = vdwg.mxu0
  %v2305 = vmul.f32 %v2297, 0.14433756
  %v2306 = vmul.f32 %v2302, 0.14433756
  %v2307 = vsel %vm638, %v2305, -inf
  %2308 = vmax.xlane.f32.xlu0 %v2307
  %v2309 = vpop.xlane.xlu0 %2308
  %v2310 = vsel %vm642, %v2306, -inf
  %2311 = vmax.xlane.f32.xlu0 %v2310
  %v2312 = vpop.xlane.xlu0 %2311
  %v2313 = vsub.f32 %v2305, %v2309
  %v2314 = vsub.f32 %v2306, %v2312
  %v2315 = vmul.f32 %v2313, 1.442695
  %v2316 = vpow.pop %v2315
  %v2317 = vmul.f32 %v2314, 1.442695
  %v2318 = vpow.pop %v2317
  %v2319 = vsel %vm638, %v2316, 0.0
  %2320 = vadd.xlane.f32.xlu0 %v2319
  %v2321 = vpop.xlane.xlu0 %2320
  %v2322 = vsel %vm642, %v2318, 0.0
  %2323 = vadd.xlane.f32.xlu0 %v2322
  %v2324 = vpop.xlane.xlu0 %2323
  %v2325 = vrcp.pop %v2321
  %v2326 = vmul.f32 %v2316, %v2325
  %v2327 = vrcp.pop %v2324
  %v2328 = vmul.f32 %v2318, %v2327
  %v2330 = vsel %vm638, %v2326, 0
  %v2333 = vsel %vm638, %v2328, 0
  %2335 = vmatprep.subr.mxu0 0.0
  %2336 = vmatpush1.msra.mxu0 %v872
  %2337 = vmatprep.subr.mxu0 0.0
  %2338 = vmatpush1.msra.mxu0 %v882
  %2339 = vmatprep.subr.mxu0 0.0
  %2340 = vmatpush1.msra.mxu0 0.0
  %2341 = vmatprep.subr.mxu0 0.0
  %2342 = vmatpush1.msra.mxu0 0.0
  %2343 = vmatprep.subr.mxu0 0.0
  %2344 = vmatpush1.msra.mxu0 0.0
  %2345 = vmatprep.subr.mxu0 0.0
  %2346 = vmatpush1.msra.mxu0 0.0
  %2347 = vmatprep.subr.mxu0 0.0
  %2348 = vmatpush1.msra.mxu0 0.0
  %2349 = vmatprep.subr.mxu0 0.0
  %2350 = vmatpush1.msra.mxu0 0.0
  %2351 = vmatprep.subr.mxu0 0.0
  %2352 = vmatpush1.msra.mxu0 0.0
  %2353 = vmatprep.subr.mxu0 0.0
  %2354 = vmatpush1.msra.mxu0 0.0
  %2355 = vmatprep.subr.mxu0 0.0
  %2356 = vmatpush1.msra.mxu0 0.0
  %2357 = vmatprep.subr.mxu0 0.0
  %2358 = vmatpush1.msra.mxu0 0.0
  %2359 = vmatprep.subr.mxu0 0.0
  %2360 = vmatpush1.msra.mxu0 0.0
  %2361 = vmatprep.subr.mxu0 0.0
  %2362 = vmatpush1.msra.mxu0 0.0
  %2363 = vmatprep.subr.mxu0 0.0
  %2364 = vmatpush1.msra.mxu0 0.0
  %2365 = vmatprep.subr.mxu0 0.0
  %2366 = vmatpush1.msra.mxu0 0.0
  %2367 = vmatprep.subr.mxu0 0.0
  %2368 = vmatpush1.msra.mxu0 0.0
  %2369 = vmatprep.subr.mxu0 0.0
  %2370 = vmatpush1.msra.mxu0 0.0
  %2371 = vmatprep.subr.mxu0 0.0
  %2372 = vmatpush1.msra.mxu0 0.0
  %2373 = vmatprep.subr.mxu0 0.0
  %2374 = vmatpush1.msra.mxu0 0.0
  %2375 = vmatprep.subr.mxu0 0.0
  %2376 = vmatpush1.msra.mxu0 0.0
  %2377 = vmatprep.subr.mxu0 0.0
  %2378 = vmatpush1.msra.mxu0 0.0
  %2379 = vmatprep.subr.mxu0 0.0
  %2380 = vmatpush1.msra.mxu0 0.0
  %2381 = vmatprep.subr.mxu0 0.0
  %2382 = vmatpush1.msra.mxu0 0.0
  %2383 = vmatprep.subr.mxu0 0.0
  %2384 = vmatpush1.msra.mxu0 0.0
  %2385 = vmatprep.subr.mxu0 0.0
  %2386 = vmatpush1.msra.mxu0 0.0
  %2387 = vmatprep.subr.mxu0 0.0
  %2388 = vmatpush1.msra.mxu0 0.0
  %2389 = vmatprep.subr.mxu0 0.0
  %2390 = vmatpush1.msra.mxu0 0.0
  %2391 = vmatprep.subr.mxu0 0.0
  %2392 = vmatpush1.msra.mxu0 0.0
  %2393 = vmatprep.subr.mxu0 0.0
  %2394 = vmatpush1.msra.mxu0 0.0
  %2395 = vmatprep.subr.mxu0 0.0
  %2396 = vmatpush1.msra.mxu0 0.0
  %2397 = vmatprep.subr.mxu0 0.0
  %2398 = vmatpush1.msra.mxu0 0.0
  %2399 = vmatprep.mubr.f32.mxu0 0.0
  %2400 = vmatmul.mubr.f32.gmra.mrb[0].mxu0 %v2330
  %v2401 = vpop.f32.mrb[0].mxu0
  %v2402 = vadd.f32 0.0, %v2401
  %v2403 = vpop.f32.mrb[0].mxu0
  %2404 = vmatprep.mubr.f32.mxu0 0.0
  %2405 = vmatmul.mubr.f32.gmra.mrb[0].mxu0 %v2333
  %v2406 = vpop.f32.mrb[0].mxu0
  %v2407 = vadd.f32 0.0, %v2406
  %v2408 = vpop.f32.mrb[0].mxu0
  %2409 = vdwg.mxu0
  %2410 = vrot.lane.b32.xlu0 %v1925, 32
  %v2411 = vpop.permute.xlu0 %2410
  %2412 = vrot.lane.b32.xlu0 %v1927, 32
  %v2413 = vpop.permute.xlu0 %2412
  %2414 = vrot.lane.b32.xlu0 %v1931, 32
  %v2415 = vpop.permute.xlu0 %2414
  %2416 = vrot.lane.b32.xlu0 %v1933, 32
  %v2417 = vpop.permute.xlu0 %2416
  %v2418 = vsel %vm967, %v2411, %v2413
  %v2419 = vsel %vm967, %v2415, %v2417
  %2420 = vrot.lane.b32.xlu0 %v2002, 96
  %v2421 = vpop.permute.xlu0 %2420
  %2422 = vrot.lane.b32.xlu0 %v2007, 96
  %v2423 = vpop.permute.xlu0 %2422
  %v2424 = vsel %vm550, %v2418, 0
  %v2426 = vsel %vm550, %v2419, 0
  %v2428 = vsel %vm550, %v2421, 0
  %v2430 = vsel %vm550, %v2423, 0
  %2432 = vmatprep.subr.mxu0 0.0
  %2433 = vmatpush1.xpose.msra.mxu0 %v2428
  %2434 = vmatprep.subr.mxu0 0.0
  %2435 = vmatpush1.xpose.msra.mxu0 %v2430
  %2436 = vmatprep.subr.mxu0 0.0
  %2437 = vmatpush1.xpose.msra.mxu0 0.0
  %2438 = vmatprep.subr.mxu0 0.0
  %2439 = vmatpush1.xpose.msra.mxu0 0.0
  %2440 = vmatprep.subr.mxu0 0.0
  %2441 = vmatpush1.xpose.msra.mxu0 0.0
  %2442 = vmatprep.subr.mxu0 0.0
  %2443 = vmatpush1.xpose.msra.mxu0 0.0
  %2444 = vmatprep.subr.mxu0 0.0
  %2445 = vmatpush1.xpose.msra.mxu0 0.0
  %2446 = vmatprep.subr.mxu0 0.0
  %2447 = vmatpush1.xpose.msra.mxu0 0.0
  %2448 = vmatprep.subr.mxu0 0.0
  %2449 = vmatpush1.xpose.msra.mxu0 0.0
  %2450 = vmatprep.subr.mxu0 0.0
  %2451 = vmatpush1.xpose.msra.mxu0 0.0
  %2452 = vmatprep.subr.mxu0 0.0
  %2453 = vmatpush1.xpose.msra.mxu0 0.0
  %2454 = vmatprep.subr.mxu0 0.0
  %2455 = vmatpush1.xpose.msra.mxu0 0.0
  %2456 = vmatprep.subr.mxu0 0.0
  %2457 = vmatpush1.xpose.msra.mxu0 0.0
  %2458 = vmatprep.subr.mxu0 0.0
  %2459 = vmatpush1.xpose.msra.mxu0 0.0
  %2460 = vmatprep.subr.mxu0 0.0
  %2461 = vmatpush1.xpose.msra.mxu0 0.0
  %2462 = vmatprep.subr.mxu0 0.0
  %2463 = vmatpush1.xpose.msra.mxu0 0.0
  %2464 = vmatprep.subr.mxu0 0.0
  %2465 = vmatpush1.xpose.msra.mxu0 0.0
  %2466 = vmatprep.subr.mxu0 0.0
  %2467 = vmatpush1.xpose.msra.mxu0 0.0
  %2468 = vmatprep.subr.mxu0 0.0
  %2469 = vmatpush1.xpose.msra.mxu0 0.0
  %2470 = vmatprep.subr.mxu0 0.0
  %2471 = vmatpush1.xpose.msra.mxu0 0.0
  %2472 = vmatprep.subr.mxu0 0.0
  %2473 = vmatpush1.xpose.msra.mxu0 0.0
  %2474 = vmatprep.subr.mxu0 0.0
  %2475 = vmatpush1.xpose.msra.mxu0 0.0
  %2476 = vmatprep.subr.mxu0 0.0
  %2477 = vmatpush1.xpose.msra.mxu0 0.0
  %2478 = vmatprep.subr.mxu0 0.0
  %2479 = vmatpush1.xpose.msra.mxu0 0.0
  %2480 = vmatprep.subr.mxu0 0.0
  %2481 = vmatpush1.xpose.msra.mxu0 0.0
  %2482 = vmatprep.subr.mxu0 0.0
  %2483 = vmatpush1.xpose.msra.mxu0 0.0
  %2484 = vmatprep.subr.mxu0 0.0
  %2485 = vmatpush1.xpose.msra.mxu0 0.0
  %2486 = vmatprep.subr.mxu0 0.0
  %2487 = vmatpush1.xpose.msra.mxu0 0.0
  %2488 = vmatprep.subr.mxu0 0.0
  %2489 = vmatpush1.xpose.msra.mxu0 0.0
  %2490 = vmatprep.subr.mxu0 0.0
  %2491 = vmatpush1.xpose.msra.mxu0 0.0
  %2492 = vmatprep.subr.mxu0 0.0
  %2493 = vmatpush1.xpose.msra.mxu0 0.0
  %2494 = vmatprep.subr.mxu0 0.0
  %2495 = vmatpush1.xpose.msra.mxu0 0.0
  %2496 = vmatprep.mubr.f32.mxu0 0.0
  %2497 = vmatmul.mubr.f32.gmra.mrb[0].mxu0 %v2424
  %v2498 = vpop.f32.mrb[0].mxu0
  %v2499 = vadd.f32 0.0, %v2498
  %v2500 = vpop.f32.mrb[0].mxu0
  %2501 = vmatprep.mubr.f32.mxu0 0.0
  %2502 = vmatmul.mubr.f32.gmra.mrb[0].mxu0 %v2426
  %v2503 = vpop.f32.mrb[0].mxu0
  %v2504 = vadd.f32 0.0, %v2503
  %v2505 = vpop.f32.mrb[0].mxu0
  %2506 = vdwg.mxu0
  %v2507 = vmul.f32 %v2499, 0.14433756
  %v2508 = vmul.f32 %v2504, 0.14433756
  %v2509 = vsel %vm638, %v2507, -inf
  %2510 = vmax.xlane.f32.xlu0 %v2509
  %v2511 = vpop.xlane.xlu0 %2510
  %v2512 = vsel %vm642, %v2508, -inf
  %2513 = vmax.xlane.f32.xlu0 %v2512
  %v2514 = vpop.xlane.xlu0 %2513
  %v2515 = vsub.f32 %v2507, %v2511
  %v2516 = vsub.f32 %v2508, %v2514
  %v2517 = vmul.f32 %v2515, 1.442695
  %v2518 = vpow.pop %v2517
  %v2519 = vmul.f32 %v2516, 1.442695
  %v2520 = vpow.pop %v2519
  %v2521 = vsel %vm638, %v2518, 0.0
  %2522 = vadd.xlane.f32.xlu0 %v2521
  %v2523 = vpop.xlane.xlu0 %2522
  %v2524 = vsel %vm642, %v2520, 0.0
  %2525 = vadd.xlane.f32.xlu0 %v2524
  %v2526 = vpop.xlane.xlu0 %2525
  %v2527 = vrcp.pop %v2523
  %v2528 = vmul.f32 %v2518, %v2527
  %v2529 = vrcp.pop %v2526
  %v2530 = vmul.f32 %v2520, %v2529
  %v2532 = vsel %vm638, %v2528, 0
  %v2535 = vsel %vm638, %v2530, 0
  %2537 = vmatprep.subr.mxu0 0.0
  %2538 = vmatpush1.msra.mxu0 %v1091
  %2539 = vmatprep.subr.mxu0 0.0
  %2540 = vmatpush1.msra.mxu0 %v1100
  %2541 = vmatprep.subr.mxu0 0.0
  %2542 = vmatpush1.msra.mxu0 0.0
  %2543 = vmatprep.subr.mxu0 0.0
  %2544 = vmatpush1.msra.mxu0 0.0
  %2545 = vmatprep.subr.mxu0 0.0
  %2546 = vmatpush1.msra.mxu0 0.0
  %2547 = vmatprep.subr.mxu0 0.0
  %2548 = vmatpush1.msra.mxu0 0.0
  %2549 = vmatprep.subr.mxu0 0.0
  %2550 = vmatpush1.msra.mxu0 0.0
  %2551 = vmatprep.subr.mxu0 0.0
  %2552 = vmatpush1.msra.mxu0 0.0
  %2553 = vmatprep.subr.mxu0 0.0
  %2554 = vmatpush1.msra.mxu0 0.0
  %2555 = vmatprep.subr.mxu0 0.0
  %2556 = vmatpush1.msra.mxu0 0.0
  %2557 = vmatprep.subr.mxu0 0.0
  %2558 = vmatpush1.msra.mxu0 0.0
  %2559 = vmatprep.subr.mxu0 0.0
  %2560 = vmatpush1.msra.mxu0 0.0
  %2561 = vmatprep.subr.mxu0 0.0
  %2562 = vmatpush1.msra.mxu0 0.0
  %2563 = vmatprep.subr.mxu0 0.0
  %2564 = vmatpush1.msra.mxu0 0.0
  %2565 = vmatprep.subr.mxu0 0.0
  %2566 = vmatpush1.msra.mxu0 0.0
  %2567 = vmatprep.subr.mxu0 0.0
  %2568 = vmatpush1.msra.mxu0 0.0
  %2569 = vmatprep.subr.mxu0 0.0
  %2570 = vmatpush1.msra.mxu0 0.0
  %2571 = vmatprep.subr.mxu0 0.0
  %2572 = vmatpush1.msra.mxu0 0.0
  %2573 = vmatprep.subr.mxu0 0.0
  %2574 = vmatpush1.msra.mxu0 0.0
  %2575 = vmatprep.subr.mxu0 0.0
  %2576 = vmatpush1.msra.mxu0 0.0
  %2577 = vmatprep.subr.mxu0 0.0
  %2578 = vmatpush1.msra.mxu0 0.0
  %2579 = vmatprep.subr.mxu0 0.0
  %2580 = vmatpush1.msra.mxu0 0.0
  %2581 = vmatprep.subr.mxu0 0.0
  %2582 = vmatpush1.msra.mxu0 0.0
  %2583 = vmatprep.subr.mxu0 0.0
  %2584 = vmatpush1.msra.mxu0 0.0
  %2585 = vmatprep.subr.mxu0 0.0
  %2586 = vmatpush1.msra.mxu0 0.0
  %2587 = vmatprep.subr.mxu0 0.0
  %2588 = vmatpush1.msra.mxu0 0.0
  %2589 = vmatprep.subr.mxu0 0.0
  %2590 = vmatpush1.msra.mxu0 0.0
  %2591 = vmatprep.subr.mxu0 0.0
  %2592 = vmatpush1.msra.mxu0 0.0
  %2593 = vmatprep.subr.mxu0 0.0
  %2594 = vmatpush1.msra.mxu0 0.0
  %2595 = vmatprep.subr.mxu0 0.0
  %2596 = vmatpush1.msra.mxu0 0.0
  %2597 = vmatprep.subr.mxu0 0.0
  %2598 = vmatpush1.msra.mxu0 0.0
  %2599 = vmatprep.subr.mxu0 0.0
  %2600 = vmatpush1.msra.mxu0 0.0
  %2601 = vmatprep.mubr.f32.mxu0 0.0
  %2602 = vmatmul.mubr.f32.gmra.mrb[0].mxu0 %v2532
  %v2603 = vpop.f32.mrb[0].mxu0
  %v2604 = vadd.f32 0.0, %v2603
  %v2605 = vpop.f32.mrb[0].mxu0
  %2606 = vmatprep.mubr.f32.mxu0 0.0
  %2607 = vmatmul.mubr.f32.gmra.mrb[0].mxu0 %v2535
  %v2608 = vpop.f32.mrb[0].mxu0
  %v2609 = vadd.f32 0.0, %v2608
  %v2610 = vpop.f32.mrb[0].mxu0
  %2611 = vdwg.mxu0
  %2612 = vrot.lane.b32.xlu0 %v1927, 112
  %v2613 = vpop.permute.xlu0 %2612
  %2614 = vrot.lane.b32.xlu0 %v1933, 112
  %v2615 = vpop.permute.xlu0 %2614
  %2616 = vrot.lane.b32.xlu0 %v2002, 48
  %v2617 = vpop.permute.xlu0 %2616
  %2618 = vrot.lane.b32.xlu0 %v2007, 48
  %v2619 = vpop.permute.xlu0 %2618
  %v2620 = vsel %vm550, %v2613, 0
  %v2622 = vsel %vm550, %v2615, 0
  %v2624 = vsel %vm550, %v2617, 0
  %v2626 = vsel %vm550, %v2619, 0
  %2628 = vmatprep.subr.mxu0 0.0
  %2629 = vmatpush1.xpose.msra.mxu0 %v2624
  %2630 = vmatprep.subr.mxu0 0.0
  %2631 = vmatpush1.xpose.msra.mxu0 %v2626
  %2632 = vmatprep.subr.mxu0 0.0
  %2633 = vmatpush1.xpose.msra.mxu0 0.0
  %2634 = vmatprep.subr.mxu0 0.0
  %2635 = vmatpush1.xpose.msra.mxu0 0.0
  %2636 = vmatprep.subr.mxu0 0.0
  %2637 = vmatpush1.xpose.msra.mxu0 0.0
  %2638 = vmatprep.subr.mxu0 0.0
  %2639 = vmatpush1.xpose.msra.mxu0 0.0
  %2640 = vmatprep.subr.mxu0 0.0
  %2641 = vmatpush1.xpose.msra.mxu0 0.0
  %2642 = vmatprep.subr.mxu0 0.0
  %2643 = vmatpush1.xpose.msra.mxu0 0.0
  %2644 = vmatprep.subr.mxu0 0.0
  %2645 = vmatpush1.xpose.msra.mxu0 0.0
  %2646 = vmatprep.subr.mxu0 0.0
  %2647 = vmatpush1.xpose.msra.mxu0 0.0
  %2648 = vmatprep.subr.mxu0 0.0
  %2649 = vmatpush1.xpose.msra.mxu0 0.0
  %2650 = vmatprep.subr.mxu0 0.0
  %2651 = vmatpush1.xpose.msra.mxu0 0.0
  %2652 = vmatprep.subr.mxu0 0.0
  %2653 = vmatpush1.xpose.msra.mxu0 0.0
  %2654 = vmatprep.subr.mxu0 0.0
  %2655 = vmatpush1.xpose.msra.mxu0 0.0
  %2656 = vmatprep.subr.mxu0 0.0
  %2657 = vmatpush1.xpose.msra.mxu0 0.0
  %2658 = vmatprep.subr.mxu0 0.0
  %2659 = vmatpush1.xpose.msra.mxu0 0.0
  %2660 = vmatprep.subr.mxu0 0.0
  %2661 = vmatpush1.xpose.msra.mxu0 0.0
  %2662 = vmatprep.subr.mxu0 0.0
  %2663 = vmatpush1.xpose.msra.mxu0 0.0
  %2664 = vmatprep.subr.mxu0 0.0
  %2665 = vmatpush1.xpose.msra.mxu0 0.0
  %2666 = vmatprep.subr.mxu0 0.0
  %2667 = vmatpush1.xpose.msra.mxu0 0.0
  %2668 = vmatprep.subr.mxu0 0.0
  %2669 = vmatpush1.xpose.msra.mxu0 0.0
  %2670 = vmatprep.subr.mxu0 0.0
  %2671 = vmatpush1.xpose.msra.mxu0 0.0
  %2672 = vmatprep.subr.mxu0 0.0
  %2673 = vmatpush1.xpose.msra.mxu0 0.0
  %2674 = vmatprep.subr.mxu0 0.0
  %2675 = vmatpush1.xpose.msra.mxu0 0.0
  %2676 = vmatprep.subr.mxu0 0.0
  %2677 = vmatpush1.xpose.msra.mxu0 0.0
  %2678 = vmatprep.subr.mxu0 0.0
  %2679 = vmatpush1.xpose.msra.mxu0 0.0
  %2680 = vmatprep.subr.mxu0 0.0
  %2681 = vmatpush1.xpose.msra.mxu0 0.0
  %2682 = vmatprep.subr.mxu0 0.0
  %2683 = vmatpush1.xpose.msra.mxu0 0.0
  %2684 = vmatprep.subr.mxu0 0.0
  %2685 = vmatpush1.xpose.msra.mxu0 0.0
  %2686 = vmatprep.subr.mxu0 0.0
  %2687 = vmatpush1.xpose.msra.mxu0 0.0
  %2688 = vmatprep.subr.mxu0 0.0
  %2689 = vmatpush1.xpose.msra.mxu0 0.0
  %2690 = vmatprep.subr.mxu0 0.0
  %2691 = vmatpush1.xpose.msra.mxu0 0.0
  %2692 = vmatprep.mubr.f32.mxu0 0.0
  %2693 = vmatmul.mubr.f32.gmra.mrb[0].mxu0 %v2620
  %v2694 = vpop.f32.mrb[0].mxu0
  %v2695 = vadd.f32 0.0, %v2694
  %v2696 = vpop.f32.mrb[0].mxu0
  %2697 = vmatprep.mubr.f32.mxu0 0.0
  %2698 = vmatmul.mubr.f32.gmra.mrb[0].mxu0 %v2622
  %v2699 = vpop.f32.mrb[0].mxu0
  %v2700 = vadd.f32 0.0, %v2699
  %v2701 = vpop.f32.mrb[0].mxu0
  %2702 = vdwg.mxu0
  %v2703 = vmul.f32 %v2695, 0.14433756
  %v2704 = vmul.f32 %v2700, 0.14433756
  %v2705 = vsel %vm638, %v2703, -inf
  %2706 = vmax.xlane.f32.xlu0 %v2705
  %v2707 = vpop.xlane.xlu0 %2706
  %v2708 = vsel %vm642, %v2704, -inf
  %2709 = vmax.xlane.f32.xlu0 %v2708
  %v2710 = vpop.xlane.xlu0 %2709
  %v2711 = vsub.f32 %v2703, %v2707
  %v2712 = vsub.f32 %v2704, %v2710
  %v2713 = vmul.f32 %v2711, 1.442695
  %v2714 = vpow.pop %v2713
  %v2715 = vmul.f32 %v2712, 1.442695
  %v2716 = vpow.pop %v2715
  %v2717 = vsel %vm638, %v2714, 0.0
  %2718 = vadd.xlane.f32.xlu0 %v2717
  %v2719 = vpop.xlane.xlu0 %2718
  %v2720 = vsel %vm642, %v2716, 0.0
  %2721 = vadd.xlane.f32.xlu0 %v2720
  %v2722 = vpop.xlane.xlu0 %2721
  %v2723 = vrcp.pop %v2719
  %v2724 = vmul.f32 %v2714, %v2723
  %v2725 = vrcp.pop %v2722
  %v2726 = vmul.f32 %v2716, %v2725
  %v2728 = vsel %vm638, %v2724, 0
  %v2731 = vsel %vm638, %v2726, 0
  %2733 = vmatprep.subr.mxu0 0.0
  %2734 = vmatpush1.msra.mxu0 %v1293
  %2735 = vmatprep.subr.mxu0 0.0
  %2736 = vmatpush1.msra.mxu0 %v1303
  %2737 = vmatprep.subr.mxu0 0.0
  %2738 = vmatpush1.msra.mxu0 0.0
  %2739 = vmatprep.subr.mxu0 0.0
  %2740 = vmatpush1.msra.mxu0 0.0
  %2741 = vmatprep.subr.mxu0 0.0
  %2742 = vmatpush1.msra.mxu0 0.0
  %2743 = vmatprep.subr.mxu0 0.0
  %2744 = vmatpush1.msra.mxu0 0.0
  %2745 = vmatprep.subr.mxu0 0.0
  %2746 = vmatpush1.msra.mxu0 0.0
  %2747 = vmatprep.subr.mxu0 0.0
  %2748 = vmatpush1.msra.mxu0 0.0
  %2749 = vmatprep.subr.mxu0 0.0
  %2750 = vmatpush1.msra.mxu0 0.0
  %2751 = vmatprep.subr.mxu0 0.0
  %2752 = vmatpush1.msra.mxu0 0.0
  %2753 = vmatprep.subr.mxu0 0.0
  %2754 = vmatpush1.msra.mxu0 0.0
  %2755 = vmatprep.subr.mxu0 0.0
  %2756 = vmatpush1.msra.mxu0 0.0
  %2757 = vmatprep.subr.mxu0 0.0
  %2758 = vmatpush1.msra.mxu0 0.0
  %2759 = vmatprep.subr.mxu0 0.0
  %2760 = vmatpush1.msra.mxu0 0.0
  %2761 = vmatprep.subr.mxu0 0.0
  %2762 = vmatpush1.msra.mxu0 0.0
  %2763 = vmatprep.subr.mxu0 0.0
  %2764 = vmatpush1.msra.mxu0 0.0
  %2765 = vmatprep.subr.mxu0 0.0
  %2766 = vmatpush1.msra.mxu0 0.0
  %2767 = vmatprep.subr.mxu0 0.0
  %2768 = vmatpush1.msra.mxu0 0.0
  %2769 = vmatprep.subr.mxu0 0.0
  %2770 = vmatpush1.msra.mxu0 0.0
  %2771 = vmatprep.subr.mxu0 0.0
  %2772 = vmatpush1.msra.mxu0 0.0
  %2773 = vmatprep.subr.mxu0 0.0
  %2774 = vmatpush1.msra.mxu0 0.0
  %2775 = vmatprep.subr.mxu0 0.0
  %2776 = vmatpush1.msra.mxu0 0.0
  %2777 = vmatprep.subr.mxu0 0.0
  %2778 = vmatpush1.msra.mxu0 0.0
  %2779 = vmatprep.subr.mxu0 0.0
  %2780 = vmatpush1.msra.mxu0 0.0
  %2781 = vmatprep.subr.mxu0 0.0
  %2782 = vmatpush1.msra.mxu0 0.0
  %2783 = vmatprep.subr.mxu0 0.0
  %2784 = vmatpush1.msra.mxu0 0.0
  %2785 = vmatprep.subr.mxu0 0.0
  %2786 = vmatpush1.msra.mxu0 0.0
  %2787 = vmatprep.subr.mxu0 0.0
  %2788 = vmatpush1.msra.mxu0 0.0
  %2789 = vmatprep.subr.mxu0 0.0
  %2790 = vmatpush1.msra.mxu0 0.0
  %2791 = vmatprep.subr.mxu0 0.0
  %2792 = vmatpush1.msra.mxu0 0.0
  %2793 = vmatprep.subr.mxu0 0.0
  %2794 = vmatpush1.msra.mxu0 0.0
  %2795 = vmatprep.subr.mxu0 0.0
  %2796 = vmatpush1.msra.mxu0 0.0
  %2797 = vmatprep.mubr.f32.mxu0 0.0
  %2798 = vmatmul.mubr.f32.gmra.mrb[0].mxu0 %v2728
  %v2799 = vpop.f32.mrb[0].mxu0
  %v2800 = vadd.f32 0.0, %v2799
  %v2801 = vpop.f32.mrb[0].mxu0
  %2802 = vmatprep.mubr.f32.mxu0 0.0
  %2803 = vmatmul.mubr.f32.gmra.mrb[0].mxu0 %v2731
  %v2804 = vpop.f32.mrb[0].mxu0
  %v2805 = vadd.f32 0.0, %v2804
  %v2806 = vpop.f32.mrb[0].mxu0
  %2807 = vdwg.mxu0
  %2810 = vrot.lane.b32.xlu0 %v2402, 48
  %v2811 = vpop.permute.xlu0 %2810
  %2812 = vrot.lane.b32.xlu0 %v2407, 48
  %v2813 = vpop.permute.xlu0 %2812
  %2818 = vrot.lane.b32.xlu0 %v2604, 96
  %v2819 = vpop.permute.xlu0 %2818
  %2820 = vrot.lane.b32.xlu0 %v2609, 96
  %v2821 = vpop.permute.xlu0 %2820
  %2826 = vrot.lane.b32.xlu0 %v2800, 16
  %v2827 = vpop.permute.xlu0 %2826
  %2828 = vrot.lane.b32.xlu0 %v2805, 16
  %v2829 = vpop.permute.xlu0 %2828
  %v2832 = vsel %vm550, %v2198, %v2811
  %v2833 = vsel %vm550, %v2203, %v2813
  %v2834 = vsel %vm1406, %v2832, %v2819
  %v2835 = vsel %vm1406, %v2833, %v2821
  %v2836 = vsel %vm760, %v2819, %v2827
  %v2837 = vsel %vm760, %v2821, %v2829
  %v2838 = vld [vmem:[%s10] sm:$0xff]
  %v2839 = vld [vmem:[%s10 + $0x8] sm:$0xff]
  %v2840 = vld [vmem:[%s10 + $0x10] sm:$0xff]
  %v2841 = vld [vmem:[%s10 + $0x18] sm:$0xff]
  %v2842 = vld [vmem:[%s10 + $0x20] sm:$0xff]
  %v2843 = vld [vmem:[%s10 + $0x28] sm:$0xff]
  %v2844 = vld [vmem:[%s10 + $0x30] sm:$0xff]
  %v2845 = vld [vmem:[%s10 + $0x38] sm:$0xff]
  %v2846 = vld [vmem:[%s10 + $0x40] sm:$0xff]
  %v2847 = vld [vmem:[%s10 + $0x48] sm:$0xff]
  %v2848 = vld [vmem:[%s10 + $0x50] sm:$0xff]
  %v2849 = vld [vmem:[%s10 + $0x58] sm:$0xff]
  %v2850 = vld [vmem:[%s10 + $0x60] sm:$0xff]
  %v2851 = vld [vmem:[%s10 + $0x68] sm:$0xff]
  %v2852 = vld [vmem:[%s10 + $0x70] sm:$0xff]
  %v2853 = vld [vmem:[%s10 + $0x78] sm:$0xff]
  %v2854 = vld [vmem:[%s10 + $0x80] sm:$0xff]
  %v2855 = vld [vmem:[%s10 + $0x88] sm:$0xff]
  %v2856 = vld [vmem:[%s10 + $0x90] sm:$0xff]
  %v2857 = vld [vmem:[%s10 + $0x98] sm:$0xff]
  %v2858 = vld [vmem:[%s10 + $0xa0] sm:$0xff]
  %v2859 = vld [vmem:[%s10 + $0xa8] sm:$0xff]
  %v2860 = vld [vmem:[%s10 + $0xb0] sm:$0xff]
  %v2861 = vld [vmem:[%s10 + $0xb8] sm:$0xff]
  %v2862 = vld [vmem:[%s10 + $0xc0] sm:$0xff]
  %v2863 = vld [vmem:[%s10 + $0xc8] sm:$0xff]
  %v2864 = vld [vmem:[%s10 + $0xd0] sm:$0xff]
  %v2865 = vld [vmem:[%s10 + $0xd8] sm:$0xff]
  %v2866 = vld [vmem:[%s10 + $0xe0] sm:$0xff]
  %v2867 = vld [vmem:[%s10 + $0xe8] sm:$0xff]
  %v2868 = vld [vmem:[%s10 + $0xf0] sm:$0xff]
  %v2869 = vld [vmem:[%s10 + $0xf8] sm:$0xff]
  %v2870 = vld [vmem:[%s10 + $0x100] sm:$0xff]
  %v2871 = vld [vmem:[%s10 + $0x108] sm:$0xff]
  %v2872 = vld [vmem:[%s10 + $0x110] sm:$0xff]
  %v2873 = vld [vmem:[%s10 + $0x118] sm:$0xff]
  %v2874 = vld [vmem:[%s10 + $0x120] sm:$0xff]
  %v2875 = vld [vmem:[%s10 + $0x128] sm:$0xff]
  %v2876 = vld [vmem:[%s10 + $0x130] sm:$0xff]
  %v2877 = vld [vmem:[%s10 + $0x138] sm:$0xff]
  %v2878 = vld [vmem:[%s10 + $0x140] sm:$0xff]
  %v2879 = vld [vmem:[%s10 + $0x148] sm:$0xff]
  %v2880 = vld [vmem:[%s10 + $0x150] sm:$0xff]
  %v2881 = vld [vmem:[%s10 + $0x158] sm:$0xff]
  %v2882 = vld [vmem:[%s10 + $0x160] sm:$0xff]
  %v2883 = vld [vmem:[%s10 + $0x168] sm:$0xff]
  %v2884 = vld [vmem:[%s10 + $0x170] sm:$0xff]
  %v2885 = vld [vmem:[%s10 + $0x178] sm:$0xff]
  %v2886 = vld [vmem:[%s11] sm:$0x3]
  %v2888 = vlaneseq
  %v2889 = vshrl.u32 %v2888, 7
  %v2890 = vsub.s32 0, %v2889
  %v2891 = vrot.slane %v2886, %v2890
  %v2892 = vlaneseq
  %v2893 = vshrl.u32 %v2892, 7
  %v2894 = vsub.s32 1, %v2893
  %v2895 = vrot.slane %v2886, %v2894
  %v2899 = vsel %vm105, %v2836, 0
  %v2902 = vsel %vm105, %v2837, 0
  %2904 = vmatprep.subr.mxu0 %v2839
  %2905 = vmatpush1.msra.mxu0 %v2838
  %2906 = vmatprep.subr.mxu0 %v2841
  %2907 = vmatpush1.msra.mxu0 %v2840
  %2908 = vmatprep.subr.mxu0 %v2843
  %2909 = vmatpush1.msra.mxu0 %v2842
  %2910 = vmatprep.subr.mxu0 %v2845
  %2911 = vmatpush1.msra.mxu0 %v2844
  %2912 = vmatprep.subr.mxu0 %v2847
  %2913 = vmatpush1.msra.mxu0 %v2846
  %2914 = vmatprep.subr.mxu0 %v2849
  %2915 = vmatpush1.msra.mxu0 %v2848
  %2916 = vmatprep.subr.mxu0 %v2851
  %2917 = vmatpush1.msra.mxu0 %v2850
  %2918 = vmatprep.subr.mxu0 %v2853
  %2919 = vmatpush1.msra.mxu0 %v2852
  %2920 = vmatprep.subr.mxu0 %v2855
  %2921 = vmatpush1.msra.mxu0 %v2854
  %2922 = vmatprep.subr.mxu0 %v2857
  %2923 = vmatpush1.msra.mxu0 %v2856
  %2924 = vmatprep.subr.mxu0 %v2859
  %2925 = vmatpush1.msra.mxu0 %v2858
  %2926 = vmatprep.subr.mxu0 %v2861
  %2927 = vmatpush1.msra.mxu0 %v2860
  %2928 = vmatprep.subr.mxu0 %v2863
  %2929 = vmatpush1.msra.mxu0 %v2862
  %2930 = vmatprep.subr.mxu0 %v2865
  %2931 = vmatpush1.msra.mxu0 %v2864
  %2932 = vmatprep.subr.mxu0 %v2867
  %2933 = vmatpush1.msra.mxu0 %v2866
  %2934 = vmatprep.subr.mxu0 %v2869
  %2935 = vmatpush1.msra.mxu0 %v2868
  %2936 = vmatprep.subr.mxu0 %v2871
  %2937 = vmatpush1.msra.mxu0 %v2870
  %2938 = vmatprep.subr.mxu0 %v2873
  %2939 = vmatpush1.msra.mxu0 %v2872
  %2940 = vmatprep.subr.mxu0 %v2875
  %2941 = vmatpush1.msra.mxu0 %v2874
  %2942 = vmatprep.subr.mxu0 %v2877
  %2943 = vmatpush1.msra.mxu0 %v2876
  %2944 = vmatprep.subr.mxu0 %v2879
  %2945 = vmatpush1.msra.mxu0 %v2878
  %2946 = vmatprep.subr.mxu0 %v2881
  %2947 = vmatpush1.msra.mxu0 %v2880
  %2948 = vmatprep.subr.mxu0 %v2883
  %2949 = vmatpush1.msra.mxu0 %v2882
  %2950 = vmatprep.subr.mxu0 %v2885
  %2951 = vmatpush1.msra.mxu0 %v2884
  %2952 = vmatprep.subr.mxu0 0.0
  %2953 = vmatpush1.msra.mxu0 0.0
  %2954 = vmatprep.subr.mxu0 0.0
  %2955 = vmatpush1.msra.mxu0 0.0
  %2956 = vmatprep.subr.mxu0 0.0
  %2957 = vmatpush1.msra.mxu0 0.0
  %2958 = vmatprep.subr.mxu0 0.0
  %2959 = vmatpush1.msra.mxu0 0.0
  %2960 = vmatprep.subr.mxu0 0.0
  %2961 = vmatpush1.msra.mxu0 0.0
  %2962 = vmatprep.subr.mxu0 0.0
  %2963 = vmatpush1.msra.mxu0 0.0
  %2964 = vmatprep.subr.mxu0 0.0
  %2965 = vmatpush1.msra.mxu0 0.0
  %2966 = vmatprep.subr.mxu0 0.0
  %2967 = vmatpush1.msra.mxu0 0.0
  %2968 = vmatprep.mubr.f32.mxu0 %v2899
  %2969 = vmatmul.mubr.f32.gmra.mrb[0].mxu0 %v2834
  %v2970 = vpop.f32.mrb[0].mxu0
  %v2971 = vadd.f32 %v2891, %v2970
  %v2972 = vpop.f32.mrb[0].mxu0
  %v2973 = vadd.f32 %v2895, %v2972
  %2974 = vmatprep.mubr.f32.mxu0 %v2902
  %2975 = vmatmul.mubr.f32.gmra.mrb[0].mxu0 %v2835
  %v2976 = vpop.f32.mrb[0].mxu0
  %v2977 = vadd.f32 %v2891, %v2976
  %v2978 = vpop.f32.mrb[0].mxu0
  %v2979 = vadd.f32 %v2895, %v2978
  %2980 = vdwg.mxu0
  %v2981 = vld [vmem:[%s4] sm:$0x3]
  %v2982 = vld [vmem:[%s5] sm:$0x3]
  %v2983 = vsel %vm195, %v2977, 0.0
  %v2984 = vadd.f32 %v2971, %v2983
  %v2985 = vrot.slane %v2984, 4
  %v2986 = vadd.f32 %v2984, %v2985
  %v2987 = vrot.slane %v2986, 2
  %v2988 = vadd.f32 %v2986, %v2987
  %v2989 = vrot.slane %v2988, 1
  %v2990 = vadd.f32 %v2988, %v2989
  %v2991 = vsel %vm105, %v2973, 0.0
  %v2992 = vsel %vm205, %v2979, 0.0
  %v2993 = vadd.f32 %v2991, %v2992
  %v2994 = vrot.slane %v2993, 4
  %v2995 = vadd.f32 %v2993, %v2994
  %v2996 = vrot.slane %v2995, 2
  %v2997 = vadd.f32 %v2995, %v2996
  %v2998 = vrot.slane %v2997, 1
  %v2999 = vadd.f32 %v2997, %v2998
  %v3000 = vmul.f32 %v2990, %v214
  %v3001 = vmul.f32 %v2999, %v214
  %v3002 = vsub.f32 %v2971, %v3000
  %v3003 = vsub.f32 %v2973, %v3001
  %v3004 = vsub.f32 %v2977, %v3000
  %v3005 = vsub.f32 %v2979, %v3001
  %v3006 = vmul.f32 %v3002, %v3002
  %v3007 = vmul.f32 %v3003, %v3003
  %v3008 = vmul.f32 %v3004, %v3004
  %v3009 = vmul.f32 %v3005, %v3005
  %v3010 = vsel %vm195, %v3008, 0.0
  %v3011 = vadd.f32 %v3006, %v3010
  %v3012 = vrot.slane %v3011, 4
  %v3013 = vadd.f32 %v3011, %v3012
  %v3014 = vrot.slane %v3013, 2
  %v3015 = vadd.f32 %v3013, %v3014
  %v3016 = vrot.slane %v3015, 1
  %v3017 = vadd.f32 %v3015, %v3016
  %v3018 = vsel %vm105, %v3007, 0.0
  %v3019 = vsel %vm205, %v3009, 0.0
  %v3020 = vadd.f32 %v3018, %v3019
  %v3021 = vrot.slane %v3020, 4
  %v3022 = vadd.f32 %v3020, %v3021
  %v3023 = vrot.slane %v3022, 2
  %v3024 = vadd.f32 %v3022, %v3023
  %v3025 = vrot.slane %v3024, 1
  %v3026 = vadd.f32 %v3024, %v3025
  %v3027 = vmul.f32 %v3017, %v242
  %v3028 = vmul.f32 %v3026, %v242
  %v3029 = vadd.f32 %v3027, 1e-08
  %v3030 = vadd.f32 %v3028, 1e-08
  %v3031 = vrsqrt.pop %v3029
  %v3032 = vmul.f32 %v3029, %v3031
  %vm3033 = vcmp.eq.f32.partialorder %v3029, inf
  %v3034 = vsel %vm3033, %v3029, %v3032
  %vm3035 = vcmp.eq.f32.partialorder %v3029, 0.0
  %v3036 = vand.u32 %v3029, 2147483648
  %v3037 = vsel %vm3035, %v3036, %v3034
  %v3038 = vrsqrt.pop %v3030
  %v3039 = vmul.f32 %v3030, %v3038
  %vm3040 = vcmp.eq.f32.partialorder %v3030, inf
  %v3041 = vsel %vm3040, %v3030, %v3039
  %vm3042 = vcmp.eq.f32.partialorder %v3030, 0.0
  %v3043 = vand.u32 %v3030, 2147483648
  %v3044 = vsel %vm3042, %v3043, %v3041
  %v3045 = vrcp.pop %v3037
  %v3046 = vmul.f32 %v3002, %v3045
  %v3047 = vrcp.pop %v3044
  %v3048 = vmul.f32 %v3003, %v3047
  %v3049 = vmul.f32 %v3004, %v3045
  %v3050 = vmul.f32 %v3005, %v3047
  %v3052 = vlaneseq
  %v3053 = vshrl.u32 %v3052, 7
  %v3054 = vsub.s32 0, %v3053
  %v3055 = vrot.slane %v2981, %v3054
  %v3056 = vlaneseq
  %v3057 = vshrl.u32 %v3056, 7
  %v3058 = vsub.s32 1, %v3057
  %v3059 = vrot.slane %v2981, %v3058
  %v3062 = vmul.f32 %v3046, %v3055
  %v3063 = vmul.f32 %v3048, %v3059
  %v3064 = vmul.f32 %v3049, %v3055
  %v3065 = vmul.f32 %v3050, %v3059
  %v3067 = vlaneseq
  %v3068 = vshrl.u32 %v3067, 7
  %v3069 = vsub.s32 0, %v3068
  %v3070 = vrot.slane %v2982, %v3069
  %v3071 = vlaneseq
  %v3072 = vshrl.u32 %v3071, 7
  %v3073 = vsub.s32 1, %v3072
  %v3074 = vrot.slane %v2982, %v3073
  %v3077 = vadd.f32 %v3062, %v3070
  %v3078 = vadd.f32 %v3063, %v3074
  %v3079 = vadd.f32 %v3064, %v3070
  %v3080 = vadd.f32 %v3065, %v3074
  %s3081 = scalar_lea.vmem %s12, 32
  %3082 = vst [vmem:[%s3081] sm:$0xff] %v3077
  %3083 = vst.msk [vmem:[%s3081 + $0x8] sm:$0xff] %vm105, %v3078
  %3084 = vst [vmem:[%s3081 + $0x10] sm:$0x1] %v3079
  %3085 = vst.msk [vmem:[%s3081 + $0x18] sm:$0x1] %vm205, %v3080
  // Predicated region
  $region50: #{model_forward.2} parent=0 // pred_check
    _
  $region51: #{model_forward.2} parent=0 // pred_check_branch
    %3087 = sbr.rel (0) target = $region53
  $region52: #{model_forward.2} parent=0 // pred_region
    _
  $region53: #{model_forward.2} parent=0 // pred_fallthru
    _
  // Predicated region
  $region54: #{model_forward.2} parent=0 // pred_check
    _
  $region55: #{model_forward.2} parent=0 // pred_check_branch
    %3089 = sbr.rel (0) target = $region57
  $region56: #{model_forward.2} parent=0 // pred_region
    _
  $region57: #{model_forward.2} parent=0 // pred_fallthru
    _

// kernel: model_forward.3
$region0: #{model_forward.3}
  #allocation0 [shape = 'u32[]', space=smem, size = 0x4, offset = 0x4, fixed_abs, tag = 'smem constant byte address 0x4 - core index']
  #allocation1 [shape = 'u32[144,128]{1,0:T(1,128)}', space=vmem, size = 0x12000, scoped, tag = 'internal scratch']
  %s0 = inlined_call_operand.vmem [shape: f32[2,5,192], index: 0, kind: input, shape index: {}]
  %s1 = inlined_call_operand.vmem [shape: f32[192,64], index: 1, kind: input, shape index: {}]
  %s2 = inlined_call_operand.vmem [shape: f32[5,64], index: 2, kind: input, shape index: {}]
  %s3 = inlined_call_operand.vmem [shape: f32[2,1,64], index: 3, kind: input, shape index: {}]
  %s4 = inlined_call_operand.vmem [shape: f32[2,1,64], index: 4, kind: input, shape index: {}]
  %s5 = inlined_call_operand.vmem [shape: f32[2,64,192], index: 5, kind: input, shape index: {}]
  %s6 = inlined_call_operand.vmem [shape: f32[2,1,192], index: 6, kind: input, shape index: {}]
  %s7 = inlined_call_operand.vmem [shape: f32[2,64,64], index: 7, kind: input, shape index: {}]
  %s8 = inlined_call_operand.vmem [shape: f32[2,1,64], index: 8, kind: input, shape index: {}]
  %s9 = inlined_call_operand.vmem [shape: f32[2,1,64], index: 9, kind: input, shape index: {}]
  %s10 = inlined_call_operand.vmem [shape: f32[2,1,64], index: 10, kind: input, shape index: {}]
  %s11 = inlined_call_operand.vmem [shape: f32[2,64,128], index: 11, kind: input, shape index: {}]
  %s12 = inlined_call_operand.vmem [shape: f32[2,1,128], index: 12, kind: input, shape index: {}]
  %s13 = inlined_call_operand.vmem [shape: f32[2,128,64], index: 13, kind: input, shape index: {}]
  %s14 = inlined_call_operand.vmem [shape: f32[2,1,64], index: 14, kind: input, shape index: {}]
  %s15 = inlined_call_operand.vmem [shape: f32[1,64], index: 15, kind: input, shape index: {}]
  %s16 = inlined_call_operand.vmem [shape: f32[1,64], index: 16, kind: input, shape index: {}]
  %s17 = inlined_call_operand.vmem [shape: f32[64,128], index: 17, kind: input, shape index: {}]
  %s18 = inlined_call_operand.vmem [shape: f32[1,128], index: 18, kind: input, shape index: {}]
  %s19 = inlined_call_operand.hbm [shape: f32[2,1,128], index: 19, kind: output, shape index: {}]
  %s20 = sld [smem:[#allocation0]]
  $region86: #{model_forward.3} parent=0
    _
  %s22 = ssub.s32 1, %s20
  %s23 = scalar_select 0, %s22, %s20
  $region1: #{model_forward.3} parent=0
    #allocation2 [shape = 'u8[1024]{0}', space=vmem, size = 0x400, scoped, tag = 'output window, operand 0, single buffered']
    #allocation3 [shape = 's32[1]{0}', space=sflag, size = 0x4, scoped, tag = 'scoped memory for model_forward.3']
    %24 = vsyncpa [#allocation3], 0
    // Predicated region
    $region2: #{model_forward.3} parent=1 // pred_check
      _
    $region3: #{model_forward.3} parent=1 // pred_check_branch
      %26 = sbr.rel (0) target = $region5
    $region4: #{model_forward.3} parent=1 // pred_region
      _
    $region5: #{model_forward.3} parent=1 // pred_fallthru
      _
    // Predicated region
    $region6: #{model_forward.3} parent=1 // pred_check
      _
    $region7: #{model_forward.3} parent=1 // pred_check_branch
      %28 = sbr.rel (0) target = $region9
    $region8: #{model_forward.3} parent=1 // pred_region
      _
    $region9: #{model_forward.3} parent=1 // pred_fallthru
      _
    // Predicated region
    $region10: #{model_forward.3} parent=1 // pred_check
      _
    $region11: #{model_forward.3} parent=1 // pred_check_branch
      %30 = sbr.rel (0) target = $region13
    $region12: #{model_forward.3} parent=1 // pred_region
      _
    $region13: #{model_forward.3} parent=1 // pred_fallthru
      _
    // Predicated region
    $region14: #{model_forward.3} parent=1 // pred_check
      _
    $region15: #{model_forward.3} parent=1 // pred_check_branch
      %32 = sbr.rel (0) target = $region17
    $region16: #{model_forward.3} parent=1 // pred_region
      _
    $region17: #{model_forward.3} parent=1 // pred_fallthru
      _
    // Predicated region
    $region18: #{model_forward.3} parent=1 // pred_check
      _
    $region19: #{model_forward.3} parent=1 // pred_check_branch
      %34 = sbr.rel (0) target = $region21
    $region20: #{model_forward.3} parent=1 // pred_region
      _
    $region21: #{model_forward.3} parent=1 // pred_fallthru
      _
    // Predicated region
    $region22: #{model_forward.3} parent=1 // pred_check
      _
    $region23: #{model_forward.3} parent=1 // pred_check_branch
      %36 = sbr.rel (0) target = $region25
    $region24: #{model_forward.3} parent=1 // pred_region
      _
    $region25: #{model_forward.3} parent=1 // pred_fallthru
      _
    // Predicated region
    $region26: #{model_forward.3} parent=1 // pred_check
      _
    $region27: #{model_forward.3} parent=1 // pred_check_branch
      %38 = sbr.rel (0) target = $region29
    $region28: #{model_forward.3} parent=1 // pred_region
      _
    $region29: #{model_forward.3} parent=1 // pred_fallthru
      _
    // Predicated region
    $region30: #{model_forward.3} parent=1 // pred_check
      _
    $region31: #{model_forward.3} parent=1 // pred_check_branch
      %40 = sbr.rel (0) target = $region33
    $region32: #{model_forward.3} parent=1 // pred_region
      _
    $region33: #{model_forward.3} parent=1 // pred_fallthru
      _
    // Predicated region
    $region34: #{model_forward.3} parent=1 // pred_check
      _
    $region35: #{model_forward.3} parent=1 // pred_check_branch
      %42 = sbr.rel (0) target = $region37
    $region36: #{model_forward.3} parent=1 // pred_region
      _
    $region37: #{model_forward.3} parent=1 // pred_fallthru
      _
    // Predicated region
    $region38: #{model_forward.3} parent=1 // pred_check
      _
    $region39: #{model_forward.3} parent=1 // pred_check_branch
      %44 = sbr.rel (0) target = $region41
    $region40: #{model_forward.3} parent=1 // pred_region
      _
    $region41: #{model_forward.3} parent=1 // pred_fallthru
      _
    // Predicated region
    $region42: #{model_forward.3} parent=1 // pred_check
      _
    $region43: #{model_forward.3} parent=1 // pred_check_branch
      %46 = sbr.rel (0) target = $region45
    $region44: #{model_forward.3} parent=1 // pred_region
      _
    $region45: #{model_forward.3} parent=1 // pred_fallthru
      _
    // Predicated region
    $region46: #{model_forward.3} parent=1 // pred_check
      _
    $region47: #{model_forward.3} parent=1 // pred_check_branch
      %48 = sbr.rel (0) target = $region49
    $region48: #{model_forward.3} parent=1 // pred_region
      _
    $region49: #{model_forward.3} parent=1 // pred_fallthru
      _
    // Predicated region
    $region50: #{model_forward.3} parent=1 // pred_check
      _
    $region51: #{model_forward.3} parent=1 // pred_check_branch
      %50 = sbr.rel (0) target = $region53
    $region52: #{model_forward.3} parent=1 // pred_region
      _
    $region53: #{model_forward.3} parent=1 // pred_fallthru
      _
    // Predicated region
    $region54: #{model_forward.3} parent=1 // pred_check
      _
    $region55: #{model_forward.3} parent=1 // pred_check_branch
      %52 = sbr.rel (0) target = $region57
    $region56: #{model_forward.3} parent=1 // pred_region
      _
    $region57: #{model_forward.3} parent=1 // pred_fallthru
      _
    // Predicated region
    $region58: #{model_forward.3} parent=1 // pred_check
      _
    $region59: #{model_forward.3} parent=1 // pred_check_branch
      %54 = sbr.rel (0) target = $region61
    $region60: #{model_forward.3} parent=1 // pred_region
      _
    $region61: #{model_forward.3} parent=1 // pred_fallthru
      _
    // Predicated region
    $region62: #{model_forward.3} parent=1 // pred_check
      _
    $region63: #{model_forward.3} parent=1 // pred_check_branch
      %56 = sbr.rel (0) target = $region65
    $region64: #{model_forward.3} parent=1 // pred_region
      _
    $region65: #{model_forward.3} parent=1 // pred_fallthru
      _
    // Predicated region
    $region66: #{model_forward.3} parent=1 // pred_check
      _
    $region67: #{model_forward.3} parent=1 // pred_check_branch
      %58 = sbr.rel (0) target = $region69
    $region68: #{model_forward.3} parent=1 // pred_region
      _
    $region69: #{model_forward.3} parent=1 // pred_fallthru
      _
    // Predicated region
    $region70: #{model_forward.3} parent=1 // pred_check
      _
    $region71: #{model_forward.3} parent=1 // pred_check_branch
      %60 = sbr.rel (0) target = $region73
    $region72: #{model_forward.3} parent=1 // pred_region
      _
    $region73: #{model_forward.3} parent=1 // pred_fallthru
      _
    // Predicated region
    $region74: #{model_forward.3} parent=1 // pred_check
      _
    $region75: #{model_forward.3} parent=1 // pred_check_branch
      %62 = sbr.rel (0) target = $region77
    $region76: #{model_forward.3} parent=1 // pred_region
      _
    $region77: #{model_forward.3} parent=1 // pred_fallthru
      _
    %v63 = vld [vmem:[%s0] sm:$0x1f]
    %v64 = vld [vmem:[%s0 + $0x8] sm:$0x1f]
    %v65 = vld [vmem:[%s1] sm:$0xff]
    %v66 = vld [vmem:[%s1 + $0x8] sm:$0xff]
    %v67 = vld [vmem:[%s1 + $0x10] sm:$0xff]
    %v68 = vld [vmem:[%s1 + $0x18] sm:$0xff]
    %v69 = vld [vmem:[%s1 + $0x20] sm:$0xff]
    %v70 = vld [vmem:[%s1 + $0x28] sm:$0xff]
    %v71 = vld [vmem:[%s1 + $0x30] sm:$0xff]
    %v72 = vld [vmem:[%s1 + $0x38] sm:$0xff]
    %v73 = vld [vmem:[%s1 + $0x40] sm:$0xff]
    %v74 = vld [vmem:[%s1 + $0x48] sm:$0xff]
    %v75 = vld [vmem:[%s1 + $0x50] sm:$0xff]
    %v76 = vld [vmem:[%s1 + $0x58] sm:$0xff]
    %v77 = vld [vmem:[%s1 + $0x60] sm:$0xff]
    %v78 = vld [vmem:[%s1 + $0x68] sm:$0xff]
    %v79 = vld [vmem:[%s1 + $0x70] sm:$0xff]
    %v80 = vld [vmem:[%s1 + $0x78] sm:$0xff]
    %v81 = vld [vmem:[%s1 + $0x80] sm:$0xff]
    %v82 = vld [vmem:[%s1 + $0x88] sm:$0xff]
    %v83 = vld [vmem:[%s1 + $0x90] sm:$0xff]
    %v84 = vld [vmem:[%s1 + $0x98] sm:$0xff]
    %v85 = vld [vmem:[%s1 + $0xa0] sm:$0xff]
    %v86 = vld [vmem:[%s1 + $0xa8] sm:$0xff]
    %v87 = vld [vmem:[%s1 + $0xb0] sm:$0xff]
    %v88 = vld [vmem:[%s1 + $0xb8] sm:$0xff]
    %v89 = vld [vmem:[%s2] sm:$0x1f]
    %vm90 = vcmask 523264
    %v92 = vsel %vm90, %v64, 0
    %94 = vmatprep.subr.mxu0 0.0
    %95 = vmatpush1.msra.mxu0 %v65
    %96 = vmatprep.subr.mxu0 0.0
    %97 = vmatpush1.msra.mxu0 %v66
    %98 = vmatprep.subr.mxu0 0.0
    %99 = vmatpush1.msra.mxu0 %v67
    %100 = vmatprep.subr.mxu0 0.0
    %101 = vmatpush1.msra.mxu0 %v68
    %102 = vmatprep.subr.mxu0 0.0
    %103 = vmatpush1.msra.mxu0 %v69
    %104 = vmatprep.subr.mxu0 0.0
    %105 = vmatpush1.msra.mxu0 %v70
    %106 = vmatprep.subr.mxu0 0.0
    %107 = vmatpush1.msra.mxu0 %v71
    %108 = vmatprep.subr.mxu0 0.0
    %109 = vmatpush1.msra.mxu0 %v72
    %110 = vmatprep.subr.mxu0 0.0
    %111 = vmatpush1.msra.mxu0 %v73
    %112 = vmatprep.subr.mxu0 0.0
    %113 = vmatpush1.msra.mxu0 %v74
    %114 = vmatprep.subr.mxu0 0.0
    %115 = vmatpush1.msra.mxu0 %v75
    %116 = vmatprep.subr.mxu0 0.0
    %117 = vmatpush1.msra.mxu0 %v76
    %118 = vmatprep.subr.mxu0 0.0
    %119 = vmatpush1.msra.mxu0 %v77
    %120 = vmatprep.subr.mxu0 0.0
    %121 = vmatpush1.msra.mxu0 %v78
    %122 = vmatprep.subr.mxu0 0.0
    %123 = vmatpush1.msra.mxu0 %v79
    %124 = vmatprep.subr.mxu0 0.0
    %125 = vmatpush1.msra.mxu0 %v80
    %126 = vmatprep.subr.mxu0 0.0
    %127 = vmatpush1.msra.mxu0 %v81
    %128 = vmatprep.subr.mxu0 0.0
    %129 = vmatpush1.msra.mxu0 %v82
    %130 = vmatprep.subr.mxu0 0.0
    %131 = vmatpush1.msra.mxu0 %v83
    %132 = vmatprep.subr.mxu0 0.0
    %133 = vmatpush1.msra.mxu0 %v84
    %134 = vmatprep.subr.mxu0 0.0
    %135 = vmatpush1.msra.mxu0 %v85
    %136 = vmatprep.subr.mxu0 0.0
    %137 = vmatpush1.msra.mxu0 %v86
    %138 = vmatprep.subr.mxu0 0.0
    %139 = vmatpush1.msra.mxu0 %v87
    %140 = vmatprep.subr.mxu0 0.0
    %141 = vmatpush1.msra.mxu0 %v88
    %142 = vmatprep.subr.mxu0 0.0
    %143 = vmatpush1.msra.mxu0 0.0
    %144 = vmatprep.subr.mxu0 0.0
    %145 = vmatpush1.msra.mxu0 0.0
    %146 = vmatprep.subr.mxu0 0.0
    %147 = vmatpush1.msra.mxu0 0.0
    %148 = vmatprep.subr.mxu0 0.0
    %149 = vmatpush1.msra.mxu0 0.0
    %150 = vmatprep.subr.mxu0 0.0
    %151 = vmatpush1.msra.mxu0 0.0
    %152 = vmatprep.subr.mxu0 0.0
    %153 = vmatpush1.msra.mxu0 0.0
    %154 = vmatprep.subr.mxu0 0.0
    %155 = vmatpush1.msra.mxu0 0.0
    %156 = vmatprep.subr.mxu0 0.0
    %157 = vmatpush1.msra.mxu0 0.0
    %158 = vmatprep.mubr.f32.mxu0 %v92
    %159 = vmatmul.mubr.f32.gmra.mrb[0].mxu0 %v63
    %v160 = vpop.f32.mrb[0].mxu0
    %v161 = vadd.f32 %v89, %v160
    %v162 = vpop.f32.mrb[0].mxu0
    %163 = vdwg.mxu0
    %v164 = vld [vmem:[%s3] sm:$0x1]
    %v165 = vld [vmem:[%s4] sm:$0x1]
    %vm166 = vcmask 520192
    %v167 = vsel %vm166, %v161, 0.0
    %168 = vadd.xlane.f32.xlu0 %v167
    %v169 = vpop.xlane.xlu0 %168
    %v170 = vrcp.pop 64.0
    %v171 = vmul.f32 %v169, %v170
    %v172 = vsub.f32 %v161, %v171
    %v173 = vmul.f32 %v172, %v172
    %v174 = vsel %vm166, %v173, 0.0
    %175 = vadd.xlane.f32.xlu0 %v174
    %v176 = vpop.xlane.xlu0 %175
    %v177 = vmul.f32 %v176, %v170
    %v178 = vadd.f32 %v177, 1e-06
    %v179 = vrsqrt.pop %v178
    %v180 = vmul.f32 %v172, %v179
    %v182 = vlaneseq
    %v183 = vshrl.u32 %v182, 7
    %v184 = vsub.s32 0, %v183
    %v185 = vrot.slane %v164, %v184
    %v187 = vmul.f32 %v180, %v185
    %v189 = vlaneseq
    %v190 = vshrl.u32 %v189, 7
    %v191 = vsub.s32 0, %v190
    %v192 = vrot.slane %v165, %v191
    %v194 = vadd.f32 %v187, %v192
    %v195 = vld [vmem:[%s5] sm:$0xff]
    %v196 = vld [vmem:[%s5 + $0x8] sm:$0xff]
    %v197 = vld [vmem:[%s5 + $0x10] sm:$0xff]
    %v198 = vld [vmem:[%s5 + $0x18] sm:$0xff]
    %v199 = vld [vmem:[%s5 + $0x20] sm:$0xff]
    %v200 = vld [vmem:[%s5 + $0x28] sm:$0xff]
    %v201 = vld [vmem:[%s5 + $0x30] sm:$0xff]
    %v202 = vld [vmem:[%s5 + $0x38] sm:$0xff]
    %v203 = vld [vmem:[%s5 + $0x40] sm:$0xff]
    %v204 = vld [vmem:[%s5 + $0x48] sm:$0xff]
    %v205 = vld [vmem:[%s5 + $0x50] sm:$0xff]
    %v206 = vld [vmem:[%s5 + $0x58] sm:$0xff]
    %v207 = vld [vmem:[%s5 + $0x60] sm:$0xff]
    %v208 = vld [vmem:[%s5 + $0x68] sm:$0xff]
    %v209 = vld [vmem:[%s5 + $0x70] sm:$0xff]
    %v210 = vld [vmem:[%s5 + $0x78] sm:$0xff]
    %v211 = vld [vmem:[%s6] sm:$0x3]
    %v213 = vlaneseq
    %v214 = vshrl.u32 %v213, 7
    %v215 = vsub.s32 0, %v214
    %v216 = vrot.slane %v211, %v215
    %v217 = vlaneseq
    %v218 = vshrl.u32 %v217, 7
    %v219 = vsub.s32 1, %v218
    %v220 = vrot.slane %v211, %v219
    %v224 = vsel %vm90, %v194, 0
    %226 = vmatprep.subr.mxu0 %v196
    %227 = vmatpush1.msra.mxu0 %v195
    %228 = vmatprep.subr.mxu0 %v198
    %229 = vmatpush1.msra.mxu0 %v197
    %230 = vmatprep.subr.mxu0 %v200
    %231 = vmatpush1.msra.mxu0 %v199
    %232 = vmatprep.subr.mxu0 %v202
    %233 = vmatpush1.msra.mxu0 %v201
    %234 = vmatprep.subr.mxu0 %v204
    %235 = vmatpush1.msra.mxu0 %v203
    %236 = vmatprep.subr.mxu0 %v206
    %237 = vmatpush1.msra.mxu0 %v205
    %238 = vmatprep.subr.mxu0 %v208
    %239 = vmatpush1.msra.mxu0 %v207
    %240 = vmatprep.subr.mxu0 %v210
    %241 = vmatpush1.msra.mxu0 %v209
    %242 = vmatprep.subr.mxu0 0.0
    %243 = vmatpush1.msra.mxu0 0.0
    %244 = vmatprep.subr.mxu0 0.0
    %245 = vmatpush1.msra.mxu0 0.0
    %246 = vmatprep.subr.mxu0 0.0
    %247 = vmatpush1.msra.mxu0 0.0
    %248 = vmatprep.subr.mxu0 0.0
    %249 = vmatpush1.msra.mxu0 0.0
    %250 = vmatprep.subr.mxu0 0.0
    %251 = vmatpush1.msra.mxu0 0.0
    %252 = vmatprep.subr.mxu0 0.0
    %253 = vmatpush1.msra.mxu0 0.0
    %254 = vmatprep.subr.mxu0 0.0
    %255 = vmatpush1.msra.mxu0 0.0
    %256 = vmatprep.subr.mxu0 0.0
    %257 = vmatpush1.msra.mxu0 0.0
    %258 = vmatprep.subr.mxu0 0.0
    %259 = vmatpush1.msra.mxu0 0.0
    %260 = vmatprep.subr.mxu0 0.0
    %261 = vmatpush1.msra.mxu0 0.0
    %262 = vmatprep.subr.mxu0 0.0
    %263 = vmatpush1.msra.mxu0 0.0
    %264 = vmatprep.subr.mxu0 0.0
    %265 = vmatpush1.msra.mxu0 0.0
    %266 = vmatprep.subr.mxu0 0.0
    %267 = vmatpush1.msra.mxu0 0.0
    %268 = vmatprep.subr.mxu0 0.0
    %269 = vmatpush1.msra.mxu0 0.0
    %270 = vmatprep.subr.mxu0 0.0
    %271 = vmatpush1.msra.mxu0 0.0
    %272 = vmatprep.subr.mxu0 0.0
    %273 = vmatpush1.msra.mxu0 0.0
    %274 = vmatprep.subr.mxu0 0.0
    %275 = vmatpush1.msra.mxu0 0.0
    %276 = vmatprep.subr.mxu0 0.0
    %277 = vmatpush1.msra.mxu0 0.0
    %278 = vmatprep.subr.mxu0 0.0
    %279 = vmatpush1.msra.mxu0 0.0
    %280 = vmatprep.subr.mxu0 0.0
    %281 = vmatpush1.msra.mxu0 0.0
    %282 = vmatprep.subr.mxu0 0.0
    %283 = vmatpush1.msra.mxu0 0.0
    %284 = vmatprep.subr.mxu0 0.0
    %285 = vmatpush1.msra.mxu0 0.0
    %286 = vmatprep.subr.mxu0 0.0
    %287 = vmatpush1.msra.mxu0 0.0
    %288 = vmatprep.subr.mxu0 0.0
    %289 = vmatpush1.msra.mxu0 0.0
    %290 = vmatprep.mubr.f32.mxu0 0.0
    %291 = vmatmul.mubr.f32.gmra.mrb[0].mxu0 %v224
    %v292 = vpop.f32.mrb[0].mxu0
    %v293 = vadd.f32 %v216, %v292
    %v294 = vpop.f32.mrb[0].mxu0
    %v295 = vadd.f32 %v220, %v294
    %296 = vdwg.mxu0
    %298 = vrot.lane.b32.xlu0 %v293, 64
    %v299 = vpop.permute.xlu0 %298
    %vm300 = vcmask 130048
    %v301 = vsel %vm300, %v293, 0
    %v303 = vsel %vm300, %v299, 0
    %305 = vmatprep.subr.mxu0 0.0
    %306 = vmatpush1.xpose.msra.mxu0 %v303
    %307 = vmatprep.subr.mxu0 0.0
    %308 = vmatpush1.xpose.msra.mxu0 0.0
    %309 = vmatprep.subr.mxu0 0.0
    %310 = vmatpush1.xpose.msra.mxu0 0.0
    %311 = vmatprep.subr.mxu0 0.0
    %312 = vmatpush1.xpose.msra.mxu0 0.0
    %313 = vmatprep.subr.mxu0 0.0
    %314 = vmatpush1.xpose.msra.mxu0 0.0
    %315 = vmatprep.subr.mxu0 0.0
    %316 = vmatpush1.xpose.msra.mxu0 0.0
    %317 = vmatprep.subr.mxu0 0.0
    %318 = vmatpush1.xpose.msra.mxu0 0.0
    %319 = vmatprep.subr.mxu0 0.0
    %320 = vmatpush1.xpose.msra.mxu0 0.0
    %321 = vmatprep.subr.mxu0 0.0
    %322 = vmatpush1.xpose.msra.mxu0 0.0
    %323 = vmatprep.subr.mxu0 0.0
    %324 = vmatpush1.xpose.msra.mxu0 0.0
    %325 = vmatprep.subr.mxu0 0.0
    %326 = vmatpush1.xpose.msra.mxu0 0.0
    %327 = vmatprep.subr.mxu0 0.0
    %328 = vmatpush1.xpose.msra.mxu0 0.0
    %329 = vmatprep.subr.mxu0 0.0
    %330 = vmatpush1.xpose.msra.mxu0 0.0
    %331 = vmatprep.subr.mxu0 0.0
    %332 = vmatpush1.xpose.msra.mxu0 0.0
    %333 = vmatprep.subr.mxu0 0.0
    %334 = vmatpush1.xpose.msra.mxu0 0.0
    %335 = vmatprep.subr.mxu0 0.0
    %336 = vmatpush1.xpose.msra.mxu0 0.0
    %337 = vmatprep.subr.mxu0 0.0
    %338 = vmatpush1.xpose.msra.mxu0 0.0
    %339 = vmatprep.subr.mxu0 0.0
    %340 = vmatpush1.xpose.msra.mxu0 0.0
    %341 = vmatprep.subr.mxu0 0.0
    %342 = vmatpush1.xpose.msra.mxu0 0.0
    %343 = vmatprep.subr.mxu0 0.0
    %344 = vmatpush1.xpose.msra.mxu0 0.0
    %345 = vmatprep.subr.mxu0 0.0
    %346 = vmatpush1.xpose.msra.mxu0 0.0
    %347 = vmatprep.subr.mxu0 0.0
    %348 = vmatpush1.xpose.msra.mxu0 0.0
    %349 = vmatprep.subr.mxu0 0.0
    %350 = vmatpush1.xpose.msra.mxu0 0.0
    %351 = vmatprep.subr.mxu0 0.0
    %352 = vmatpush1.xpose.msra.mxu0 0.0
    %353 = vmatprep.subr.mxu0 0.0
    %354 = vmatpush1.xpose.msra.mxu0 0.0
    %355 = vmatprep.subr.mxu0 0.0
    %356 = vmatpush1.xpose.msra.mxu0 0.0
    %357 = vmatprep.subr.mxu0 0.0
    %358 = vmatpush1.xpose.msra.mxu0 0.0
    %359 = vmatprep.subr.mxu0 0.0
    %360 = vmatpush1.xpose.msra.mxu0 0.0
    %361 = vmatprep.subr.mxu0 0.0
    %362 = vmatpush1.xpose.msra.mxu0 0.0
    %363 = vmatprep.subr.mxu0 0.0
    %364 = vmatpush1.xpose.msra.mxu0 0.0
    %365 = vmatprep.subr.mxu0 0.0
    %366 = vmatpush1.xpose.msra.mxu0 0.0
    %367 = vmatprep.subr.mxu0 0.0
    %368 = vmatpush1.xpose.msra.mxu0 0.0
    %369 = vmatprep.mubr.f32.mxu0 0.0
    %370 = vmatmul.mubr.f32.gmra.mrb[0].mxu0 %v301
    %v371 = vpop.f32.mrb[0].mxu0
    %v372 = vadd.f32 0.0, %v371
    %v373 = vpop.f32.mrb[0].mxu0
    %374 = vdwg.mxu0
    %v375 = vmul.f32 %v372, 0.25
    %vm376 = vcmask 36864
    %v377 = vsel %vm376, %v375, -inf
    %378 = vmax.xlane.f32.xlu0 %v377
    %v379 = vpop.xlane.xlu0 %378
    %v380 = vsub.f32 %v375, %v379
    %v381 = vmul.f32 %v380, 1.442695
    %v382 = vpow.pop %v381
    %v383 = vsel %vm376, %v382, 0.0
    %384 = vadd.xlane.f32.xlu0 %v383
    %v385 = vpop.xlane.xlu0 %384
    %v386 = vrcp.pop %v385
    %v387 = vmul.f32 %v382, %v386
    %vm388 = vcmask 39936
    %v390 = vsel %vm388, %v387, 0
    %vm392 = vcmask 1044480
    %v394 = vsel %vm392, %v295, 0
    %396 = vmatprep.subr.mxu0 0.0
    %397 = vmatpush1.msra.mxu0 %v394
    %398 = vmatprep.subr.mxu0 0.0
    %399 = vmatpush1.msra.mxu0 0.0
    %400 = vmatprep.subr.mxu0 0.0
    %401 = vmatpush1.msra.mxu0 0.0
    %402 = vmatprep.subr.mxu0 0.0
    %403 = vmatpush1.msra.mxu0 0.0
    %404 = vmatprep.subr.mxu0 0.0
    %405 = vmatpush1.msra.mxu0 0.0
    %406 = vmatprep.subr.mxu0 0.0
    %407 = vmatpush1.msra.mxu0 0.0
    %408 = vmatprep.subr.mxu0 0.0
    %409 = vmatpush1.msra.mxu0 0.0
    %410 = vmatprep.subr.mxu0 0.0
    %411 = vmatpush1.msra.mxu0 0.0
    %412 = vmatprep.subr.mxu0 0.0
    %413 = vmatpush1.msra.mxu0 0.0
    %414 = vmatprep.subr.mxu0 0.0
    %415 = vmatpush1.msra.mxu0 0.0
    %416 = vmatprep.subr.mxu0 0.0
    %417 = vmatpush1.msra.mxu0 0.0
    %418 = vmatprep.subr.mxu0 0.0
    %419 = vmatpush1.msra.mxu0 0.0
    %420 = vmatprep.subr.mxu0 0.0
    %421 = vmatpush1.msra.mxu0 0.0
    %422 = vmatprep.subr.mxu0 0.0
    %423 = vmatpush1.msra.mxu0 0.0
    %424 = vmatprep.subr.mxu0 0.0
    %425 = vmatpush1.msra.mxu0 0.0
    %426 = vmatprep.subr.mxu0 0.0
    %427 = vmatpush1.msra.mxu0 0.0
    %428 = vmatprep.subr.mxu0 0.0
    %429 = vmatpush1.msra.mxu0 0.0
    %430 = vmatprep.subr.mxu0 0.0
    %431 = vmatpush1.msra.mxu0 0.0
    %432 = vmatprep.subr.mxu0 0.0
    %433 = vmatpush1.msra.mxu0 0.0
    %434 = vmatprep.subr.mxu0 0.0
    %435 = vmatpush1.msra.mxu0 0.0
    %436 = vmatprep.subr.mxu0 0.0
    %437 = vmatpush1.msra.mxu0 0.0
    %438 = vmatprep.subr.mxu0 0.0
    %439 = vmatpush1.msra.mxu0 0.0
    %440 = vmatprep.subr.mxu0 0.0
    %441 = vmatpush1.msra.mxu0 0.0
    %442 = vmatprep.subr.mxu0 0.0
    %443 = vmatpush1.msra.mxu0 0.0
    %444 = vmatprep.subr.mxu0 0.0
    %445 = vmatpush1.msra.mxu0 0.0
    %446 = vmatprep.subr.mxu0 0.0
    %447 = vmatpush1.msra.mxu0 0.0
    %448 = vmatprep.subr.mxu0 0.0
    %449 = vmatpush1.msra.mxu0 0.0
    %450 = vmatprep.subr.mxu0 0.0
    %451 = vmatpush1.msra.mxu0 0.0
    %452 = vmatprep.subr.mxu0 0.0
    %453 = vmatpush1.msra.mxu0 0.0
    %454 = vmatprep.subr.mxu0 0.0
    %455 = vmatpush1.msra.mxu0 0.0
    %456 = vmatprep.subr.mxu0 0.0
    %457 = vmatpush1.msra.mxu0 0.0
    %458 = vmatprep.subr.mxu0 0.0
    %459 = vmatpush1.msra.mxu0 0.0
    %460 = vmatprep.mubr.f32.mxu0 0.0
    %461 = vmatmul.mubr.f32.gmra.mrb[0].mxu0 %v390
    %v462 = vpop.f32.mrb[0].mxu0
    %v463 = vadd.f32 0.0, %v462
    %v464 = vpop.f32.mrb[0].mxu0
    %465 = vdwg.mxu0
    %466 = vrot.lane.b32.xlu0 %v293, 112
    %v467 = vpop.permute.xlu0 %466
    %468 = vrot.lane.b32.xlu0 %v293, 48
    %v469 = vpop.permute.xlu0 %468
    %v470 = vsel %vm300, %v467, 0
    %v472 = vsel %vm300, %v469, 0
    %474 = vmatprep.subr.mxu0 0.0
    %475 = vmatpush1.xpose.msra.mxu0 %v472
    %476 = vmatprep.subr.mxu0 0.0
    %477 = vmatpush1.xpose.msra.mxu0 0.0
    %478 = vmatprep.subr.mxu0 0.0
    %479 = vmatpush1.xpose.msra.mxu0 0.0
    %480 = vmatprep.subr.mxu0 0.0
    %481 = vmatpush1.xpose.msra.mxu0 0.0
    %482 = vmatprep.subr.mxu0 0.0
    %483 = vmatpush1.xpose.msra.mxu0 0.0
    %484 = vmatprep.subr.mxu0 0.0
    %485 = vmatpush1.xpose.msra.mxu0 0.0
    %486 = vmatprep.subr.mxu0 0.0
    %487 = vmatpush1.xpose.msra.mxu0 0.0
    %488 = vmatprep.subr.mxu0 0.0
    %489 = vmatpush1.xpose.msra.mxu0 0.0
    %490 = vmatprep.subr.mxu0 0.0
    %491 = vmatpush1.xpose.msra.mxu0 0.0
    %492 = vmatprep.subr.mxu0 0.0
    %493 = vmatpush1.xpose.msra.mxu0 0.0
    %494 = vmatprep.subr.mxu0 0.0
    %495 = vmatpush1.xpose.msra.mxu0 0.0
    %496 = vmatprep.subr.mxu0 0.0
    %497 = vmatpush1.xpose.msra.mxu0 0.0
    %498 = vmatprep.subr.mxu0 0.0
    %499 = vmatpush1.xpose.msra.mxu0 0.0
    %500 = vmatprep.subr.mxu0 0.0
    %501 = vmatpush1.xpose.msra.mxu0 0.0
    %502 = vmatprep.subr.mxu0 0.0
    %503 = vmatpush1.xpose.msra.mxu0 0.0
    %504 = vmatprep.subr.mxu0 0.0
    %505 = vmatpush1.xpose.msra.mxu0 0.0
    %506 = vmatprep.subr.mxu0 0.0
    %507 = vmatpush1.xpose.msra.mxu0 0.0
    %508 = vmatprep.subr.mxu0 0.0
    %509 = vmatpush1.xpose.msra.mxu0 0.0
    %510 = vmatprep.subr.mxu0 0.0
    %511 = vmatpush1.xpose.msra.mxu0 0.0
    %512 = vmatprep.subr.mxu0 0.0
    %513 = vmatpush1.xpose.msra.mxu0 0.0
    %514 = vmatprep.subr.mxu0 0.0
    %515 = vmatpush1.xpose.msra.mxu0 0.0
    %516 = vmatprep.subr.mxu0 0.0
    %517 = vmatpush1.xpose.msra.mxu0 0.0
    %518 = vmatprep.subr.mxu0 0.0
    %519 = vmatpush1.xpose.msra.mxu0 0.0
    %520 = vmatprep.subr.mxu0 0.0
    %521 = vmatpush1.xpose.msra.mxu0 0.0
    %522 = vmatprep.subr.mxu0 0.0
    %523 = vmatpush1.xpose.msra.mxu0 0.0
    %524 = vmatprep.subr.mxu0 0.0
    %525 = vmatpush1.xpose.msra.mxu0 0.0
    %526 = vmatprep.subr.mxu0 0.0
    %527 = vmatpush1.xpose.msra.mxu0 0.0
    %528 = vmatprep.subr.mxu0 0.0
    %529 = vmatpush1.xpose.msra.mxu0 0.0
    %530 = vmatprep.subr.mxu0 0.0
    %531 = vmatpush1.xpose.msra.mxu0 0.0
    %532 = vmatprep.subr.mxu0 0.0
    %533 = vmatpush1.xpose.msra.mxu0 0.0
    %534 = vmatprep.subr.mxu0 0.0
    %535 = vmatpush1.xpose.msra.mxu0 0.0
    %536 = vmatprep.subr.mxu0 0.0
    %537 = vmatpush1.xpose.msra.mxu0 0.0
    %538 = vmatprep.mubr.f32.mxu0 0.0
    %539 = vmatmul.mubr.f32.gmra.mrb[0].mxu0 %v470
    %v540 = vpop.f32.mrb[0].mxu0
    %v541 = vadd.f32 0.0, %v540
    %v542 = vpop.f32.mrb[0].mxu0
    %543 = vdwg.mxu0
    %v544 = vmul.f32 %v541, 0.25
    %v545 = vsel %vm376, %v544, -inf
    %546 = vmax.xlane.f32.xlu0 %v545
    %v547 = vpop.xlane.xlu0 %546
    %v548 = vsub.f32 %v544, %v547
    %v549 = vmul.f32 %v548, 1.442695
    %v550 = vpow.pop %v549
    %v551 = vsel %vm376, %v550, 0.0
    %552 = vadd.xlane.f32.xlu0 %v551
    %v553 = vpop.xlane.xlu0 %552
    %v554 = vrcp.pop %v553
    %v555 = vmul.f32 %v550, %v554
    %556 = vrot.lane.b32.xlu0 %v295, 112
    %v557 = vpop.permute.xlu0 %556
    %v559 = vsel %vm388, %v555, 0
    %v561 = vsel %vm392, %v557, 0
    %563 = vmatprep.subr.mxu0 0.0
    %564 = vmatpush1.msra.mxu0 %v561
    %565 = vmatprep.subr.mxu0 0.0
    %566 = vmatpush1.msra.mxu0 0.0
    %567 = vmatprep.subr.mxu0 0.0
    %568 = vmatpush1.msra.mxu0 0.0
    %569 = vmatprep.subr.mxu0 0.0
    %570 = vmatpush1.msra.mxu0 0.0
    %571 = vmatprep.subr.mxu0 0.0
    %572 = vmatpush1.msra.mxu0 0.0
    %573 = vmatprep.subr.mxu0 0.0
    %574 = vmatpush1.msra.mxu0 0.0
    %575 = vmatprep.subr.mxu0 0.0
    %576 = vmatpush1.msra.mxu0 0.0
    %577 = vmatprep.subr.mxu0 0.0
    %578 = vmatpush1.msra.mxu0 0.0
    %579 = vmatprep.subr.mxu0 0.0
    %580 = vmatpush1.msra.mxu0 0.0
    %581 = vmatprep.subr.mxu0 0.0
    %582 = vmatpush1.msra.mxu0 0.0
    %583 = vmatprep.subr.mxu0 0.0
    %584 = vmatpush1.msra.mxu0 0.0
    %585 = vmatprep.subr.mxu0 0.0
    %586 = vmatpush1.msra.mxu0 0.0
    %587 = vmatprep.subr.mxu0 0.0
    %588 = vmatpush1.msra.mxu0 0.0
    %589 = vmatprep.subr.mxu0 0.0
    %590 = vmatpush1.msra.mxu0 0.0
    %591 = vmatprep.subr.mxu0 0.0
    %592 = vmatpush1.msra.mxu0 0.0
    %593 = vmatprep.subr.mxu0 0.0
    %594 = vmatpush1.msra.mxu0 0.0
    %595 = vmatprep.subr.mxu0 0.0
    %596 = vmatpush1.msra.mxu0 0.0
    %597 = vmatprep.subr.mxu0 0.0
    %598 = vmatpush1.msra.mxu0 0.0
    %599 = vmatprep.subr.mxu0 0.0
    %600 = vmatpush1.msra.mxu0 0.0
    %601 = vmatprep.subr.mxu0 0.0
    %602 = vmatpush1.msra.mxu0 0.0
    %603 = vmatprep.subr.mxu0 0.0
    %604 = vmatpush1.msra.mxu0 0.0
    %605 = vmatprep.subr.mxu0 0.0
    %606 = vmatpush1.msra.mxu0 0.0
    %607 = vmatprep.subr.mxu0 0.0
    %608 = vmatpush1.msra.mxu0 0.0
    %609 = vmatprep.subr.mxu0 0.0
    %610 = vmatpush1.msra.mxu0 0.0
    %611 = vmatprep.subr.mxu0 0.0
    %612 = vmatpush1.msra.mxu0 0.0
    %613 = vmatprep.subr.mxu0 0.0
    %614 = vmatpush1.msra.mxu0 0.0
    %615 = vmatprep.subr.mxu0 0.0
    %616 = vmatpush1.msra.mxu0 0.0
    %617 = vmatprep.subr.mxu0 0.0
    %618 = vmatpush1.msra.mxu0 0.0
    %619 = vmatprep.subr.mxu0 0.0
    %620 = vmatpush1.msra.mxu0 0.0
    %621 = vmatprep.subr.mxu0 0.0
    %622 = vmatpush1.msra.mxu0 0.0
    %623 = vmatprep.subr.mxu0 0.0
    %624 = vmatpush1.msra.mxu0 0.0
    %625 = vmatprep.subr.mxu0 0.0
    %626 = vmatpush1.msra.mxu0 0.0
    %627 = vmatprep.mubr.f32.mxu0 0.0
    %628 = vmatmul.mubr.f32.gmra.mrb[0].mxu0 %v559
    %v629 = vpop.f32.mrb[0].mxu0
    %v630 = vadd.f32 0.0, %v629
    %v631 = vpop.f32.mrb[0].mxu0
    %632 = vdwg.mxu0
    %633 = vrot.lane.b32.xlu0 %v293, 96
    %v634 = vpop.permute.xlu0 %633
    %635 = vrot.lane.b32.xlu0 %v293, 32
    %v636 = vpop.permute.xlu0 %635
    %v637 = vsel %vm300, %v634, 0
    %v639 = vsel %vm300, %v636, 0
    %641 = vmatprep.subr.mxu0 0.0
    %642 = vmatpush1.xpose.msra.mxu0 %v639
    %643 = vmatprep.subr.mxu0 0.0
    %644 = vmatpush1.xpose.msra.mxu0 0.0
    %645 = vmatprep.subr.mxu0 0.0
    %646 = vmatpush1.xpose.msra.mxu0 0.0
    %647 = vmatprep.subr.mxu0 0.0
    %648 = vmatpush1.xpose.msra.mxu0 0.0
    %649 = vmatprep.subr.mxu0 0.0
    %650 = vmatpush1.xpose.msra.mxu0 0.0
    %651 = vmatprep.subr.mxu0 0.0
    %652 = vmatpush1.xpose.msra.mxu0 0.0
    %653 = vmatprep.subr.mxu0 0.0
    %654 = vmatpush1.xpose.msra.mxu0 0.0
    %655 = vmatprep.subr.mxu0 0.0
    %656 = vmatpush1.xpose.msra.mxu0 0.0
    %657 = vmatprep.subr.mxu0 0.0
    %658 = vmatpush1.xpose.msra.mxu0 0.0
    %659 = vmatprep.subr.mxu0 0.0
    %660 = vmatpush1.xpose.msra.mxu0 0.0
    %661 = vmatprep.subr.mxu0 0.0
    %662 = vmatpush1.xpose.msra.mxu0 0.0
    %663 = vmatprep.subr.mxu0 0.0
    %664 = vmatpush1.xpose.msra.mxu0 0.0
    %665 = vmatprep.subr.mxu0 0.0
    %666 = vmatpush1.xpose.msra.mxu0 0.0
    %667 = vmatprep.subr.mxu0 0.0
    %668 = vmatpush1.xpose.msra.mxu0 0.0
    %669 = vmatprep.subr.mxu0 0.0
    %670 = vmatpush1.xpose.msra.mxu0 0.0
    %671 = vmatprep.subr.mxu0 0.0
    %672 = vmatpush1.xpose.msra.mxu0 0.0
    %673 = vmatprep.subr.mxu0 0.0
    %674 = vmatpush1.xpose.msra.mxu0 0.0
    %675 = vmatprep.subr.mxu0 0.0
    %676 = vmatpush1.xpose.msra.mxu0 0.0
    %677 = vmatprep.subr.mxu0 0.0
    %678 = vmatpush1.xpose.msra.mxu0 0.0
    %679 = vmatprep.subr.mxu0 0.0
    %680 = vmatpush1.xpose.msra.mxu0 0.0
    %681 = vmatprep.subr.mxu0 0.0
    %682 = vmatpush1.xpose.msra.mxu0 0.0
    %683 = vmatprep.subr.mxu0 0.0
    %684 = vmatpush1.xpose.msra.mxu0 0.0
    %685 = vmatprep.subr.mxu0 0.0
    %686 = vmatpush1.xpose.msra.mxu0 0.0
    %687 = vmatprep.subr.mxu0 0.0
    %688 = vmatpush1.xpose.msra.mxu0 0.0
    %689 = vmatprep.subr.mxu0 0.0
    %690 = vmatpush1.xpose.msra.mxu0 0.0
    %691 = vmatprep.subr.mxu0 0.0
    %692 = vmatpush1.xpose.msra.mxu0 0.0
    %693 = vmatprep.subr.mxu0 0.0
    %694 = vmatpush1.xpose.msra.mxu0 0.0
    %695 = vmatprep.subr.mxu0 0.0
    %696 = vmatpush1.xpose.msra.mxu0 0.0
    %697 = vmatprep.subr.mxu0 0.0
    %698 = vmatpush1.xpose.msra.mxu0 0.0
    %699 = vmatprep.subr.mxu0 0.0
    %700 = vmatpush1.xpose.msra.mxu0 0.0
    %701 = vmatprep.subr.mxu0 0.0
    %702 = vmatpush1.xpose.msra.mxu0 0.0
    %703 = vmatprep.subr.mxu0 0.0
    %704 = vmatpush1.xpose.msra.mxu0 0.0
    %705 = vmatprep.mubr.f32.mxu0 0.0
    %706 = vmatmul.mubr.f32.gmra.mrb[0].mxu0 %v637
    %v707 = vpop.f32.mrb[0].mxu0
    %v708 = vadd.f32 0.0, %v707
    %v709 = vpop.f32.mrb[0].mxu0
    %710 = vdwg.mxu0
    %v711 = vmul.f32 %v708, 0.25
    %v712 = vsel %vm376, %v711, -inf
    %713 = vmax.xlane.f32.xlu0 %v712
    %v714 = vpop.xlane.xlu0 %713
    %v715 = vsub.f32 %v711, %v714
    %v716 = vmul.f32 %v715, 1.442695
    %v717 = vpow.pop %v716
    %v718 = vsel %vm376, %v717, 0.0
    %719 = vadd.xlane.f32.xlu0 %v718
    %v720 = vpop.xlane.xlu0 %719
    %v721 = vrcp.pop %v720
    %v722 = vmul.f32 %v717, %v721
    %723 = vrot.lane.b32.xlu0 %v295, 96
    %v724 = vpop.permute.xlu0 %723
    %v726 = vsel %vm388, %v722, 0
    %v728 = vsel %vm392, %v724, 0
    %730 = vmatprep.subr.mxu0 0.0
    %731 = vmatpush1.msra.mxu0 %v728
    %732 = vmatprep.subr.mxu0 0.0
    %733 = vmatpush1.msra.mxu0 0.0
    %734 = vmatprep.subr.mxu0 0.0
    %735 = vmatpush1.msra.mxu0 0.0
    %736 = vmatprep.subr.mxu0 0.0
    %737 = vmatpush1.msra.mxu0 0.0
    %738 = vmatprep.subr.mxu0 0.0
    %739 = vmatpush1.msra.mxu0 0.0
    %740 = vmatprep.subr.mxu0 0.0
    %741 = vmatpush1.msra.mxu0 0.0
    %742 = vmatprep.subr.mxu0 0.0
    %743 = vmatpush1.msra.mxu0 0.0
    %744 = vmatprep.subr.mxu0 0.0
    %745 = vmatpush1.msra.mxu0 0.0
    %746 = vmatprep.subr.mxu0 0.0
    %747 = vmatpush1.msra.mxu0 0.0
    %748 = vmatprep.subr.mxu0 0.0
    %749 = vmatpush1.msra.mxu0 0.0
    %750 = vmatprep.subr.mxu0 0.0
    %751 = vmatpush1.msra.mxu0 0.0
    %752 = vmatprep.subr.mxu0 0.0
    %753 = vmatpush1.msra.mxu0 0.0
    %754 = vmatprep.subr.mxu0 0.0
    %755 = vmatpush1.msra.mxu0 0.0
    %756 = vmatprep.subr.mxu0 0.0
    %757 = vmatpush1.msra.mxu0 0.0
    %758 = vmatprep.subr.mxu0 0.0
    %759 = vmatpush1.msra.mxu0 0.0
    %760 = vmatprep.subr.mxu0 0.0
    %761 = vmatpush1.msra.mxu0 0.0
    %762 = vmatprep.subr.mxu0 0.0
    %763 = vmatpush1.msra.mxu0 0.0
    %764 = vmatprep.subr.mxu0 0.0
    %765 = vmatpush1.msra.mxu0 0.0
    %766 = vmatprep.subr.mxu0 0.0
    %767 = vmatpush1.msra.mxu0 0.0
    %768 = vmatprep.subr.mxu0 0.0
    %769 = vmatpush1.msra.mxu0 0.0
    %770 = vmatprep.subr.mxu0 0.0
    %771 = vmatpush1.msra.mxu0 0.0
    %772 = vmatprep.subr.mxu0 0.0
    %773 = vmatpush1.msra.mxu0 0.0
    %774 = vmatprep.subr.mxu0 0.0
    %775 = vmatpush1.msra.mxu0 0.0
    %776 = vmatprep.subr.mxu0 0.0
    %777 = vmatpush1.msra.mxu0 0.0
    %778 = vmatprep.subr.mxu0 0.0
    %779 = vmatpush1.msra.mxu0 0.0
    %780 = vmatprep.subr.mxu0 0.0
    %781 = vmatpush1.msra.mxu0 0.0
    %782 = vmatprep.subr.mxu0 0.0
    %783 = vmatpush1.msra.mxu0 0.0
    %784 = vmatprep.subr.mxu0 0.0
    %785 = vmatpush1.msra.mxu0 0.0
    %786 = vmatprep.subr.mxu0 0.0
    %787 = vmatpush1.msra.mxu0 0.0
    %788 = vmatprep.subr.mxu0 0.0
    %789 = vmatpush1.msra.mxu0 0.0
    %790 = vmatprep.subr.mxu0 0.0
    %791 = vmatpush1.msra.mxu0 0.0
    %792 = vmatprep.subr.mxu0 0.0
    %793 = vmatpush1.msra.mxu0 0.0
    %794 = vmatprep.mubr.f32.mxu0 0.0
    %795 = vmatmul.mubr.f32.gmra.mrb[0].mxu0 %v726
    %v796 = vpop.f32.mrb[0].mxu0
    %v797 = vadd.f32 0.0, %v796
    %v798 = vpop.f32.mrb[0].mxu0
    %799 = vdwg.mxu0
    %800 = vrot.lane.b32.xlu0 %v293, 80
    %v801 = vpop.permute.xlu0 %800
    %802 = vrot.lane.b32.xlu0 %v293, 16
    %v803 = vpop.permute.xlu0 %802
    %v804 = vsel %vm300, %v801, 0
    %v806 = vsel %vm300, %v803, 0
    %808 = vmatprep.subr.mxu0 0.0
    %809 = vmatpush1.xpose.msra.mxu0 %v806
    %810 = vmatprep.subr.mxu0 0.0
    %811 = vmatpush1.xpose.msra.mxu0 0.0
    %812 = vmatprep.subr.mxu0 0.0
    %813 = vmatpush1.xpose.msra.mxu0 0.0
    %814 = vmatprep.subr.mxu0 0.0
    %815 = vmatpush1.xpose.msra.mxu0 0.0
    %816 = vmatprep.subr.mxu0 0.0
    %817 = vmatpush1.xpose.msra.mxu0 0.0
    %818 = vmatprep.subr.mxu0 0.0
    %819 = vmatpush1.xpose.msra.mxu0 0.0
    %820 = vmatprep.subr.mxu0 0.0
    %821 = vmatpush1.xpose.msra.mxu0 0.0
    %822 = vmatprep.subr.mxu0 0.0
    %823 = vmatpush1.xpose.msra.mxu0 0.0
    %824 = vmatprep.subr.mxu0 0.0
    %825 = vmatpush1.xpose.msra.mxu0 0.0
    %826 = vmatprep.subr.mxu0 0.0
    %827 = vmatpush1.xpose.msra.mxu0 0.0
    %828 = vmatprep.subr.mxu0 0.0
    %829 = vmatpush1.xpose.msra.mxu0 0.0
    %830 = vmatprep.subr.mxu0 0.0
    %831 = vmatpush1.xpose.msra.mxu0 0.0
    %832 = vmatprep.subr.mxu0 0.0
    %833 = vmatpush1.xpose.msra.mxu0 0.0
    %834 = vmatprep.subr.mxu0 0.0
    %835 = vmatpush1.xpose.msra.mxu0 0.0
    %836 = vmatprep.subr.mxu0 0.0
    %837 = vmatpush1.xpose.msra.mxu0 0.0
    %838 = vmatprep.subr.mxu0 0.0
    %839 = vmatpush1.xpose.msra.mxu0 0.0
    %840 = vmatprep.subr.mxu0 0.0
    %841 = vmatpush1.xpose.msra.mxu0 0.0
    %842 = vmatprep.subr.mxu0 0.0
    %843 = vmatpush1.xpose.msra.mxu0 0.0
    %844 = vmatprep.subr.mxu0 0.0
    %845 = vmatpush1.xpose.msra.mxu0 0.0
    %846 = vmatprep.subr.mxu0 0.0
    %847 = vmatpush1.xpose.msra.mxu0 0.0
    %848 = vmatprep.subr.mxu0 0.0
    %849 = vmatpush1.xpose.msra.mxu0 0.0
    %850 = vmatprep.subr.mxu0 0.0
    %851 = vmatpush1.xpose.msra.mxu0 0.0
    %852 = vmatprep.subr.mxu0 0.0
    %853 = vmatpush1.xpose.msra.mxu0 0.0
    %854 = vmatprep.subr.mxu0 0.0
    %855 = vmatpush1.xpose.msra.mxu0 0.0
    %856 = vmatprep.subr.mxu0 0.0
    %857 = vmatpush1.xpose.msra.mxu0 0.0
    %858 = vmatprep.subr.mxu0 0.0
    %859 = vmatpush1.xpose.msra.mxu0 0.0
    %860 = vmatprep.subr.mxu0 0.0
    %861 = vmatpush1.xpose.msra.mxu0 0.0
    %862 = vmatprep.subr.mxu0 0.0
    %863 = vmatpush1.xpose.msra.mxu0 0.0
    %864 = vmatprep.subr.mxu0 0.0
    %865 = vmatpush1.xpose.msra.mxu0 0.0
    %866 = vmatprep.subr.mxu0 0.0
    %867 = vmatpush1.xpose.msra.mxu0 0.0
    %868 = vmatprep.subr.mxu0 0.0
    %869 = vmatpush1.xpose.msra.mxu0 0.0
    %870 = vmatprep.subr.mxu0 0.0
    %871 = vmatpush1.xpose.msra.mxu0 0.0
    %872 = vmatprep.mubr.f32.mxu0 0.0
    %873 = vmatmul.mubr.f32.gmra.mrb[0].mxu0 %v804
    %v874 = vpop.f32.mrb[0].mxu0
    %v875 = vadd.f32 0.0, %v874
    %v876 = vpop.f32.mrb[0].mxu0
    %877 = vdwg.mxu0
    %v878 = vmul.f32 %v875, 0.25
    %v879 = vsel %vm376, %v878, -inf
    %880 = vmax.xlane.f32.xlu0 %v879
    %v881 = vpop.xlane.xlu0 %880
    %v882 = vsub.f32 %v878, %v881
    %v883 = vmul.f32 %v882, 1.442695
    %v884 = vpow.pop %v883
    %v885 = vsel %vm376, %v884, 0.0
    %886 = vadd.xlane.f32.xlu0 %v885
    %v887 = vpop.xlane.xlu0 %886
    %v888 = vrcp.pop %v887
    %v889 = vmul.f32 %v884, %v888
    %890 = vrot.lane.b32.xlu0 %v295, 80
    %v891 = vpop.permute.xlu0 %890
    %v893 = vsel %vm388, %v889, 0
    %v895 = vsel %vm392, %v891, 0
    %897 = vmatprep.subr.mxu0 0.0
    %898 = vmatpush1.msra.mxu0 %v895
    %899 = vmatprep.subr.mxu0 0.0
    %900 = vmatpush1.msra.mxu0 0.0
    %901 = vmatprep.subr.mxu0 0.0
    %902 = vmatpush1.msra.mxu0 0.0
    %903 = vmatprep.subr.mxu0 0.0
    %904 = vmatpush1.msra.mxu0 0.0
    %905 = vmatprep.subr.mxu0 0.0
    %906 = vmatpush1.msra.mxu0 0.0
    %907 = vmatprep.subr.mxu0 0.0
    %908 = vmatpush1.msra.mxu0 0.0
    %909 = vmatprep.subr.mxu0 0.0
    %910 = vmatpush1.msra.mxu0 0.0
    %911 = vmatprep.subr.mxu0 0.0
    %912 = vmatpush1.msra.mxu0 0.0
    %913 = vmatprep.subr.mxu0 0.0
    %914 = vmatpush1.msra.mxu0 0.0
    %915 = vmatprep.subr.mxu0 0.0
    %916 = vmatpush1.msra.mxu0 0.0
    %917 = vmatprep.subr.mxu0 0.0
    %918 = vmatpush1.msra.mxu0 0.0
    %919 = vmatprep.subr.mxu0 0.0
    %920 = vmatpush1.msra.mxu0 0.0
    %921 = vmatprep.subr.mxu0 0.0
    %922 = vmatpush1.msra.mxu0 0.0
    %923 = vmatprep.subr.mxu0 0.0
    %924 = vmatpush1.msra.mxu0 0.0
    %925 = vmatprep.subr.mxu0 0.0
    %926 = vmatpush1.msra.mxu0 0.0
    %927 = vmatprep.subr.mxu0 0.0
    %928 = vmatpush1.msra.mxu0 0.0
    %929 = vmatprep.subr.mxu0 0.0
    %930 = vmatpush1.msra.mxu0 0.0
    %931 = vmatprep.subr.mxu0 0.0
    %932 = vmatpush1.msra.mxu0 0.0
    %933 = vmatprep.subr.mxu0 0.0
    %934 = vmatpush1.msra.mxu0 0.0
    %935 = vmatprep.subr.mxu0 0.0
    %936 = vmatpush1.msra.mxu0 0.0
    %937 = vmatprep.subr.mxu0 0.0
    %938 = vmatpush1.msra.mxu0 0.0
    %939 = vmatprep.subr.mxu0 0.0
    %940 = vmatpush1.msra.mxu0 0.0
    %941 = vmatprep.subr.mxu0 0.0
    %942 = vmatpush1.msra.mxu0 0.0
    %943 = vmatprep.subr.mxu0 0.0
    %944 = vmatpush1.msra.mxu0 0.0
    %945 = vmatprep.subr.mxu0 0.0
    %946 = vmatpush1.msra.mxu0 0.0
    %947 = vmatprep.subr.mxu0 0.0
    %948 = vmatpush1.msra.mxu0 0.0
    %949 = vmatprep.subr.mxu0 0.0
    %950 = vmatpush1.msra.mxu0 0.0
    %951 = vmatprep.subr.mxu0 0.0
    %952 = vmatpush1.msra.mxu0 0.0
    %953 = vmatprep.subr.mxu0 0.0
    %954 = vmatpush1.msra.mxu0 0.0
    %955 = vmatprep.subr.mxu0 0.0
    %956 = vmatpush1.msra.mxu0 0.0
    %957 = vmatprep.subr.mxu0 0.0
    %958 = vmatpush1.msra.mxu0 0.0
    %959 = vmatprep.subr.mxu0 0.0
    %960 = vmatpush1.msra.mxu0 0.0
    %961 = vmatprep.mubr.f32.mxu0 0.0
    %962 = vmatmul.mubr.f32.gmra.mrb[0].mxu0 %v893
    %v963 = vpop.f32.mrb[0].mxu0
    %v964 = vadd.f32 0.0, %v963
    %v965 = vpop.f32.mrb[0].mxu0
    %966 = vdwg.mxu0
    %968 = vrot.lane.b32.xlu0 %v630, 16
    %v969 = vpop.permute.xlu0 %968
    %972 = vrot.lane.b32.xlu0 %v797, 32
    %v973 = vpop.permute.xlu0 %972
    %976 = vrot.lane.b32.xlu0 %v964, 48
    %v977 = vpop.permute.xlu0 %976
    %v979 = vsel %vm300, %v463, %v969
    %vm980 = vcmask 261120
    %v981 = vsel %vm980, %v979, %v973
    %vm982 = vcmask 392192
    %v983 = vsel %vm982, %v981, %v977
    %v984 = vld [vmem:[%s7] sm:$0xff]
    %v985 = vld [vmem:[%s7 + $0x8] sm:$0xff]
    %v986 = vld [vmem:[%s7 + $0x10] sm:$0xff]
    %v987 = vld [vmem:[%s7 + $0x18] sm:$0xff]
    %v988 = vld [vmem:[%s7 + $0x20] sm:$0xff]
    %v989 = vld [vmem:[%s7 + $0x28] sm:$0xff]
    %v990 = vld [vmem:[%s7 + $0x30] sm:$0xff]
    %v991 = vld [vmem:[%s7 + $0x38] sm:$0xff]
    %v993 = vsel %vm90, %v983, 0
    %995 = vmatprep.subr.mxu0 0.0
    %996 = vmatpush1.msra.mxu0 %v984
    %997 = vmatprep.subr.mxu0 0.0
    %998 = vmatpush1.msra.mxu0 %v985
    %999 = vmatprep.subr.mxu0 0.0
    %1000 = vmatpush1.msra.mxu0 %v986
    %1001 = vmatprep.subr.mxu0 0.0
    %1002 = vmatpush1.msra.mxu0 %v987
    %1003 = vmatprep.subr.mxu0 0.0
    %1004 = vmatpush1.msra.mxu0 %v988
    %1005 = vmatprep.subr.mxu0 0.0
    %1006 = vmatpush1.msra.mxu0 %v989
    %1007 = vmatprep.subr.mxu0 0.0
    %1008 = vmatpush1.msra.mxu0 %v990
    %1009 = vmatprep.subr.mxu0 0.0
    %1010 = vmatpush1.msra.mxu0 %v991
    %1011 = vmatprep.subr.mxu0 0.0
    %1012 = vmatpush1.msra.mxu0 0.0
    %1013 = vmatprep.subr.mxu0 0.0
    %1014 = vmatpush1.msra.mxu0 0.0
    %1015 = vmatprep.subr.mxu0 0.0
    %1016 = vmatpush1.msra.mxu0 0.0
    %1017 = vmatprep.subr.mxu0 0.0
    %1018 = vmatpush1.msra.mxu0 0.0
    %1019 = vmatprep.subr.mxu0 0.0
    %1020 = vmatpush1.msra.mxu0 0.0
    %1021 = vmatprep.subr.mxu0 0.0
    %1022 = vmatpush1.msra.mxu0 0.0
    %1023 = vmatprep.subr.mxu0 0.0
    %1024 = vmatpush1.msra.mxu0 0.0
    %1025 = vmatprep.subr.mxu0 0.0
    %1026 = vmatpush1.msra.mxu0 0.0
    %1027 = vmatprep.subr.mxu0 0.0
    %1028 = vmatpush1.msra.mxu0 0.0
    %1029 = vmatprep.subr.mxu0 0.0
    %1030 = vmatpush1.msra.mxu0 0.0
    %1031 = vmatprep.subr.mxu0 0.0
    %1032 = vmatpush1.msra.mxu0 0.0
    %1033 = vmatprep.subr.mxu0 0.0
    %1034 = vmatpush1.msra.mxu0 0.0
    %1035 = vmatprep.subr.mxu0 0.0
    %1036 = vmatpush1.msra.mxu0 0.0
    %1037 = vmatprep.subr.mxu0 0.0
    %1038 = vmatpush1.msra.mxu0 0.0
    %1039 = vmatprep.subr.mxu0 0.0
    %1040 = vmatpush1.msra.mxu0 0.0
    %1041 = vmatprep.subr.mxu0 0.0
    %1042 = vmatpush1.msra.mxu0 0.0
    %1043 = vmatprep.subr.mxu0 0.0
    %1044 = vmatpush1.msra.mxu0 0.0
    %1045 = vmatprep.subr.mxu0 0.0
    %1046 = vmatpush1.msra.mxu0 0.0
    %1047 = vmatprep.subr.mxu0 0.0
    %1048 = vmatpush1.msra.mxu0 0.0
    %1049 = vmatprep.subr.mxu0 0.0
    %1050 = vmatpush1.msra.mxu0 0.0
    %1051 = vmatprep.subr.mxu0 0.0
    %1052 = vmatpush1.msra.mxu0 0.0
    %1053 = vmatprep.subr.mxu0 0.0
    %1054 = vmatpush1.msra.mxu0 0.0
    %1055 = vmatprep.subr.mxu0 0.0
    %1056 = vmatpush1.msra.mxu0 0.0
    %1057 = vmatprep.subr.mxu0 0.0
    %1058 = vmatpush1.msra.mxu0 0.0
    %1059 = vmatprep.mubr.f32.mxu0 0.0
    %1060 = vmatmul.mubr.f32.gmra.mrb[0].mxu0 %v993
    %v1061 = vpop.f32.mrb[0].mxu0
    %v1062 = vadd.f32 0.0, %v1061
    %v1063 = vpop.f32.mrb[0].mxu0
    %1064 = vdwg.mxu0
    %v1065 = vadd.f32 %v161, %v1062
    %v1066 = vld [vmem:[%s8] sm:$0x1]
    %v1068 = vlaneseq
    %v1069 = vshrl.u32 %v1068, 7
    %v1070 = vsub.s32 0, %v1069
    %v1071 = vrot.slane %v1066, %v1070
    %v1073 = vadd.f32 %v1065, %v1071
    %v1074 = vld [vmem:[%s9] sm:$0x1]
    %v1075 = vld [vmem:[%s10] sm:$0x1]
    %v1076 = vsel %vm166, %v1073, 0.0
    %1077 = vadd.xlane.f32.xlu0 %v1076
    %v1078 = vpop.xlane.xlu0 %1077
    %v1079 = vmul.f32 %v1078, %v170
    %v1080 = vsub.f32 %v1073, %v1079
    %v1081 = vmul.f32 %v1080, %v1080
    %v1082 = vsel %vm166, %v1081, 0.0
    %1083 = vadd.xlane.f32.xlu0 %v1082
    %v1084 = vpop.xlane.xlu0 %1083
    %v1085 = vmul.f32 %v1084, %v170
    %v1086 = vadd.f32 %v1085, 1e-06
    %v1087 = vrsqrt.pop %v1086
    %v1088 = vmul.f32 %v1080, %v1087
    %v1090 = vlaneseq
    %v1091 = vshrl.u32 %v1090, 7
    %v1092 = vsub.s32 0, %v1091
    %v1093 = vrot.slane %v1074, %v1092
    %v1095 = vmul.f32 %v1088, %v1093
    %v1097 = vlaneseq
    %v1098 = vshrl.u32 %v1097, 7
    %v1099 = vsub.s32 0, %v1098
    %v1100 = vrot.slane %v1075, %v1099
    %v1102 = vadd.f32 %v1095, %v1100
    %v1103 = vld [vmem:[%s11] sm:$0xff]
    %v1104 = vld [vmem:[%s11 + $0x8] sm:$0xff]
    %v1105 = vld [vmem:[%s11 + $0x10] sm:$0xff]
    %v1106 = vld [vmem:[%s11 + $0x18] sm:$0xff]
    %v1107 = vld [vmem:[%s11 + $0x20] sm:$0xff]
    %v1108 = vld [vmem:[%s11 + $0x28] sm:$0xff]
    %v1109 = vld [vmem:[%s11 + $0x30] sm:$0xff]
    %v1110 = vld [vmem:[%s11 + $0x38] sm:$0xff]
    %v1111 = vld [vmem:[%s12] sm:$0x1]
    %v1113 = vlaneseq
    %v1114 = vshrl.u32 %v1113, 7
    %v1115 = vsub.s32 0, %v1114
    %v1116 = vrot.slane %v1111, %v1115
    %v1119 = vsel %vm90, %v1102, 0
    %1121 = vmatprep.subr.mxu0 0.0
    %1122 = vmatpush1.msra.mxu0 %v1103
    %1123 = vmatprep.subr.mxu0 0.0
    %1124 = vmatpush1.msra.mxu0 %v1104
    %1125 = vmatprep.subr.mxu0 0.0
    %1126 = vmatpush1.msra.mxu0 %v1105
    %1127 = vmatprep.subr.mxu0 0.0
    %1128 = vmatpush1.msra.mxu0 %v1106
    %1129 = vmatprep.subr.mxu0 0.0
    %1130 = vmatpush1.msra.mxu0 %v1107
    %1131 = vmatprep.subr.mxu0 0.0
    %1132 = vmatpush1.msra.mxu0 %v1108
    %1133 = vmatprep.subr.mxu0 0.0
    %1134 = vmatpush1.msra.mxu0 %v1109
    %1135 = vmatprep.subr.mxu0 0.0
    %1136 = vmatpush1.msra.mxu0 %v1110
    %1137 = vmatprep.subr.mxu0 0.0
    %1138 = vmatpush1.msra.mxu0 0.0
    %1139 = vmatprep.subr.mxu0 0.0
    %1140 = vmatpush1.msra.mxu0 0.0
    %1141 = vmatprep.subr.mxu0 0.0
    %1142 = vmatpush1.msra.mxu0 0.0
    %1143 = vmatprep.subr.mxu0 0.0
    %1144 = vmatpush1.msra.mxu0 0.0
    %1145 = vmatprep.subr.mxu0 0.0
    %1146 = vmatpush1.msra.mxu0 0.0
    %1147 = vmatprep.subr.mxu0 0.0
    %1148 = vmatpush1.msra.mxu0 0.0
    %1149 = vmatprep.subr.mxu0 0.0
    %1150 = vmatpush1.msra.mxu0 0.0
    %1151 = vmatprep.subr.mxu0 0.0
    %1152 = vmatpush1.msra.mxu0 0.0
    %1153 = vmatprep.subr.mxu0 0.0
    %1154 = vmatpush1.msra.mxu0 0.0
    %1155 = vmatprep.subr.mxu0 0.0
    %1156 = vmatpush1.msra.mxu0 0.0
    %1157 = vmatprep.subr.mxu0 0.0
    %1158 = vmatpush1.msra.mxu0 0.0
    %1159 = vmatprep.subr.mxu0 0.0
    %1160 = vmatpush1.msra.mxu0 0.0
    %1161 = vmatprep.subr.mxu0 0.0
    %1162 = vmatpush1.msra.mxu0 0.0
    %1163 = vmatprep.subr.mxu0 0.0
    %1164 = vmatpush1.msra.mxu0 0.0
    %1165 = vmatprep.subr.mxu0 0.0
    %1166 = vmatpush1.msra.mxu0 0.0
    %1167 = vmatprep.subr.mxu0 0.0
    %1168 = vmatpush1.msra.mxu0 0.0
    %1169 = vmatprep.subr.mxu0 0.0
    %1170 = vmatpush1.msra.mxu0 0.0
    %1171 = vmatprep.subr.mxu0 0.0
    %1172 = vmatpush1.msra.mxu0 0.0
    %1173 = vmatprep.subr.mxu0 0.0
    %1174 = vmatpush1.msra.mxu0 0.0
    %1175 = vmatprep.subr.mxu0 0.0
    %1176 = vmatpush1.msra.mxu0 0.0
    %1177 = vmatprep.subr.mxu0 0.0
    %1178 = vmatpush1.msra.mxu0 0.0
    %1179 = vmatprep.subr.mxu0 0.0
    %1180 = vmatpush1.msra.mxu0 0.0
    %1181 = vmatprep.subr.mxu0 0.0
    %1182 = vmatpush1.msra.mxu0 0.0
    %1183 = vmatprep.subr.mxu0 0.0
    %1184 = vmatpush1.msra.mxu0 0.0
    %1185 = vmatprep.mubr.f32.mxu0 0.0
    %1186 = vmatmul.mubr.f32.gmra.mrb[0].mxu0 %v1119
    %v1187 = vpop.f32.mrb[0].mxu0
    %v1188 = vadd.f32 %v1116, %v1187
    %v1189 = vpop.f32.mrb[0].mxu0
    %1190 = vdwg.mxu0
    %v1191 = vmul.f32 %v1188, 0.5
    %v1192 = vmul.f32 %v1188, 0.70710677
    %v1193 = vand.u32 2147483647, %v1192
    %v1194 = vmul.f32 %v1193, 0.3275911
    %v1195 = vadd.f32 %v1194, 1.0
    %v1196 = vrcp.pop %v1195
    %v1197 = vmul.f32 1.0, %v1196
    %v1198 = vmul.f32 %v1197, 1.0614054
    %v1199 = vadd.f32 %v1198, -1.4531521
    %v1200 = vmul.f32 %v1199, %v1197
    %v1201 = vadd.f32 %v1200, 1.4214138
    %v1202 = vmul.f32 %v1201, %v1197
    %v1203 = vadd.f32 %v1202, -0.28449672
    %v1204 = vmul.f32 %v1203, %v1197
    %v1205 = vadd.f32 %v1204, 0.2548296
    %v1206 = vmul.f32 %v1205, %v1197
    %v1207 = vsub.f32 0.0, %v1193
    %v1208 = vmul.f32 %v1207, %v1193
    %v1209 = vmul.f32 %v1208, 1.442695
    %v1210 = vpow.pop %v1209
    %v1211 = vmul.f32 %v1206, %v1210
    %v1212 = vsub.f32 1.0, %v1211
    %vm1213 = vcmp.ge.f32.partialorder %v1192, 0.0
    %v1214 = vsub.f32 0.0, %v1212
    %v1215 = vsel %vm1213, %v1212, %v1214
    %v1216 = vadd.f32 %v1215, 1.0
    %v1217 = vmul.f32 %v1191, %v1216
    %v1218 = vld [vmem:[%s13] sm:$0xff]
    %v1219 = vld [vmem:[%s13 + $0x8] sm:$0xff]
    %v1220 = vld [vmem:[%s13 + $0x10] sm:$0xff]
    %v1221 = vld [vmem:[%s13 + $0x18] sm:$0xff]
    %v1222 = vld [vmem:[%s13 + $0x20] sm:$0xff]
    %v1223 = vld [vmem:[%s13 + $0x28] sm:$0xff]
    %v1224 = vld [vmem:[%s13 + $0x30] sm:$0xff]
    %v1225 = vld [vmem:[%s13 + $0x38] sm:$0xff]
    %v1226 = vld [vmem:[%s13 + $0x40] sm:$0xff]
    %v1227 = vld [vmem:[%s13 + $0x48] sm:$0xff]
    %v1228 = vld [vmem:[%s13 + $0x50] sm:$0xff]
    %v1229 = vld [vmem:[%s13 + $0x58] sm:$0xff]
    %v1230 = vld [vmem:[%s13 + $0x60] sm:$0xff]
    %v1231 = vld [vmem:[%s13 + $0x68] sm:$0xff]
    %v1232 = vld [vmem:[%s13 + $0x70] sm:$0xff]
    %v1233 = vld [vmem:[%s13 + $0x78] sm:$0xff]
    %1234 = vmatprep.subr.mxu0 0.0
    %1235 = vmatpush1.msra.mxu0 %v1218
    %1236 = vmatprep.subr.mxu0 0.0
    %1237 = vmatpush1.msra.mxu0 %v1219
    %1238 = vmatprep.subr.mxu0 0.0
    %1239 = vmatpush1.msra.mxu0 %v1220
    %1240 = vmatprep.subr.mxu0 0.0
    %1241 = vmatpush1.msra.mxu0 %v1221
    %1242 = vmatprep.subr.mxu0 0.0
    %1243 = vmatpush1.msra.mxu0 %v1222
    %1244 = vmatprep.subr.mxu0 0.0
    %1245 = vmatpush1.msra.mxu0 %v1223
    %1246 = vmatprep.subr.mxu0 0.0
    %1247 = vmatpush1.msra.mxu0 %v1224
    %1248 = vmatprep.subr.mxu0 0.0
    %1249 = vmatpush1.msra.mxu0 %v1225
    %1250 = vmatprep.subr.mxu0 0.0
    %1251 = vmatpush1.msra.mxu0 %v1226
    %1252 = vmatprep.subr.mxu0 0.0
    %1253 = vmatpush1.msra.mxu0 %v1227
    %1254 = vmatprep.subr.mxu0 0.0
    %1255 = vmatpush1.msra.mxu0 %v1228
    %1256 = vmatprep.subr.mxu0 0.0
    %1257 = vmatpush1.msra.mxu0 %v1229
    %1258 = vmatprep.subr.mxu0 0.0
    %1259 = vmatpush1.msra.mxu0 %v1230
    %1260 = vmatprep.subr.mxu0 0.0
    %1261 = vmatpush1.msra.mxu0 %v1231
    %1262 = vmatprep.subr.mxu0 0.0
    %1263 = vmatpush1.msra.mxu0 %v1232
    %1264 = vmatprep.subr.mxu0 0.0
    %1265 = vmatpush1.msra.mxu0 %v1233
    %1266 = vmatprep.subr.mxu0 0.0
    %1267 = vmatpush1.msra.mxu0 0.0
    %1268 = vmatprep.subr.mxu0 0.0
    %1269 = vmatpush1.msra.mxu0 0.0
    %1270 = vmatprep.subr.mxu0 0.0
    %1271 = vmatpush1.msra.mxu0 0.0
    %1272 = vmatprep.subr.mxu0 0.0
    %1273 = vmatpush1.msra.mxu0 0.0
    %1274 = vmatprep.subr.mxu0 0.0
    %1275 = vmatpush1.msra.mxu0 0.0
    %1276 = vmatprep.subr.mxu0 0.0
    %1277 = vmatpush1.msra.mxu0 0.0
    %1278 = vmatprep.subr.mxu0 0.0
    %1279 = vmatpush1.msra.mxu0 0.0
    %1280 = vmatprep.subr.mxu0 0.0
    %1281 = vmatpush1.msra.mxu0 0.0
    %1282 = vmatprep.subr.mxu0 0.0
    %1283 = vmatpush1.msra.mxu0 0.0
    %1284 = vmatprep.subr.mxu0 0.0
    %1285 = vmatpush1.msra.mxu0 0.0
    %1286 = vmatprep.subr.mxu0 0.0
    %1287 = vmatpush1.msra.mxu0 0.0
    %1288 = vmatprep.subr.mxu0 0.0
    %1289 = vmatpush1.msra.mxu0 0.0
    %1290 = vmatprep.subr.mxu0 0.0
    %1291 = vmatpush1.msra.mxu0 0.0
    %1292 = vmatprep.subr.mxu0 0.0
    %1293 = vmatpush1.msra.mxu0 0.0
    %1294 = vmatprep.subr.mxu0 0.0
    %1295 = vmatpush1.msra.mxu0 0.0
    %1296 = vmatprep.subr.mxu0 0.0
    %1297 = vmatpush1.msra.mxu0 0.0
    %1298 = vmatprep.mubr.f32.mxu0 0.0
    %1299 = vmatmul.mubr.f32.gmra.mrb[0].mxu0 %v1217
    %v1300 = vpop.f32.mrb[0].mxu0
    %v1301 = vadd.f32 0.0, %v1300
    %v1302 = vpop.f32.mrb[0].mxu0
    %1303 = vdwg.mxu0
    %v1304 = vadd.f32 %v1073, %v1301
    %v1305 = vld [vmem:[%s14] sm:$0x1]
    %v1307 = vlaneseq
    %v1308 = vshrl.u32 %v1307, 7
    %v1309 = vsub.s32 0, %v1308
    %v1310 = vrot.slane %v1305, %v1309
    %v1312 = vadd.f32 %v1304, %v1310
    %s1313 = scalar_lea.vmem %s3, 1
    %v1314 = vld [vmem:[%s1313] sm:$0x1]
    %s1315 = scalar_lea.vmem %s4, 1
    %v1316 = vld [vmem:[%s1315] sm:$0x1]
    %v1317 = vsel %vm166, %v1312, 0.0
    %1318 = vadd.xlane.f32.xlu0 %v1317
    %v1319 = vpop.xlane.xlu0 %1318
    %v1320 = vmul.f32 %v1319, %v170
    %v1321 = vsub.f32 %v1312, %v1320
    %v1322 = vmul.f32 %v1321, %v1321
    %v1323 = vsel %vm166, %v1322, 0.0
    %1324 = vadd.xlane.f32.xlu0 %v1323
    %v1325 = vpop.xlane.xlu0 %1324
    %v1326 = vmul.f32 %v1325, %v170
    %v1327 = vadd.f32 %v1326, 1e-06
    %v1328 = vrsqrt.pop %v1327
    %v1329 = vmul.f32 %v1321, %v1328
    %v1331 = vlaneseq
    %v1332 = vshrl.u32 %v1331, 7
    %v1333 = vsub.s32 0, %v1332
    %v1334 = vrot.slane %v1314, %v1333
    %v1336 = vmul.f32 %v1329, %v1334
    %v1338 = vlaneseq
    %v1339 = vshrl.u32 %v1338, 7
    %v1340 = vsub.s32 0, %v1339
    %v1341 = vrot.slane %v1316, %v1340
    %v1343 = vadd.f32 %v1336, %v1341
    %s1344 = scalar_lea.vmem %s5, 128
    %v1345 = vld [vmem:[%s1344] sm:$0xff]
    %v1346 = vld [vmem:[%s1344 + $0x8] sm:$0xff]
    %v1347 = vld [vmem:[%s1344 + $0x10] sm:$0xff]
    %v1348 = vld [vmem:[%s1344 + $0x18] sm:$0xff]
    %v1349 = vld [vmem:[%s1344 + $0x20] sm:$0xff]
    %v1350 = vld [vmem:[%s1344 + $0x28] sm:$0xff]
    %v1351 = vld [vmem:[%s1344 + $0x30] sm:$0xff]
    %v1352 = vld [vmem:[%s1344 + $0x38] sm:$0xff]
    %v1353 = vld [vmem:[%s1344 + $0x40] sm:$0xff]
    %v1354 = vld [vmem:[%s1344 + $0x48] sm:$0xff]
    %v1355 = vld [vmem:[%s1344 + $0x50] sm:$0xff]
    %v1356 = vld [vmem:[%s1344 + $0x58] sm:$0xff]
    %v1357 = vld [vmem:[%s1344 + $0x60] sm:$0xff]
    %v1358 = vld [vmem:[%s1344 + $0x68] sm:$0xff]
    %v1359 = vld [vmem:[%s1344 + $0x70] sm:$0xff]
    %v1360 = vld [vmem:[%s1344 + $0x78] sm:$0xff]
    %s1361 = scalar_lea.vmem %s6, 2
    %v1362 = vld [vmem:[%s1361] sm:$0x3]
    %v1364 = vlaneseq
    %v1365 = vshrl.u32 %v1364, 7
    %v1366 = vsub.s32 0, %v1365
    %v1367 = vrot.slane %v1362, %v1366
    %v1368 = vlaneseq
    %v1369 = vshrl.u32 %v1368, 7
    %v1370 = vsub.s32 1, %v1369
    %v1371 = vrot.slane %v1362, %v1370
    %v1375 = vsel %vm90, %v1343, 0
    %1377 = vmatprep.subr.mxu0 %v1346
    %1378 = vmatpush1.msra.mxu0 %v1345
    %1379 = vmatprep.subr.mxu0 %v1348
    %1380 = vmatpush1.msra.mxu0 %v1347
    %1381 = vmatprep.subr.mxu0 %v1350
    %1382 = vmatpush1.msra.mxu0 %v1349
    %1383 = vmatprep.subr.mxu0 %v1352
    %1384 = vmatpush1.msra.mxu0 %v1351
    %1385 = vmatprep.subr.mxu0 %v1354
    %1386 = vmatpush1.msra.mxu0 %v1353
    %1387 = vmatprep.subr.mxu0 %v1356
    %1388 = vmatpush1.msra.mxu0 %v1355
    %1389 = vmatprep.subr.mxu0 %v1358
    %1390 = vmatpush1.msra.mxu0 %v1357
    %1391 = vmatprep.subr.mxu0 %v1360
    %1392 = vmatpush1.msra.mxu0 %v1359
    %1393 = vmatprep.subr.mxu0 0.0
    %1394 = vmatpush1.msra.mxu0 0.0
    %1395 = vmatprep.subr.mxu0 0.0
    %1396 = vmatpush1.msra.mxu0 0.0
    %1397 = vmatprep.subr.mxu0 0.0
    %1398 = vmatpush1.msra.mxu0 0.0
    %1399 = vmatprep.subr.mxu0 0.0
    %1400 = vmatpush1.msra.mxu0 0.0
    %1401 = vmatprep.subr.mxu0 0.0
    %1402 = vmatpush1.msra.mxu0 0.0
    %1403 = vmatprep.subr.mxu0 0.0
    %1404 = vmatpush1.msra.mxu0 0.0
    %1405 = vmatprep.subr.mxu0 0.0
    %1406 = vmatpush1.msra.mxu0 0.0
    %1407 = vmatprep.subr.mxu0 0.0
    %1408 = vmatpush1.msra.mxu0 0.0
    %1409 = vmatprep.subr.mxu0 0.0
    %1410 = vmatpush1.msra.mxu0 0.0
    %1411 = vmatprep.subr.mxu0 0.0
    %1412 = vmatpush1.msra.mxu0 0.0
    %1413 = vmatprep.subr.mxu0 0.0
    %1414 = vmatpush1.msra.mxu0 0.0
    %1415 = vmatprep.subr.mxu0 0.0
    %1416 = vmatpush1.msra.mxu0 0.0
    %1417 = vmatprep.subr.mxu0 0.0
    %1418 = vmatpush1.msra.mxu0 0.0
    %1419 = vmatprep.subr.mxu0 0.0
    %1420 = vmatpush1.msra.mxu0 0.0
    %1421 = vmatprep.subr.mxu0 0.0
    %1422 = vmatpush1.msra.mxu0 0.0
    %1423 = vmatprep.subr.mxu0 0.0
    %1424 = vmatpush1.msra.mxu0 0.0
    %1425 = vmatprep.subr.mxu0 0.0
    %1426 = vmatpush1.msra.mxu0 0.0
    %1427 = vmatprep.subr.mxu0 0.0
    %1428 = vmatpush1.msra.mxu0 0.0
    %1429 = vmatprep.subr.mxu0 0.0
    %1430 = vmatpush1.msra.mxu0 0.0
    %1431 = vmatprep.subr.mxu0 0.0
    %1432 = vmatpush1.msra.mxu0 0.0
    %1433 = vmatprep.subr.mxu0 0.0
    %1434 = vmatpush1.msra.mxu0 0.0
    %1435 = vmatprep.subr.mxu0 0.0
    %1436 = vmatpush1.msra.mxu0 0.0
    %1437 = vmatprep.subr.mxu0 0.0
    %1438 = vmatpush1.msra.mxu0 0.0
    %1439 = vmatprep.subr.mxu0 0.0
    %1440 = vmatpush1.msra.mxu0 0.0
    %1441 = vmatprep.mubr.f32.mxu0 0.0
    %1442 = vmatmul.mubr.f32.gmra.mrb[0].mxu0 %v1375
    %v1443 = vpop.f32.mrb[0].mxu0
    %v1444 = vadd.f32 %v1367, %v1443
    %v1445 = vpop.f32.mrb[0].mxu0
    %v1446 = vadd.f32 %v1371, %v1445
    %1447 = vdwg.mxu0
    %1449 = vrot.lane.b32.xlu0 %v1444, 64
    %v1450 = vpop.permute.xlu0 %1449
    %v1451 = vsel %vm300, %v1444, 0
    %v1453 = vsel %vm300, %v1450, 0
    %1455 = vmatprep.subr.mxu0 0.0
    %1456 = vmatpush1.xpose.msra.mxu0 %v1453
    %1457 = vmatprep.subr.mxu0 0.0
    %1458 = vmatpush1.xpose.msra.mxu0 0.0
    %1459 = vmatprep.subr.mxu0 0.0
    %1460 = vmatpush1.xpose.msra.mxu0 0.0
    %1461 = vmatprep.subr.mxu0 0.0
    %1462 = vmatpush1.xpose.msra.mxu0 0.0
    %1463 = vmatprep.subr.mxu0 0.0
    %1464 = vmatpush1.xpose.msra.mxu0 0.0
    %1465 = vmatprep.subr.mxu0 0.0
    %1466 = vmatpush1.xpose.msra.mxu0 0.0
    %1467 = vmatprep.subr.mxu0 0.0
    %1468 = vmatpush1.xpose.msra.mxu0 0.0
    %1469 = vmatprep.subr.mxu0 0.0
    %1470 = vmatpush1.xpose.msra.mxu0 0.0
    %1471 = vmatprep.subr.mxu0 0.0
    %1472 = vmatpush1.xpose.msra.mxu0 0.0
    %1473 = vmatprep.subr.mxu0 0.0
    %1474 = vmatpush1.xpose.msra.mxu0 0.0
    %1475 = vmatprep.subr.mxu0 0.0
    %1476 = vmatpush1.xpose.msra.mxu0 0.0
    %1477 = vmatprep.subr.mxu0 0.0
    %1478 = vmatpush1.xpose.msra.mxu0 0.0
    %1479 = vmatprep.subr.mxu0 0.0
    %1480 = vmatpush1.xpose.msra.mxu0 0.0
    %1481 = vmatprep.subr.mxu0 0.0
    %1482 = vmatpush1.xpose.msra.mxu0 0.0
    %1483 = vmatprep.subr.mxu0 0.0
    %1484 = vmatpush1.xpose.msra.mxu0 0.0
    %1485 = vmatprep.subr.mxu0 0.0
    %1486 = vmatpush1.xpose.msra.mxu0 0.0
    %1487 = vmatprep.subr.mxu0 0.0
    %1488 = vmatpush1.xpose.msra.mxu0 0.0
    %1489 = vmatprep.subr.mxu0 0.0
    %1490 = vmatpush1.xpose.msra.mxu0 0.0
    %1491 = vmatprep.subr.mxu0 0.0
    %1492 = vmatpush1.xpose.msra.mxu0 0.0
    %1493 = vmatprep.subr.mxu0 0.0
    %1494 = vmatpush1.xpose.msra.mxu0 0.0
    %1495 = vmatprep.subr.mxu0 0.0
    %1496 = vmatpush1.xpose.msra.mxu0 0.0
    %1497 = vmatprep.subr.mxu0 0.0
    %1498 = vmatpush1.xpose.msra.mxu0 0.0
    %1499 = vmatprep.subr.mxu0 0.0
    %1500 = vmatpush1.xpose.msra.mxu0 0.0
    %1501 = vmatprep.subr.mxu0 0.0
    %1502 = vmatpush1.xpose.msra.mxu0 0.0
    %1503 = vmatprep.subr.mxu0 0.0
    %1504 = vmatpush1.xpose.msra.mxu0 0.0
    %1505 = vmatprep.subr.mxu0 0.0
    %1506 = vmatpush1.xpose.msra.mxu0 0.0
    %1507 = vmatprep.subr.mxu0 0.0
    %1508 = vmatpush1.xpose.msra.mxu0 0.0
    %1509 = vmatprep.subr.mxu0 0.0
    %1510 = vmatpush1.xpose.msra.mxu0 0.0
    %1511 = vmatprep.subr.mxu0 0.0
    %1512 = vmatpush1.xpose.msra.mxu0 0.0
    %1513 = vmatprep.subr.mxu0 0.0
    %1514 = vmatpush1.xpose.msra.mxu0 0.0
    %1515 = vmatprep.subr.mxu0 0.0
    %1516 = vmatpush1.xpose.msra.mxu0 0.0
    %1517 = vmatprep.subr.mxu0 0.0
    %1518 = vmatpush1.xpose.msra.mxu0 0.0
    %1519 = vmatprep.mubr.f32.mxu0 0.0
    %1520 = vmatmul.mubr.f32.gmra.mrb[0].mxu0 %v1451
    %v1521 = vpop.f32.mrb[0].mxu0
    %v1522 = vadd.f32 0.0, %v1521
    %v1523 = vpop.f32.mrb[0].mxu0
    %1524 = vdwg.mxu0
    %v1525 = vmul.f32 %v1522, 0.25
    %v1526 = vsel %vm376, %v1525, -inf
    %1527 = vmax.xlane.f32.xlu0 %v1526
    %v1528 = vpop.xlane.xlu0 %1527
    %v1529 = vsub.f32 %v1525, %v1528
    %v1530 = vmul.f32 %v1529, 1.442695
    %v1531 = vpow.pop %v1530
    %v1532 = vsel %vm376, %v1531, 0.0
    %1533 = vadd.xlane.f32.xlu0 %v1532
    %v1534 = vpop.xlane.xlu0 %1533
    %v1535 = vrcp.pop %v1534
    %v1536 = vmul.f32 %v1531, %v1535
    %v1538 = vsel %vm388, %v1536, 0
    %v1541 = vsel %vm392, %v1446, 0
    %1543 = vmatprep.subr.mxu0 0.0
    %1544 = vmatpush1.msra.mxu0 %v1541
    %1545 = vmatprep.subr.mxu0 0.0
    %1546 = vmatpush1.msra.mxu0 0.0
    %1547 = vmatprep.subr.mxu0 0.0
    %1548 = vmatpush1.msra.mxu0 0.0
    %1549 = vmatprep.subr.mxu0 0.0
    %1550 = vmatpush1.msra.mxu0 0.0
    %1551 = vmatprep.subr.mxu0 0.0
    %1552 = vmatpush1.msra.mxu0 0.0
    %1553 = vmatprep.subr.mxu0 0.0
    %1554 = vmatpush1.msra.mxu0 0.0
    %1555 = vmatprep.subr.mxu0 0.0
    %1556 = vmatpush1.msra.mxu0 0.0
    %1557 = vmatprep.subr.mxu0 0.0
    %1558 = vmatpush1.msra.mxu0 0.0
    %1559 = vmatprep.subr.mxu0 0.0
    %1560 = vmatpush1.msra.mxu0 0.0
    %1561 = vmatprep.subr.mxu0 0.0
    %1562 = vmatpush1.msra.mxu0 0.0
    %1563 = vmatprep.subr.mxu0 0.0
    %1564 = vmatpush1.msra.mxu0 0.0
    %1565 = vmatprep.subr.mxu0 0.0
    %1566 = vmatpush1.msra.mxu0 0.0
    %1567 = vmatprep.subr.mxu0 0.0
    %1568 = vmatpush1.msra.mxu0 0.0
    %1569 = vmatprep.subr.mxu0 0.0
    %1570 = vmatpush1.msra.mxu0 0.0
    %1571 = vmatprep.subr.mxu0 0.0
    %1572 = vmatpush1.msra.mxu0 0.0
    %1573 = vmatprep.subr.mxu0 0.0
    %1574 = vmatpush1.msra.mxu0 0.0
    %1575 = vmatprep.subr.mxu0 0.0
    %1576 = vmatpush1.msra.mxu0 0.0
    %1577 = vmatprep.subr.mxu0 0.0
    %1578 = vmatpush1.msra.mxu0 0.0
    %1579 = vmatprep.subr.mxu0 0.0
    %1580 = vmatpush1.msra.mxu0 0.0
    %1581 = vmatprep.subr.mxu0 0.0
    %1582 = vmatpush1.msra.mxu0 0.0
    %1583 = vmatprep.subr.mxu0 0.0
    %1584 = vmatpush1.msra.mxu0 0.0
    %1585 = vmatprep.subr.mxu0 0.0
    %1586 = vmatpush1.msra.mxu0 0.0
    %1587 = vmatprep.subr.mxu0 0.0
    %1588 = vmatpush1.msra.mxu0 0.0
    %1589 = vmatprep.subr.mxu0 0.0
    %1590 = vmatpush1.msra.mxu0 0.0
    %1591 = vmatprep.subr.mxu0 0.0
    %1592 = vmatpush1.msra.mxu0 0.0
    %1593 = vmatprep.subr.mxu0 0.0
    %1594 = vmatpush1.msra.mxu0 0.0
    %1595 = vmatprep.subr.mxu0 0.0
    %1596 = vmatpush1.msra.mxu0 0.0
    %1597 = vmatprep.subr.mxu0 0.0
    %1598 = vmatpush1.msra.mxu0 0.0
    %1599 = vmatprep.subr.mxu0 0.0
    %1600 = vmatpush1.msra.mxu0 0.0
    %1601 = vmatprep.subr.mxu0 0.0
    %1602 = vmatpush1.msra.mxu0 0.0
    %1603 = vmatprep.subr.mxu0 0.0
    %1604 = vmatpush1.msra.mxu0 0.0
    %1605 = vmatprep.subr.mxu0 0.0
    %1606 = vmatpush1.msra.mxu0 0.0
    %1607 = vmatprep.mubr.f32.mxu0 0.0
    %1608 = vmatmul.mubr.f32.gmra.mrb[0].mxu0 %v1538
    %v1609 = vpop.f32.mrb[0].mxu0
    %v1610 = vadd.f32 0.0, %v1609
    %v1611 = vpop.f32.mrb[0].mxu0
    %1612 = vdwg.mxu0
    %1613 = vrot.lane.b32.xlu0 %v1444, 112
    %v1614 = vpop.permute.xlu0 %1613
    %1615 = vrot.lane.b32.xlu0 %v1444, 48
    %v1616 = vpop.permute.xlu0 %1615
    %v1617 = vsel %vm300, %v1614, 0
    %v1619 = vsel %vm300, %v1616, 0
    %1621 = vmatprep.subr.mxu0 0.0
    %1622 = vmatpush1.xpose.msra.mxu0 %v1619
    %1623 = vmatprep.subr.mxu0 0.0
    %1624 = vmatpush1.xpose.msra.mxu0 0.0
    %1625 = vmatprep.subr.mxu0 0.0
    %1626 = vmatpush1.xpose.msra.mxu0 0.0
    %1627 = vmatprep.subr.mxu0 0.0
    %1628 = vmatpush1.xpose.msra.mxu0 0.0
    %1629 = vmatprep.subr.mxu0 0.0
    %1630 = vmatpush1.xpose.msra.mxu0 0.0
    %1631 = vmatprep.subr.mxu0 0.0
    %1632 = vmatpush1.xpose.msra.mxu0 0.0
    %1633 = vmatprep.subr.mxu0 0.0
    %1634 = vmatpush1.xpose.msra.mxu0 0.0
    %1635 = vmatprep.subr.mxu0 0.0
    %1636 = vmatpush1.xpose.msra.mxu0 0.0
    %1637 = vmatprep.subr.mxu0 0.0
    %1638 = vmatpush1.xpose.msra.mxu0 0.0
    %1639 = vmatprep.subr.mxu0 0.0
    %1640 = vmatpush1.xpose.msra.mxu0 0.0
    %1641 = vmatprep.subr.mxu0 0.0
    %1642 = vmatpush1.xpose.msra.mxu0 0.0
    %1643 = vmatprep.subr.mxu0 0.0
    %1644 = vmatpush1.xpose.msra.mxu0 0.0
    %1645 = vmatprep.subr.mxu0 0.0
    %1646 = vmatpush1.xpose.msra.mxu0 0.0
    %1647 = vmatprep.subr.mxu0 0.0
    %1648 = vmatpush1.xpose.msra.mxu0 0.0
    %1649 = vmatprep.subr.mxu0 0.0
    %1650 = vmatpush1.xpose.msra.mxu0 0.0
    %1651 = vmatprep.subr.mxu0 0.0
    %1652 = vmatpush1.xpose.msra.mxu0 0.0
    %1653 = vmatprep.subr.mxu0 0.0
    %1654 = vmatpush1.xpose.msra.mxu0 0.0
    %1655 = vmatprep.subr.mxu0 0.0
    %1656 = vmatpush1.xpose.msra.mxu0 0.0
    %1657 = vmatprep.subr.mxu0 0.0
    %1658 = vmatpush1.xpose.msra.mxu0 0.0
    %1659 = vmatprep.subr.mxu0 0.0
    %1660 = vmatpush1.xpose.msra.mxu0 0.0
    %1661 = vmatprep.subr.mxu0 0.0
    %1662 = vmatpush1.xpose.msra.mxu0 0.0
    %1663 = vmatprep.subr.mxu0 0.0
    %1664 = vmatpush1.xpose.msra.mxu0 0.0
    %1665 = vmatprep.subr.mxu0 0.0
    %1666 = vmatpush1.xpose.msra.mxu0 0.0
    %1667 = vmatprep.subr.mxu0 0.0
    %1668 = vmatpush1.xpose.msra.mxu0 0.0
    %1669 = vmatprep.subr.mxu0 0.0
    %1670 = vmatpush1.xpose.msra.mxu0 0.0
    %1671 = vmatprep.subr.mxu0 0.0
    %1672 = vmatpush1.xpose.msra.mxu0 0.0
    %1673 = vmatprep.subr.mxu0 0.0
    %1674 = vmatpush1.xpose.msra.mxu0 0.0
    %1675 = vmatprep.subr.mxu0 0.0
    %1676 = vmatpush1.xpose.msra.mxu0 0.0
    %1677 = vmatprep.subr.mxu0 0.0
    %1678 = vmatpush1.xpose.msra.mxu0 0.0
    %1679 = vmatprep.subr.mxu0 0.0
    %1680 = vmatpush1.xpose.msra.mxu0 0.0
    %1681 = vmatprep.subr.mxu0 0.0
    %1682 = vmatpush1.xpose.msra.mxu0 0.0
    %1683 = vmatprep.subr.mxu0 0.0
    %1684 = vmatpush1.xpose.msra.mxu0 0.0
    %1685 = vmatprep.mubr.f32.mxu0 0.0
    %1686 = vmatmul.mubr.f32.gmra.mrb[0].mxu0 %v1617
    %v1687 = vpop.f32.mrb[0].mxu0
    %v1688 = vadd.f32 0.0, %v1687
    %v1689 = vpop.f32.mrb[0].mxu0
    %1690 = vdwg.mxu0
    %v1691 = vmul.f32 %v1688, 0.25
    %v1692 = vsel %vm376, %v1691, -inf
    %1693 = vmax.xlane.f32.xlu0 %v1692
    %v1694 = vpop.xlane.xlu0 %1693
    %v1695 = vsub.f32 %v1691, %v1694
    %v1696 = vmul.f32 %v1695, 1.442695
    %v1697 = vpow.pop %v1696
    %v1698 = vsel %vm376, %v1697, 0.0
    %1699 = vadd.xlane.f32.xlu0 %v1698
    %v1700 = vpop.xlane.xlu0 %1699
    %v1701 = vrcp.pop %v1700
    %v1702 = vmul.f32 %v1697, %v1701
    %1703 = vrot.lane.b32.xlu0 %v1446, 112
    %v1704 = vpop.permute.xlu0 %1703
    %v1706 = vsel %vm388, %v1702, 0
    %v1708 = vsel %vm392, %v1704, 0
    %1710 = vmatprep.subr.mxu0 0.0
    %1711 = vmatpush1.msra.mxu0 %v1708
    %1712 = vmatprep.subr.mxu0 0.0
    %1713 = vmatpush1.msra.mxu0 0.0
    %1714 = vmatprep.subr.mxu0 0.0
    %1715 = vmatpush1.msra.mxu0 0.0
    %1716 = vmatprep.subr.mxu0 0.0
    %1717 = vmatpush1.msra.mxu0 0.0
    %1718 = vmatprep.subr.mxu0 0.0
    %1719 = vmatpush1.msra.mxu0 0.0
    %1720 = vmatprep.subr.mxu0 0.0
    %1721 = vmatpush1.msra.mxu0 0.0
    %1722 = vmatprep.subr.mxu0 0.0
    %1723 = vmatpush1.msra.mxu0 0.0
    %1724 = vmatprep.subr.mxu0 0.0
    %1725 = vmatpush1.msra.mxu0 0.0
    %1726 = vmatprep.subr.mxu0 0.0
    %1727 = vmatpush1.msra.mxu0 0.0
    %1728 = vmatprep.subr.mxu0 0.0
    %1729 = vmatpush1.msra.mxu0 0.0
    %1730 = vmatprep.subr.mxu0 0.0
    %1731 = vmatpush1.msra.mxu0 0.0
    %1732 = vmatprep.subr.mxu0 0.0
    %1733 = vmatpush1.msra.mxu0 0.0
    %1734 = vmatprep.subr.mxu0 0.0
    %1735 = vmatpush1.msra.mxu0 0.0
    %1736 = vmatprep.subr.mxu0 0.0
    %1737 = vmatpush1.msra.mxu0 0.0
    %1738 = vmatprep.subr.mxu0 0.0
    %1739 = vmatpush1.msra.mxu0 0.0
    %1740 = vmatprep.subr.mxu0 0.0
    %1741 = vmatpush1.msra.mxu0 0.0
    %1742 = vmatprep.subr.mxu0 0.0
    %1743 = vmatpush1.msra.mxu0 0.0
    %1744 = vmatprep.subr.mxu0 0.0
    %1745 = vmatpush1.msra.mxu0 0.0
    %1746 = vmatprep.subr.mxu0 0.0
    %1747 = vmatpush1.msra.mxu0 0.0
    %1748 = vmatprep.subr.mxu0 0.0
    %1749 = vmatpush1.msra.mxu0 0.0
    %1750 = vmatprep.subr.mxu0 0.0
    %1751 = vmatpush1.msra.mxu0 0.0
    %1752 = vmatprep.subr.mxu0 0.0
    %1753 = vmatpush1.msra.mxu0 0.0
    %1754 = vmatprep.subr.mxu0 0.0
    %1755 = vmatpush1.msra.mxu0 0.0
    %1756 = vmatprep.subr.mxu0 0.0
    %1757 = vmatpush1.msra.mxu0 0.0
    %1758 = vmatprep.subr.mxu0 0.0
    %1759 = vmatpush1.msra.mxu0 0.0
    %1760 = vmatprep.subr.mxu0 0.0
    %1761 = vmatpush1.msra.mxu0 0.0
    %1762 = vmatprep.subr.mxu0 0.0
    %1763 = vmatpush1.msra.mxu0 0.0
    %1764 = vmatprep.subr.mxu0 0.0
    %1765 = vmatpush1.msra.mxu0 0.0
    %1766 = vmatprep.subr.mxu0 0.0
    %1767 = vmatpush1.msra.mxu0 0.0
    %1768 = vmatprep.subr.mxu0 0.0
    %1769 = vmatpush1.msra.mxu0 0.0
    %1770 = vmatprep.subr.mxu0 0.0
    %1771 = vmatpush1.msra.mxu0 0.0
    %1772 = vmatprep.subr.mxu0 0.0
    %1773 = vmatpush1.msra.mxu0 0.0
    %1774 = vmatprep.mubr.f32.mxu0 0.0
    %1775 = vmatmul.mubr.f32.gmra.mrb[0].mxu0 %v1706
    %v1776 = vpop.f32.mrb[0].mxu0
    %v1777 = vadd.f32 0.0, %v1776
    %v1778 = vpop.f32.mrb[0].mxu0
    %1779 = vdwg.mxu0
    %1780 = vrot.lane.b32.xlu0 %v1444, 96
    %v1781 = vpop.permute.xlu0 %1780
    %1782 = vrot.lane.b32.xlu0 %v1444, 32
    %v1783 = vpop.permute.xlu0 %1782
    %v1784 = vsel %vm300, %v1781, 0
    %v1786 = vsel %vm300, %v1783, 0
    %1788 = vmatprep.subr.mxu0 0.0
    %1789 = vmatpush1.xpose.msra.mxu0 %v1786
    %1790 = vmatprep.subr.mxu0 0.0
    %1791 = vmatpush1.xpose.msra.mxu0 0.0
    %1792 = vmatprep.subr.mxu0 0.0
    %1793 = vmatpush1.xpose.msra.mxu0 0.0
    %1794 = vmatprep.subr.mxu0 0.0
    %1795 = vmatpush1.xpose.msra.mxu0 0.0
    %1796 = vmatprep.subr.mxu0 0.0
    %1797 = vmatpush1.xpose.msra.mxu0 0.0
    %1798 = vmatprep.subr.mxu0 0.0
    %1799 = vmatpush1.xpose.msra.mxu0 0.0
    %1800 = vmatprep.subr.mxu0 0.0
    %1801 = vmatpush1.xpose.msra.mxu0 0.0
    %1802 = vmatprep.subr.mxu0 0.0
    %1803 = vmatpush1.xpose.msra.mxu0 0.0
    %1804 = vmatprep.subr.mxu0 0.0
    %1805 = vmatpush1.xpose.msra.mxu0 0.0
    %1806 = vmatprep.subr.mxu0 0.0
    %1807 = vmatpush1.xpose.msra.mxu0 0.0
    %1808 = vmatprep.subr.mxu0 0.0
    %1809 = vmatpush1.xpose.msra.mxu0 0.0
    %1810 = vmatprep.subr.mxu0 0.0
    %1811 = vmatpush1.xpose.msra.mxu0 0.0
    %1812 = vmatprep.subr.mxu0 0.0
    %1813 = vmatpush1.xpose.msra.mxu0 0.0
    %1814 = vmatprep.subr.mxu0 0.0
    %1815 = vmatpush1.xpose.msra.mxu0 0.0
    %1816 = vmatprep.subr.mxu0 0.0
    %1817 = vmatpush1.xpose.msra.mxu0 0.0
    %1818 = vmatprep.subr.mxu0 0.0
    %1819 = vmatpush1.xpose.msra.mxu0 0.0
    %1820 = vmatprep.subr.mxu0 0.0
    %1821 = vmatpush1.xpose.msra.mxu0 0.0
    %1822 = vmatprep.subr.mxu0 0.0
    %1823 = vmatpush1.xpose.msra.mxu0 0.0
    %1824 = vmatprep.subr.mxu0 0.0
    %1825 = vmatpush1.xpose.msra.mxu0 0.0
    %1826 = vmatprep.subr.mxu0 0.0
    %1827 = vmatpush1.xpose.msra.mxu0 0.0
    %1828 = vmatprep.subr.mxu0 0.0
    %1829 = vmatpush1.xpose.msra.mxu0 0.0
    %1830 = vmatprep.subr.mxu0 0.0
    %1831 = vmatpush1.xpose.msra.mxu0 0.0
    %1832 = vmatprep.subr.mxu0 0.0
    %1833 = vmatpush1.xpose.msra.mxu0 0.0
    %1834 = vmatprep.subr.mxu0 0.0
    %1835 = vmatpush1.xpose.msra.mxu0 0.0
    %1836 = vmatprep.subr.mxu0 0.0
    %1837 = vmatpush1.xpose.msra.mxu0 0.0
    %1838 = vmatprep.subr.mxu0 0.0
    %1839 = vmatpush1.xpose.msra.mxu0 0.0
    %1840 = vmatprep.subr.mxu0 0.0
    %1841 = vmatpush1.xpose.msra.mxu0 0.0
    %1842 = vmatprep.subr.mxu0 0.0
    %1843 = vmatpush1.xpose.msra.mxu0 0.0
    %1844 = vmatprep.subr.mxu0 0.0
    %1845 = vmatpush1.xpose.msra.mxu0 0.0
    %1846 = vmatprep.subr.mxu0 0.0
    %1847 = vmatpush1.xpose.msra.mxu0 0.0
    %1848 = vmatprep.subr.mxu0 0.0
    %1849 = vmatpush1.xpose.msra.mxu0 0.0
    %1850 = vmatprep.subr.mxu0 0.0
    %1851 = vmatpush1.xpose.msra.mxu0 0.0
    %1852 = vmatprep.mubr.f32.mxu0 0.0
    %1853 = vmatmul.mubr.f32.gmra.mrb[0].mxu0 %v1784
    %v1854 = vpop.f32.mrb[0].mxu0
    %v1855 = vadd.f32 0.0, %v1854
    %v1856 = vpop.f32.mrb[0].mxu0
    %1857 = vdwg.mxu0
    %v1858 = vmul.f32 %v1855, 0.25
    %v1859 = vsel %vm376, %v1858, -inf
    %1860 = vmax.xlane.f32.xlu0 %v1859
    %v1861 = vpop.xlane.xlu0 %1860
    %v1862 = vsub.f32 %v1858, %v1861
    %v1863 = vmul.f32 %v1862, 1.442695
    %v1864 = vpow.pop %v1863
    %v1865 = vsel %vm376, %v1864, 0.0
    %1866 = vadd.xlane.f32.xlu0 %v1865
    %v1867 = vpop.xlane.xlu0 %1866
    %v1868 = vrcp.pop %v1867
    %v1869 = vmul.f32 %v1864, %v1868
    %1870 = vrot.lane.b32.xlu0 %v1446, 96
    %v1871 = vpop.permute.xlu0 %1870
    %v1873 = vsel %vm388, %v1869, 0
    %v1875 = vsel %vm392, %v1871, 0
    %1877 = vmatprep.subr.mxu0 0.0
    %1878 = vmatpush1.msra.mxu0 %v1875
    %1879 = vmatprep.subr.mxu0 0.0
    %1880 = vmatpush1.msra.mxu0 0.0
    %1881 = vmatprep.subr.mxu0 0.0
    %1882 = vmatpush1.msra.mxu0 0.0
    %1883 = vmatprep.subr.mxu0 0.0
    %1884 = vmatpush1.msra.mxu0 0.0
    %1885 = vmatprep.subr.mxu0 0.0
    %1886 = vmatpush1.msra.mxu0 0.0
    %1887 = vmatprep.subr.mxu0 0.0
    %1888 = vmatpush1.msra.mxu0 0.0
    %1889 = vmatprep.subr.mxu0 0.0
    %1890 = vmatpush1.msra.mxu0 0.0
    %1891 = vmatprep.subr.mxu0 0.0
    %1892 = vmatpush1.msra.mxu0 0.0
    %1893 = vmatprep.subr.mxu0 0.0
    %1894 = vmatpush1.msra.mxu0 0.0
    %1895 = vmatprep.subr.mxu0 0.0
    %1896 = vmatpush1.msra.mxu0 0.0
    %1897 = vmatprep.subr.mxu0 0.0
    %1898 = vmatpush1.msra.mxu0 0.0
    %1899 = vmatprep.subr.mxu0 0.0
    %1900 = vmatpush1.msra.mxu0 0.0
    %1901 = vmatprep.subr.mxu0 0.0
    %1902 = vmatpush1.msra.mxu0 0.0
    %1903 = vmatprep.subr.mxu0 0.0
    %1904 = vmatpush1.msra.mxu0 0.0
    %1905 = vmatprep.subr.mxu0 0.0
    %1906 = vmatpush1.msra.mxu0 0.0
    %1907 = vmatprep.subr.mxu0 0.0
    %1908 = vmatpush1.msra.mxu0 0.0
    %1909 = vmatprep.subr.mxu0 0.0
    %1910 = vmatpush1.msra.mxu0 0.0
    %1911 = vmatprep.subr.mxu0 0.0
    %1912 = vmatpush1.msra.mxu0 0.0
    %1913 = vmatprep.subr.mxu0 0.0
    %1914 = vmatpush1.msra.mxu0 0.0
    %1915 = vmatprep.subr.mxu0 0.0
    %1916 = vmatpush1.msra.mxu0 0.0
    %1917 = vmatprep.subr.mxu0 0.0
    %1918 = vmatpush1.msra.mxu0 0.0
    %1919 = vmatprep.subr.mxu0 0.0
    %1920 = vmatpush1.msra.mxu0 0.0
    %1921 = vmatprep.subr.mxu0 0.0
    %1922 = vmatpush1.msra.mxu0 0.0
    %1923 = vmatprep.subr.mxu0 0.0
    %1924 = vmatpush1.msra.mxu0 0.0
    %1925 = vmatprep.subr.mxu0 0.0
    %1926 = vmatpush1.msra.mxu0 0.0
    %1927 = vmatprep.subr.mxu0 0.0
    %1928 = vmatpush1.msra.mxu0 0.0
    %1929 = vmatprep.subr.mxu0 0.0
    %1930 = vmatpush1.msra.mxu0 0.0
    %1931 = vmatprep.subr.mxu0 0.0
    %1932 = vmatpush1.msra.mxu0 0.0
    %1933 = vmatprep.subr.mxu0 0.0
    %1934 = vmatpush1.msra.mxu0 0.0
    %1935 = vmatprep.subr.mxu0 0.0
    %1936 = vmatpush1.msra.mxu0 0.0
    %1937 = vmatprep.subr.mxu0 0.0
    %1938 = vmatpush1.msra.mxu0 0.0
    %1939 = vmatprep.subr.mxu0 0.0
    %1940 = vmatpush1.msra.mxu0 0.0
    %1941 = vmatprep.mubr.f32.mxu0 0.0
    %1942 = vmatmul.mubr.f32.gmra.mrb[0].mxu0 %v1873
    %v1943 = vpop.f32.mrb[0].mxu0
    %v1944 = vadd.f32 0.0, %v1943
    %v1945 = vpop.f32.mrb[0].mxu0
    %1946 = vdwg.mxu0
    %1947 = vrot.lane.b32.xlu0 %v1444, 80
    %v1948 = vpop.permute.xlu0 %1947
    %1949 = vrot.lane.b32.xlu0 %v1444, 16
    %v1950 = vpop.permute.xlu0 %1949
    %v1951 = vsel %vm300, %v1948, 0
    %v1953 = vsel %vm300, %v1950, 0
    %1955 = vmatprep.subr.mxu0 0.0
    %1956 = vmatpush1.xpose.msra.mxu0 %v1953
    %1957 = vmatprep.subr.mxu0 0.0
    %1958 = vmatpush1.xpose.msra.mxu0 0.0
    %1959 = vmatprep.subr.mxu0 0.0
    %1960 = vmatpush1.xpose.msra.mxu0 0.0
    %1961 = vmatprep.subr.mxu0 0.0
    %1962 = vmatpush1.xpose.msra.mxu0 0.0
    %1963 = vmatprep.subr.mxu0 0.0
    %1964 = vmatpush1.xpose.msra.mxu0 0.0
    %1965 = vmatprep.subr.mxu0 0.0
    %1966 = vmatpush1.xpose.msra.mxu0 0.0
    %1967 = vmatprep.subr.mxu0 0.0
    %1968 = vmatpush1.xpose.msra.mxu0 0.0
    %1969 = vmatprep.subr.mxu0 0.0
    %1970 = vmatpush1.xpose.msra.mxu0 0.0
    %1971 = vmatprep.subr.mxu0 0.0
    %1972 = vmatpush1.xpose.msra.mxu0 0.0
    %1973 = vmatprep.subr.mxu0 0.0
    %1974 = vmatpush1.xpose.msra.mxu0 0.0
    %1975 = vmatprep.subr.mxu0 0.0
    %1976 = vmatpush1.xpose.msra.mxu0 0.0
    %1977 = vmatprep.subr.mxu0 0.0
    %1978 = vmatpush1.xpose.msra.mxu0 0.0
    %1979 = vmatprep.subr.mxu0 0.0
    %1980 = vmatpush1.xpose.msra.mxu0 0.0
    %1981 = vmatprep.subr.mxu0 0.0
    %1982 = vmatpush1.xpose.msra.mxu0 0.0
    %1983 = vmatprep.subr.mxu0 0.0
    %1984 = vmatpush1.xpose.msra.mxu0 0.0
    %1985 = vmatprep.subr.mxu0 0.0
    %1986 = vmatpush1.xpose.msra.mxu0 0.0
    %1987 = vmatprep.subr.mxu0 0.0
    %1988 = vmatpush1.xpose.msra.mxu0 0.0
    %1989 = vmatprep.subr.mxu0 0.0
    %1990 = vmatpush1.xpose.msra.mxu0 0.0
    %1991 = vmatprep.subr.mxu0 0.0
    %1992 = vmatpush1.xpose.msra.mxu0 0.0
    %1993 = vmatprep.subr.mxu0 0.0
    %1994 = vmatpush1.xpose.msra.mxu0 0.0
    %1995 = vmatprep.subr.mxu0 0.0
    %1996 = vmatpush1.xpose.msra.mxu0 0.0
    %1997 = vmatprep.subr.mxu0 0.0
    %1998 = vmatpush1.xpose.msra.mxu0 0.0
    %1999 = vmatprep.subr.mxu0 0.0
    %2000 = vmatpush1.xpose.msra.mxu0 0.0
    %2001 = vmatprep.subr.mxu0 0.0
    %2002 = vmatpush1.xpose.msra.mxu0 0.0
    %2003 = vmatprep.subr.mxu0 0.0
    %2004 = vmatpush1.xpose.msra.mxu0 0.0
    %2005 = vmatprep.subr.mxu0 0.0
    %2006 = vmatpush1.xpose.msra.mxu0 0.0
    %2007 = vmatprep.subr.mxu0 0.0
    %2008 = vmatpush1.xpose.msra.mxu0 0.0
    %2009 = vmatprep.subr.mxu0 0.0
    %2010 = vmatpush1.xpose.msra.mxu0 0.0
    %2011 = vmatprep.subr.mxu0 0.0
    %2012 = vmatpush1.xpose.msra.mxu0 0.0
    %2013 = vmatprep.subr.mxu0 0.0
    %2014 = vmatpush1.xpose.msra.mxu0 0.0
    %2015 = vmatprep.subr.mxu0 0.0
    %2016 = vmatpush1.xpose.msra.mxu0 0.0
    %2017 = vmatprep.subr.mxu0 0.0
    %2018 = vmatpush1.xpose.msra.mxu0 0.0
    %2019 = vmatprep.mubr.f32.mxu0 0.0
    %2020 = vmatmul.mubr.f32.gmra.mrb[0].mxu0 %v1951
    %v2021 = vpop.f32.mrb[0].mxu0
    %v2022 = vadd.f32 0.0, %v2021
    %v2023 = vpop.f32.mrb[0].mxu0
    %2024 = vdwg.mxu0
    %v2025 = vmul.f32 %v2022, 0.25
    %v2026 = vsel %vm376, %v2025, -inf
    %2027 = vmax.xlane.f32.xlu0 %v2026
    %v2028 = vpop.xlane.xlu0 %2027
    %v2029 = vsub.f32 %v2025, %v2028
    %v2030 = vmul.f32 %v2029, 1.442695
    %v2031 = vpow.pop %v2030
    %v2032 = vsel %vm376, %v2031, 0.0
    %2033 = vadd.xlane.f32.xlu0 %v2032
    %v2034 = vpop.xlane.xlu0 %2033
    %v2035 = vrcp.pop %v2034
    %v2036 = vmul.f32 %v2031, %v2035
    %2037 = vrot.lane.b32.xlu0 %v1446, 80
    %v2038 = vpop.permute.xlu0 %2037
    %v2040 = vsel %vm388, %v2036, 0
    %v2042 = vsel %vm392, %v2038, 0
    %2044 = vmatprep.subr.mxu0 0.0
    %2045 = vmatpush1.msra.mxu0 %v2042
    %2046 = vmatprep.subr.mxu0 0.0
    %2047 = vmatpush1.msra.mxu0 0.0
    %2048 = vmatprep.subr.mxu0 0.0
    %2049 = vmatpush1.msra.mxu0 0.0
    %2050 = vmatprep.subr.mxu0 0.0
    %2051 = vmatpush1.msra.mxu0 0.0
    %2052 = vmatprep.subr.mxu0 0.0
    %2053 = vmatpush1.msra.mxu0 0.0
    %2054 = vmatprep.subr.mxu0 0.0
    %2055 = vmatpush1.msra.mxu0 0.0
    %2056 = vmatprep.subr.mxu0 0.0
    %2057 = vmatpush1.msra.mxu0 0.0
    %2058 = vmatprep.subr.mxu0 0.0
    %2059 = vmatpush1.msra.mxu0 0.0
    %2060 = vmatprep.subr.mxu0 0.0
    %2061 = vmatpush1.msra.mxu0 0.0
    %2062 = vmatprep.subr.mxu0 0.0
    %2063 = vmatpush1.msra.mxu0 0.0
    %2064 = vmatprep.subr.mxu0 0.0
    %2065 = vmatpush1.msra.mxu0 0.0
    %2066 = vmatprep.subr.mxu0 0.0
    %2067 = vmatpush1.msra.mxu0 0.0
    %2068 = vmatprep.subr.mxu0 0.0
    %2069 = vmatpush1.msra.mxu0 0.0
    %2070 = vmatprep.subr.mxu0 0.0
    %2071 = vmatpush1.msra.mxu0 0.0
    %2072 = vmatprep.subr.mxu0 0.0
    %2073 = vmatpush1.msra.mxu0 0.0
    %2074 = vmatprep.subr.mxu0 0.0
    %2075 = vmatpush1.msra.mxu0 0.0
    %2076 = vmatprep.subr.mxu0 0.0
    %2077 = vmatpush1.msra.mxu0 0.0
    %2078 = vmatprep.subr.mxu0 0.0
    %2079 = vmatpush1.msra.mxu0 0.0
    %2080 = vmatprep.subr.mxu0 0.0
    %2081 = vmatpush1.msra.mxu0 0.0
    %2082 = vmatprep.subr.mxu0 0.0
    %2083 = vmatpush1.msra.mxu0 0.0
    %2084 = vmatprep.subr.mxu0 0.0
    %2085 = vmatpush1.msra.mxu0 0.0
    %2086 = vmatprep.subr.mxu0 0.0
    %2087 = vmatpush1.msra.mxu0 0.0
    %2088 = vmatprep.subr.mxu0 0.0
    %2089 = vmatpush1.msra.mxu0 0.0
    %2090 = vmatprep.subr.mxu0 0.0
    %2091 = vmatpush1.msra.mxu0 0.0
    %2092 = vmatprep.subr.mxu0 0.0
    %2093 = vmatpush1.msra.mxu0 0.0
    %2094 = vmatprep.subr.mxu0 0.0
    %2095 = vmatpush1.msra.mxu0 0.0
    %2096 = vmatprep.subr.mxu0 0.0
    %2097 = vmatpush1.msra.mxu0 0.0
    %2098 = vmatprep.subr.mxu0 0.0
    %2099 = vmatpush1.msra.mxu0 0.0
    %2100 = vmatprep.subr.mxu0 0.0
    %2101 = vmatpush1.msra.mxu0 0.0
    %2102 = vmatprep.subr.mxu0 0.0
    %2103 = vmatpush1.msra.mxu0 0.0
    %2104 = vmatprep.subr.mxu0 0.0
    %2105 = vmatpush1.msra.mxu0 0.0
    %2106 = vmatprep.subr.mxu0 0.0
    %2107 = vmatpush1.msra.mxu0 0.0
    %2108 = vmatprep.mubr.f32.mxu0 0.0
    %2109 = vmatmul.mubr.f32.gmra.mrb[0].mxu0 %v2040
    %v2110 = vpop.f32.mrb[0].mxu0
    %v2111 = vadd.f32 0.0, %v2110
    %v2112 = vpop.f32.mrb[0].mxu0
    %2113 = vdwg.mxu0
    %2115 = vrot.lane.b32.xlu0 %v1777, 16
    %v2116 = vpop.permute.xlu0 %2115
    %2119 = vrot.lane.b32.xlu0 %v1944, 32
    %v2120 = vpop.permute.xlu0 %2119
    %2123 = vrot.lane.b32.xlu0 %v2111, 48
    %v2124 = vpop.permute.xlu0 %2123
    %v2126 = vsel %vm300, %v1610, %v2116
    %v2127 = vsel %vm980, %v2126, %v2120
    %v2128 = vsel %vm982, %v2127, %v2124
    %s2129 = scalar_lea.vmem %s7, 64
    %v2130 = vld [vmem:[%s2129] sm:$0xff]
    %v2131 = vld [vmem:[%s2129 + $0x8] sm:$0xff]
    %v2132 = vld [vmem:[%s2129 + $0x10] sm:$0xff]
    %v2133 = vld [vmem:[%s2129 + $0x18] sm:$0xff]
    %v2134 = vld [vmem:[%s2129 + $0x20] sm:$0xff]
    %v2135 = vld [vmem:[%s2129 + $0x28] sm:$0xff]
    %v2136 = vld [vmem:[%s2129 + $0x30] sm:$0xff]
    %v2137 = vld [vmem:[%s2129 + $0x38] sm:$0xff]
    %v2139 = vsel %vm90, %v2128, 0
    %2141 = vmatprep.subr.mxu0 0.0
    %2142 = vmatpush1.msra.mxu0 %v2130
    %2143 = vmatprep.subr.mxu0 0.0
    %2144 = vmatpush1.msra.mxu0 %v2131
    %2145 = vmatprep.subr.mxu0 0.0
    %2146 = vmatpush1.msra.mxu0 %v2132
    %2147 = vmatprep.subr.mxu0 0.0
    %2148 = vmatpush1.msra.mxu0 %v2133
    %2149 = vmatprep.subr.mxu0 0.0
    %2150 = vmatpush1.msra.mxu0 %v2134
    %2151 = vmatprep.subr.mxu0 0.0
    %2152 = vmatpush1.msra.mxu0 %v2135
    %2153 = vmatprep.subr.mxu0 0.0
    %2154 = vmatpush1.msra.mxu0 %v2136
    %2155 = vmatprep.subr.mxu0 0.0
    %2156 = vmatpush1.msra.mxu0 %v2137
    %2157 = vmatprep.subr.mxu0 0.0
    %2158 = vmatpush1.msra.mxu0 0.0
    %2159 = vmatprep.subr.mxu0 0.0
    %2160 = vmatpush1.msra.mxu0 0.0
    %2161 = vmatprep.subr.mxu0 0.0
    %2162 = vmatpush1.msra.mxu0 0.0
    %2163 = vmatprep.subr.mxu0 0.0
    %2164 = vmatpush1.msra.mxu0 0.0
    %2165 = vmatprep.subr.mxu0 0.0
    %2166 = vmatpush1.msra.mxu0 0.0
    %2167 = vmatprep.subr.mxu0 0.0
    %2168 = vmatpush1.msra.mxu0 0.0
    %2169 = vmatprep.subr.mxu0 0.0
    %2170 = vmatpush1.msra.mxu0 0.0
    %2171 = vmatprep.subr.mxu0 0.0
    %2172 = vmatpush1.msra.mxu0 0.0
    %2173 = vmatprep.subr.mxu0 0.0
    %2174 = vmatpush1.msra.mxu0 0.0
    %2175 = vmatprep.subr.mxu0 0.0
    %2176 = vmatpush1.msra.mxu0 0.0
    %2177 = vmatprep.subr.mxu0 0.0
    %2178 = vmatpush1.msra.mxu0 0.0
    %2179 = vmatprep.subr.mxu0 0.0
    %2180 = vmatpush1.msra.mxu0 0.0
    %2181 = vmatprep.subr.mxu0 0.0
    %2182 = vmatpush1.msra.mxu0 0.0
    %2183 = vmatprep.subr.mxu0 0.0
    %2184 = vmatpush1.msra.mxu0 0.0
    %2185 = vmatprep.subr.mxu0 0.0
    %2186 = vmatpush1.msra.mxu0 0.0
    %2187 = vmatprep.subr.mxu0 0.0
    %2188 = vmatpush1.msra.mxu0 0.0
    %2189 = vmatprep.subr.mxu0 0.0
    %2190 = vmatpush1.msra.mxu0 0.0
    %2191 = vmatprep.subr.mxu0 0.0
    %2192 = vmatpush1.msra.mxu0 0.0
    %2193 = vmatprep.subr.mxu0 0.0
    %2194 = vmatpush1.msra.mxu0 0.0
    %2195 = vmatprep.subr.mxu0 0.0
    %2196 = vmatpush1.msra.mxu0 0.0
    %2197 = vmatprep.subr.mxu0 0.0
    %2198 = vmatpush1.msra.mxu0 0.0
    %2199 = vmatprep.subr.mxu0 0.0
    %2200 = vmatpush1.msra.mxu0 0.0
    %2201 = vmatprep.subr.mxu0 0.0
    %2202 = vmatpush1.msra.mxu0 0.0
    %2203 = vmatprep.subr.mxu0 0.0
    %2204 = vmatpush1.msra.mxu0 0.0
    %2205 = vmatprep.mubr.f32.mxu0 0.0
    %2206 = vmatmul.mubr.f32.gmra.mrb[0].mxu0 %v2139
    %v2207 = vpop.f32.mrb[0].mxu0
    %v2208 = vadd.f32 0.0, %v2207
    %v2209 = vpop.f32.mrb[0].mxu0
    %2210 = vdwg.mxu0
    %v2211 = vadd.f32 %v1312, %v2208
    %s2212 = scalar_lea.vmem %s8, 1
    %v2213 = vld [vmem:[%s2212] sm:$0x1]
    %v2215 = vlaneseq
    %v2216 = vshrl.u32 %v2215, 7
    %v2217 = vsub.s32 0, %v2216
    %v2218 = vrot.slane %v2213, %v2217
    %v2220 = vadd.f32 %v2211, %v2218
    %s2221 = scalar_lea.vmem %s9, 1
    %v2222 = vld [vmem:[%s2221] sm:$0x1]
    %s2223 = scalar_lea.vmem %s10, 1
    %v2224 = vld [vmem:[%s2223] sm:$0x1]
    %v2225 = vsel %vm166, %v2220, 0.0
    %2226 = vadd.xlane.f32.xlu0 %v2225
    %v2227 = vpop.xlane.xlu0 %2226
    %v2228 = vmul.f32 %v2227, %v170
    %v2229 = vsub.f32 %v2220, %v2228
    %v2230 = vmul.f32 %v2229, %v2229
    %v2231 = vsel %vm166, %v2230, 0.0
    %2232 = vadd.xlane.f32.xlu0 %v2231
    %v2233 = vpop.xlane.xlu0 %2232
    %v2234 = vmul.f32 %v2233, %v170
    %v2235 = vadd.f32 %v2234, 1e-06
    %v2236 = vrsqrt.pop %v2235
    %v2237 = vmul.f32 %v2229, %v2236
    %v2239 = vlaneseq
    %v2240 = vshrl.u32 %v2239, 7
    %v2241 = vsub.s32 0, %v2240
    %v2242 = vrot.slane %v2222, %v2241
    %v2244 = vmul.f32 %v2237, %v2242
    %v2246 = vlaneseq
    %v2247 = vshrl.u32 %v2246, 7
    %v2248 = vsub.s32 0, %v2247
    %v2249 = vrot.slane %v2224, %v2248
    %v2251 = vadd.f32 %v2244, %v2249
    %s2252 = scalar_lea.vmem %s11, 64
    %v2253 = vld [vmem:[%s2252] sm:$0xff]
    %v2254 = vld [vmem:[%s2252 + $0x8] sm:$0xff]
    %v2255 = vld [vmem:[%s2252 + $0x10] sm:$0xff]
    %v2256 = vld [vmem:[%s2252 + $0x18] sm:$0xff]
    %v2257 = vld [vmem:[%s2252 + $0x20] sm:$0xff]
    %v2258 = vld [vmem:[%s2252 + $0x28] sm:$0xff]
    %v2259 = vld [vmem:[%s2252 + $0x30] sm:$0xff]
    %v2260 = vld [vmem:[%s2252 + $0x38] sm:$0xff]
    %s2261 = scalar_lea.vmem %s12, 1
    %v2262 = vld [vmem:[%s2261] sm:$0x1]
    %v2264 = vlaneseq
    %v2265 = vshrl.u32 %v2264, 7
    %v2266 = vsub.s32 0, %v2265
    %v2267 = vrot.slane %v2262, %v2266
    %v2270 = vsel %vm90, %v2251, 0
    %2272 = vmatprep.subr.mxu0 0.0
    %2273 = vmatpush1.msra.mxu0 %v2253
    %2274 = vmatprep.subr.mxu0 0.0
    %2275 = vmatpush1.msra.mxu0 %v2254
    %2276 = vmatprep.subr.mxu0 0.0
    %2277 = vmatpush1.msra.mxu0 %v2255
    %2278 = vmatprep.subr.mxu0 0.0
    %2279 = vmatpush1.msra.mxu0 %v2256
    %2280 = vmatprep.subr.mxu0 0.0
    %2281 = vmatpush1.msra.mxu0 %v2257
    %2282 = vmatprep.subr.mxu0 0.0
    %2283 = vmatpush1.msra.mxu0 %v2258
    %2284 = vmatprep.subr.mxu0 0.0
    %2285 = vmatpush1.msra.mxu0 %v2259
    %2286 = vmatprep.subr.mxu0 0.0
    %2287 = vmatpush1.msra.mxu0 %v2260
    %2288 = vmatprep.subr.mxu0 0.0
    %2289 = vmatpush1.msra.mxu0 0.0
    %2290 = vmatprep.subr.mxu0 0.0
    %2291 = vmatpush1.msra.mxu0 0.0
    %2292 = vmatprep.subr.mxu0 0.0
    %2293 = vmatpush1.msra.mxu0 0.0
    %2294 = vmatprep.subr.mxu0 0.0
    %2295 = vmatpush1.msra.mxu0 0.0
    %2296 = vmatprep.subr.mxu0 0.0
    %2297 = vmatpush1.msra.mxu0 0.0
    %2298 = vmatprep.subr.mxu0 0.0
    %2299 = vmatpush1.msra.mxu0 0.0
    %2300 = vmatprep.subr.mxu0 0.0
    %2301 = vmatpush1.msra.mxu0 0.0
    %2302 = vmatprep.subr.mxu0 0.0
    %2303 = vmatpush1.msra.mxu0 0.0
    %2304 = vmatprep.subr.mxu0 0.0
    %2305 = vmatpush1.msra.mxu0 0.0
    %2306 = vmatprep.subr.mxu0 0.0
    %2307 = vmatpush1.msra.mxu0 0.0
    %2308 = vmatprep.subr.mxu0 0.0
    %2309 = vmatpush1.msra.mxu0 0.0
    %2310 = vmatprep.subr.mxu0 0.0
    %2311 = vmatpush1.msra.mxu0 0.0
    %2312 = vmatprep.subr.mxu0 0.0
    %2313 = vmatpush1.msra.mxu0 0.0
    %2314 = vmatprep.subr.mxu0 0.0
    %2315 = vmatpush1.msra.mxu0 0.0
    %2316 = vmatprep.subr.mxu0 0.0
    %2317 = vmatpush1.msra.mxu0 0.0
    %2318 = vmatprep.subr.mxu0 0.0
    %2319 = vmatpush1.msra.mxu0 0.0
    %2320 = vmatprep.subr.mxu0 0.0
    %2321 = vmatpush1.msra.mxu0 0.0
    %2322 = vmatprep.subr.mxu0 0.0
    %2323 = vmatpush1.msra.mxu0 0.0
    %2324 = vmatprep.subr.mxu0 0.0
    %2325 = vmatpush1.msra.mxu0 0.0
    %2326 = vmatprep.subr.mxu0 0.0
    %2327 = vmatpush1.msra.mxu0 0.0
    %2328 = vmatprep.subr.mxu0 0.0
    %2329 = vmatpush1.msra.mxu0 0.0
    %2330 = vmatprep.subr.mxu0 0.0
    %2331 = vmatpush1.msra.mxu0 0.0
    %2332 = vmatprep.subr.mxu0 0.0
    %2333 = vmatpush1.msra.mxu0 0.0
    %2334 = vmatprep.subr.mxu0 0.0
    %2335 = vmatpush1.msra.mxu0 0.0
    %2336 = vmatprep.mubr.f32.mxu0 0.0
    %2337 = vmatmul.mubr.f32.gmra.mrb[0].mxu0 %v2270
    %v2338 = vpop.f32.mrb[0].mxu0
    %v2339 = vadd.f32 %v2267, %v2338
    %v2340 = vpop.f32.mrb[0].mxu0
    %2341 = vdwg.mxu0
    %v2342 = vmul.f32 %v2339, 0.5
    %v2343 = vmul.f32 %v2339, 0.70710677
    %v2344 = vand.u32 2147483647, %v2343
    %v2345 = vmul.f32 %v2344, 0.3275911
    %v2346 = vadd.f32 %v2345, 1.0
    %v2347 = vrcp.pop %v2346
    %v2348 = vmul.f32 1.0, %v2347
    %v2349 = vmul.f32 %v2348, 1.0614054
    %v2350 = vadd.f32 %v2349, -1.4531521
    %v2351 = vmul.f32 %v2350, %v2348
    %v2352 = vadd.f32 %v2351, 1.4214138
    %v2353 = vmul.f32 %v2352, %v2348
    %v2354 = vadd.f32 %v2353, -0.28449672
    %v2355 = vmul.f32 %v2354, %v2348
    %v2356 = vadd.f32 %v2355, 0.2548296
    %v2357 = vmul.f32 %v2356, %v2348
    %v2358 = vsub.f32 0.0, %v2344
    %v2359 = vmul.f32 %v2358, %v2344
    %v2360 = vmul.f32 %v2359, 1.442695
    %v2361 = vpow.pop %v2360
    %v2362 = vmul.f32 %v2357, %v2361
    %v2363 = vsub.f32 1.0, %v2362
    %vm2364 = vcmp.ge.f32.partialorder %v2343, 0.0
    %v2365 = vsub.f32 0.0, %v2363
    %v2366 = vsel %vm2364, %v2363, %v2365
    %v2367 = vadd.f32 %v2366, 1.0
    %v2368 = vmul.f32 %v2342, %v2367
    %s2369 = scalar_lea.vmem %s13, 128
    %v2370 = vld [vmem:[%s2369] sm:$0xff]
    %v2371 = vld [vmem:[%s2369 + $0x8] sm:$0xff]
    %v2372 = vld [vmem:[%s2369 + $0x10] sm:$0xff]
    %v2373 = vld [vmem:[%s2369 + $0x18] sm:$0xff]
    %v2374 = vld [vmem:[%s2369 + $0x20] sm:$0xff]
    %v2375 = vld [vmem:[%s2369 + $0x28] sm:$0xff]
    %v2376 = vld [vmem:[%s2369 + $0x30] sm:$0xff]
    %v2377 = vld [vmem:[%s2369 + $0x38] sm:$0xff]
    %v2378 = vld [vmem:[%s2369 + $0x40] sm:$0xff]
    %v2379 = vld [vmem:[%s2369 + $0x48] sm:$0xff]
    %v2380 = vld [vmem:[%s2369 + $0x50] sm:$0xff]
    %v2381 = vld [vmem:[%s2369 + $0x58] sm:$0xff]
    %v2382 = vld [vmem:[%s2369 + $0x60] sm:$0xff]
    %v2383 = vld [vmem:[%s2369 + $0x68] sm:$0xff]
    %v2384 = vld [vmem:[%s2369 + $0x70] sm:$0xff]
    %v2385 = vld [vmem:[%s2369 + $0x78] sm:$0xff]
    %2386 = vmatprep.subr.mxu0 0.0
    %2387 = vmatpush1.msra.mxu0 %v2370
    %2388 = vmatprep.subr.mxu0 0.0
    %2389 = vmatpush1.msra.mxu0 %v2371
    %2390 = vmatprep.subr.mxu0 0.0
    %2391 = vmatpush1.msra.mxu0 %v2372
    %2392 = vmatprep.subr.mxu0 0.0
    %2393 = vmatpush1.msra.mxu0 %v2373
    %2394 = vmatprep.subr.mxu0 0.0
    %2395 = vmatpush1.msra.mxu0 %v2374
    %2396 = vmatprep.subr.mxu0 0.0
    %2397 = vmatpush1.msra.mxu0 %v2375
    %2398 = vmatprep.subr.mxu0 0.0
    %2399 = vmatpush1.msra.mxu0 %v2376
    %2400 = vmatprep.subr.mxu0 0.0
    %2401 = vmatpush1.msra.mxu0 %v2377
    %2402 = vmatprep.subr.mxu0 0.0
    %2403 = vmatpush1.msra.mxu0 %v2378
    %2404 = vmatprep.subr.mxu0 0.0
    %2405 = vmatpush1.msra.mxu0 %v2379
    %2406 = vmatprep.subr.mxu0 0.0
    %2407 = vmatpush1.msra.mxu0 %v2380
    %2408 = vmatprep.subr.mxu0 0.0
    %2409 = vmatpush1.msra.mxu0 %v2381
    %2410 = vmatprep.subr.mxu0 0.0
    %2411 = vmatpush1.msra.mxu0 %v2382
    %2412 = vmatprep.subr.mxu0 0.0
    %2413 = vmatpush1.msra.mxu0 %v2383
    %2414 = vmatprep.subr.mxu0 0.0
    %2415 = vmatpush1.msra.mxu0 %v2384
    %2416 = vmatprep.subr.mxu0 0.0
    %2417 = vmatpush1.msra.mxu0 %v2385
    %2418 = vmatprep.subr.mxu0 0.0
    %2419 = vmatpush1.msra.mxu0 0.0
    %2420 = vmatprep.subr.mxu0 0.0
    %2421 = vmatpush1.msra.mxu0 0.0
    %2422 = vmatprep.subr.mxu0 0.0
    %2423 = vmatpush1.msra.mxu0 0.0
    %2424 = vmatprep.subr.mxu0 0.0
    %2425 = vmatpush1.msra.mxu0 0.0
    %2426 = vmatprep.subr.mxu0 0.0
    %2427 = vmatpush1.msra.mxu0 0.0
    %2428 = vmatprep.subr.mxu0 0.0
    %2429 = vmatpush1.msra.mxu0 0.0
    %2430 = vmatprep.subr.mxu0 0.0
    %2431 = vmatpush1.msra.mxu0 0.0
    %2432 = vmatprep.subr.mxu0 0.0
    %2433 = vmatpush1.msra.mxu0 0.0
    %2434 = vmatprep.subr.mxu0 0.0
    %2435 = vmatpush1.msra.mxu0 0.0
    %2436 = vmatprep.subr.mxu0 0.0
    %2437 = vmatpush1.msra.mxu0 0.0
    %2438 = vmatprep.subr.mxu0 0.0
    %2439 = vmatpush1.msra.mxu0 0.0
    %2440 = vmatprep.subr.mxu0 0.0
    %2441 = vmatpush1.msra.mxu0 0.0
    %2442 = vmatprep.subr.mxu0 0.0
    %2443 = vmatpush1.msra.mxu0 0.0
    %2444 = vmatprep.subr.mxu0 0.0
    %2445 = vmatpush1.msra.mxu0 0.0
    %2446 = vmatprep.subr.mxu0 0.0
    %2447 = vmatpush1.msra.mxu0 0.0
    %2448 = vmatprep.subr.mxu0 0.0
    %2449 = vmatpush1.msra.mxu0 0.0
    %2450 = vmatprep.mubr.f32.mxu0 0.0
    %2451 = vmatmul.mubr.f32.gmra.mrb[0].mxu0 %v2368
    %v2452 = vpop.f32.mrb[0].mxu0
    %v2453 = vadd.f32 0.0, %v2452
    %v2454 = vpop.f32.mrb[0].mxu0
    %2455 = vdwg.mxu0
    %v2456 = vadd.f32 %v2220, %v2453
    %s2457 = scalar_lea.vmem %s14, 1
    %v2458 = vld [vmem:[%s2457] sm:$0x1]
    %v2460 = vlaneseq
    %v2461 = vshrl.u32 %v2460, 7
    %v2462 = vsub.s32 0, %v2461
    %v2463 = vrot.slane %v2458, %v2462
    %v2465 = vadd.f32 %v2456, %v2463
    %v2466 = vld [vmem:[%s15] sm:$0x1]
    %v2467 = vld [vmem:[%s16] sm:$0x1]
    %v2468 = vsel %vm166, %v2465, 0.0
    %2469 = vadd.xlane.f32.xlu0 %v2468
    %v2470 = vpop.xlane.xlu0 %2469
    %v2471 = vmul.f32 %v2470, %v170
    %v2472 = vsub.f32 %v2465, %v2471
    %v2473 = vmul.f32 %v2472, %v2472
    %v2474 = vsel %vm166, %v2473, 0.0
    %2475 = vadd.xlane.f32.xlu0 %v2474
    %v2476 = vpop.xlane.xlu0 %2475
    %v2477 = vmul.f32 %v2476, %v170
    %v2478 = vadd.f32 %v2477, 1e-06
    %v2479 = vrsqrt.pop %v2478
    %v2480 = vmul.f32 %v2472, %v2479
    %v2482 = vlaneseq
    %v2483 = vshrl.u32 %v2482, 7
    %v2484 = vsub.s32 0, %v2483
    %v2485 = vrot.slane %v2466, %v2484
    %v2487 = vmul.f32 %v2480, %v2485
    %v2489 = vlaneseq
    %v2490 = vshrl.u32 %v2489, 7
    %v2491 = vsub.s32 0, %v2490
    %v2492 = vrot.slane %v2467, %v2491
    %v2494 = vadd.f32 %v2487, %v2492
    %v2495 = vld [vmem:[%s17] sm:$0xff]
    %v2496 = vld [vmem:[%s17 + $0x8] sm:$0xff]
    %v2497 = vld [vmem:[%s17 + $0x10] sm:$0xff]
    %v2498 = vld [vmem:[%s17 + $0x18] sm:$0xff]
    %v2499 = vld [vmem:[%s17 + $0x20] sm:$0xff]
    %v2500 = vld [vmem:[%s17 + $0x28] sm:$0xff]
    %v2501 = vld [vmem:[%s17 + $0x30] sm:$0xff]
    %v2502 = vld [vmem:[%s17 + $0x38] sm:$0xff]
    %v2503 = vld [vmem:[%s18] sm:$0x1]
    %v2505 = vsel %vm90, %v2494, 0
    %2507 = vmatprep.subr.mxu0 0.0
    %2508 = vmatpush1.msra.mxu0 %v2495
    %2509 = vmatprep.subr.mxu0 0.0
    %2510 = vmatpush1.msra.mxu0 %v2496
    %2511 = vmatprep.subr.mxu0 0.0
    %2512 = vmatpush1.msra.mxu0 %v2497
    %2513 = vmatprep.subr.mxu0 0.0
    %2514 = vmatpush1.msra.mxu0 %v2498
    %2515 = vmatprep.subr.mxu0 0.0
    %2516 = vmatpush1.msra.mxu0 %v2499
    %2517 = vmatprep.subr.mxu0 0.0
    %2518 = vmatpush1.msra.mxu0 %v2500
    %2519 = vmatprep.subr.mxu0 0.0
    %2520 = vmatpush1.msra.mxu0 %v2501
    %2521 = vmatprep.subr.mxu0 0.0
    %2522 = vmatpush1.msra.mxu0 %v2502
    %2523 = vmatprep.subr.mxu0 0.0
    %2524 = vmatpush1.msra.mxu0 0.0
    %2525 = vmatprep.subr.mxu0 0.0
    %2526 = vmatpush1.msra.mxu0 0.0
    %2527 = vmatprep.subr.mxu0 0.0
    %2528 = vmatpush1.msra.mxu0 0.0
    %2529 = vmatprep.subr.mxu0 0.0
    %2530 = vmatpush1.msra.mxu0 0.0
    %2531 = vmatprep.subr.mxu0 0.0
    %2532 = vmatpush1.msra.mxu0 0.0
    %2533 = vmatprep.subr.mxu0 0.0
    %2534 = vmatpush1.msra.mxu0 0.0
    %2535 = vmatprep.subr.mxu0 0.0
    %2536 = vmatpush1.msra.mxu0 0.0
    %2537 = vmatprep.subr.mxu0 0.0
    %2538 = vmatpush1.msra.mxu0 0.0
    %2539 = vmatprep.subr.mxu0 0.0
    %2540 = vmatpush1.msra.mxu0 0.0
    %2541 = vmatprep.subr.mxu0 0.0
    %2542 = vmatpush1.msra.mxu0 0.0
    %2543 = vmatprep.subr.mxu0 0.0
    %2544 = vmatpush1.msra.mxu0 0.0
    %2545 = vmatprep.subr.mxu0 0.0
    %2546 = vmatpush1.msra.mxu0 0.0
    %2547 = vmatprep.subr.mxu0 0.0
    %2548 = vmatpush1.msra.mxu0 0.0
    %2549 = vmatprep.subr.mxu0 0.0
    %2550 = vmatpush1.msra.mxu0 0.0
    %2551 = vmatprep.subr.mxu0 0.0
    %2552 = vmatpush1.msra.mxu0 0.0
    %2553 = vmatprep.subr.mxu0 0.0
    %2554 = vmatpush1.msra.mxu0 0.0
    %2555 = vmatprep.subr.mxu0 0.0
    %2556 = vmatpush1.msra.mxu0 0.0
    %2557 = vmatprep.subr.mxu0 0.0
    %2558 = vmatpush1.msra.mxu0 0.0
    %2559 = vmatprep.subr.mxu0 0.0
    %2560 = vmatpush1.msra.mxu0 0.0
    %2561 = vmatprep.subr.mxu0 0.0
    %2562 = vmatpush1.msra.mxu0 0.0
    %2563 = vmatprep.subr.mxu0 0.0
    %2564 = vmatpush1.msra.mxu0 0.0
    %2565 = vmatprep.subr.mxu0 0.0
    %2566 = vmatpush1.msra.mxu0 0.0
    %2567 = vmatprep.subr.mxu0 0.0
    %2568 = vmatpush1.msra.mxu0 0.0
    %2569 = vmatprep.subr.mxu0 0.0
    %2570 = vmatpush1.msra.mxu0 0.0
    %2571 = vmatprep.mubr.f32.mxu0 0.0
    %2572 = vmatmul.mubr.f32.gmra.mrb[0].mxu0 %v2505
    %v2573 = vpop.f32.mrb[0].mxu0
    %v2574 = vadd.f32 %v2503, %v2573
    %v2575 = vpop.f32.mrb[0].mxu0
    %2576 = vdwg.mxu0
    %2577 = vst [vmem:[#allocation2] sm:$0x1] %v2574
    %s2578 = scalar_lea.vmem %s0, 16
    %v2579 = vld [vmem:[%s2578] sm:$0x1f]
    %v2580 = vld [vmem:[%s2578 + $0x8] sm:$0x1f]
    %v2581 = vld [vmem:[%s1] sm:$0xff]
    %v2582 = vld [vmem:[%s1 + $0x8] sm:$0xff]
    %v2583 = vld [vmem:[%s1 + $0x10] sm:$0xff]
    %v2584 = vld [vmem:[%s1 + $0x18] sm:$0xff]
    %v2585 = vld [vmem:[%s1 + $0x20] sm:$0xff]
    %v2586 = vld [vmem:[%s1 + $0x28] sm:$0xff]
    %v2587 = vld [vmem:[%s1 + $0x30] sm:$0xff]
    %v2588 = vld [vmem:[%s1 + $0x38] sm:$0xff]
    %v2589 = vld [vmem:[%s1 + $0x40] sm:$0xff]
    %v2590 = vld [vmem:[%s1 + $0x48] sm:$0xff]
    %v2591 = vld [vmem:[%s1 + $0x50] sm:$0xff]
    %v2592 = vld [vmem:[%s1 + $0x58] sm:$0xff]
    %v2593 = vld [vmem:[%s1 + $0x60] sm:$0xff]
    %v2594 = vld [vmem:[%s1 + $0x68] sm:$0xff]
    %v2595 = vld [vmem:[%s1 + $0x70] sm:$0xff]
    %v2596 = vld [vmem:[%s1 + $0x78] sm:$0xff]
    %v2597 = vld [vmem:[%s1 + $0x80] sm:$0xff]
    %v2598 = vld [vmem:[%s1 + $0x88] sm:$0xff]
    %v2599 = vld [vmem:[%s1 + $0x90] sm:$0xff]
    %v2600 = vld [vmem:[%s1 + $0x98] sm:$0xff]
    %v2601 = vld [vmem:[%s1 + $0xa0] sm:$0xff]
    %v2602 = vld [vmem:[%s1 + $0xa8] sm:$0xff]
    %v2603 = vld [vmem:[%s1 + $0xb0] sm:$0xff]
    %v2604 = vld [vmem:[%s1 + $0xb8] sm:$0xff]
    %v2605 = vld [vmem:[%s2] sm:$0x1f]
    %v2607 = vsel %vm90, %v2580, 0
    %2609 = vmatprep.subr.mxu0 0.0
    %2610 = vmatpush1.msra.mxu0 %v2581
    %2611 = vmatprep.subr.mxu0 0.0
    %2612 = vmatpush1.msra.mxu0 %v2582
    %2613 = vmatprep.subr.mxu0 0.0
    %2614 = vmatpush1.msra.mxu0 %v2583
    %2615 = vmatprep.subr.mxu0 0.0
    %2616 = vmatpush1.msra.mxu0 %v2584
    %2617 = vmatprep.subr.mxu0 0.0
    %2618 = vmatpush1.msra.mxu0 %v2585
    %2619 = vmatprep.subr.mxu0 0.0
    %2620 = vmatpush1.msra.mxu0 %v2586
    %2621 = vmatprep.subr.mxu0 0.0
    %2622 = vmatpush1.msra.mxu0 %v2587
    %2623 = vmatprep.subr.mxu0 0.0
    %2624 = vmatpush1.msra.mxu0 %v2588
    %2625 = vmatprep.subr.mxu0 0.0
    %2626 = vmatpush1.msra.mxu0 %v2589
    %2627 = vmatprep.subr.mxu0 0.0
    %2628 = vmatpush1.msra.mxu0 %v2590
    %2629 = vmatprep.subr.mxu0 0.0
    %2630 = vmatpush1.msra.mxu0 %v2591
    %2631 = vmatprep.subr.mxu0 0.0
    %2632 = vmatpush1.msra.mxu0 %v2592
    %2633 = vmatprep.subr.mxu0 0.0
    %2634 = vmatpush1.msra.mxu0 %v2593
    %2635 = vmatprep.subr.mxu0 0.0
    %2636 = vmatpush1.msra.mxu0 %v2594
    %2637 = vmatprep.subr.mxu0 0.0
    %2638 = vmatpush1.msra.mxu0 %v2595
    %2639 = vmatprep.subr.mxu0 0.0
    %2640 = vmatpush1.msra.mxu0 %v2596
    %2641 = vmatprep.subr.mxu0 0.0
    %2642 = vmatpush1.msra.mxu0 %v2597
    %2643 = vmatprep.subr.mxu0 0.0
    %2644 = vmatpush1.msra.mxu0 %v2598
    %2645 = vmatprep.subr.mxu0 0.0
    %2646 = vmatpush1.msra.mxu0 %v2599
    %2647 = vmatprep.subr.mxu0 0.0
    %2648 = vmatpush1.msra.mxu0 %v2600
    %2649 = vmatprep.subr.mxu0 0.0
    %2650 = vmatpush1.msra.mxu0 %v2601
    %2651 = vmatprep.subr.mxu0 0.0
    %2652 = vmatpush1.msra.mxu0 %v2602
    %2653 = vmatprep.subr.mxu0 0.0
    %2654 = vmatpush1.msra.mxu0 %v2603
    %2655 = vmatprep.subr.mxu0 0.0
    %2656 = vmatpush1.msra.mxu0 %v2604
    %2657 = vmatprep.subr.mxu0 0.0
    %2658 = vmatpush1.msra.mxu0 0.0
    %2659 = vmatprep.subr.mxu0 0.0
    %2660 = vmatpush1.msra.mxu0 0.0
    %2661 = vmatprep.subr.mxu0 0.0
    %2662 = vmatpush1.msra.mxu0 0.0
    %2663 = vmatprep.subr.mxu0 0.0
    %2664 = vmatpush1.msra.mxu0 0.0
    %2665 = vmatprep.subr.mxu0 0.0
    %2666 = vmatpush1.msra.mxu0 0.0
    %2667 = vmatprep.subr.mxu0 0.0
    %2668 = vmatpush1.msra.mxu0 0.0
    %2669 = vmatprep.subr.mxu0 0.0
    %2670 = vmatpush1.msra.mxu0 0.0
    %2671 = vmatprep.subr.mxu0 0.0
    %2672 = vmatpush1.msra.mxu0 0.0
    %2673 = vmatprep.mubr.f32.mxu0 %v2607
    %2674 = vmatmul.mubr.f32.gmra.mrb[0].mxu0 %v2579
    %v2675 = vpop.f32.mrb[0].mxu0
    %v2676 = vadd.f32 %v2605, %v2675
    %v2677 = vpop.f32.mrb[0].mxu0
    %2678 = vdwg.mxu0
    %v2679 = vld [vmem:[%s3] sm:$0x1]
    %v2680 = vld [vmem:[%s4] sm:$0x1]
    %v2681 = vsel %vm166, %v2676, 0.0
    %2682 = vadd.xlane.f32.xlu0 %v2681
    %v2683 = vpop.xlane.xlu0 %2682
    %v2684 = vmul.f32 %v2683, %v170
    %v2685 = vsub.f32 %v2676, %v2684
    %v2686 = vmul.f32 %v2685, %v2685
    %v2687 = vsel %vm166, %v2686, 0.0
    %2688 = vadd.xlane.f32.xlu0 %v2687
    %v2689 = vpop.xlane.xlu0 %2688
    %v2690 = vmul.f32 %v2689, %v170
    %v2691 = vadd.f32 %v2690, 1e-06
    %v2692 = vrsqrt.pop %v2691
    %v2693 = vmul.f32 %v2685, %v2692
    %v2695 = vlaneseq
    %v2696 = vshrl.u32 %v2695, 7
    %v2697 = vsub.s32 0, %v2696
    %v2698 = vrot.slane %v2679, %v2697
    %v2700 = vmul.f32 %v2693, %v2698
    %v2702 = vlaneseq
    %v2703 = vshrl.u32 %v2702, 7
    %v2704 = vsub.s32 0, %v2703
    %v2705 = vrot.slane %v2680, %v2704
    %v2707 = vadd.f32 %v2700, %v2705
    %v2708 = vld [vmem:[%s5] sm:$0xff]
    %v2709 = vld [vmem:[%s5 + $0x8] sm:$0xff]
    %v2710 = vld [vmem:[%s5 + $0x10] sm:$0xff]
    %v2711 = vld [vmem:[%s5 + $0x18] sm:$0xff]
    %v2712 = vld [vmem:[%s5 + $0x20] sm:$0xff]
    %v2713 = vld [vmem:[%s5 + $0x28] sm:$0xff]
    %v2714 = vld [vmem:[%s5 + $0x30] sm:$0xff]
    %v2715 = vld [vmem:[%s5 + $0x38] sm:$0xff]
    %v2716 = vld [vmem:[%s5 + $0x40] sm:$0xff]
    %v2717 = vld [vmem:[%s5 + $0x48] sm:$0xff]
    %v2718 = vld [vmem:[%s5 + $0x50] sm:$0xff]
    %v2719 = vld [vmem:[%s5 + $0x58] sm:$0xff]
    %v2720 = vld [vmem:[%s5 + $0x60] sm:$0xff]
    %v2721 = vld [vmem:[%s5 + $0x68] sm:$0xff]
    %v2722 = vld [vmem:[%s5 + $0x70] sm:$0xff]
    %v2723 = vld [vmem:[%s5 + $0x78] sm:$0xff]
    %v2724 = vld [vmem:[%s6] sm:$0x3]
    %v2726 = vlaneseq
    %v2727 = vshrl.u32 %v2726, 7
    %v2728 = vsub.s32 0, %v2727
    %v2729 = vrot.slane %v2724, %v2728
    %v2730 = vlaneseq
    %v2731 = vshrl.u32 %v2730, 7
    %v2732 = vsub.s32 1, %v2731
    %v2733 = vrot.slane %v2724, %v2732
    %v2737 = vsel %vm90, %v2707, 0
    %2739 = vmatprep.subr.mxu0 %v2709
    %2740 = vmatpush1.msra.mxu0 %v2708
    %2741 = vmatprep.subr.mxu0 %v2711
    %2742 = vmatpush1.msra.mxu0 %v2710
    %2743 = vmatprep.subr.mxu0 %v2713
    %2744 = vmatpush1.msra.mxu0 %v2712
    %2745 = vmatprep.subr.mxu0 %v2715
    %2746 = vmatpush1.msra.mxu0 %v2714
    %2747 = vmatprep.subr.mxu0 %v2717
    %2748 = vmatpush1.msra.mxu0 %v2716
    %2749 = vmatprep.subr.mxu0 %v2719
    %2750 = vmatpush1.msra.mxu0 %v2718
    %2751 = vmatprep.subr.mxu0 %v2721
    %2752 = vmatpush1.msra.mxu0 %v2720
    %2753 = vmatprep.subr.mxu0 %v2723
    %2754 = vmatpush1.msra.mxu0 %v2722
    %2755 = vmatprep.subr.mxu0 0.0
    %2756 = vmatpush1.msra.mxu0 0.0
    %2757 = vmatprep.subr.mxu0 0.0
    %2758 = vmatpush1.msra.mxu0 0.0
    %2759 = vmatprep.subr.mxu0 0.0
    %2760 = vmatpush1.msra.mxu0 0.0
    %2761 = vmatprep.subr.mxu0 0.0
    %2762 = vmatpush1.msra.mxu0 0.0
    %2763 = vmatprep.subr.mxu0 0.0
    %2764 = vmatpush1.msra.mxu0 0.0
    %2765 = vmatprep.subr.mxu0 0.0
    %2766 = vmatpush1.msra.mxu0 0.0
    %2767 = vmatprep.subr.mxu0 0.0
    %2768 = vmatpush1.msra.mxu0 0.0
    %2769 = vmatprep.subr.mxu0 0.0
    %2770 = vmatpush1.msra.mxu0 0.0
    %2771 = vmatprep.subr.mxu0 0.0
    %2772 = vmatpush1.msra.mxu0 0.0
    %2773 = vmatprep.subr.mxu0 0.0
    %2774 = vmatpush1.msra.mxu0 0.0
    %2775 = vmatprep.subr.mxu0 0.0
    %2776 = vmatpush1.msra.mxu0 0.0
    %2777 = vmatprep.subr.mxu0 0.0
    %2778 = vmatpush1.msra.mxu0 0.0
    %2779 = vmatprep.subr.mxu0 0.0
    %2780 = vmatpush1.msra.mxu0 0.0
    %2781 = vmatprep.subr.mxu0 0.0
    %2782 = vmatpush1.msra.mxu0 0.0
    %2783 = vmatprep.subr.mxu0 0.0
    %2784 = vmatpush1.msra.mxu0 0.0
    %2785 = vmatprep.subr.mxu0 0.0
    %2786 = vmatpush1.msra.mxu0 0.0
    %2787 = vmatprep.subr.mxu0 0.0
    %2788 = vmatpush1.msra.mxu0 0.0
    %2789 = vmatprep.subr.mxu0 0.0
    %2790 = vmatpush1.msra.mxu0 0.0
    %2791 = vmatprep.subr.mxu0 0.0
    %2792 = vmatpush1.msra.mxu0 0.0
    %2793 = vmatprep.subr.mxu0 0.0
    %2794 = vmatpush1.msra.mxu0 0.0
    %2795 = vmatprep.subr.mxu0 0.0
    %2796 = vmatpush1.msra.mxu0 0.0
    %2797 = vmatprep.subr.mxu0 0.0
    %2798 = vmatpush1.msra.mxu0 0.0
    %2799 = vmatprep.subr.mxu0 0.0
    %2800 = vmatpush1.msra.mxu0 0.0
    %2801 = vmatprep.subr.mxu0 0.0
    %2802 = vmatpush1.msra.mxu0 0.0
    %2803 = vmatprep.mubr.f32.mxu0 0.0
    %2804 = vmatmul.mubr.f32.gmra.mrb[0].mxu0 %v2737
    %v2805 = vpop.f32.mrb[0].mxu0
    %v2806 = vadd.f32 %v2729, %v2805
    %v2807 = vpop.f32.mrb[0].mxu0
    %v2808 = vadd.f32 %v2733, %v2807
    %2809 = vdwg.mxu0
    %2811 = vrot.lane.b32.xlu0 %v2806, 64
    %v2812 = vpop.permute.xlu0 %2811
    %v2813 = vsel %vm300, %v2806, 0
    %v2815 = vsel %vm300, %v2812, 0
    %2817 = vmatprep.subr.mxu0 0.0
    %2818 = vmatpush1.xpose.msra.mxu0 %v2815
    %2819 = vmatprep.subr.mxu0 0.0
    %2820 = vmatpush1.xpose.msra.mxu0 0.0
    %2821 = vmatprep.subr.mxu0 0.0
    %2822 = vmatpush1.xpose.msra.mxu0 0.0
    %2823 = vmatprep.subr.mxu0 0.0
    %2824 = vmatpush1.xpose.msra.mxu0 0.0
    %2825 = vmatprep.subr.mxu0 0.0
    %2826 = vmatpush1.xpose.msra.mxu0 0.0
    %2827 = vmatprep.subr.mxu0 0.0
    %2828 = vmatpush1.xpose.msra.mxu0 0.0
    %2829 = vmatprep.subr.mxu0 0.0
    %2830 = vmatpush1.xpose.msra.mxu0 0.0
    %2831 = vmatprep.subr.mxu0 0.0
    %2832 = vmatpush1.xpose.msra.mxu0 0.0
    %2833 = vmatprep.subr.mxu0 0.0
    %2834 = vmatpush1.xpose.msra.mxu0 0.0
    %2835 = vmatprep.subr.mxu0 0.0
    %2836 = vmatpush1.xpose.msra.mxu0 0.0
    %2837 = vmatprep.subr.mxu0 0.0
    %2838 = vmatpush1.xpose.msra.mxu0 0.0
    %2839 = vmatprep.subr.mxu0 0.0
    %2840 = vmatpush1.xpose.msra.mxu0 0.0
    %2841 = vmatprep.subr.mxu0 0.0
    %2842 = vmatpush1.xpose.msra.mxu0 0.0
    %2843 = vmatprep.subr.mxu0 0.0
    %2844 = vmatpush1.xpose.msra.mxu0 0.0
    %2845 = vmatprep.subr.mxu0 0.0
    %2846 = vmatpush1.xpose.msra.mxu0 0.0
    %2847 = vmatprep.subr.mxu0 0.0
    %2848 = vmatpush1.xpose.msra.mxu0 0.0
    %2849 = vmatprep.subr.mxu0 0.0
    %2850 = vmatpush1.xpose.msra.mxu0 0.0
    %2851 = vmatprep.subr.mxu0 0.0
    %2852 = vmatpush1.xpose.msra.mxu0 0.0
    %2853 = vmatprep.subr.mxu0 0.0
    %2854 = vmatpush1.xpose.msra.mxu0 0.0
    %2855 = vmatprep.subr.mxu0 0.0
    %2856 = vmatpush1.xpose.msra.mxu0 0.0
    %2857 = vmatprep.subr.mxu0 0.0
    %2858 = vmatpush1.xpose.msra.mxu0 0.0
    %2859 = vmatprep.subr.mxu0 0.0
    %2860 = vmatpush1.xpose.msra.mxu0 0.0
    %2861 = vmatprep.subr.mxu0 0.0
    %2862 = vmatpush1.xpose.msra.mxu0 0.0
    %2863 = vmatprep.subr.mxu0 0.0
    %2864 = vmatpush1.xpose.msra.mxu0 0.0
    %2865 = vmatprep.subr.mxu0 0.0
    %2866 = vmatpush1.xpose.msra.mxu0 0.0
    %2867 = vmatprep.subr.mxu0 0.0
    %2868 = vmatpush1.xpose.msra.mxu0 0.0
    %2869 = vmatprep.subr.mxu0 0.0
    %2870 = vmatpush1.xpose.msra.mxu0 0.0
    %2871 = vmatprep.subr.mxu0 0.0
    %2872 = vmatpush1.xpose.msra.mxu0 0.0
    %2873 = vmatprep.subr.mxu0 0.0
    %2874 = vmatpush1.xpose.msra.mxu0 0.0
    %2875 = vmatprep.subr.mxu0 0.0
    %2876 = vmatpush1.xpose.msra.mxu0 0.0
    %2877 = vmatprep.subr.mxu0 0.0
    %2878 = vmatpush1.xpose.msra.mxu0 0.0
    %2879 = vmatprep.subr.mxu0 0.0
    %2880 = vmatpush1.xpose.msra.mxu0 0.0
    %2881 = vmatprep.mubr.f32.mxu0 0.0
    %2882 = vmatmul.mubr.f32.gmra.mrb[0].mxu0 %v2813
    %v2883 = vpop.f32.mrb[0].mxu0
    %v2884 = vadd.f32 0.0, %v2883
    %v2885 = vpop.f32.mrb[0].mxu0
    %2886 = vdwg.mxu0
    %v2887 = vmul.f32 %v2884, 0.25
    %v2888 = vsel %vm376, %v2887, -inf
    %2889 = vmax.xlane.f32.xlu0 %v2888
    %v2890 = vpop.xlane.xlu0 %2889
    %v2891 = vsub.f32 %v2887, %v2890
    %v2892 = vmul.f32 %v2891, 1.442695
    %v2893 = vpow.pop %v2892
    %v2894 = vsel %vm376, %v2893, 0.0
    %2895 = vadd.xlane.f32.xlu0 %v2894
    %v2896 = vpop.xlane.xlu0 %2895
    %v2897 = vrcp.pop %v2896
    %v2898 = vmul.f32 %v2893, %v2897
    %v2900 = vsel %vm388, %v2898, 0
    %v2903 = vsel %vm392, %v2808, 0
    %2905 = vmatprep.subr.mxu0 0.0
    %2906 = vmatpush1.msra.mxu0 %v2903
    %2907 = vmatprep.subr.mxu0 0.0
    %2908 = vmatpush1.msra.mxu0 0.0
    %2909 = vmatprep.subr.mxu0 0.0
    %2910 = vmatpush1.msra.mxu0 0.0
    %2911 = vmatprep.subr.mxu0 0.0
    %2912 = vmatpush1.msra.mxu0 0.0
    %2913 = vmatprep.subr.mxu0 0.0
    %2914 = vmatpush1.msra.mxu0 0.0
    %2915 = vmatprep.subr.mxu0 0.0
    %2916 = vmatpush1.msra.mxu0 0.0
    %2917 = vmatprep.subr.mxu0 0.0
    %2918 = vmatpush1.msra.mxu0 0.0
    %2919 = vmatprep.subr.mxu0 0.0
    %2920 = vmatpush1.msra.mxu0 0.0
    %2921 = vmatprep.subr.mxu0 0.0
    %2922 = vmatpush1.msra.mxu0 0.0
    %2923 = vmatprep.subr.mxu0 0.0
    %2924 = vmatpush1.msra.mxu0 0.0
    %2925 = vmatprep.subr.mxu0 0.0
    %2926 = vmatpush1.msra.mxu0 0.0
    %2927 = vmatprep.subr.mxu0 0.0
    %2928 = vmatpush1.msra.mxu0 0.0
    %2929 = vmatprep.subr.mxu0 0.0
    %2930 = vmatpush1.msra.mxu0 0.0
    %2931 = vmatprep.subr.mxu0 0.0
    %2932 = vmatpush1.msra.mxu0 0.0
    %2933 = vmatprep.subr.mxu0 0.0
    %2934 = vmatpush1.msra.mxu0 0.0
    %2935 = vmatprep.subr.mxu0 0.0
    %2936 = vmatpush1.msra.mxu0 0.0
    %2937 = vmatprep.subr.mxu0 0.0
    %2938 = vmatpush1.msra.mxu0 0.0
    %2939 = vmatprep.subr.mxu0 0.0
    %2940 = vmatpush1.msra.mxu0 0.0
    %2941 = vmatprep.subr.mxu0 0.0
    %2942 = vmatpush1.msra.mxu0 0.0
    %2943 = vmatprep.subr.mxu0 0.0
    %2944 = vmatpush1.msra.mxu0 0.0
    %2945 = vmatprep.subr.mxu0 0.0
    %2946 = vmatpush1.msra.mxu0 0.0
    %2947 = vmatprep.subr.mxu0 0.0
    %2948 = vmatpush1.msra.mxu0 0.0
    %2949 = vmatprep.subr.mxu0 0.0
    %2950 = vmatpush1.msra.mxu0 0.0
    %2951 = vmatprep.subr.mxu0 0.0
    %2952 = vmatpush1.msra.mxu0 0.0
    %2953 = vmatprep.subr.mxu0 0.0
    %2954 = vmatpush1.msra.mxu0 0.0
    %2955 = vmatprep.subr.mxu0 0.0
    %2956 = vmatpush1.msra.mxu0 0.0
    %2957 = vmatprep.subr.mxu0 0.0
    %2958 = vmatpush1.msra.mxu0 0.0
    %2959 = vmatprep.subr.mxu0 0.0
    %2960 = vmatpush1.msra.mxu0 0.0
    %2961 = vmatprep.subr.mxu0 0.0
    %2962 = vmatpush1.msra.mxu0 0.0
    %2963 = vmatprep.subr.mxu0 0.0
    %2964 = vmatpush1.msra.mxu0 0.0
    %2965 = vmatprep.subr.mxu0 0.0
    %2966 = vmatpush1.msra.mxu0 0.0
    %2967 = vmatprep.subr.mxu0 0.0
    %2968 = vmatpush1.msra.mxu0 0.0
    %2969 = vmatprep.mubr.f32.mxu0 0.0
    %2970 = vmatmul.mubr.f32.gmra.mrb[0].mxu0 %v2900
    %v2971 = vpop.f32.mrb[0].mxu0
    %v2972 = vadd.f32 0.0, %v2971
    %v2973 = vpop.f32.mrb[0].mxu0
    %2974 = vdwg.mxu0
    %2975 = vrot.lane.b32.xlu0 %v2806, 112
    %v2976 = vpop.permute.xlu0 %2975
    %2977 = vrot.lane.b32.xlu0 %v2806, 48
    %v2978 = vpop.permute.xlu0 %2977
    %v2979 = vsel %vm300, %v2976, 0
    %v2981 = vsel %vm300, %v2978, 0
    %2983 = vmatprep.subr.mxu0 0.0
    %2984 = vmatpush1.xpose.msra.mxu0 %v2981
    %2985 = vmatprep.subr.mxu0 0.0
    %2986 = vmatpush1.xpose.msra.mxu0 0.0
    %2987 = vmatprep.subr.mxu0 0.0
    %2988 = vmatpush1.xpose.msra.mxu0 0.0
    %2989 = vmatprep.subr.mxu0 0.0
    %2990 = vmatpush1.xpose.msra.mxu0 0.0
    %2991 = vmatprep.subr.mxu0 0.0
    %2992 = vmatpush1.xpose.msra.mxu0 0.0
    %2993 = vmatprep.subr.mxu0 0.0
    %2994 = vmatpush1.xpose.msra.mxu0 0.0
    %2995 = vmatprep.subr.mxu0 0.0
    %2996 = vmatpush1.xpose.msra.mxu0 0.0
    %2997 = vmatprep.subr.mxu0 0.0
    %2998 = vmatpush1.xpose.msra.mxu0 0.0
    %2999 = vmatprep.subr.mxu0 0.0
    %3000 = vmatpush1.xpose.msra.mxu0 0.0
    %3001 = vmatprep.subr.mxu0 0.0
    %3002 = vmatpush1.xpose.msra.mxu0 0.0
    %3003 = vmatprep.subr.mxu0 0.0
    %3004 = vmatpush1.xpose.msra.mxu0 0.0
    %3005 = vmatprep.subr.mxu0 0.0
    %3006 = vmatpush1.xpose.msra.mxu0 0.0
    %3007 = vmatprep.subr.mxu0 0.0
    %3008 = vmatpush1.xpose.msra.mxu0 0.0
    %3009 = vmatprep.subr.mxu0 0.0
    %3010 = vmatpush1.xpose.msra.mxu0 0.0
    %3011 = vmatprep.subr.mxu0 0.0
    %3012 = vmatpush1.xpose.msra.mxu0 0.0
    %3013 = vmatprep.subr.mxu0 0.0
    %3014 = vmatpush1.xpose.msra.mxu0 0.0
    %3015 = vmatprep.subr.mxu0 0.0
    %3016 = vmatpush1.xpose.msra.mxu0 0.0
    %3017 = vmatprep.subr.mxu0 0.0
    %3018 = vmatpush1.xpose.msra.mxu0 0.0
    %3019 = vmatprep.subr.mxu0 0.0
    %3020 = vmatpush1.xpose.msra.mxu0 0.0
    %3021 = vmatprep.subr.mxu0 0.0
    %3022 = vmatpush1.xpose.msra.mxu0 0.0
    %3023 = vmatprep.subr.mxu0 0.0
    %3024 = vmatpush1.xpose.msra.mxu0 0.0
    %3025 = vmatprep.subr.mxu0 0.0
    %3026 = vmatpush1.xpose.msra.mxu0 0.0
    %3027 = vmatprep.subr.mxu0 0.0
    %3028 = vmatpush1.xpose.msra.mxu0 0.0
    %3029 = vmatprep.subr.mxu0 0.0
    %3030 = vmatpush1.xpose.msra.mxu0 0.0
    %3031 = vmatprep.subr.mxu0 0.0
    %3032 = vmatpush1.xpose.msra.mxu0 0.0
    %3033 = vmatprep.subr.mxu0 0.0
    %3034 = vmatpush1.xpose.msra.mxu0 0.0
    %3035 = vmatprep.subr.mxu0 0.0
    %3036 = vmatpush1.xpose.msra.mxu0 0.0
    %3037 = vmatprep.subr.mxu0 0.0
    %3038 = vmatpush1.xpose.msra.mxu0 0.0
    %3039 = vmatprep.subr.mxu0 0.0
    %3040 = vmatpush1.xpose.msra.mxu0 0.0
    %3041 = vmatprep.subr.mxu0 0.0
    %3042 = vmatpush1.xpose.msra.mxu0 0.0
    %3043 = vmatprep.subr.mxu0 0.0
    %3044 = vmatpush1.xpose.msra.mxu0 0.0
    %3045 = vmatprep.subr.mxu0 0.0
    %3046 = vmatpush1.xpose.msra.mxu0 0.0
    %3047 = vmatprep.mubr.f32.mxu0 0.0
    %3048 = vmatmul.mubr.f32.gmra.mrb[0].mxu0 %v2979
    %v3049 = vpop.f32.mrb[0].mxu0
    %v3050 = vadd.f32 0.0, %v3049
    %v3051 = vpop.f32.mrb[0].mxu0
    %3052 = vdwg.mxu0
    %v3053 = vmul.f32 %v3050, 0.25
    %v3054 = vsel %vm376, %v3053, -inf
    %3055 = vmax.xlane.f32.xlu0 %v3054
    %v3056 = vpop.xlane.xlu0 %3055
    %v3057 = vsub.f32 %v3053, %v3056
    %v3058 = vmul.f32 %v3057, 1.442695
    %v3059 = vpow.pop %v3058
    %v3060 = vsel %vm376, %v3059, 0.0
    %3061 = vadd.xlane.f32.xlu0 %v3060
    %v3062 = vpop.xlane.xlu0 %3061
    %v3063 = vrcp.pop %v3062
    %v3064 = vmul.f32 %v3059, %v3063
    %3065 = vrot.lane.b32.xlu0 %v2808, 112
    %v3066 = vpop.permute.xlu0 %3065
    %v3068 = vsel %vm388, %v3064, 0
    %v3070 = vsel %vm392, %v3066, 0
    %3072 = vmatprep.subr.mxu0 0.0
    %3073 = vmatpush1.msra.mxu0 %v3070
    %3074 = vmatprep.subr.mxu0 0.0
    %3075 = vmatpush1.msra.mxu0 0.0
    %3076 = vmatprep.subr.mxu0 0.0
    %3077 = vmatpush1.msra.mxu0 0.0
    %3078 = vmatprep.subr.mxu0 0.0
    %3079 = vmatpush1.msra.mxu0 0.0
    %3080 = vmatprep.subr.mxu0 0.0
    %3081 = vmatpush1.msra.mxu0 0.0
    %3082 = vmatprep.subr.mxu0 0.0
    %3083 = vmatpush1.msra.mxu0 0.0
    %3084 = vmatprep.subr.mxu0 0.0
    %3085 = vmatpush1.msra.mxu0 0.0
    %3086 = vmatprep.subr.mxu0 0.0
    %3087 = vmatpush1.msra.mxu0 0.0
    %3088 = vmatprep.subr.mxu0 0.0
    %3089 = vmatpush1.msra.mxu0 0.0
    %3090 = vmatprep.subr.mxu0 0.0
    %3091 = vmatpush1.msra.mxu0 0.0
    %3092 = vmatprep.subr.mxu0 0.0
    %3093 = vmatpush1.msra.mxu0 0.0
    %3094 = vmatprep.subr.mxu0 0.0
    %3095 = vmatpush1.msra.mxu0 0.0
    %3096 = vmatprep.subr.mxu0 0.0
    %3097 = vmatpush1.msra.mxu0 0.0
    %3098 = vmatprep.subr.mxu0 0.0
    %3099 = vmatpush1.msra.mxu0 0.0
    %3100 = vmatprep.subr.mxu0 0.0
    %3101 = vmatpush1.msra.mxu0 0.0
    %3102 = vmatprep.subr.mxu0 0.0
    %3103 = vmatpush1.msra.mxu0 0.0
    %3104 = vmatprep.subr.mxu0 0.0
    %3105 = vmatpush1.msra.mxu0 0.0
    %3106 = vmatprep.subr.mxu0 0.0
    %3107 = vmatpush1.msra.mxu0 0.0
    %3108 = vmatprep.subr.mxu0 0.0
    %3109 = vmatpush1.msra.mxu0 0.0
    %3110 = vmatprep.subr.mxu0 0.0
    %3111 = vmatpush1.msra.mxu0 0.0
    %3112 = vmatprep.subr.mxu0 0.0
    %3113 = vmatpush1.msra.mxu0 0.0
    %3114 = vmatprep.subr.mxu0 0.0
    %3115 = vmatpush1.msra.mxu0 0.0
    %3116 = vmatprep.subr.mxu0 0.0
    %3117 = vmatpush1.msra.mxu0 0.0
    %3118 = vmatprep.subr.mxu0 0.0
    %3119 = vmatpush1.msra.mxu0 0.0
    %3120 = vmatprep.subr.mxu0 0.0
    %3121 = vmatpush1.msra.mxu0 0.0
    %3122 = vmatprep.subr.mxu0 0.0
    %3123 = vmatpush1.msra.mxu0 0.0
    %3124 = vmatprep.subr.mxu0 0.0
    %3125 = vmatpush1.msra.mxu0 0.0
    %3126 = vmatprep.subr.mxu0 0.0
    %3127 = vmatpush1.msra.mxu0 0.0
    %3128 = vmatprep.subr.mxu0 0.0
    %3129 = vmatpush1.msra.mxu0 0.0
    %3130 = vmatprep.subr.mxu0 0.0
    %3131 = vmatpush1.msra.mxu0 0.0
    %3132 = vmatprep.subr.mxu0 0.0
    %3133 = vmatpush1.msra.mxu0 0.0
    %3134 = vmatprep.subr.mxu0 0.0
    %3135 = vmatpush1.msra.mxu0 0.0
    %3136 = vmatprep.mubr.f32.mxu0 0.0
    %3137 = vmatmul.mubr.f32.gmra.mrb[0].mxu0 %v3068
    %v3138 = vpop.f32.mrb[0].mxu0
    %v3139 = vadd.f32 0.0, %v3138
    %v3140 = vpop.f32.mrb[0].mxu0
    %3141 = vdwg.mxu0
    %3142 = vrot.lane.b32.xlu0 %v2806, 96
    %v3143 = vpop.permute.xlu0 %3142
    %3144 = vrot.lane.b32.xlu0 %v2806, 32
    %v3145 = vpop.permute.xlu0 %3144
    %v3146 = vsel %vm300, %v3143, 0
    %v3148 = vsel %vm300, %v3145, 0
    %3150 = vmatprep.subr.mxu0 0.0
    %3151 = vmatpush1.xpose.msra.mxu0 %v3148
    %3152 = vmatprep.subr.mxu0 0.0
    %3153 = vmatpush1.xpose.msra.mxu0 0.0
    %3154 = vmatprep.subr.mxu0 0.0
    %3155 = vmatpush1.xpose.msra.mxu0 0.0
    %3156 = vmatprep.subr.mxu0 0.0
    %3157 = vmatpush1.xpose.msra.mxu0 0.0
    %3158 = vmatprep.subr.mxu0 0.0
    %3159 = vmatpush1.xpose.msra.mxu0 0.0
    %3160 = vmatprep.subr.mxu0 0.0
    %3161 = vmatpush1.xpose.msra.mxu0 0.0
    %3162 = vmatprep.subr.mxu0 0.0
    %3163 = vmatpush1.xpose.msra.mxu0 0.0
    %3164 = vmatprep.subr.mxu0 0.0
    %3165 = vmatpush1.xpose.msra.mxu0 0.0
    %3166 = vmatprep.subr.mxu0 0.0
    %3167 = vmatpush1.xpose.msra.mxu0 0.0
    %3168 = vmatprep.subr.mxu0 0.0
    %3169 = vmatpush1.xpose.msra.mxu0 0.0
    %3170 = vmatprep.subr.mxu0 0.0
    %3171 = vmatpush1.xpose.msra.mxu0 0.0
    %3172 = vmatprep.subr.mxu0 0.0
    %3173 = vmatpush1.xpose.msra.mxu0 0.0
    %3174 = vmatprep.subr.mxu0 0.0
    %3175 = vmatpush1.xpose.msra.mxu0 0.0
    %3176 = vmatprep.subr.mxu0 0.0
    %3177 = vmatpush1.xpose.msra.mxu0 0.0
    %3178 = vmatprep.subr.mxu0 0.0
    %3179 = vmatpush1.xpose.msra.mxu0 0.0
    %3180 = vmatprep.subr.mxu0 0.0
    %3181 = vmatpush1.xpose.msra.mxu0 0.0
    %3182 = vmatprep.subr.mxu0 0.0
    %3183 = vmatpush1.xpose.msra.mxu0 0.0
    %3184 = vmatprep.subr.mxu0 0.0
    %3185 = vmatpush1.xpose.msra.mxu0 0.0
    %3186 = vmatprep.subr.mxu0 0.0
    %3187 = vmatpush1.xpose.msra.mxu0 0.0
    %3188 = vmatprep.subr.mxu0 0.0
    %3189 = vmatpush1.xpose.msra.mxu0 0.0
    %3190 = vmatprep.subr.mxu0 0.0
    %3191 = vmatpush1.xpose.msra.mxu0 0.0
    %3192 = vmatprep.subr.mxu0 0.0
    %3193 = vmatpush1.xpose.msra.mxu0 0.0
    %3194 = vmatprep.subr.mxu0 0.0
    %3195 = vmatpush1.xpose.msra.mxu0 0.0
    %3196 = vmatprep.subr.mxu0 0.0
    %3197 = vmatpush1.xpose.msra.mxu0 0.0
    %3198 = vmatprep.subr.mxu0 0.0
    %3199 = vmatpush1.xpose.msra.mxu0 0.0
    %3200 = vmatprep.subr.mxu0 0.0
    %3201 = vmatpush1.xpose.msra.mxu0 0.0
    %3202 = vmatprep.subr.mxu0 0.0
    %3203 = vmatpush1.xpose.msra.mxu0 0.0
    %3204 = vmatprep.subr.mxu0 0.0
    %3205 = vmatpush1.xpose.msra.mxu0 0.0
    %3206 = vmatprep.subr.mxu0 0.0
    %3207 = vmatpush1.xpose.msra.mxu0 0.0
    %3208 = vmatprep.subr.mxu0 0.0
    %3209 = vmatpush1.xpose.msra.mxu0 0.0
    %3210 = vmatprep.subr.mxu0 0.0
    %3211 = vmatpush1.xpose.msra.mxu0 0.0
    %3212 = vmatprep.subr.mxu0 0.0
    %3213 = vmatpush1.xpose.msra.mxu0 0.0
    %3214 = vmatprep.mubr.f32.mxu0 0.0
    %3215 = vmatmul.mubr.f32.gmra.mrb[0].mxu0 %v3146
    %v3216 = vpop.f32.mrb[0].mxu0
    %v3217 = vadd.f32 0.0, %v3216
    %v3218 = vpop.f32.mrb[0].mxu0
    %3219 = vdwg.mxu0
    %v3220 = vmul.f32 %v3217, 0.25
    %v3221 = vsel %vm376, %v3220, -inf
    %3222 = vmax.xlane.f32.xlu0 %v3221
    %v3223 = vpop.xlane.xlu0 %3222
    %v3224 = vsub.f32 %v3220, %v3223
    %v3225 = vmul.f32 %v3224, 1.442695
    %v3226 = vpow.pop %v3225
    %v3227 = vsel %vm376, %v3226, 0.0
    %3228 = vadd.xlane.f32.xlu0 %v3227
    %v3229 = vpop.xlane.xlu0 %3228
    %v3230 = vrcp.pop %v3229
    %v3231 = vmul.f32 %v3226, %v3230
    %3232 = vrot.lane.b32.xlu0 %v2808, 96
    %v3233 = vpop.permute.xlu0 %3232
    %v3235 = vsel %vm388, %v3231, 0
    %v3237 = vsel %vm392, %v3233, 0
    %3239 = vmatprep.subr.mxu0 0.0
    %3240 = vmatpush1.msra.mxu0 %v3237
    %3241 = vmatprep.subr.mxu0 0.0
    %3242 = vmatpush1.msra.mxu0 0.0
    %3243 = vmatprep.subr.mxu0 0.0
    %3244 = vmatpush1.msra.mxu0 0.0
    %3245 = vmatprep.subr.mxu0 0.0
    %3246 = vmatpush1.msra.mxu0 0.0
    %3247 = vmatprep.subr.mxu0 0.0
    %3248 = vmatpush1.msra.mxu0 0.0
    %3249 = vmatprep.subr.mxu0 0.0
    %3250 = vmatpush1.msra.mxu0 0.0
    %3251 = vmatprep.subr.mxu0 0.0
    %3252 = vmatpush1.msra.mxu0 0.0
    %3253 = vmatprep.subr.mxu0 0.0
    %3254 = vmatpush1.msra.mxu0 0.0
    %3255 = vmatprep.subr.mxu0 0.0
    %3256 = vmatpush1.msra.mxu0 0.0
    %3257 = vmatprep.subr.mxu0 0.0
    %3258 = vmatpush1.msra.mxu0 0.0
    %3259 = vmatprep.subr.mxu0 0.0
    %3260 = vmatpush1.msra.mxu0 0.0
    %3261 = vmatprep.subr.mxu0 0.0
    %3262 = vmatpush1.msra.mxu0 0.0
    %3263 = vmatprep.subr.mxu0 0.0
    %3264 = vmatpush1.msra.mxu0 0.0
    %3265 = vmatprep.subr.mxu0 0.0
    %3266 = vmatpush1.msra.mxu0 0.0
    %3267 = vmatprep.subr.mxu0 0.0
    %3268 = vmatpush1.msra.mxu0 0.0
    %3269 = vmatprep.subr.mxu0 0.0
    %3270 = vmatpush1.msra.mxu0 0.0
    %3271 = vmatprep.subr.mxu0 0.0
    %3272 = vmatpush1.msra.mxu0 0.0
    %3273 = vmatprep.subr.mxu0 0.0
    %3274 = vmatpush1.msra.mxu0 0.0
    %3275 = vmatprep.subr.mxu0 0.0
    %3276 = vmatpush1.msra.mxu0 0.0
    %3277 = vmatprep.subr.mxu0 0.0
    %3278 = vmatpush1.msra.mxu0 0.0
    %3279 = vmatprep.subr.mxu0 0.0
    %3280 = vmatpush1.msra.mxu0 0.0
    %3281 = vmatprep.subr.mxu0 0.0
    %3282 = vmatpush1.msra.mxu0 0.0
    %3283 = vmatprep.subr.mxu0 0.0
    %3284 = vmatpush1.msra.mxu0 0.0
    %3285 = vmatprep.subr.mxu0 0.0
    %3286 = vmatpush1.msra.mxu0 0.0
    %3287 = vmatprep.subr.mxu0 0.0
    %3288 = vmatpush1.msra.mxu0 0.0
    %3289 = vmatprep.subr.mxu0 0.0
    %3290 = vmatpush1.msra.mxu0 0.0
    %3291 = vmatprep.subr.mxu0 0.0
    %3292 = vmatpush1.msra.mxu0 0.0
    %3293 = vmatprep.subr.mxu0 0.0
    %3294 = vmatpush1.msra.mxu0 0.0
    %3295 = vmatprep.subr.mxu0 0.0
    %3296 = vmatpush1.msra.mxu0 0.0
    %3297 = vmatprep.subr.mxu0 0.0
    %3298 = vmatpush1.msra.mxu0 0.0
    %3299 = vmatprep.subr.mxu0 0.0
    %3300 = vmatpush1.msra.mxu0 0.0
    %3301 = vmatprep.subr.mxu0 0.0
    %3302 = vmatpush1.msra.mxu0 0.0
    %3303 = vmatprep.mubr.f32.mxu0 0.0
    %3304 = vmatmul.mubr.f32.gmra.mrb[0].mxu0 %v3235
    %v3305 = vpop.f32.mrb[0].mxu0
    %v3306 = vadd.f32 0.0, %v3305
    %v3307 = vpop.f32.mrb[0].mxu0
    %3308 = vdwg.mxu0
    %3309 = vrot.lane.b32.xlu0 %v2806, 80
    %v3310 = vpop.permute.xlu0 %3309
    %3311 = vrot.lane.b32.xlu0 %v2806, 16
    %v3312 = vpop.permute.xlu0 %3311
    %v3313 = vsel %vm300, %v3310, 0
    %v3315 = vsel %vm300, %v3312, 0
    %3317 = vmatprep.subr.mxu0 0.0
    %3318 = vmatpush1.xpose.msra.mxu0 %v3315
    %3319 = vmatprep.subr.mxu0 0.0
    %3320 = vmatpush1.xpose.msra.mxu0 0.0
    %3321 = vmatprep.subr.mxu0 0.0
    %3322 = vmatpush1.xpose.msra.mxu0 0.0
    %3323 = vmatprep.subr.mxu0 0.0
    %3324 = vmatpush1.xpose.msra.mxu0 0.0
    %3325 = vmatprep.subr.mxu0 0.0
    %3326 = vmatpush1.xpose.msra.mxu0 0.0
    %3327 = vmatprep.subr.mxu0 0.0
    %3328 = vmatpush1.xpose.msra.mxu0 0.0
    %3329 = vmatprep.subr.mxu0 0.0
    %3330 = vmatpush1.xpose.msra.mxu0 0.0
    %3331 = vmatprep.subr.mxu0 0.0
    %3332 = vmatpush1.xpose.msra.mxu0 0.0
    %3333 = vmatprep.subr.mxu0 0.0
    %3334 = vmatpush1.xpose.msra.mxu0 0.0
    %3335 = vmatprep.subr.mxu0 0.0
    %3336 = vmatpush1.xpose.msra.mxu0 0.0
    %3337 = vmatprep.subr.mxu0 0.0
    %3338 = vmatpush1.xpose.msra.mxu0 0.0
    %3339 = vmatprep.subr.mxu0 0.0
    %3340 = vmatpush1.xpose.msra.mxu0 0.0
    %3341 = vmatprep.subr.mxu0 0.0
    %3342 = vmatpush1.xpose.msra.mxu0 0.0
    %3343 = vmatprep.subr.mxu0 0.0
    %3344 = vmatpush1.xpose.msra.mxu0 0.0
    %3345 = vmatprep.subr.mxu0 0.0
    %3346 = vmatpush1.xpose.msra.mxu0 0.0
    %3347 = vmatprep.subr.mxu0 0.0
    %3348 = vmatpush1.xpose.msra.mxu0 0.0
    %3349 = vmatprep.subr.mxu0 0.0
    %3350 = vmatpush1.xpose.msra.mxu0 0.0
    %3351 = vmatprep.subr.mxu0 0.0
    %3352 = vmatpush1.xpose.msra.mxu0 0.0
    %3353 = vmatprep.subr.mxu0 0.0
    %3354 = vmatpush1.xpose.msra.mxu0 0.0
    %3355 = vmatprep.subr.mxu0 0.0
    %3356 = vmatpush1.xpose.msra.mxu0 0.0
    %3357 = vmatprep.subr.mxu0 0.0
    %3358 = vmatpush1.xpose.msra.mxu0 0.0
    %3359 = vmatprep.subr.mxu0 0.0
    %3360 = vmatpush1.xpose.msra.mxu0 0.0
    %3361 = vmatprep.subr.mxu0 0.0
    %3362 = vmatpush1.xpose.msra.mxu0 0.0
    %3363 = vmatprep.subr.mxu0 0.0
    %3364 = vmatpush1.xpose.msra.mxu0 0.0
    %3365 = vmatprep.subr.mxu0 0.0
    %3366 = vmatpush1.xpose.msra.mxu0 0.0
    %3367 = vmatprep.subr.mxu0 0.0
    %3368 = vmatpush1.xpose.msra.mxu0 0.0
    %3369 = vmatprep.subr.mxu0 0.0
    %3370 = vmatpush1.xpose.msra.mxu0 0.0
    %3371 = vmatprep.subr.mxu0 0.0
    %3372 = vmatpush1.xpose.msra.mxu0 0.0
    %3373 = vmatprep.subr.mxu0 0.0
    %3374 = vmatpush1.xpose.msra.mxu0 0.0
    %3375 = vmatprep.subr.mxu0 0.0
    %3376 = vmatpush1.xpose.msra.mxu0 0.0
    %3377 = vmatprep.subr.mxu0 0.0
    %3378 = vmatpush1.xpose.msra.mxu0 0.0
    %3379 = vmatprep.subr.mxu0 0.0
    %3380 = vmatpush1.xpose.msra.mxu0 0.0
    %3381 = vmatprep.mubr.f32.mxu0 0.0
    %3382 = vmatmul.mubr.f32.gmra.mrb[0].mxu0 %v3313
    %v3383 = vpop.f32.mrb[0].mxu0
    %v3384 = vadd.f32 0.0, %v3383
    %v3385 = vpop.f32.mrb[0].mxu0
    %3386 = vdwg.mxu0
    %v3387 = vmul.f32 %v3384, 0.25
    %v3388 = vsel %vm376, %v3387, -inf
    %3389 = vmax.xlane.f32.xlu0 %v3388
    %v3390 = vpop.xlane.xlu0 %3389
    %v3391 = vsub.f32 %v3387, %v3390
    %v3392 = vmul.f32 %v3391, 1.442695
    %v3393 = vpow.pop %v3392
    %v3394 = vsel %vm376, %v3393, 0.0
    %3395 = vadd.xlane.f32.xlu0 %v3394
    %v3396 = vpop.xlane.xlu0 %3395
    %v3397 = vrcp.pop %v3396
    %v3398 = vmul.f32 %v3393, %v3397
    %3399 = vrot.lane.b32.xlu0 %v2808, 80
    %v3400 = vpop.permute.xlu0 %3399
    %v3402 = vsel %vm388, %v3398, 0
    %v3404 = vsel %vm392, %v3400, 0
    %3406 = vmatprep.subr.mxu0 0.0
    %3407 = vmatpush1.msra.mxu0 %v3404
    %3408 = vmatprep.subr.mxu0 0.0
    %3409 = vmatpush1.msra.mxu0 0.0
    %3410 = vmatprep.subr.mxu0 0.0
    %3411 = vmatpush1.msra.mxu0 0.0
    %3412 = vmatprep.subr.mxu0 0.0
    %3413 = vmatpush1.msra.mxu0 0.0
    %3414 = vmatprep.subr.mxu0 0.0
    %3415 = vmatpush1.msra.mxu0 0.0
    %3416 = vmatprep.subr.mxu0 0.0
    %3417 = vmatpush1.msra.mxu0 0.0
    %3418 = vmatprep.subr.mxu0 0.0
    %3419 = vmatpush1.msra.mxu0 0.0
    %3420 = vmatprep.subr.mxu0 0.0
    %3421 = vmatpush1.msra.mxu0 0.0
    %3422 = vmatprep.subr.mxu0 0.0
    %3423 = vmatpush1.msra.mxu0 0.0
    %3424 = vmatprep.subr.mxu0 0.0
    %3425 = vmatpush1.msra.mxu0 0.0
    %3426 = vmatprep.subr.mxu0 0.0
    %3427 = vmatpush1.msra.mxu0 0.0
    %3428 = vmatprep.subr.mxu0 0.0
    %3429 = vmatpush1.msra.mxu0 0.0
    %3430 = vmatprep.subr.mxu0 0.0
    %3431 = vmatpush1.msra.mxu0 0.0
    %3432 = vmatprep.subr.mxu0 0.0
    %3433 = vmatpush1.msra.mxu0 0.0
    %3434 = vmatprep.subr.mxu0 0.0
    %3435 = vmatpush1.msra.mxu0 0.0
    %3436 = vmatprep.subr.mxu0 0.0
    %3437 = vmatpush1.msra.mxu0 0.0
    %3438 = vmatprep.subr.mxu0 0.0
    %3439 = vmatpush1.msra.mxu0 0.0
    %3440 = vmatprep.subr.mxu0 0.0
    %3441 = vmatpush1.msra.mxu0 0.0
    %3442 = vmatprep.subr.mxu0 0.0
    %3443 = vmatpush1.msra.mxu0 0.0
    %3444 = vmatprep.subr.mxu0 0.0
    %3445 = vmatpush1.msra.mxu0 0.0
    %3446 = vmatprep.subr.mxu0 0.0
    %3447 = vmatpush1.msra.mxu0 0.0
    %3448 = vmatprep.subr.mxu0 0.0
    %3449 = vmatpush1.msra.mxu0 0.0
    %3450 = vmatprep.subr.mxu0 0.0
    %3451 = vmatpush1.msra.mxu0 0.0
    %3452 = vmatprep.subr.mxu0 0.0
    %3453 = vmatpush1.msra.mxu0 0.0
    %3454 = vmatprep.subr.mxu0 0.0
    %3455 = vmatpush1.msra.mxu0 0.0
    %3456 = vmatprep.subr.mxu0 0.0
    %3457 = vmatpush1.msra.mxu0 0.0
    %3458 = vmatprep.subr.mxu0 0.0
    %3459 = vmatpush1.msra.mxu0 0.0
    %3460 = vmatprep.subr.mxu0 0.0
    %3461 = vmatpush1.msra.mxu0 0.0
    %3462 = vmatprep.subr.mxu0 0.0
    %3463 = vmatpush1.msra.mxu0 0.0
    %3464 = vmatprep.subr.mxu0 0.0
    %3465 = vmatpush1.msra.mxu0 0.0
    %3466 = vmatprep.subr.mxu0 0.0
    %3467 = vmatpush1.msra.mxu0 0.0
    %3468 = vmatprep.subr.mxu0 0.0
    %3469 = vmatpush1.msra.mxu0 0.0
    %3470 = vmatprep.mubr.f32.mxu0 0.0
    %3471 = vmatmul.mubr.f32.gmra.mrb[0].mxu0 %v3402
    %v3472 = vpop.f32.mrb[0].mxu0
    %v3473 = vadd.f32 0.0, %v3472
    %v3474 = vpop.f32.mrb[0].mxu0
    %3475 = vdwg.mxu0
    %3477 = vrot.lane.b32.xlu0 %v3139, 16
    %v3478 = vpop.permute.xlu0 %3477
    %3481 = vrot.lane.b32.xlu0 %v3306, 32
    %v3482 = vpop.permute.xlu0 %3481
    %3485 = vrot.lane.b32.xlu0 %v3473, 48
    %v3486 = vpop.permute.xlu0 %3485
    %v3488 = vsel %vm300, %v2972, %v3478
    %v3489 = vsel %vm980, %v3488, %v3482
    %v3490 = vsel %vm982, %v3489, %v3486
    %v3491 = vld [vmem:[%s7] sm:$0xff]
    %v3492 = vld [vmem:[%s7 + $0x8] sm:$0xff]
    %v3493 = vld [vmem:[%s7 + $0x10] sm:$0xff]
    %v3494 = vld [vmem:[%s7 + $0x18] sm:$0xff]
    %v3495 = vld [vmem:[%s7 + $0x20] sm:$0xff]
    %v3496 = vld [vmem:[%s7 + $0x28] sm:$0xff]
    %v3497 = vld [vmem:[%s7 + $0x30] sm:$0xff]
    %v3498 = vld [vmem:[%s7 + $0x38] sm:$0xff]
    %v3500 = vsel %vm90, %v3490, 0
    %3502 = vmatprep.subr.mxu0 0.0
    %3503 = vmatpush1.msra.mxu0 %v3491
    %3504 = vmatprep.subr.mxu0 0.0
    %3505 = vmatpush1.msra.mxu0 %v3492
    %3506 = vmatprep.subr.mxu0 0.0
    %3507 = vmatpush1.msra.mxu0 %v3493
    %3508 = vmatprep.subr.mxu0 0.0
    %3509 = vmatpush1.msra.mxu0 %v3494
    %3510 = vmatprep.subr.mxu0 0.0
    %3511 = vmatpush1.msra.mxu0 %v3495
    %3512 = vmatprep.subr.mxu0 0.0
    %3513 = vmatpush1.msra.mxu0 %v3496
    %3514 = vmatprep.subr.mxu0 0.0
    %3515 = vmatpush1.msra.mxu0 %v3497
    %3516 = vmatprep.subr.mxu0 0.0
    %3517 = vmatpush1.msra.mxu0 %v3498
    %3518 = vmatprep.subr.mxu0 0.0
    %3519 = vmatpush1.msra.mxu0 0.0
    %3520 = vmatprep.subr.mxu0 0.0
    %3521 = vmatpush1.msra.mxu0 0.0
    %3522 = vmatprep.subr.mxu0 0.0
    %3523 = vmatpush1.msra.mxu0 0.0
    %3524 = vmatprep.subr.mxu0 0.0
    %3525 = vmatpush1.msra.mxu0 0.0
    %3526 = vmatprep.subr.mxu0 0.0
    %3527 = vmatpush1.msra.mxu0 0.0
    %3528 = vmatprep.subr.mxu0 0.0
    %3529 = vmatpush1.msra.mxu0 0.0
    %3530 = vmatprep.subr.mxu0 0.0
    %3531 = vmatpush1.msra.mxu0 0.0
    %3532 = vmatprep.subr.mxu0 0.0
    %3533 = vmatpush1.msra.mxu0 0.0
    %3534 = vmatprep.subr.mxu0 0.0
    %3535 = vmatpush1.msra.mxu0 0.0
    %3536 = vmatprep.subr.mxu0 0.0
    %3537 = vmatpush1.msra.mxu0 0.0
    %3538 = vmatprep.subr.mxu0 0.0
    %3539 = vmatpush1.msra.mxu0 0.0
    %3540 = vmatprep.subr.mxu0 0.0
    %3541 = vmatpush1.msra.mxu0 0.0
    %3542 = vmatprep.subr.mxu0 0.0
    %3543 = vmatpush1.msra.mxu0 0.0
    %3544 = vmatprep.subr.mxu0 0.0
    %3545 = vmatpush1.msra.mxu0 0.0
    %3546 = vmatprep.subr.mxu0 0.0
    %3547 = vmatpush1.msra.mxu0 0.0
    %3548 = vmatprep.subr.mxu0 0.0
    %3549 = vmatpush1.msra.mxu0 0.0
    %3550 = vmatprep.subr.mxu0 0.0
    %3551 = vmatpush1.msra.mxu0 0.0
    %3552 = vmatprep.subr.mxu0 0.0
    %3553 = vmatpush1.msra.mxu0 0.0
    %3554 = vmatprep.subr.mxu0 0.0
    %3555 = vmatpush1.msra.mxu0 0.0
    %3556 = vmatprep.subr.mxu0 0.0
    %3557 = vmatpush1.msra.mxu0 0.0
    %3558 = vmatprep.subr.mxu0 0.0
    %3559 = vmatpush1.msra.mxu0 0.0
    %3560 = vmatprep.subr.mxu0 0.0
    %3561 = vmatpush1.msra.mxu0 0.0
    %3562 = vmatprep.subr.mxu0 0.0
    %3563 = vmatpush1.msra.mxu0 0.0
    %3564 = vmatprep.subr.mxu0 0.0
    %3565 = vmatpush1.msra.mxu0 0.0
    %3566 = vmatprep.mubr.f32.mxu0 0.0
    %3567 = vmatmul.mubr.f32.gmra.mrb[0].mxu0 %v3500
    %v3568 = vpop.f32.mrb[0].mxu0
    %v3569 = vadd.f32 0.0, %v3568
    %v3570 = vpop.f32.mrb[0].mxu0
    %3571 = vdwg.mxu0
    %v3572 = vadd.f32 %v2676, %v3569
    %v3573 = vld [vmem:[%s8] sm:$0x1]
    %v3575 = vlaneseq
    %v3576 = vshrl.u32 %v3575, 7
    %v3577 = vsub.s32 0, %v3576
    %v3578 = vrot.slane %v3573, %v3577
    %v3580 = vadd.f32 %v3572, %v3578
    %v3581 = vld [vmem:[%s9] sm:$0x1]
    %v3582 = vld [vmem:[%s10] sm:$0x1]
    %v3583 = vsel %vm166, %v3580, 0.0
    %3584 = vadd.xlane.f32.xlu0 %v3583
    %v3585 = vpop.xlane.xlu0 %3584
    %v3586 = vmul.f32 %v3585, %v170
    %v3587 = vsub.f32 %v3580, %v3586
    %v3588 = vmul.f32 %v3587, %v3587
    %v3589 = vsel %vm166, %v3588, 0.0
    %3590 = vadd.xlane.f32.xlu0 %v3589
    %v3591 = vpop.xlane.xlu0 %3590
    %v3592 = vmul.f32 %v3591, %v170
    %v3593 = vadd.f32 %v3592, 1e-06
    %v3594 = vrsqrt.pop %v3593
    %v3595 = vmul.f32 %v3587, %v3594
    %v3597 = vlaneseq
    %v3598 = vshrl.u32 %v3597, 7
    %v3599 = vsub.s32 0, %v3598
    %v3600 = vrot.slane %v3581, %v3599
    %v3602 = vmul.f32 %v3595, %v3600
    %v3604 = vlaneseq
    %v3605 = vshrl.u32 %v3604, 7
    %v3606 = vsub.s32 0, %v3605
    %v3607 = vrot.slane %v3582, %v3606
    %v3609 = vadd.f32 %v3602, %v3607
    %v3610 = vld [vmem:[%s11] sm:$0xff]
    %v3611 = vld [vmem:[%s11 + $0x8] sm:$0xff]
    %v3612 = vld [vmem:[%s11 + $0x10] sm:$0xff]
    %v3613 = vld [vmem:[%s11 + $0x18] sm:$0xff]
    %v3614 = vld [vmem:[%s11 + $0x20] sm:$0xff]
    %v3615 = vld [vmem:[%s11 + $0x28] sm:$0xff]
    %v3616 = vld [vmem:[%s11 + $0x30] sm:$0xff]
    %v3617 = vld [vmem:[%s11 + $0x38] sm:$0xff]
    %v3618 = vld [vmem:[%s12] sm:$0x1]
    %v3620 = vlaneseq
    %v3621 = vshrl.u32 %v3620, 7
    %v3622 = vsub.s32 0, %v3621
    %v3623 = vrot.slane %v3618, %v3622
    %v3626 = vsel %vm90, %v3609, 0
    %3628 = vmatprep.subr.mxu0 0.0
    %3629 = vmatpush1.msra.mxu0 %v3610
    %3630 = vmatprep.subr.mxu0 0.0
    %3631 = vmatpush1.msra.mxu0 %v3611
    %3632 = vmatprep.subr.mxu0 0.0
    %3633 = vmatpush1.msra.mxu0 %v3612
    %3634 = vmatprep.subr.mxu0 0.0
    %3635 = vmatpush1.msra.mxu0 %v3613
    %3636 = vmatprep.subr.mxu0 0.0
    %3637 = vmatpush1.msra.mxu0 %v3614
    %3638 = vmatprep.subr.mxu0 0.0
    %3639 = vmatpush1.msra.mxu0 %v3615
    %3640 = vmatprep.subr.mxu0 0.0
    %3641 = vmatpush1.msra.mxu0 %v3616
    %3642 = vmatprep.subr.mxu0 0.0
    %3643 = vmatpush1.msra.mxu0 %v3617
    %3644 = vmatprep.subr.mxu0 0.0
    %3645 = vmatpush1.msra.mxu0 0.0
    %3646 = vmatprep.subr.mxu0 0.0
    %3647 = vmatpush1.msra.mxu0 0.0
    %3648 = vmatprep.subr.mxu0 0.0
    %3649 = vmatpush1.msra.mxu0 0.0
    %3650 = vmatprep.subr.mxu0 0.0
    %3651 = vmatpush1.msra.mxu0 0.0
    %3652 = vmatprep.subr.mxu0 0.0
    %3653 = vmatpush1.msra.mxu0 0.0
    %3654 = vmatprep.subr.mxu0 0.0
    %3655 = vmatpush1.msra.mxu0 0.0
    %3656 = vmatprep.subr.mxu0 0.0
    %3657 = vmatpush1.msra.mxu0 0.0
    %3658 = vmatprep.subr.mxu0 0.0
    %3659 = vmatpush1.msra.mxu0 0.0
    %3660 = vmatprep.subr.mxu0 0.0
    %3661 = vmatpush1.msra.mxu0 0.0
    %3662 = vmatprep.subr.mxu0 0.0
    %3663 = vmatpush1.msra.mxu0 0.0
    %3664 = vmatprep.subr.mxu0 0.0
    %3665 = vmatpush1.msra.mxu0 0.0
    %3666 = vmatprep.subr.mxu0 0.0
    %3667 = vmatpush1.msra.mxu0 0.0
    %3668 = vmatprep.subr.mxu0 0.0
    %3669 = vmatpush1.msra.mxu0 0.0
    %3670 = vmatprep.subr.mxu0 0.0
    %3671 = vmatpush1.msra.mxu0 0.0
    %3672 = vmatprep.subr.mxu0 0.0
    %3673 = vmatpush1.msra.mxu0 0.0
    %3674 = vmatprep.subr.mxu0 0.0
    %3675 = vmatpush1.msra.mxu0 0.0
    %3676 = vmatprep.subr.mxu0 0.0
    %3677 = vmatpush1.msra.mxu0 0.0
    %3678 = vmatprep.subr.mxu0 0.0
    %3679 = vmatpush1.msra.mxu0 0.0
    %3680 = vmatprep.subr.mxu0 0.0
    %3681 = vmatpush1.msra.mxu0 0.0
    %3682 = vmatprep.subr.mxu0 0.0
    %3683 = vmatpush1.msra.mxu0 0.0
    %3684 = vmatprep.subr.mxu0 0.0
    %3685 = vmatpush1.msra.mxu0 0.0
    %3686 = vmatprep.subr.mxu0 0.0
    %3687 = vmatpush1.msra.mxu0 0.0
    %3688 = vmatprep.subr.mxu0 0.0
    %3689 = vmatpush1.msra.mxu0 0.0
    %3690 = vmatprep.subr.mxu0 0.0
    %3691 = vmatpush1.msra.mxu0 0.0
    %3692 = vmatprep.mubr.f32.mxu0 0.0
    %3693 = vmatmul.mubr.f32.gmra.mrb[0].mxu0 %v3626
    %v3694 = vpop.f32.mrb[0].mxu0
    %v3695 = vadd.f32 %v3623, %v3694
    %v3696 = vpop.f32.mrb[0].mxu0
    %3697 = vdwg.mxu0
    %v3698 = vmul.f32 %v3695, 0.5
    %v3699 = vmul.f32 %v3695, 0.70710677
    %v3700 = vand.u32 2147483647, %v3699
    %v3701 = vmul.f32 %v3700, 0.3275911
    %v3702 = vadd.f32 %v3701, 1.0
    %v3703 = vrcp.pop %v3702
    %v3704 = vmul.f32 1.0, %v3703
    %v3705 = vmul.f32 %v3704, 1.0614054
    %v3706 = vadd.f32 %v3705, -1.4531521
    %v3707 = vmul.f32 %v3706, %v3704
    %v3708 = vadd.f32 %v3707, 1.4214138
    %v3709 = vmul.f32 %v3708, %v3704
    %v3710 = vadd.f32 %v3709, -0.28449672
    %v3711 = vmul.f32 %v3710, %v3704
    %v3712 = vadd.f32 %v3711, 0.2548296
    %v3713 = vmul.f32 %v3712, %v3704
    %v3714 = vsub.f32 0.0, %v3700
    %v3715 = vmul.f32 %v3714, %v3700
    %v3716 = vmul.f32 %v3715, 1.442695
    %v3717 = vpow.pop %v3716
    %v3718 = vmul.f32 %v3713, %v3717
    %v3719 = vsub.f32 1.0, %v3718
    %vm3720 = vcmp.ge.f32.partialorder %v3699, 0.0
    %v3721 = vsub.f32 0.0, %v3719
    %v3722 = vsel %vm3720, %v3719, %v3721
    %v3723 = vadd.f32 %v3722, 1.0
    %v3724 = vmul.f32 %v3698, %v3723
    %v3725 = vld [vmem:[%s13] sm:$0xff]
    %v3726 = vld [vmem:[%s13 + $0x8] sm:$0xff]
    %v3727 = vld [vmem:[%s13 + $0x10] sm:$0xff]
    %v3728 = vld [vmem:[%s13 + $0x18] sm:$0xff]
    %v3729 = vld [vmem:[%s13 + $0x20] sm:$0xff]
    %v3730 = vld [vmem:[%s13 + $0x28] sm:$0xff]
    %v3731 = vld [vmem:[%s13 + $0x30] sm:$0xff]
    %v3732 = vld [vmem:[%s13 + $0x38] sm:$0xff]
    %v3733 = vld [vmem:[%s13 + $0x40] sm:$0xff]
    %v3734 = vld [vmem:[%s13 + $0x48] sm:$0xff]
    %v3735 = vld [vmem:[%s13 + $0x50] sm:$0xff]
    %v3736 = vld [vmem:[%s13 + $0x58] sm:$0xff]
    %v3737 = vld [vmem:[%s13 + $0x60] sm:$0xff]
    %v3738 = vld [vmem:[%s13 + $0x68] sm:$0xff]
    %v3739 = vld [vmem:[%s13 + $0x70] sm:$0xff]
    %v3740 = vld [vmem:[%s13 + $0x78] sm:$0xff]
    %3741 = vmatprep.subr.mxu0 0.0
    %3742 = vmatpush1.msra.mxu0 %v3725
    %3743 = vmatprep.subr.mxu0 0.0
    %3744 = vmatpush1.msra.mxu0 %v3726
    %3745 = vmatprep.subr.mxu0 0.0
    %3746 = vmatpush1.msra.mxu0 %v3727
    %3747 = vmatprep.subr.mxu0 0.0
    %3748 = vmatpush1.msra.mxu0 %v3728
    %3749 = vmatprep.subr.mxu0 0.0
    %3750 = vmatpush1.msra.mxu0 %v3729
    %3751 = vmatprep.subr.mxu0 0.0
    %3752 = vmatpush1.msra.mxu0 %v3730
    %3753 = vmatprep.subr.mxu0 0.0
    %3754 = vmatpush1.msra.mxu0 %v3731
    %3755 = vmatprep.subr.mxu0 0.0
    %3756 = vmatpush1.msra.mxu0 %v3732
    %3757 = vmatprep.subr.mxu0 0.0
    %3758 = vmatpush1.msra.mxu0 %v3733
    %3759 = vmatprep.subr.mxu0 0.0
    %3760 = vmatpush1.msra.mxu0 %v3734
    %3761 = vmatprep.subr.mxu0 0.0
    %3762 = vmatpush1.msra.mxu0 %v3735
    %3763 = vmatprep.subr.mxu0 0.0
    %3764 = vmatpush1.msra.mxu0 %v3736
    %3765 = vmatprep.subr.mxu0 0.0
    %3766 = vmatpush1.msra.mxu0 %v3737
    %3767 = vmatprep.subr.mxu0 0.0
    %3768 = vmatpush1.msra.mxu0 %v3738
    %3769 = vmatprep.subr.mxu0 0.0
    %3770 = vmatpush1.msra.mxu0 %v3739
    %3771 = vmatprep.subr.mxu0 0.0
    %3772 = vmatpush1.msra.mxu0 %v3740
    %3773 = vmatprep.subr.mxu0 0.0
    %3774 = vmatpush1.msra.mxu0 0.0
    %3775 = vmatprep.subr.mxu0 0.0
    %3776 = vmatpush1.msra.mxu0 0.0
    %3777 = vmatprep.subr.mxu0 0.0
    %3778 = vmatpush1.msra.mxu0 0.0
    %3779 = vmatprep.subr.mxu0 0.0
    %3780 = vmatpush1.msra.mxu0 0.0
    %3781 = vmatprep.subr.mxu0 0.0
    %3782 = vmatpush1.msra.mxu0 0.0
    %3783 = vmatprep.subr.mxu0 0.0
    %3784 = vmatpush1.msra.mxu0 0.0
    %3785 = vmatprep.subr.mxu0 0.0
    %3786 = vmatpush1.msra.mxu0 0.0
    %3787 = vmatprep.subr.mxu0 0.0
    %3788 = vmatpush1.msra.mxu0 0.0
    %3789 = vmatprep.subr.mxu0 0.0
    %3790 = vmatpush1.msra.mxu0 0.0
    %3791 = vmatprep.subr.mxu0 0.0
    %3792 = vmatpush1.msra.mxu0 0.0
    %3793 = vmatprep.subr.mxu0 0.0
    %3794 = vmatpush1.msra.mxu0 0.0
    %3795 = vmatprep.subr.mxu0 0.0
    %3796 = vmatpush1.msra.mxu0 0.0
    %3797 = vmatprep.subr.mxu0 0.0
    %3798 = vmatpush1.msra.mxu0 0.0
    %3799 = vmatprep.subr.mxu0 0.0
    %3800 = vmatpush1.msra.mxu0 0.0
    %3801 = vmatprep.subr.mxu0 0.0
    %3802 = vmatpush1.msra.mxu0 0.0
    %3803 = vmatprep.subr.mxu0 0.0
    %3804 = vmatpush1.msra.mxu0 0.0
    %3805 = vmatprep.mubr.f32.mxu0 0.0
    %3806 = vmatmul.mubr.f32.gmra.mrb[0].mxu0 %v3724
    %v3807 = vpop.f32.mrb[0].mxu0
    %v3808 = vadd.f32 0.0, %v3807
    %v3809 = vpop.f32.mrb[0].mxu0
    %3810 = vdwg.mxu0
    %v3811 = vadd.f32 %v3580, %v3808
    %v3812 = vld [vmem:[%s14] sm:$0x1]
    %v3814 = vlaneseq
    %v3815 = vshrl.u32 %v3814, 7
    %v3816 = vsub.s32 0, %v3815
    %v3817 = vrot.slane %v3812, %v3816
    %v3819 = vadd.f32 %v3811, %v3817
    %v3820 = vld [vmem:[%s1313] sm:$0x1]
    %v3821 = vld [vmem:[%s1315] sm:$0x1]
    %v3822 = vsel %vm166, %v3819, 0.0
    %3823 = vadd.xlane.f32.xlu0 %v3822
    %v3824 = vpop.xlane.xlu0 %3823
    %v3825 = vmul.f32 %v3824, %v170
    %v3826 = vsub.f32 %v3819, %v3825
    %v3827 = vmul.f32 %v3826, %v3826
    %v3828 = vsel %vm166, %v3827, 0.0
    %3829 = vadd.xlane.f32.xlu0 %v3828
    %v3830 = vpop.xlane.xlu0 %3829
    %v3831 = vmul.f32 %v3830, %v170
    %v3832 = vadd.f32 %v3831, 1e-06
    %v3833 = vrsqrt.pop %v3832
    %v3834 = vmul.f32 %v3826, %v3833
    %v3836 = vlaneseq
    %v3837 = vshrl.u32 %v3836, 7
    %v3838 = vsub.s32 0, %v3837
    %v3839 = vrot.slane %v3820, %v3838
    %v3841 = vmul.f32 %v3834, %v3839
    %v3843 = vlaneseq
    %v3844 = vshrl.u32 %v3843, 7
    %v3845 = vsub.s32 0, %v3844
    %v3846 = vrot.slane %v3821, %v3845
    %v3848 = vadd.f32 %v3841, %v3846
    %v3849 = vld [vmem:[%s1344] sm:$0xff]
    %v3850 = vld [vmem:[%s1344 + $0x8] sm:$0xff]
    %v3851 = vld [vmem:[%s1344 + $0x10] sm:$0xff]
    %v3852 = vld [vmem:[%s1344 + $0x18] sm:$0xff]
    %v3853 = vld [vmem:[%s1344 + $0x20] sm:$0xff]
    %v3854 = vld [vmem:[%s1344 + $0x28] sm:$0xff]
    %v3855 = vld [vmem:[%s1344 + $0x30] sm:$0xff]
    %v3856 = vld [vmem:[%s1344 + $0x38] sm:$0xff]
    %v3857 = vld [vmem:[%s1344 + $0x40] sm:$0xff]
    %v3858 = vld [vmem:[%s1344 + $0x48] sm:$0xff]
    %v3859 = vld [vmem:[%s1344 + $0x50] sm:$0xff]
    %v3860 = vld [vmem:[%s1344 + $0x58] sm:$0xff]
    %v3861 = vld [vmem:[%s1344 + $0x60] sm:$0xff]
    %v3862 = vld [vmem:[%s1344 + $0x68] sm:$0xff]
    %v3863 = vld [vmem:[%s1344 + $0x70] sm:$0xff]
    %v3864 = vld [vmem:[%s1344 + $0x78] sm:$0xff]
    %v3865 = vld [vmem:[%s1361] sm:$0x3]
    %v3867 = vlaneseq
    %v3868 = vshrl.u32 %v3867, 7
    %v3869 = vsub.s32 0, %v3868
    %v3870 = vrot.slane %v3865, %v3869
    %v3871 = vlaneseq
    %v3872 = vshrl.u32 %v3871, 7
    %v3873 = vsub.s32 1, %v3872
    %v3874 = vrot.slane %v3865, %v3873
    %v3878 = vsel %vm90, %v3848, 0
    %3880 = vmatprep.subr.mxu0 %v3850
    %3881 = vmatpush1.msra.mxu0 %v3849
    %3882 = vmatprep.subr.mxu0 %v3852
    %3883 = vmatpush1.msra.mxu0 %v3851
    %3884 = vmatprep.subr.mxu0 %v3854
    %3885 = vmatpush1.msra.mxu0 %v3853
    %3886 = vmatprep.subr.mxu0 %v3856
    %3887 = vmatpush1.msra.mxu0 %v3855
    %3888 = vmatprep.subr.mxu0 %v3858
    %3889 = vmatpush1.msra.mxu0 %v3857
    %3890 = vmatprep.subr.mxu0 %v3860
    %3891 = vmatpush1.msra.mxu0 %v3859
    %3892 = vmatprep.subr.mxu0 %v3862
    %3893 = vmatpush1.msra.mxu0 %v3861
    %3894 = vmatprep.subr.mxu0 %v3864
    %3895 = vmatpush1.msra.mxu0 %v3863
    %3896 = vmatprep.subr.mxu0 0.0
    %3897 = vmatpush1.msra.mxu0 0.0
    %3898 = vmatprep.subr.mxu0 0.0
    %3899 = vmatpush1.msra.mxu0 0.0
    %3900 = vmatprep.subr.mxu0 0.0
    %3901 = vmatpush1.msra.mxu0 0.0
    %3902 = vmatprep.subr.mxu0 0.0
    %3903 = vmatpush1.msra.mxu0 0.0
    %3904 = vmatprep.subr.mxu0 0.0
    %3905 = vmatpush1.msra.mxu0 0.0
    %3906 = vmatprep.subr.mxu0 0.0
    %3907 = vmatpush1.msra.mxu0 0.0
    %3908 = vmatprep.subr.mxu0 0.0
    %3909 = vmatpush1.msra.mxu0 0.0
    %3910 = vmatprep.subr.mxu0 0.0
    %3911 = vmatpush1.msra.mxu0 0.0
    %3912 = vmatprep.subr.mxu0 0.0
    %3913 = vmatpush1.msra.mxu0 0.0
    %3914 = vmatprep.subr.mxu0 0.0
    %3915 = vmatpush1.msra.mxu0 0.0
    %3916 = vmatprep.subr.mxu0 0.0
    %3917 = vmatpush1.msra.mxu0 0.0
    %3918 = vmatprep.subr.mxu0 0.0
    %3919 = vmatpush1.msra.mxu0 0.0
    %3920 = vmatprep.subr.mxu0 0.0
    %3921 = vmatpush1.msra.mxu0 0.0
    %3922 = vmatprep.subr.mxu0 0.0
    %3923 = vmatpush1.msra.mxu0 0.0
    %3924 = vmatprep.subr.mxu0 0.0
    %3925 = vmatpush1.msra.mxu0 0.0
    %3926 = vmatprep.subr.mxu0 0.0
    %3927 = vmatpush1.msra.mxu0 0.0
    %3928 = vmatprep.subr.mxu0 0.0
    %3929 = vmatpush1.msra.mxu0 0.0
    %3930 = vmatprep.subr.mxu0 0.0
    %3931 = vmatpush1.msra.mxu0 0.0
    %3932 = vmatprep.subr.mxu0 0.0
    %3933 = vmatpush1.msra.mxu0 0.0
    %3934 = vmatprep.subr.mxu0 0.0
    %3935 = vmatpush1.msra.mxu0 0.0
    %3936 = vmatprep.subr.mxu0 0.0
    %3937 = vmatpush1.msra.mxu0 0.0
    %3938 = vmatprep.subr.mxu0 0.0
    %3939 = vmatpush1.msra.mxu0 0.0
    %3940 = vmatprep.subr.mxu0 0.0
    %3941 = vmatpush1.msra.mxu0 0.0
    %3942 = vmatprep.subr.mxu0 0.0
    %3943 = vmatpush1.msra.mxu0 0.0
    %3944 = vmatprep.mubr.f32.mxu0 0.0
    %3945 = vmatmul.mubr.f32.gmra.mrb[0].mxu0 %v3878
    %v3946 = vpop.f32.mrb[0].mxu0
    %v3947 = vadd.f32 %v3870, %v3946
    %v3948 = vpop.f32.mrb[0].mxu0
    %v3949 = vadd.f32 %v3874, %v3948
    %3950 = vdwg.mxu0
    %3952 = vrot.lane.b32.xlu0 %v3947, 64
    %v3953 = vpop.permute.xlu0 %3952
    %v3954 = vsel %vm300, %v3947, 0
    %v3956 = vsel %vm300, %v3953, 0
    %3958 = vmatprep.subr.mxu0 0.0
    %3959 = vmatpush1.xpose.msra.mxu0 %v3956
    %3960 = vmatprep.subr.mxu0 0.0
    %3961 = vmatpush1.xpose.msra.mxu0 0.0
    %3962 = vmatprep.subr.mxu0 0.0
    %3963 = vmatpush1.xpose.msra.mxu0 0.0
    %3964 = vmatprep.subr.mxu0 0.0
    %3965 = vmatpush1.xpose.msra.mxu0 0.0
    %3966 = vmatprep.subr.mxu0 0.0
    %3967 = vmatpush1.xpose.msra.mxu0 0.0
    %3968 = vmatprep.subr.mxu0 0.0
    %3969 = vmatpush1.xpose.msra.mxu0 0.0
    %3970 = vmatprep.subr.mxu0 0.0
    %3971 = vmatpush1.xpose.msra.mxu0 0.0
    %3972 = vmatprep.subr.mxu0 0.0
    %3973 = vmatpush1.xpose.msra.mxu0 0.0
    %3974 = vmatprep.subr.mxu0 0.0
    %3975 = vmatpush1.xpose.msra.mxu0 0.0
    %3976 = vmatprep.subr.mxu0 0.0
    %3977 = vmatpush1.xpose.msra.mxu0 0.0
    %3978 = vmatprep.subr.mxu0 0.0
    %3979 = vmatpush1.xpose.msra.mxu0 0.0
    %3980 = vmatprep.subr.mxu0 0.0
    %3981 = vmatpush1.xpose.msra.mxu0 0.0
    %3982 = vmatprep.subr.mxu0 0.0
    %3983 = vmatpush1.xpose.msra.mxu0 0.0
    %3984 = vmatprep.subr.mxu0 0.0
    %3985 = vmatpush1.xpose.msra.mxu0 0.0
    %3986 = vmatprep.subr.mxu0 0.0
    %3987 = vmatpush1.xpose.msra.mxu0 0.0
    %3988 = vmatprep.subr.mxu0 0.0
    %3989 = vmatpush1.xpose.msra.mxu0 0.0
    %3990 = vmatprep.subr.mxu0 0.0
    %3991 = vmatpush1.xpose.msra.mxu0 0.0
    %3992 = vmatprep.subr.mxu0 0.0
    %3993 = vmatpush1.xpose.msra.mxu0 0.0
    %3994 = vmatprep.subr.mxu0 0.0
    %3995 = vmatpush1.xpose.msra.mxu0 0.0
    %3996 = vmatprep.subr.mxu0 0.0
    %3997 = vmatpush1.xpose.msra.mxu0 0.0
    %3998 = vmatprep.subr.mxu0 0.0
    %3999 = vmatpush1.xpose.msra.mxu0 0.0
    %4000 = vmatprep.subr.mxu0 0.0
    %4001 = vmatpush1.xpose.msra.mxu0 0.0
    %4002 = vmatprep.subr.mxu0 0.0
    %4003 = vmatpush1.xpose.msra.mxu0 0.0
    %4004 = vmatprep.subr.mxu0 0.0
    %4005 = vmatpush1.xpose.msra.mxu0 0.0
    %4006 = vmatprep.subr.mxu0 0.0
    %4007 = vmatpush1.xpose.msra.mxu0 0.0
    %4008 = vmatprep.subr.mxu0 0.0
    %4009 = vmatpush1.xpose.msra.mxu0 0.0
    %4010 = vmatprep.subr.mxu0 0.0
    %4011 = vmatpush1.xpose.msra.mxu0 0.0
    %4012 = vmatprep.subr.mxu0 0.0
    %4013 = vmatpush1.xpose.msra.mxu0 0.0
    %4014 = vmatprep.subr.mxu0 0.0
    %4015 = vmatpush1.xpose.msra.mxu0 0.0
    %4016 = vmatprep.subr.mxu0 0.0
    %4017 = vmatpush1.xpose.msra.mxu0 0.0
    %4018 = vmatprep.subr.mxu0 0.0
    %4019 = vmatpush1.xpose.msra.mxu0 0.0
    %4020 = vmatprep.subr.mxu0 0.0
    %4021 = vmatpush1.xpose.msra.mxu0 0.0
    %4022 = vmatprep.mubr.f32.mxu0 0.0
    %4023 = vmatmul.mubr.f32.gmra.mrb[0].mxu0 %v3954
    %v4024 = vpop.f32.mrb[0].mxu0
    %v4025 = vadd.f32 0.0, %v4024
    %v4026 = vpop.f32.mrb[0].mxu0
    %4027 = vdwg.mxu0
    %v4028 = vmul.f32 %v4025, 0.25
    %v4029 = vsel %vm376, %v4028, -inf
    %4030 = vmax.xlane.f32.xlu0 %v4029
    %v4031 = vpop.xlane.xlu0 %4030
    %v4032 = vsub.f32 %v4028, %v4031
    %v4033 = vmul.f32 %v4032, 1.442695
    %v4034 = vpow.pop %v4033
    %v4035 = vsel %vm376, %v4034, 0.0
    %4036 = vadd.xlane.f32.xlu0 %v4035
    %v4037 = vpop.xlane.xlu0 %4036
    %v4038 = vrcp.pop %v4037
    %v4039 = vmul.f32 %v4034, %v4038
    %v4041 = vsel %vm388, %v4039, 0
    %v4044 = vsel %vm392, %v3949, 0
    %4046 = vmatprep.subr.mxu0 0.0
    %4047 = vmatpush1.msra.mxu0 %v4044
    %4048 = vmatprep.subr.mxu0 0.0
    %4049 = vmatpush1.msra.mxu0 0.0
    %4050 = vmatprep.subr.mxu0 0.0
    %4051 = vmatpush1.msra.mxu0 0.0
    %4052 = vmatprep.subr.mxu0 0.0
    %4053 = vmatpush1.msra.mxu0 0.0
    %4054 = vmatprep.subr.mxu0 0.0
    %4055 = vmatpush1.msra.mxu0 0.0
    %4056 = vmatprep.subr.mxu0 0.0
    %4057 = vmatpush1.msra.mxu0 0.0
    %4058 = vmatprep.subr.mxu0 0.0
    %4059 = vmatpush1.msra.mxu0 0.0
    %4060 = vmatprep.subr.mxu0 0.0
    %4061 = vmatpush1.msra.mxu0 0.0
    %4062 = vmatprep.subr.mxu0 0.0
    %4063 = vmatpush1.msra.mxu0 0.0
    %4064 = vmatprep.subr.mxu0 0.0
    %4065 = vmatpush1.msra.mxu0 0.0
    %4066 = vmatprep.subr.mxu0 0.0
    %4067 = vmatpush1.msra.mxu0 0.0
    %4068 = vmatprep.subr.mxu0 0.0
    %4069 = vmatpush1.msra.mxu0 0.0
    %4070 = vmatprep.subr.mxu0 0.0
    %4071 = vmatpush1.msra.mxu0 0.0
    %4072 = vmatprep.subr.mxu0 0.0
    %4073 = vmatpush1.msra.mxu0 0.0
    %4074 = vmatprep.subr.mxu0 0.0
    %4075 = vmatpush1.msra.mxu0 0.0
    %4076 = vmatprep.subr.mxu0 0.0
    %4077 = vmatpush1.msra.mxu0 0.0
    %4078 = vmatprep.subr.mxu0 0.0
    %4079 = vmatpush1.msra.mxu0 0.0
    %4080 = vmatprep.subr.mxu0 0.0
    %4081 = vmatpush1.msra.mxu0 0.0
    %4082 = vmatprep.subr.mxu0 0.0
    %4083 = vmatpush1.msra.mxu0 0.0
    %4084 = vmatprep.subr.mxu0 0.0
    %4085 = vmatpush1.msra.mxu0 0.0
    %4086 = vmatprep.subr.mxu0 0.0
    %4087 = vmatpush1.msra.mxu0 0.0
    %4088 = vmatprep.subr.mxu0 0.0
    %4089 = vmatpush1.msra.mxu0 0.0
    %4090 = vmatprep.subr.mxu0 0.0
    %4091 = vmatpush1.msra.mxu0 0.0
    %4092 = vmatprep.subr.mxu0 0.0
    %4093 = vmatpush1.msra.mxu0 0.0
    %4094 = vmatprep.subr.mxu0 0.0
    %4095 = vmatpush1.msra.mxu0 0.0
    %4096 = vmatprep.subr.mxu0 0.0
    %4097 = vmatpush1.msra.mxu0 0.0
    %4098 = vmatprep.subr.mxu0 0.0
    %4099 = vmatpush1.msra.mxu0 0.0
    %4100 = vmatprep.subr.mxu0 0.0
    %4101 = vmatpush1.msra.mxu0 0.0
    %4102 = vmatprep.subr.mxu0 0.0
    %4103 = vmatpush1.msra.mxu0 0.0
    %4104 = vmatprep.subr.mxu0 0.0
    %4105 = vmatpush1.msra.mxu0 0.0
    %4106 = vmatprep.subr.mxu0 0.0
    %4107 = vmatpush1.msra.mxu0 0.0
    %4108 = vmatprep.subr.mxu0 0.0
    %4109 = vmatpush1.msra.mxu0 0.0
    %4110 = vmatprep.mubr.f32.mxu0 0.0
    %4111 = vmatmul.mubr.f32.gmra.mrb[0].mxu0 %v4041
    %v4112 = vpop.f32.mrb[0].mxu0
    %v4113 = vadd.f32 0.0, %v4112
    %v4114 = vpop.f32.mrb[0].mxu0
    %4115 = vdwg.mxu0
    %4116 = vrot.lane.b32.xlu0 %v3947, 112
    %v4117 = vpop.permute.xlu0 %4116
    %4118 = vrot.lane.b32.xlu0 %v3947, 48
    %v4119 = vpop.permute.xlu0 %4118
    %v4120 = vsel %vm300, %v4117, 0
    %v4122 = vsel %vm300, %v4119, 0
    %4124 = vmatprep.subr.mxu0 0.0
    %4125 = vmatpush1.xpose.msra.mxu0 %v4122
    %4126 = vmatprep.subr.mxu0 0.0
    %4127 = vmatpush1.xpose.msra.mxu0 0.0
    %4128 = vmatprep.subr.mxu0 0.0
    %4129 = vmatpush1.xpose.msra.mxu0 0.0
    %4130 = vmatprep.subr.mxu0 0.0
    %4131 = vmatpush1.xpose.msra.mxu0 0.0
    %4132 = vmatprep.subr.mxu0 0.0
    %4133 = vmatpush1.xpose.msra.mxu0 0.0
    %4134 = vmatprep.subr.mxu0 0.0
    %4135 = vmatpush1.xpose.msra.mxu0 0.0
    %4136 = vmatprep.subr.mxu0 0.0
    %4137 = vmatpush1.xpose.msra.mxu0 0.0
    %4138 = vmatprep.subr.mxu0 0.0
    %4139 = vmatpush1.xpose.msra.mxu0 0.0
    %4140 = vmatprep.subr.mxu0 0.0
    %4141 = vmatpush1.xpose.msra.mxu0 0.0
    %4142 = vmatprep.subr.mxu0 0.0
    %4143 = vmatpush1.xpose.msra.mxu0 0.0
    %4144 = vmatprep.subr.mxu0 0.0
    %4145 = vmatpush1.xpose.msra.mxu0 0.0
    %4146 = vmatprep.subr.mxu0 0.0
    %4147 = vmatpush1.xpose.msra.mxu0 0.0
    %4148 = vmatprep.subr.mxu0 0.0
    %4149 = vmatpush1.xpose.msra.mxu0 0.0
    %4150 = vmatprep.subr.mxu0 0.0
    %4151 = vmatpush1.xpose.msra.mxu0 0.0
    %4152 = vmatprep.subr.mxu0 0.0
    %4153 = vmatpush1.xpose.msra.mxu0 0.0
    %4154 = vmatprep.subr.mxu0 0.0
    %4155 = vmatpush1.xpose.msra.mxu0 0.0
    %4156 = vmatprep.subr.mxu0 0.0
    %4157 = vmatpush1.xpose.msra.mxu0 0.0
    %4158 = vmatprep.subr.mxu0 0.0
    %4159 = vmatpush1.xpose.msra.mxu0 0.0
    %4160 = vmatprep.subr.mxu0 0.0
    %4161 = vmatpush1.xpose.msra.mxu0 0.0
    %4162 = vmatprep.subr.mxu0 0.0
    %4163 = vmatpush1.xpose.msra.mxu0 0.0
    %4164 = vmatprep.subr.mxu0 0.0
    %4165 = vmatpush1.xpose.msra.mxu0 0.0
    %4166 = vmatprep.subr.mxu0 0.0
    %4167 = vmatpush1.xpose.msra.mxu0 0.0
    %4168 = vmatprep.subr.mxu0 0.0
    %4169 = vmatpush1.xpose.msra.mxu0 0.0
    %4170 = vmatprep.subr.mxu0 0.0
    %4171 = vmatpush1.xpose.msra.mxu0 0.0
    %4172 = vmatprep.subr.mxu0 0.0
    %4173 = vmatpush1.xpose.msra.mxu0 0.0
    %4174 = vmatprep.subr.mxu0 0.0
    %4175 = vmatpush1.xpose.msra.mxu0 0.0
    %4176 = vmatprep.subr.mxu0 0.0
    %4177 = vmatpush1.xpose.msra.mxu0 0.0
    %4178 = vmatprep.subr.mxu0 0.0
    %4179 = vmatpush1.xpose.msra.mxu0 0.0
    %4180 = vmatprep.subr.mxu0 0.0
    %4181 = vmatpush1.xpose.msra.mxu0 0.0
    %4182 = vmatprep.subr.mxu0 0.0
    %4183 = vmatpush1.xpose.msra.mxu0 0.0
    %4184 = vmatprep.subr.mxu0 0.0
    %4185 = vmatpush1.xpose.msra.mxu0 0.0
    %4186 = vmatprep.subr.mxu0 0.0
    %4187 = vmatpush1.xpose.msra.mxu0 0.0
    %4188 = vmatprep.mubr.f32.mxu0 0.0
    %4189 = vmatmul.mubr.f32.gmra.mrb[0].mxu0 %v4120
    %v4190 = vpop.f32.mrb[0].mxu0
    %v4191 = vadd.f32 0.0, %v4190
    %v4192 = vpop.f32.mrb[0].mxu0
    %4193 = vdwg.mxu0
    %v4194 = vmul.f32 %v4191, 0.25
    %v4195 = vsel %vm376, %v4194, -inf
    %4196 = vmax.xlane.f32.xlu0 %v4195
    %v4197 = vpop.xlane.xlu0 %4196
    %v4198 = vsub.f32 %v4194, %v4197
    %v4199 = vmul.f32 %v4198, 1.442695
    %v4200 = vpow.pop %v4199
    %v4201 = vsel %vm376, %v4200, 0.0
    %4202 = vadd.xlane.f32.xlu0 %v4201
    %v4203 = vpop.xlane.xlu0 %4202
    %v4204 = vrcp.pop %v4203
    %v4205 = vmul.f32 %v4200, %v4204
    %4206 = vrot.lane.b32.xlu0 %v3949, 112
    %v4207 = vpop.permute.xlu0 %4206
    %v4209 = vsel %vm388, %v4205, 0
    %v4211 = vsel %vm392, %v4207, 0
    %4213 = vmatprep.subr.mxu0 0.0
    %4214 = vmatpush1.msra.mxu0 %v4211
    %4215 = vmatprep.subr.mxu0 0.0
    %4216 = vmatpush1.msra.mxu0 0.0
    %4217 = vmatprep.subr.mxu0 0.0
    %4218 = vmatpush1.msra.mxu0 0.0
    %4219 = vmatprep.subr.mxu0 0.0
    %4220 = vmatpush1.msra.mxu0 0.0
    %4221 = vmatprep.subr.mxu0 0.0
    %4222 = vmatpush1.msra.mxu0 0.0
    %4223 = vmatprep.subr.mxu0 0.0
    %4224 = vmatpush1.msra.mxu0 0.0
    %4225 = vmatprep.subr.mxu0 0.0
    %4226 = vmatpush1.msra.mxu0 0.0
    %4227 = vmatprep.subr.mxu0 0.0
    %4228 = vmatpush1.msra.mxu0 0.0
    %4229 = vmatprep.subr.mxu0 0.0
    %4230 = vmatpush1.msra.mxu0 0.0
    %4231 = vmatprep.subr.mxu0 0.0
    %4232 = vmatpush1.msra.mxu0 0.0
    %4233 = vmatprep.subr.mxu0 0.0
    %4234 = vmatpush1.msra.mxu0 0.0
    %4235 = vmatprep.subr.mxu0 0.0
    %4236 = vmatpush1.msra.mxu0 0.0
    %4237 = vmatprep.subr.mxu0 0.0
    %4238 = vmatpush1.msra.mxu0 0.0
    %4239 = vmatprep.subr.mxu0 0.0
    %4240 = vmatpush1.msra.mxu0 0.0
    %4241 = vmatprep.subr.mxu0 0.0
    %4242 = vmatpush1.msra.mxu0 0.0
    %4243 = vmatprep.subr.mxu0 0.0
    %4244 = vmatpush1.msra.mxu0 0.0
    %4245 = vmatprep.subr.mxu0 0.0
    %4246 = vmatpush1.msra.mxu0 0.0
    %4247 = vmatprep.subr.mxu0 0.0
    %4248 = vmatpush1.msra.mxu0 0.0
    %4249 = vmatprep.subr.mxu0 0.0
    %4250 = vmatpush1.msra.mxu0 0.0
    %4251 = vmatprep.subr.mxu0 0.0
    %4252 = vmatpush1.msra.mxu0 0.0
    %4253 = vmatprep.subr.mxu0 0.0
    %4254 = vmatpush1.msra.mxu0 0.0
    %4255 = vmatprep.subr.mxu0 0.0
    %4256 = vmatpush1.msra.mxu0 0.0
    %4257 = vmatprep.subr.mxu0 0.0
    %4258 = vmatpush1.msra.mxu0 0.0
    %4259 = vmatprep.subr.mxu0 0.0
    %4260 = vmatpush1.msra.mxu0 0.0
    %4261 = vmatprep.subr.mxu0 0.0
    %4262 = vmatpush1.msra.mxu0 0.0
    %4263 = vmatprep.subr.mxu0 0.0
    %4264 = vmatpush1.msra.mxu0 0.0
    %4265 = vmatprep.subr.mxu0 0.0
    %4266 = vmatpush1.msra.mxu0 0.0
    %4267 = vmatprep.subr.mxu0 0.0
    %4268 = vmatpush1.msra.mxu0 0.0
    %4269 = vmatprep.subr.mxu0 0.0
    %4270 = vmatpush1.msra.mxu0 0.0
    %4271 = vmatprep.subr.mxu0 0.0
    %4272 = vmatpush1.msra.mxu0 0.0
    %4273 = vmatprep.subr.mxu0 0.0
    %4274 = vmatpush1.msra.mxu0 0.0
    %4275 = vmatprep.subr.mxu0 0.0
    %4276 = vmatpush1.msra.mxu0 0.0
    %4277 = vmatprep.mubr.f32.mxu0 0.0
    %4278 = vmatmul.mubr.f32.gmra.mrb[0].mxu0 %v4209
    %v4279 = vpop.f32.mrb[0].mxu0
    %v4280 = vadd.f32 0.0, %v4279
    %v4281 = vpop.f32.mrb[0].mxu0
    %4282 = vdwg.mxu0
    %4283 = vrot.lane.b32.xlu0 %v3947, 96
    %v4284 = vpop.permute.xlu0 %4283
    %4285 = vrot.lane.b32.xlu0 %v3947, 32
    %v4286 = vpop.permute.xlu0 %4285
    %v4287 = vsel %vm300, %v4284, 0
    %v4289 = vsel %vm300, %v4286, 0
    %4291 = vmatprep.subr.mxu0 0.0
    %4292 = vmatpush1.xpose.msra.mxu0 %v4289
    %4293 = vmatprep.subr.mxu0 0.0
    %4294 = vmatpush1.xpose.msra.mxu0 0.0
    %4295 = vmatprep.subr.mxu0 0.0
    %4296 = vmatpush1.xpose.msra.mxu0 0.0
    %4297 = vmatprep.subr.mxu0 0.0
    %4298 = vmatpush1.xpose.msra.mxu0 0.0
    %4299 = vmatprep.subr.mxu0 0.0
    %4300 = vmatpush1.xpose.msra.mxu0 0.0
    %4301 = vmatprep.subr.mxu0 0.0
    %4302 = vmatpush1.xpose.msra.mxu0 0.0
    %4303 = vmatprep.subr.mxu0 0.0
    %4304 = vmatpush1.xpose.msra.mxu0 0.0
    %4305 = vmatprep.subr.mxu0 0.0
    %4306 = vmatpush1.xpose.msra.mxu0 0.0
    %4307 = vmatprep.subr.mxu0 0.0
    %4308 = vmatpush1.xpose.msra.mxu0 0.0
    %4309 = vmatprep.subr.mxu0 0.0
    %4310 = vmatpush1.xpose.msra.mxu0 0.0
    %4311 = vmatprep.subr.mxu0 0.0
    %4312 = vmatpush1.xpose.msra.mxu0 0.0
    %4313 = vmatprep.subr.mxu0 0.0
    %4314 = vmatpush1.xpose.msra.mxu0 0.0
    %4315 = vmatprep.subr.mxu0 0.0
    %4316 = vmatpush1.xpose.msra.mxu0 0.0
    %4317 = vmatprep.subr.mxu0 0.0
    %4318 = vmatpush1.xpose.msra.mxu0 0.0
    %4319 = vmatprep.subr.mxu0 0.0
    %4320 = vmatpush1.xpose.msra.mxu0 0.0
    %4321 = vmatprep.subr.mxu0 0.0
    %4322 = vmatpush1.xpose.msra.mxu0 0.0
    %4323 = vmatprep.subr.mxu0 0.0
    %4324 = vmatpush1.xpose.msra.mxu0 0.0
    %4325 = vmatprep.subr.mxu0 0.0
    %4326 = vmatpush1.xpose.msra.mxu0 0.0
    %4327 = vmatprep.subr.mxu0 0.0
    %4328 = vmatpush1.xpose.msra.mxu0 0.0
    %4329 = vmatprep.subr.mxu0 0.0
    %4330 = vmatpush1.xpose.msra.mxu0 0.0
    %4331 = vmatprep.subr.mxu0 0.0
    %4332 = vmatpush1.xpose.msra.mxu0 0.0
    %4333 = vmatprep.subr.mxu0 0.0
    %4334 = vmatpush1.xpose.msra.mxu0 0.0
    %4335 = vmatprep.subr.mxu0 0.0
    %4336 = vmatpush1.xpose.msra.mxu0 0.0
    %4337 = vmatprep.subr.mxu0 0.0
    %4338 = vmatpush1.xpose.msra.mxu0 0.0
    %4339 = vmatprep.subr.mxu0 0.0
    %4340 = vmatpush1.xpose.msra.mxu0 0.0
    %4341 = vmatprep.subr.mxu0 0.0
    %4342 = vmatpush1.xpose.msra.mxu0 0.0
    %4343 = vmatprep.subr.mxu0 0.0
    %4344 = vmatpush1.xpose.msra.mxu0 0.0
    %4345 = vmatprep.subr.mxu0 0.0
    %4346 = vmatpush1.xpose.msra.mxu0 0.0
    %4347 = vmatprep.subr.mxu0 0.0
    %4348 = vmatpush1.xpose.msra.mxu0 0.0
    %4349 = vmatprep.subr.mxu0 0.0
    %4350 = vmatpush1.xpose.msra.mxu0 0.0
    %4351 = vmatprep.subr.mxu0 0.0
    %4352 = vmatpush1.xpose.msra.mxu0 0.0
    %4353 = vmatprep.subr.mxu0 0.0
    %4354 = vmatpush1.xpose.msra.mxu0 0.0
    %4355 = vmatprep.mubr.f32.mxu0 0.0
    %4356 = vmatmul.mubr.f32.gmra.mrb[0].mxu0 %v4287
    %v4357 = vpop.f32.mrb[0].mxu0
    %v4358 = vadd.f32 0.0, %v4357
    %v4359 = vpop.f32.mrb[0].mxu0
    %4360 = vdwg.mxu0
    %v4361 = vmul.f32 %v4358, 0.25
    %v4362 = vsel %vm376, %v4361, -inf
    %4363 = vmax.xlane.f32.xlu0 %v4362
    %v4364 = vpop.xlane.xlu0 %4363
    %v4365 = vsub.f32 %v4361, %v4364
    %v4366 = vmul.f32 %v4365, 1.442695
    %v4367 = vpow.pop %v4366
    %v4368 = vsel %vm376, %v4367, 0.0
    %4369 = vadd.xlane.f32.xlu0 %v4368
    %v4370 = vpop.xlane.xlu0 %4369
    %v4371 = vrcp.pop %v4370
    %v4372 = vmul.f32 %v4367, %v4371
    %4373 = vrot.lane.b32.xlu0 %v3949, 96
    %v4374 = vpop.permute.xlu0 %4373
    %v4376 = vsel %vm388, %v4372, 0
    %v4378 = vsel %vm392, %v4374, 0
    %4380 = vmatprep.subr.mxu0 0.0
    %4381 = vmatpush1.msra.mxu0 %v4378
    %4382 = vmatprep.subr.mxu0 0.0
    %4383 = vmatpush1.msra.mxu0 0.0
    %4384 = vmatprep.subr.mxu0 0.0
    %4385 = vmatpush1.msra.mxu0 0.0
    %4386 = vmatprep.subr.mxu0 0.0
    %4387 = vmatpush1.msra.mxu0 0.0
    %4388 = vmatprep.subr.mxu0 0.0
    %4389 = vmatpush1.msra.mxu0 0.0
    %4390 = vmatprep.subr.mxu0 0.0
    %4391 = vmatpush1.msra.mxu0 0.0
    %4392 = vmatprep.subr.mxu0 0.0
    %4393 = vmatpush1.msra.mxu0 0.0
    %4394 = vmatprep.subr.mxu0 0.0
    %4395 = vmatpush1.msra.mxu0 0.0
    %4396 = vmatprep.subr.mxu0 0.0
    %4397 = vmatpush1.msra.mxu0 0.0
    %4398 = vmatprep.subr.mxu0 0.0
    %4399 = vmatpush1.msra.mxu0 0.0
    %4400 = vmatprep.subr.mxu0 0.0
    %4401 = vmatpush1.msra.mxu0 0.0
    %4402 = vmatprep.subr.mxu0 0.0
    %4403 = vmatpush1.msra.mxu0 0.0
    %4404 = vmatprep.subr.mxu0 0.0
    %4405 = vmatpush1.msra.mxu0 0.0
    %4406 = vmatprep.subr.mxu0 0.0
    %4407 = vmatpush1.msra.mxu0 0.0
    %4408 = vmatprep.subr.mxu0 0.0
    %4409 = vmatpush1.msra.mxu0 0.0
    %4410 = vmatprep.subr.mxu0 0.0
    %4411 = vmatpush1.msra.mxu0 0.0
    %4412 = vmatprep.subr.mxu0 0.0
    %4413 = vmatpush1.msra.mxu0 0.0
    %4414 = vmatprep.subr.mxu0 0.0
    %4415 = vmatpush1.msra.mxu0 0.0
    %4416 = vmatprep.subr.mxu0 0.0
    %4417 = vmatpush1.msra.mxu0 0.0
    %4418 = vmatprep.subr.mxu0 0.0
    %4419 = vmatpush1.msra.mxu0 0.0
    %4420 = vmatprep.subr.mxu0 0.0
    %4421 = vmatpush1.msra.mxu0 0.0
    %4422 = vmatprep.subr.mxu0 0.0
    %4423 = vmatpush1.msra.mxu0 0.0
    %4424 = vmatprep.subr.mxu0 0.0
    %4425 = vmatpush1.msra.mxu0 0.0
    %4426 = vmatprep.subr.mxu0 0.0
    %4427 = vmatpush1.msra.mxu0 0.0
    %4428 = vmatprep.subr.mxu0 0.0
    %4429 = vmatpush1.msra.mxu0 0.0
    %4430 = vmatprep.subr.mxu0 0.0
    %4431 = vmatpush1.msra.mxu0 0.0
    %4432 = vmatprep.subr.mxu0 0.0
    %4433 = vmatpush1.msra.mxu0 0.0
    %4434 = vmatprep.subr.mxu0 0.0
    %4435 = vmatpush1.msra.mxu0 0.0
    %4436 = vmatprep.subr.mxu0 0.0
    %4437 = vmatpush1.msra.mxu0 0.0
    %4438 = vmatprep.subr.mxu0 0.0
    %4439 = vmatpush1.msra.mxu0 0.0
    %4440 = vmatprep.subr.mxu0 0.0
    %4441 = vmatpush1.msra.mxu0 0.0
    %4442 = vmatprep.subr.mxu0 0.0
    %4443 = vmatpush1.msra.mxu0 0.0
    %4444 = vmatprep.mubr.f32.mxu0 0.0
    %4445 = vmatmul.mubr.f32.gmra.mrb[0].mxu0 %v4376
    %v4446 = vpop.f32.mrb[0].mxu0
    %v4447 = vadd.f32 0.0, %v4446
    %v4448 = vpop.f32.mrb[0].mxu0
    %4449 = vdwg.mxu0
    %4450 = vrot.lane.b32.xlu0 %v3947, 80
    %v4451 = vpop.permute.xlu0 %4450
    %4452 = vrot.lane.b32.xlu0 %v3947, 16
    %v4453 = vpop.permute.xlu0 %4452
    %v4454 = vsel %vm300, %v4451, 0
    %v4456 = vsel %vm300, %v4453, 0
    %4458 = vmatprep.subr.mxu0 0.0
    %4459 = vmatpush1.xpose.msra.mxu0 %v4456
    %4460 = vmatprep.subr.mxu0 0.0
    %4461 = vmatpush1.xpose.msra.mxu0 0.0
    %4462 = vmatprep.subr.mxu0 0.0
    %4463 = vmatpush1.xpose.msra.mxu0 0.0
    %4464 = vmatprep.subr.mxu0 0.0
    %4465 = vmatpush1.xpose.msra.mxu0 0.0
    %4466 = vmatprep.subr.mxu0 0.0
    %4467 = vmatpush1.xpose.msra.mxu0 0.0
    %4468 = vmatprep.subr.mxu0 0.0
    %4469 = vmatpush1.xpose.msra.mxu0 0.0
    %4470 = vmatprep.subr.mxu0 0.0
    %4471 = vmatpush1.xpose.msra.mxu0 0.0
    %4472 = vmatprep.subr.mxu0 0.0
    %4473 = vmatpush1.xpose.msra.mxu0 0.0
    %4474 = vmatprep.subr.mxu0 0.0
    %4475 = vmatpush1.xpose.msra.mxu0 0.0
    %4476 = vmatprep.subr.mxu0 0.0
    %4477 = vmatpush1.xpose.msra.mxu0 0.0
    %4478 = vmatprep.subr.mxu0 0.0
    %4479 = vmatpush1.xpose.msra.mxu0 0.0
    %4480 = vmatprep.subr.mxu0 0.0
    %4481 = vmatpush1.xpose.msra.mxu0 0.0
    %4482 = vmatprep.subr.mxu0 0.0
    %4483 = vmatpush1.xpose.msra.mxu0 0.0
    %4484 = vmatprep.subr.mxu0 0.0
    %4485 = vmatpush1.xpose.msra.mxu0 0.0
    %4486 = vmatprep.subr.mxu0 0.0
    %4487 = vmatpush1.xpose.msra.mxu0 0.0
    %4488 = vmatprep.subr.mxu0 0.0
    %4489 = vmatpush1.xpose.msra.mxu0 0.0
    %4490 = vmatprep.subr.mxu0 0.0
    %4491 = vmatpush1.xpose.msra.mxu0 0.0
    %4492 = vmatprep.subr.mxu0 0.0
    %4493 = vmatpush1.xpose.msra.mxu0 0.0
    %4494 = vmatprep.subr.mxu0 0.0
    %4495 = vmatpush1.xpose.msra.mxu0 0.0
    %4496 = vmatprep.subr.mxu0 0.0
    %4497 = vmatpush1.xpose.msra.mxu0 0.0
    %4498 = vmatprep.subr.mxu0 0.0
    %4499 = vmatpush1.xpose.msra.mxu0 0.0
    %4500 = vmatprep.subr.mxu0 0.0
    %4501 = vmatpush1.xpose.msra.mxu0 0.0
    %4502 = vmatprep.subr.mxu0 0.0
    %4503 = vmatpush1.xpose.msra.mxu0 0.0
    %4504 = vmatprep.subr.mxu0 0.0
    %4505 = vmatpush1.xpose.msra.mxu0 0.0
    %4506 = vmatprep.subr.mxu0 0.0
    %4507 = vmatpush1.xpose.msra.mxu0 0.0
    %4508 = vmatprep.subr.mxu0 0.0
    %4509 = vmatpush1.xpose.msra.mxu0 0.0
    %4510 = vmatprep.subr.mxu0 0.0
    %4511 = vmatpush1.xpose.msra.mxu0 0.0
    %4512 = vmatprep.subr.mxu0 0.0
    %4513 = vmatpush1.xpose.msra.mxu0 0.0
    %4514 = vmatprep.subr.mxu0 0.0
    %4515 = vmatpush1.xpose.msra.mxu0 0.0
    %4516 = vmatprep.subr.mxu0 0.0
    %4517 = vmatpush1.xpose.msra.mxu0 0.0
    %4518 = vmatprep.subr.mxu0 0.0
    %4519 = vmatpush1.xpose.msra.mxu0 0.0
    %4520 = vmatprep.subr.mxu0 0.0
    %4521 = vmatpush1.xpose.msra.mxu0 0.0
    %4522 = vmatprep.mubr.f32.mxu0 0.0
    %4523 = vmatmul.mubr.f32.gmra.mrb[0].mxu0 %v4454
    %v4524 = vpop.f32.mrb[0].mxu0
    %v4525 = vadd.f32 0.0, %v4524
    %v4526 = vpop.f32.mrb[0].mxu0
    %4527 = vdwg.mxu0
    %v4528 = vmul.f32 %v4525, 0.25
    %v4529 = vsel %vm376, %v4528, -inf
    %4530 = vmax.xlane.f32.xlu0 %v4529
    %v4531 = vpop.xlane.xlu0 %4530
    %v4532 = vsub.f32 %v4528, %v4531
    %v4533 = vmul.f32 %v4532, 1.442695
    %v4534 = vpow.pop %v4533
    %v4535 = vsel %vm376, %v4534, 0.0
    %4536 = vadd.xlane.f32.xlu0 %v4535
    %v4537 = vpop.xlane.xlu0 %4536
    %v4538 = vrcp.pop %v4537
    %v4539 = vmul.f32 %v4534, %v4538
    %4540 = vrot.lane.b32.xlu0 %v3949, 80
    %v4541 = vpop.permute.xlu0 %4540
    %v4543 = vsel %vm388, %v4539, 0
    %v4545 = vsel %vm392, %v4541, 0
    %4547 = vmatprep.subr.mxu0 0.0
    %4548 = vmatpush1.msra.mxu0 %v4545
    %4549 = vmatprep.subr.mxu0 0.0
    %4550 = vmatpush1.msra.mxu0 0.0
    %4551 = vmatprep.subr.mxu0 0.0
    %4552 = vmatpush1.msra.mxu0 0.0
    %4553 = vmatprep.subr.mxu0 0.0
    %4554 = vmatpush1.msra.mxu0 0.0
    %4555 = vmatprep.subr.mxu0 0.0
    %4556 = vmatpush1.msra.mxu0 0.0
    %4557 = vmatprep.subr.mxu0 0.0
    %4558 = vmatpush1.msra.mxu0 0.0
    %4559 = vmatprep.subr.mxu0 0.0
    %4560 = vmatpush1.msra.mxu0 0.0
    %4561 = vmatprep.subr.mxu0 0.0
    %4562 = vmatpush1.msra.mxu0 0.0
    %4563 = vmatprep.subr.mxu0 0.0
    %4564 = vmatpush1.msra.mxu0 0.0
    %4565 = vmatprep.subr.mxu0 0.0
    %4566 = vmatpush1.msra.mxu0 0.0
    %4567 = vmatprep.subr.mxu0 0.0
    %4568 = vmatpush1.msra.mxu0 0.0
    %4569 = vmatprep.subr.mxu0 0.0
    %4570 = vmatpush1.msra.mxu0 0.0
    %4571 = vmatprep.subr.mxu0 0.0
    %4572 = vmatpush1.msra.mxu0 0.0
    %4573 = vmatprep.subr.mxu0 0.0
    %4574 = vmatpush1.msra.mxu0 0.0
    %4575 = vmatprep.subr.mxu0 0.0
    %4576 = vmatpush1.msra.mxu0 0.0
    %4577 = vmatprep.subr.mxu0 0.0
    %4578 = vmatpush1.msra.mxu0 0.0
    %4579 = vmatprep.subr.mxu0 0.0
    %4580 = vmatpush1.msra.mxu0 0.0
    %4581 = vmatprep.subr.mxu0 0.0
    %4582 = vmatpush1.msra.mxu0 0.0
    %4583 = vmatprep.subr.mxu0 0.0
    %4584 = vmatpush1.msra.mxu0 0.0
    %4585 = vmatprep.subr.mxu0 0.0
    %4586 = vmatpush1.msra.mxu0 0.0
    %4587 = vmatprep.subr.mxu0 0.0
    %4588 = vmatpush1.msra.mxu0 0.0
    %4589 = vmatprep.subr.mxu0 0.0
    %4590 = vmatpush1.msra.mxu0 0.0
    %4591 = vmatprep.subr.mxu0 0.0
    %4592 = vmatpush1.msra.mxu0 0.0
    %4593 = vmatprep.subr.mxu0 0.0
    %4594 = vmatpush1.msra.mxu0 0.0
    %4595 = vmatprep.subr.mxu0 0.0
    %4596 = vmatpush1.msra.mxu0 0.0
    %4597 = vmatprep.subr.mxu0 0.0
    %4598 = vmatpush1.msra.mxu0 0.0
    %4599 = vmatprep.subr.mxu0 0.0
    %4600 = vmatpush1.msra.mxu0 0.0
    %4601 = vmatprep.subr.mxu0 0.0
    %4602 = vmatpush1.msra.mxu0 0.0
    %4603 = vmatprep.subr.mxu0 0.0
    %4604 = vmatpush1.msra.mxu0 0.0
    %4605 = vmatprep.subr.mxu0 0.0
    %4606 = vmatpush1.msra.mxu0 0.0
    %4607 = vmatprep.subr.mxu0 0.0
    %4608 = vmatpush1.msra.mxu0 0.0
    %4609 = vmatprep.subr.mxu0 0.0
    %4610 = vmatpush1.msra.mxu0 0.0
    %4611 = vmatprep.mubr.f32.mxu0 0.0
    %4612 = vmatmul.mubr.f32.gmra.mrb[0].mxu0 %v4543
    %v4613 = vpop.f32.mrb[0].mxu0
    %v4614 = vadd.f32 0.0, %v4613
    %v4615 = vpop.f32.mrb[0].mxu0
    %4616 = vdwg.mxu0
    %4618 = vrot.lane.b32.xlu0 %v4280, 16
    %v4619 = vpop.permute.xlu0 %4618
    %4622 = vrot.lane.b32.xlu0 %v4447, 32
    %v4623 = vpop.permute.xlu0 %4622
    %4626 = vrot.lane.b32.xlu0 %v4614, 48
    %v4627 = vpop.permute.xlu0 %4626
    %v4629 = vsel %vm300, %v4113, %v4619
    %v4630 = vsel %vm980, %v4629, %v4623
    %v4631 = vsel %vm982, %v4630, %v4627
    %v4632 = vld [vmem:[%s2129] sm:$0xff]
    %v4633 = vld [vmem:[%s2129 + $0x8] sm:$0xff]
    %v4634 = vld [vmem:[%s2129 + $0x10] sm:$0xff]
    %v4635 = vld [vmem:[%s2129 + $0x18] sm:$0xff]
    %v4636 = vld [vmem:[%s2129 + $0x20] sm:$0xff]
    %v4637 = vld [vmem:[%s2129 + $0x28] sm:$0xff]
    %v4638 = vld [vmem:[%s2129 + $0x30] sm:$0xff]
    %v4639 = vld [vmem:[%s2129 + $0x38] sm:$0xff]
    %v4641 = vsel %vm90, %v4631, 0
    %4643 = vmatprep.subr.mxu0 0.0
    %4644 = vmatpush1.msra.mxu0 %v4632
    %4645 = vmatprep.subr.mxu0 0.0
    %4646 = vmatpush1.msra.mxu0 %v4633
    %4647 = vmatprep.subr.mxu0 0.0
    %4648 = vmatpush1.msra.mxu0 %v4634
    %4649 = vmatprep.subr.mxu0 0.0
    %4650 = vmatpush1.msra.mxu0 %v4635
    %4651 = vmatprep.subr.mxu0 0.0
    %4652 = vmatpush1.msra.mxu0 %v4636
    %4653 = vmatprep.subr.mxu0 0.0
    %4654 = vmatpush1.msra.mxu0 %v4637
    %4655 = vmatprep.subr.mxu0 0.0
    %4656 = vmatpush1.msra.mxu0 %v4638
    %4657 = vmatprep.subr.mxu0 0.0
    %4658 = vmatpush1.msra.mxu0 %v4639
    %4659 = vmatprep.subr.mxu0 0.0
    %4660 = vmatpush1.msra.mxu0 0.0
    %4661 = vmatprep.subr.mxu0 0.0
    %4662 = vmatpush1.msra.mxu0 0.0
    %4663 = vmatprep.subr.mxu0 0.0
    %4664 = vmatpush1.msra.mxu0 0.0
    %4665 = vmatprep.subr.mxu0 0.0
    %4666 = vmatpush1.msra.mxu0 0.0
    %4667 = vmatprep.subr.mxu0 0.0
    %4668 = vmatpush1.msra.mxu0 0.0
    %4669 = vmatprep.subr.mxu0 0.0
    %4670 = vmatpush1.msra.mxu0 0.0
    %4671 = vmatprep.subr.mxu0 0.0
    %4672 = vmatpush1.msra.mxu0 0.0
    %4673 = vmatprep.subr.mxu0 0.0
    %4674 = vmatpush1.msra.mxu0 0.0
    %4675 = vmatprep.subr.mxu0 0.0
    %4676 = vmatpush1.msra.mxu0 0.0
    %4677 = vmatprep.subr.mxu0 0.0
    %4678 = vmatpush1.msra.mxu0 0.0
    %4679 = vmatprep.subr.mxu0 0.0
    %4680 = vmatpush1.msra.mxu0 0.0
    %4681 = vmatprep.subr.mxu0 0.0
    %4682 = vmatpush1.msra.mxu0 0.0
    %4683 = vmatprep.subr.mxu0 0.0
    %4684 = vmatpush1.msra.mxu0 0.0
    %4685 = vmatprep.subr.mxu0 0.0
    %4686 = vmatpush1.msra.mxu0 0.0
    %4687 = vmatprep.subr.mxu0 0.0
    %4688 = vmatpush1.msra.mxu0 0.0
    %4689 = vmatprep.subr.mxu0 0.0
    %4690 = vmatpush1.msra.mxu0 0.0
    %4691 = vmatprep.subr.mxu0 0.0
    %4692 = vmatpush1.msra.mxu0 0.0
    %4693 = vmatprep.subr.mxu0 0.0
    %4694 = vmatpush1.msra.mxu0 0.0
    %4695 = vmatprep.subr.mxu0 0.0
    %4696 = vmatpush1.msra.mxu0 0.0
    %4697 = vmatprep.subr.mxu0 0.0
    %4698 = vmatpush1.msra.mxu0 0.0
    %4699 = vmatprep.subr.mxu0 0.0
    %4700 = vmatpush1.msra.mxu0 0.0
    %4701 = vmatprep.subr.mxu0 0.0
    %4702 = vmatpush1.msra.mxu0 0.0
    %4703 = vmatprep.subr.mxu0 0.0
    %4704 = vmatpush1.msra.mxu0 0.0
    %4705 = vmatprep.subr.mxu0 0.0
    %4706 = vmatpush1.msra.mxu0 0.0
    %4707 = vmatprep.mubr.f32.mxu0 0.0
    %4708 = vmatmul.mubr.f32.gmra.mrb[0].mxu0 %v4641
    %v4709 = vpop.f32.mrb[0].mxu0
    %v4710 = vadd.f32 0.0, %v4709
    %v4711 = vpop.f32.mrb[0].mxu0
    %4712 = vdwg.mxu0
    %v4713 = vadd.f32 %v3819, %v4710
    %v4714 = vld [vmem:[%s2212] sm:$0x1]
    %v4716 = vlaneseq
    %v4717 = vshrl.u32 %v4716, 7
    %v4718 = vsub.s32 0, %v4717
    %v4719 = vrot.slane %v4714, %v4718
    %v4721 = vadd.f32 %v4713, %v4719
    %v4722 = vld [vmem:[%s2221] sm:$0x1]
    %v4723 = vld [vmem:[%s2223] sm:$0x1]
    %v4724 = vsel %vm166, %v4721, 0.0
    %4725 = vadd.xlane.f32.xlu0 %v4724
    %v4726 = vpop.xlane.xlu0 %4725
    %v4727 = vmul.f32 %v4726, %v170
    %v4728 = vsub.f32 %v4721, %v4727
    %v4729 = vmul.f32 %v4728, %v4728
    %v4730 = vsel %vm166, %v4729, 0.0
    %4731 = vadd.xlane.f32.xlu0 %v4730
    %v4732 = vpop.xlane.xlu0 %4731
    %v4733 = vmul.f32 %v4732, %v170
    %v4734 = vadd.f32 %v4733, 1e-06
    %v4735 = vrsqrt.pop %v4734
    %v4736 = vmul.f32 %v4728, %v4735
    %v4738 = vlaneseq
    %v4739 = vshrl.u32 %v4738, 7
    %v4740 = vsub.s32 0, %v4739
    %v4741 = vrot.slane %v4722, %v4740
    %v4743 = vmul.f32 %v4736, %v4741
    %v4745 = vlaneseq
    %v4746 = vshrl.u32 %v4745, 7
    %v4747 = vsub.s32 0, %v4746
    %v4748 = vrot.slane %v4723, %v4747
    %v4750 = vadd.f32 %v4743, %v4748
    %v4751 = vld [vmem:[%s2252] sm:$0xff]
    %v4752 = vld [vmem:[%s2252 + $0x8] sm:$0xff]
    %v4753 = vld [vmem:[%s2252 + $0x10] sm:$0xff]
    %v4754 = vld [vmem:[%s2252 + $0x18] sm:$0xff]
    %v4755 = vld [vmem:[%s2252 + $0x20] sm:$0xff]
    %v4756 = vld [vmem:[%s2252 + $0x28] sm:$0xff]
    %v4757 = vld [vmem:[%s2252 + $0x30] sm:$0xff]
    %v4758 = vld [vmem:[%s2252 + $0x38] sm:$0xff]
    %v4759 = vld [vmem:[%s2261] sm:$0x1]
    %v4761 = vlaneseq
    %v4762 = vshrl.u32 %v4761, 7
    %v4763 = vsub.s32 0, %v4762
    %v4764 = vrot.slane %v4759, %v4763
    %v4767 = vsel %vm90, %v4750, 0
    %4769 = vmatprep.subr.mxu0 0.0
    %4770 = vmatpush1.msra.mxu0 %v4751
    %4771 = vmatprep.subr.mxu0 0.0
    %4772 = vmatpush1.msra.mxu0 %v4752
    %4773 = vmatprep.subr.mxu0 0.0
    %4774 = vmatpush1.msra.mxu0 %v4753
    %4775 = vmatprep.subr.mxu0 0.0
    %4776 = vmatpush1.msra.mxu0 %v4754
    %4777 = vmatprep.subr.mxu0 0.0
    %4778 = vmatpush1.msra.mxu0 %v4755
    %4779 = vmatprep.subr.mxu0 0.0
    %4780 = vmatpush1.msra.mxu0 %v4756
    %4781 = vmatprep.subr.mxu0 0.0
    %4782 = vmatpush1.msra.mxu0 %v4757
    %4783 = vmatprep.subr.mxu0 0.0
    %4784 = vmatpush1.msra.mxu0 %v4758
    %4785 = vmatprep.subr.mxu0 0.0
    %4786 = vmatpush1.msra.mxu0 0.0
    %4787 = vmatprep.subr.mxu0 0.0
    %4788 = vmatpush1.msra.mxu0 0.0
    %4789 = vmatprep.subr.mxu0 0.0
    %4790 = vmatpush1.msra.mxu0 0.0
    %4791 = vmatprep.subr.mxu0 0.0
    %4792 = vmatpush1.msra.mxu0 0.0
    %4793 = vmatprep.subr.mxu0 0.0
    %4794 = vmatpush1.msra.mxu0 0.0
    %4795 = vmatprep.subr.mxu0 0.0
    %4796 = vmatpush1.msra.mxu0 0.0
    %4797 = vmatprep.subr.mxu0 0.0
    %4798 = vmatpush1.msra.mxu0 0.0
    %4799 = vmatprep.subr.mxu0 0.0
    %4800 = vmatpush1.msra.mxu0 0.0
    %4801 = vmatprep.subr.mxu0 0.0
    %4802 = vmatpush1.msra.mxu0 0.0
    %4803 = vmatprep.subr.mxu0 0.0
    %4804 = vmatpush1.msra.mxu0 0.0
    %4805 = vmatprep.subr.mxu0 0.0
    %4806 = vmatpush1.msra.mxu0 0.0
    %4807 = vmatprep.subr.mxu0 0.0
    %4808 = vmatpush1.msra.mxu0 0.0
    %4809 = vmatprep.subr.mxu0 0.0
    %4810 = vmatpush1.msra.mxu0 0.0
    %4811 = vmatprep.subr.mxu0 0.0
    %4812 = vmatpush1.msra.mxu0 0.0
    %4813 = vmatprep.subr.mxu0 0.0
    %4814 = vmatpush1.msra.mxu0 0.0
    %4815 = vmatprep.subr.mxu0 0.0
    %4816 = vmatpush1.msra.mxu0 0.0
    %4817 = vmatprep.subr.mxu0 0.0
    %4818 = vmatpush1.msra.mxu0 0.0
    %4819 = vmatprep.subr.mxu0 0.0
    %4820 = vmatpush1.msra.mxu0 0.0
    %4821 = vmatprep.subr.mxu0 0.0
    %4822 = vmatpush1.msra.mxu0 0.0
    %4823 = vmatprep.subr.mxu0 0.0
    %4824 = vmatpush1.msra.mxu0 0.0
    %4825 = vmatprep.subr.mxu0 0.0
    %4826 = vmatpush1.msra.mxu0 0.0
    %4827 = vmatprep.subr.mxu0 0.0
    %4828 = vmatpush1.msra.mxu0 0.0
    %4829 = vmatprep.subr.mxu0 0.0
    %4830 = vmatpush1.msra.mxu0 0.0
    %4831 = vmatprep.subr.mxu0 0.0
    %4832 = vmatpush1.msra.mxu0 0.0
    %4833 = vmatprep.mubr.f32.mxu0 0.0
    %4834 = vmatmul.mubr.f32.gmra.mrb[0].mxu0 %v4767
    %v4835 = vpop.f32.mrb[0].mxu0
    %v4836 = vadd.f32 %v4764, %v4835
    %v4837 = vpop.f32.mrb[0].mxu0
    %4838 = vdwg.mxu0
    %v4839 = vmul.f32 %v4836, 0.5
    %v4840 = vmul.f32 %v4836, 0.70710677
    %v4841 = vand.u32 2147483647, %v4840
    %v4842 = vmul.f32 %v4841, 0.3275911
    %v4843 = vadd.f32 %v4842, 1.0
    %v4844 = vrcp.pop %v4843
    %v4845 = vmul.f32 1.0, %v4844
    %v4846 = vmul.f32 %v4845, 1.0614054
    %v4847 = vadd.f32 %v4846, -1.4531521
    %v4848 = vmul.f32 %v4847, %v4845
    %v4849 = vadd.f32 %v4848, 1.4214138
    %v4850 = vmul.f32 %v4849, %v4845
    %v4851 = vadd.f32 %v4850, -0.28449672
    %v4852 = vmul.f32 %v4851, %v4845
    %v4853 = vadd.f32 %v4852, 0.2548296
    %v4854 = vmul.f32 %v4853, %v4845
    %v4855 = vsub.f32 0.0, %v4841
    %v4856 = vmul.f32 %v4855, %v4841
    %v4857 = vmul.f32 %v4856, 1.442695
    %v4858 = vpow.pop %v4857
    %v4859 = vmul.f32 %v4854, %v4858
    %v4860 = vsub.f32 1.0, %v4859
    %vm4861 = vcmp.ge.f32.partialorder %v4840, 0.0
    %v4862 = vsub.f32 0.0, %v4860
    %v4863 = vsel %vm4861, %v4860, %v4862
    %v4864 = vadd.f32 %v4863, 1.0
    %v4865 = vmul.f32 %v4839, %v4864
    %v4866 = vld [vmem:[%s2369] sm:$0xff]
    %v4867 = vld [vmem:[%s2369 + $0x8] sm:$0xff]
    %v4868 = vld [vmem:[%s2369 + $0x10] sm:$0xff]
    %v4869 = vld [vmem:[%s2369 + $0x18] sm:$0xff]
    %v4870 = vld [vmem:[%s2369 + $0x20] sm:$0xff]
    %v4871 = vld [vmem:[%s2369 + $0x28] sm:$0xff]
    %v4872 = vld [vmem:[%s2369 + $0x30] sm:$0xff]
    %v4873 = vld [vmem:[%s2369 + $0x38] sm:$0xff]
    %v4874 = vld [vmem:[%s2369 + $0x40] sm:$0xff]
    %v4875 = vld [vmem:[%s2369 + $0x48] sm:$0xff]
    %v4876 = vld [vmem:[%s2369 + $0x50] sm:$0xff]
    %v4877 = vld [vmem:[%s2369 + $0x58] sm:$0xff]
    %v4878 = vld [vmem:[%s2369 + $0x60] sm:$0xff]
    %v4879 = vld [vmem:[%s2369 + $0x68] sm:$0xff]
    %v4880 = vld [vmem:[%s2369 + $0x70] sm:$0xff]
    %v4881 = vld [vmem:[%s2369 + $0x78] sm:$0xff]
    %4882 = vmatprep.subr.mxu0 0.0
    %4883 = vmatpush1.msra.mxu0 %v4866
    %4884 = vmatprep.subr.mxu0 0.0
    %4885 = vmatpush1.msra.mxu0 %v4867
    %4886 = vmatprep.subr.mxu0 0.0
    %4887 = vmatpush1.msra.mxu0 %v4868
    %4888 = vmatprep.subr.mxu0 0.0
    %4889 = vmatpush1.msra.mxu0 %v4869
    %4890 = vmatprep.subr.mxu0 0.0
    %4891 = vmatpush1.msra.mxu0 %v4870
    %4892 = vmatprep.subr.mxu0 0.0
    %4893 = vmatpush1.msra.mxu0 %v4871
    %4894 = vmatprep.subr.mxu0 0.0
    %4895 = vmatpush1.msra.mxu0 %v4872
    %4896 = vmatprep.subr.mxu0 0.0
    %4897 = vmatpush1.msra.mxu0 %v4873
    %4898 = vmatprep.subr.mxu0 0.0
    %4899 = vmatpush1.msra.mxu0 %v4874
    %4900 = vmatprep.subr.mxu0 0.0
    %4901 = vmatpush1.msra.mxu0 %v4875
    %4902 = vmatprep.subr.mxu0 0.0
    %4903 = vmatpush1.msra.mxu0 %v4876
    %4904 = vmatprep.subr.mxu0 0.0
    %4905 = vmatpush1.msra.mxu0 %v4877
    %4906 = vmatprep.subr.mxu0 0.0
    %4907 = vmatpush1.msra.mxu0 %v4878
    %4908 = vmatprep.subr.mxu0 0.0
    %4909 = vmatpush1.msra.mxu0 %v4879
    %4910 = vmatprep.subr.mxu0 0.0
    %4911 = vmatpush1.msra.mxu0 %v4880
    %4912 = vmatprep.subr.mxu0 0.0
    %4913 = vmatpush1.msra.mxu0 %v4881
    %4914 = vmatprep.subr.mxu0 0.0
    %4915 = vmatpush1.msra.mxu0 0.0
    %4916 = vmatprep.subr.mxu0 0.0
    %4917 = vmatpush1.msra.mxu0 0.0
    %4918 = vmatprep.subr.mxu0 0.0
    %4919 = vmatpush1.msra.mxu0 0.0
    %4920 = vmatprep.subr.mxu0 0.0
    %4921 = vmatpush1.msra.mxu0 0.0
    %4922 = vmatprep.subr.mxu0 0.0
    %4923 = vmatpush1.msra.mxu0 0.0
    %4924 = vmatprep.subr.mxu0 0.0
    %4925 = vmatpush1.msra.mxu0 0.0
    %4926 = vmatprep.subr.mxu0 0.0
    %4927 = vmatpush1.msra.mxu0 0.0
    %4928 = vmatprep.subr.mxu0 0.0
    %4929 = vmatpush1.msra.mxu0 0.0
    %4930 = vmatprep.subr.mxu0 0.0
    %4931 = vmatpush1.msra.mxu0 0.0
    %4932 = vmatprep.subr.mxu0 0.0
    %4933 = vmatpush1.msra.mxu0 0.0
    %4934 = vmatprep.subr.mxu0 0.0
    %4935 = vmatpush1.msra.mxu0 0.0
    %4936 = vmatprep.subr.mxu0 0.0
    %4937 = vmatpush1.msra.mxu0 0.0
    %4938 = vmatprep.subr.mxu0 0.0
    %4939 = vmatpush1.msra.mxu0 0.0
    %4940 = vmatprep.subr.mxu0 0.0
    %4941 = vmatpush1.msra.mxu0 0.0
    %4942 = vmatprep.subr.mxu0 0.0
    %4943 = vmatpush1.msra.mxu0 0.0
    %4944 = vmatprep.subr.mxu0 0.0
    %4945 = vmatpush1.msra.mxu0 0.0
    %4946 = vmatprep.mubr.f32.mxu0 0.0
    %4947 = vmatmul.mubr.f32.gmra.mrb[0].mxu0 %v4865
    %v4948 = vpop.f32.mrb[0].mxu0
    %v4949 = vadd.f32 0.0, %v4948
    %v4950 = vpop.f32.mrb[0].mxu0
    %4951 = vdwg.mxu0
    %v4952 = vadd.f32 %v4721, %v4949
    %v4953 = vld [vmem:[%s2457] sm:$0x1]
    %v4955 = vlaneseq
    %v4956 = vshrl.u32 %v4955, 7
    %v4957 = vsub.s32 0, %v4956
    %v4958 = vrot.slane %v4953, %v4957
    %v4960 = vadd.f32 %v4952, %v4958
    %v4961 = vld [vmem:[%s15] sm:$0x1]
    %v4962 = vld [vmem:[%s16] sm:$0x1]
    %v4963 = vsel %vm166, %v4960, 0.0
    %4964 = vadd.xlane.f32.xlu0 %v4963
    %v4965 = vpop.xlane.xlu0 %4964
    %v4966 = vmul.f32 %v4965, %v170
    %v4967 = vsub.f32 %v4960, %v4966
    %v4968 = vmul.f32 %v4967, %v4967
    %v4969 = vsel %vm166, %v4968, 0.0
    %4970 = vadd.xlane.f32.xlu0 %v4969
    %v4971 = vpop.xlane.xlu0 %4970
    %v4972 = vmul.f32 %v4971, %v170
    %v4973 = vadd.f32 %v4972, 1e-06
    %v4974 = vrsqrt.pop %v4973
    %v4975 = vmul.f32 %v4967, %v4974
    %v4977 = vlaneseq
    %v4978 = vshrl.u32 %v4977, 7
    %v4979 = vsub.s32 0, %v4978
    %v4980 = vrot.slane %v4961, %v4979
    %v4982 = vmul.f32 %v4975, %v4980
    %v4984 = vlaneseq
    %v4985 = vshrl.u32 %v4984, 7
    %v4986 = vsub.s32 0, %v4985
    %v4987 = vrot.slane %v4962, %v4986
    %v4989 = vadd.f32 %v4982, %v4987
    %v4990 = vld [vmem:[%s17] sm:$0xff]
    %v4991 = vld [vmem:[%s17 + $0x8] sm:$0xff]
    %v4992 = vld [vmem:[%s17 + $0x10] sm:$0xff]
    %v4993 = vld [vmem:[%s17 + $0x18] sm:$0xff]
    %v4994 = vld [vmem:[%s17 + $0x20] sm:$0xff]
    %v4995 = vld [vmem:[%s17 + $0x28] sm:$0xff]
    %v4996 = vld [vmem:[%s17 + $0x30] sm:$0xff]
    %v4997 = vld [vmem:[%s17 + $0x38] sm:$0xff]
    %v4998 = vld [vmem:[%s18] sm:$0x1]
    %v5000 = vsel %vm90, %v4989, 0
    %5002 = vmatprep.subr.mxu0 0.0
    %5003 = vmatpush1.msra.mxu0 %v4990
    %5004 = vmatprep.subr.mxu0 0.0
    %5005 = vmatpush1.msra.mxu0 %v4991
    %5006 = vmatprep.subr.mxu0 0.0
    %5007 = vmatpush1.msra.mxu0 %v4992
    %5008 = vmatprep.subr.mxu0 0.0
    %5009 = vmatpush1.msra.mxu0 %v4993
    %5010 = vmatprep.subr.mxu0 0.0
    %5011 = vmatpush1.msra.mxu0 %v4994
    %5012 = vmatprep.subr.mxu0 0.0
    %5013 = vmatpush1.msra.mxu0 %v4995
    %5014 = vmatprep.subr.mxu0 0.0
    %5015 = vmatpush1.msra.mxu0 %v4996
    %5016 = vmatprep.subr.mxu0 0.0
    %5017 = vmatpush1.msra.mxu0 %v4997
    %5018 = vmatprep.subr.mxu0 0.0
    %5019 = vmatpush1.msra.mxu0 0.0
    %5020 = vmatprep.subr.mxu0 0.0
    %5021 = vmatpush1.msra.mxu0 0.0
    %5022 = vmatprep.subr.mxu0 0.0
    %5023 = vmatpush1.msra.mxu0 0.0
    %5024 = vmatprep.subr.mxu0 0.0
    %5025 = vmatpush1.msra.mxu0 0.0
    %5026 = vmatprep.subr.mxu0 0.0
    %5027 = vmatpush1.msra.mxu0 0.0
    %5028 = vmatprep.subr.mxu0 0.0
    %5029 = vmatpush1.msra.mxu0 0.0
    %5030 = vmatprep.subr.mxu0 0.0
    %5031 = vmatpush1.msra.mxu0 0.0
    %5032 = vmatprep.subr.mxu0 0.0
    %5033 = vmatpush1.msra.mxu0 0.0
    %5034 = vmatprep.subr.mxu0 0.0
    %5035 = vmatpush1.msra.mxu0 0.0
    %5036 = vmatprep.subr.mxu0 0.0
    %5037 = vmatpush1.msra.mxu0 0.0
    %5038 = vmatprep.subr.mxu0 0.0
    %5039 = vmatpush1.msra.mxu0 0.0
    %5040 = vmatprep.subr.mxu0 0.0
    %5041 = vmatpush1.msra.mxu0 0.0
    %5042 = vmatprep.subr.mxu0 0.0
    %5043 = vmatpush1.msra.mxu0 0.0
    %5044 = vmatprep.subr.mxu0 0.0
    %5045 = vmatpush1.msra.mxu0 0.0
    %5046 = vmatprep.subr.mxu0 0.0
    %5047 = vmatpush1.msra.mxu0 0.0
    %5048 = vmatprep.subr.mxu0 0.0
    %5049 = vmatpush1.msra.mxu0 0.0
    %5050 = vmatprep.subr.mxu0 0.0
    %5051 = vmatpush1.msra.mxu0 0.0
    %5052 = vmatprep.subr.mxu0 0.0
    %5053 = vmatpush1.msra.mxu0 0.0
    %5054 = vmatprep.subr.mxu0 0.0
    %5055 = vmatpush1.msra.mxu0 0.0
    %5056 = vmatprep.subr.mxu0 0.0
    %5057 = vmatpush1.msra.mxu0 0.0
    %5058 = vmatprep.subr.mxu0 0.0
    %5059 = vmatpush1.msra.mxu0 0.0
    %5060 = vmatprep.subr.mxu0 0.0
    %5061 = vmatpush1.msra.mxu0 0.0
    %5062 = vmatprep.subr.mxu0 0.0
    %5063 = vmatpush1.msra.mxu0 0.0
    %5064 = vmatprep.subr.mxu0 0.0
    %5065 = vmatpush1.msra.mxu0 0.0
    %5066 = vmatprep.mubr.f32.mxu0 0.0
    %5067 = vmatmul.mubr.f32.gmra.mrb[0].mxu0 %v5000
    %v5068 = vpop.f32.mrb[0].mxu0
    %v5069 = vadd.f32 %v4998, %v5068
    %v5070 = vpop.f32.mrb[0].mxu0
    %5071 = vdwg.mxu0
    %s5072 = scalar_lea.vmem [#allocation2], 1
    %5073 = vst [vmem:[%s5072] sm:$0x1] %v5069
    // Predicated region
    $region78: #{model_forward.3} parent=1 // pred_check
      _
    $region79: #{model_forward.3} parent=1 // pred_check_branch
      %5075 = sbr.rel (0) target = $region81
    $region80: #{model_forward.3} parent=1 // pred_region
      %s5077 = ssub.s32 32, 32
      %5078 = vsyncadd [#allocation3], %s5077
      %s5079 = sshll.u32 [#allocation2], 4
      %s5080 = int_to_ptr.vmem [resolvable:$true] %s5079
      %5085 = dma.vmem_to_hbm [thread:$0]  %s5080, 32, %s19, [#allocation3], 16, 16, 1
    $region81: #{model_forward.3} parent=1 // pred_fallthru
      _
    // Predicated region
    $region82: #{model_forward.3} parent=1 // pred_check
      _
    $region83: #{model_forward.3} parent=1 // pred_check_branch
      %5087 = sbr.rel (0) target = $region85
    $region84: #{model_forward.3} parent=1 // pred_region
      %5088 = dma.done [#allocation3], 32
    $region85: #{model_forward.3} parent=1 // pred_fallthru
      _
    %5089 = vsyncpa [#allocation3], 1

</llo_original>
